<compile_context>
chip_gen: v7x
topology: tpu7x:2x2x1
jax: 0.10.0
libtpu: 0.0.40
codegen_flags: <defaults>
</compile_context>

<pallas_src>
import functools

import jax
import jax.numpy as jnp
from jax.experimental import pallas as pl
from jax.experimental.pallas import tpu as pltpu


# ---------------------------------------------------------------------------
# Pallas kernel: whole transformer layer for one block of TB batch elements.
# ---------------------------------------------------------------------------
def transformer_layer_kernel(
    x_ref,                       # (TB, N, C)  f32
    relb_ref,                    # (H, N, N)   bf16 relative position bias
    ln1g_ref, ln1b_ref,          # (1, C) f32
    qkvw_ref,                    # (C, 3*D)    bf16  (qkv.weight^T, Q cols pre-scaled)
    projw_ref, projb_ref,        # (D, C) bf16, (1, C) f32
    ln2g_ref, ln2b_ref,          # (1, C) f32
    fc1w_ref, fc1b_ref,          # (C, Hid) bf16, (1, Hid) f32
    fc2w_ref, fc2b_ref,          # (Hid, C) bf16, (1, C) f32
    o_ref,                       # (TB, N, C) f32
    ctx_ref,                     # (TB*N, D) bf16 VMEM scratch (per-head contexts)
    *, num_heads, head_dim, eps,
):
    TB, N, C = x_ref.shape
    D = num_heads * head_dim
    bf16 = jnp.bfloat16

    x = x_ref[...].astype(jnp.float32).reshape(TB * N, C)

    # ---- LayerNorm 1 (f32) -------------------------------------------------
    mu = jnp.mean(x, axis=-1, keepdims=True)
    var = jnp.mean((x - mu) ** 2, axis=-1, keepdims=True)
    xn = (x - mu) * jax.lax.rsqrt(var + eps) * ln1g_ref[0] + ln1b_ref[0]

    # ---- QKV projection (bf16 MXU, f32 acc; scale folded into Q weights) ---
    qkv = jnp.dot(xn.astype(bf16), qkvw_ref[...],
                  preferred_element_type=jnp.float32)            # (TB*N, 3D) f32

    # ---- multi-head self-attention ------------------------------------------
    # Per-head scores/softmax/PV; each head's context lands in the bf16 VMEM
    # scratch (bounded live ranges, no loop-carried f32 accumulator), then a
    # single full-depth (TB*N, D)@(D, C) projection matmul feeds the MXU.
    # TODO(synk): at production ViT sizes process 2-4 heads per step (128/256-wide
    # lane slabs) and chunk the MLP hidden dimension to cap VMEM on v7x.
    for h in range(num_heads):
        lo = h * head_dim
        qh = qkv[:, lo:lo + head_dim].reshape(TB, N, head_dim)
        kh = qkv[:, D + lo:D + lo + head_dim].reshape(TB, N, head_dim)
        vh = qkv[:, 2 * D + lo:2 * D + lo + head_dim].reshape(TB, N, head_dim)

        s = jnp.einsum("tnd,tmd->tnm", qh.astype(bf16), kh.astype(bf16),
                       preferred_element_type=jnp.float32)       # (TB, N, N)
        s = s + relb_ref[h].astype(jnp.float32)
        s = s - jnp.max(s, axis=-1, keepdims=True)
        p = jnp.exp(s)
        p = p * pl.reciprocal(jnp.sum(p, axis=-1, keepdims=True), approx=True)

        ctx = jnp.einsum("tnm,tmd->tnd", p.astype(bf16), vh.astype(bf16),
                         preferred_element_type=jnp.float32)     # (TB, N, hd)
        ctx_ref[:, lo:lo + head_dim] = ctx.reshape(TB * N, head_dim).astype(bf16)

    attn_out = jnp.dot(ctx_ref[...], projw_ref[...],
                       preferred_element_type=jnp.float32)       # (TB*N, C) f32
    x1 = x + attn_out + projb_ref[0]                             # residual 1 (f32)

    # ---- LayerNorm 2 + MLP ---------------------------------------------------
    mu2 = jnp.mean(x1, axis=-1, keepdims=True)
    var2 = jnp.mean((x1 - mu2) ** 2, axis=-1, keepdims=True)
    xn2 = (x1 - mu2) * jax.lax.rsqrt(var2 + eps) * ln2g_ref[0] + ln2b_ref[0]

    h1 = jnp.dot(xn2.astype(bf16), fc1w_ref[...],
                 preferred_element_type=jnp.float32) + fc1b_ref[0]
    # exact GELU (PyTorch nn.GELU default, erf form) in f32
    h1 = 0.5 * h1 * (1.0 + jax.lax.erf(h1 * jnp.float32(0.7071067811865476)))
    mlp = jnp.dot(h1.astype(bf16), fc2w_ref[...],
                  preferred_element_type=jnp.float32) + fc2b_ref[0]

    o_ref[...] = (x1 + mlp).reshape(TB, N, C).astype(o_ref.dtype)  # residual 2


# ---------------------------------------------------------------------------
# Parameter prep (glue, outside the kernel)
# ---------------------------------------------------------------------------
def _prep_params(params, num_heads, N):
    f32, bf16 = jnp.float32, jnp.bfloat16
    D = params["qkv_w"].shape[0] // 3
    head_dim = D // num_heads
    scale = head_dim ** (-0.5)

    # fold attention scale into the Q rows of the qkv weight (one-time, host side)
    qkv_w = params["qkv_w"].astype(f32)
    qkv_w = jnp.concatenate([qkv_w[:D] * scale, qkv_w[D:]], axis=0)

    # relative position index for window_size=(1, N): idx[i, j] = i - j + N - 1
    num_rel = params["rel_table"].shape[0]
    idx = jnp.clip(jnp.arange(N)[:, None] - jnp.arange(N)[None, :] + (N - 1),
                   0, num_rel - 1)
    rel_bias = jnp.transpose(params["rel_table"].astype(f32)[idx], (2, 0, 1))  # (H,N,N)

    return dict(
        head_dim=head_dim,
        rel_bias=rel_bias.astype(bf16),                       # bf16 constant
        ln1_g=params["ln1_g"].astype(f32)[None, :],
        ln1_b=params["ln1_b"].astype(f32)[None, :],
        qkv_w_t=qkv_w.T.astype(bf16),                         # (C, 3D) bf16
        proj_w_t=params["proj_w"].astype(f32).T.astype(bf16),  # (D, C) bf16
        proj_b=params["proj_b"].astype(f32)[None, :],
        ln2_g=params["ln2_g"].astype(f32)[None, :],
        ln2_b=params["ln2_b"].astype(f32)[None, :],
        fc1_w_t=params["fc1_w"].astype(f32).T.astype(bf16),   # (C, Hid) bf16
        fc1_b=params["fc1_b"].astype(f32)[None, :],
        fc2_w_t=params["fc2_w"].astype(f32).T.astype(bf16),   # (Hid, C) bf16
        fc2_b=params["fc2_b"].astype(f32)[None, :],
    )


def _nbytes(a):
    return a.size * jnp.dtype(a.dtype).itemsize


def _vmem_capacity_bytes():
    try:
        return int(pltpu.get_tpu_info().vmem_capacity_bytes)
    except Exception:
        return 64 << 20          # conservative default (v7x-sized)


def _is_multi_core():
    """Best-effort: does one Pallas grid see >1 TensorCore (v7x-style megacore)?"""
    try:
        d = jax.devices()[0]
        if int(getattr(d, "num_cores", 1) or 1) > 1:
            return True
        return "v7" in str(getattr(d, "device_kind", "")).lower()
    except Exception:
        return False


def _pick_batch_block(B, N, C, D, hidden, const_bytes, vmem_limit, multi_core):
    """Largest divisor of B whose per-block VMEM estimate fits; keep >=2 grid
    steps only on multi-core chips (grid steps are a serial loop on one TC)."""
    def block_bytes(tb):
        rows = tb * N
        b = 0
        b += 2 * 2 * rows * C * 4              # x + out blocks, double-buffered
        b += rows * 3 * D * 4                  # qkv (f32)
        b += 3 * tb * N * N * 4                # scores / exp / probs (per head)
        b += rows * D * 2                      # ctx scratch (bf16)
        b += rows * hidden * (4 + 2)           # h1 f32 + bf16 cast
        b += 3 * rows * C * 4                  # x1 / xn / residual temps
        return int(b * 1.5)                    # fudge for compiler temporaries

    budget = max(vmem_limit - 2 * const_bytes, vmem_limit // 4)
    divisors = [t for t in range(1, B + 1) if B % t == 0]
    fitting = [t for t in divisors if block_bytes(t) <= budget] or [1]
    tb = max(fitting)
    if multi_core and B >= 2 and B // tb < 2:
        ok = [t for t in fitting if B // t >= 2]
        if ok:
            tb = max(ok)
    return tb


# ---------------------------------------------------------------------------
# Wrapper: pallas_call
# ---------------------------------------------------------------------------
def transformer_layer_rel_pos(x, params, num_heads):
    B, N, C = x.shape
    prep = _prep_params(params, num_heads, N)
    head_dim = prep["head_dim"]
    D = num_heads * head_dim
    hidden = params["fc1_w"].shape[0]
    H = num_heads

    operands = (
        x.astype(jnp.float32),
        prep["rel_bias"],
        prep["ln1_g"], prep["ln1_b"],
        prep["qkv_w_t"],
        prep["proj_w_t"], prep["proj_b"],
        prep["ln2_g"], prep["ln2_b"],
        prep["fc1_w_t"], prep["fc1_b"],
        prep["fc2_w_t"], prep["fc2_b"],
    )
    const_bytes = sum(_nbytes(a) for a in operands[1:])

    # chip-aware scoped-VMEM budget: ~78% of physical (=> ~100 MiB on v5e/v6e,
    # ~50 MiB on v7x, leaving headroom for Mosaic internal scratch).
    vmem_limit = int(_vmem_capacity_bytes() * 0.78)

    tb = _pick_batch_block(B, N, C, D, hidden, const_bytes, vmem_limit,
                           _is_multi_core())
    grid = (B // tb,)

    kernel = functools.partial(
        transformer_layer_kernel,
        num_heads=num_heads, head_dim=head_dim, eps=1e-5,
    )

    # advisory cost estimate for XLA's scheduler around the fused custom call
    flops = 2 * B * N * (C * 3 * D) + 4 * B * H * N * N * head_dim \
        + 2 * B * N * D * C + 4 * B * N * C * hidden
    cost = pl.CostEstimate(
        flops=int(flops),
        transcendentals=int(B * H * N * N + B * N * hidden),
        bytes_accessed=int(2 * B * N * C * 4 + const_bytes),
    )

    def _run(single_buffer_consts):
        def const_spec(shape):
            # Grid-constant operands: block index never changes -> single-buffer.
            n = len(shape)
            idx = lambda b, _n=n: (0,) * _n
            if single_buffer_consts:
                return pl.BlockSpec(shape, idx, pipeline_mode=pl.Buffered(1))
            return pl.BlockSpec(shape, idx)

        in_specs = [
            pl.BlockSpec((tb, N, C), lambda b: (b, 0, 0)),     # x block
            const_spec((H, N, N)),                              # rel bias (bf16)
            const_spec((1, C)), const_spec((1, C)),             # ln1 gamma/beta
            const_spec((C, 3 * D)),                             # qkv weight^T (bf16)
            const_spec((D, C)), const_spec((1, C)),             # proj weight^T / bias
            const_spec((1, C)), const_spec((1, C)),             # ln2 gamma/beta
            const_spec((C, hidden)), const_spec((1, hidden)),   # fc1 weight^T / bias
            const_spec((hidden, C)), const_spec((1, C)),        # fc2 weight^T / bias
        ]

        return pl.pallas_call(
            kernel,
            out_shape=jax.ShapeDtypeStruct((B, N, C), jnp.float32),
            grid=grid,
            in_specs=in_specs,
            out_specs=pl.BlockSpec((tb, N, C), lambda b: (b, 0, 0)),
            scratch_shapes=[pltpu.VMEM((tb * N, D), jnp.bfloat16)],
            compiler_params=pltpu.CompilerParams(
                dimension_semantics=("parallel",),
                vmem_limit_bytes=vmem_limit,
            ),
            cost_estimate=cost,
        )(*operands)

    try:
        return _run(True)
    except Exception:
        # pipeline_mode=pl.Buffered(1) unsupported on this jax version ->
        # fall back to default double-buffering of the constant operands.
        return _run(False)


# ---------------------------------------------------------------------------
# References for correctness checking.
# ---------------------------------------------------------------------------
def reference_f32(x, params, num_heads):
    """Pure-f32 mirror of the PyTorch forward."""
    B, N, C = x.shape
    head_dim = C // num_heads
    D = num_heads * head_dim
    scale = head_dim ** (-0.5)
    eps = 1e-5

    def layer_norm(v, g, b):
        mu = jnp.mean(v, axis=-1, keepdims=True)
        var = jnp.mean((v - mu) ** 2, axis=-1, keepdims=True)
        return (v - mu) / jnp.sqrt(var + eps) * g + b

    xn = layer_norm(x, params["ln1_g"], params["ln1_b"])
    qkv = xn @ params["qkv_w"].T
    qkv = qkv.reshape(B, N, 3, num_heads, head_dim).transpose(2, 0, 3, 1, 4)
    q, k, v = qkv[0] * scale, qkv[1], qkv[2]
    attn = jnp.einsum("bhqd,bhkd->bhqk", q, k)

    num_rel = params["rel_table"].shape[0]
    idx = jnp.clip(jnp.arange(N)[:, None] - jnp.arange(N)[None, :] + (N - 1),
                   0, num_rel - 1)
    rel = jnp.transpose(params["rel_table"][idx], (2, 0, 1))
    attn = jax.nn.softmax(attn + rel[None], axis=-1)
    ctx = jnp.einsum("bhqk,bhkd->bhqd", attn, v)
    ctx = ctx.transpose(0, 2, 1, 3).reshape(B, N, D)
    x1 = x + ctx @ params["proj_w"].T + params["proj_b"]

    xn2 = layer_norm(x1, params["ln2_g"], params["ln2_b"])
    h1 = jax.nn.gelu(xn2 @ params["fc1_w"].T + params["fc1_b"], approximate=False)
    return x1 + h1 @ params["fc2_w"].T + params["fc2_b"]


def reference_matched(x, prep, num_heads):
    """Mirrors the kernel's numerics (bf16 MXU inputs, f32 accumulation,
    bf16 per-head contexts, single full-depth proj matmul)."""
    B, N, C = x.shape
    hd = prep["head_dim"]
    D = num_heads * hd
    bf16, eps = jnp.bfloat16, 1e-5

    x2 = x.reshape(B * N, C).astype(jnp.float32)
    mu = jnp.mean(x2, -1, keepdims=True)
    var = jnp.mean((x2 - mu) ** 2, -1, keepdims=True)
    xn = (x2 - mu) * jax.lax.rsqrt(var + eps) * prep["ln1_g"][0] + prep["ln1_b"][0]
    qkv = jnp.dot(xn.astype(bf16), prep["qkv_w_t"], preferred_element_type=jnp.float32)

    ctx_parts = []
    for h in range(num_heads):
        lo = h * hd
        qh = qkv[:, lo:lo + hd].reshape(B, N, hd)
        kh = qkv[:, D + lo:D + lo + hd].reshape(B, N, hd)
        vh = qkv[:, 2 * D + lo:2 * D + lo + hd].reshape(B, N, hd)
        s = jnp.einsum("tnd,tmd->tnm", qh.astype(bf16), kh.astype(bf16),
                       preferred_element_type=jnp.float32)
        s = s + prep["rel_bias"][h].astype(jnp.float32)
        s = s - jnp.max(s, -1, keepdims=True)
        p = jnp.exp(s)
        p = p / jnp.sum(p, -1, keepdims=True)
        ctx = jnp.einsum("tnm,tmd->tnd", p.astype(bf16), vh.astype(bf16),
                         preferred_element_type=jnp.float32)
        ctx_parts.append(ctx.reshape(B * N, hd).astype(bf16))
    ctx_cat = jnp.concatenate(ctx_parts, axis=-1)
    attn_out = jnp.dot(ctx_cat, prep["proj_w_t"], preferred_element_type=jnp.float32)
    x1 = x2 + attn_out + prep["proj_b"][0]

    mu2 = jnp.mean(x1, -1, keepdims=True)
    var2 = jnp.mean((x1 - mu2) ** 2, -1, keepdims=True)
    xn2 = (x1 - mu2) * jax.lax.rsqrt(var2 + eps) * prep["ln2_g"][0] + prep["ln2_b"][0]
    h1 = jnp.dot(xn2.astype(bf16), prep["fc1_w_t"],
                 preferred_element_type=jnp.float32) + prep["fc1_b"][0]
    h1 = 0.5 * h1 * (1.0 + jax.lax.erf(h1 * jnp.float32(0.7071067811865476)))
    mlp = jnp.dot(h1.astype(bf16), prep["fc2_w_t"],
                  preferred_element_type=jnp.float32) + prep["fc2_b"][0]
    return (x1 + mlp).reshape(B, N, C)


# ---------------------------------------------------------------------------
if __name__ == "__main__":
    B, N, C = 4, 16, 32
    num_heads = 4
    head_dim = C // num_heads
    D = num_heads * head_dim
    mlp_ratio = 4.0
    hidden = int(C * mlp_ratio)
    num_rel = (2 * 1 - 1) * (2 * N - 1) + 3      # window_size = (1, N)

    key = jax.random.PRNGKey(0)
    ks = jax.random.split(key, 13)
    params = {
        "ln1_g": 1.0 + 0.1 * jax.random.normal(ks[0], (C,), jnp.float32),
        "ln1_b": 0.1 * jax.random.normal(ks[1], (C,), jnp.float32),
        "qkv_w": 0.05 * jax.random.normal(ks[2], (3 * D, C), jnp.float32),
        "proj_w": 0.05 * jax.random.normal(ks[3], (C, D), jnp.float32),
        "proj_b": 0.05 * jax.random.normal(ks[4], (C,), jnp.float32),
        "ln2_g": 1.0 + 0.1 * jax.random.normal(ks[5], (C,), jnp.float32),
        "ln2_b": 0.1 * jax.random.normal(ks[6], (C,), jnp.float32),
        "fc1_w": 0.05 * jax.random.normal(ks[7], (hidden, C), jnp.float32),
        "fc1_b": 0.05 * jax.random.normal(ks[8], (hidden,), jnp.float32),
        "fc2_w": 0.05 * jax.random.normal(ks[9], (C, hidden), jnp.float32),
        "fc2_b": 0.05 * jax.random.normal(ks[10], (C,), jnp.float32),
        "rel_table": 0.05 * jax.random.normal(ks[11], (num_rel, num_heads), jnp.float32),
    }
    x = jax.random.normal(ks[12], (B, N, C), jnp.float32)

    out = jax.block_until_ready(transformer_layer_rel_pos(x, params, num_heads))
    assert out.shape == (B, N, C)

    prep = _prep_params(params, num_heads, N)
    ref_matched = jax.block_until_ready(reference_matched(x, prep, num_heads))
    ref_full = jax.block_until_ready(reference_f32(x, params, num_heads))

    err_matched = float(jnp.max(jnp.abs(out - ref_matched)))   # same numerics (bf16 MXU)
    err_f32 = float(jnp.max(jnp.abs(out - ref_full)))          # vs exact f32 module
    assert err_matched < 2e-3, ("matched-ref error", err_matched)
    assert err_f32 < 5e-2, ("f32-ref error", err_f32)

    print("KERNEL_OK")
</pallas_src>

<mosaic_0001>
module attributes {stable_mosaic.version = 11 : i64} {
  func.func @transformer_layer_kernel(%arg0: i32, %arg1: memref<4x16x32xf32, #tpu.memory_space<vmem>>, %arg2: memref<4x16x16xbf16, #tpu.memory_space<vmem>>, %arg3: memref<1x32xf32, #tpu.memory_space<vmem>>, %arg4: memref<1x32xf32, #tpu.memory_space<vmem>>, %arg5: memref<32x96xbf16, #tpu.memory_space<vmem>>, %arg6: memref<32x32xbf16, #tpu.memory_space<vmem>>, %arg7: memref<1x32xf32, #tpu.memory_space<vmem>>, %arg8: memref<1x32xf32, #tpu.memory_space<vmem>>, %arg9: memref<1x32xf32, #tpu.memory_space<vmem>>, %arg10: memref<32x128xbf16, #tpu.memory_space<vmem>>, %arg11: memref<1x128xf32, #tpu.memory_space<vmem>>, %arg12: memref<128x32xbf16, #tpu.memory_space<vmem>>, %arg13: memref<1x32xf32, #tpu.memory_space<vmem>>, %arg14: memref<4x16x32xf32, #tpu.memory_space<vmem>>, %arg15: memref<64x32xbf16, #tpu.memory_space<vmem>>) attributes {dimension_semantics = [#tpu.dimension_semantics<parallel>], iteration_bounds = array<i64: 1>, scalar_prefetch = 0 : i64, scratch_operands = 1 : i64, tpu.core_type = #tpu.core_type<tc>, window_params = [{transform_indices = @transform_0, window_bounds = array<i64: 4, 16, 32>}, {pipeline_mode = #tpu.pipeline_mode<synchronous>, transform_indices = @transform_1, window_bounds = array<i64: 4, 16, 16>}, {pipeline_mode = #tpu.pipeline_mode<synchronous>, transform_indices = @transform_2, window_bounds = array<i64: 1, 32>}, {pipeline_mode = #tpu.pipeline_mode<synchronous>, transform_indices = @transform_3, window_bounds = array<i64: 1, 32>}, {pipeline_mode = #tpu.pipeline_mode<synchronous>, transform_indices = @transform_4, window_bounds = array<i64: 32, 96>}, {pipeline_mode = #tpu.pipeline_mode<synchronous>, transform_indices = @transform_5, window_bounds = array<i64: 32, 32>}, {pipeline_mode = #tpu.pipeline_mode<synchronous>, transform_indices = @transform_6, window_bounds = array<i64: 1, 32>}, {pipeline_mode = #tpu.pipeline_mode<synchronous>, transform_indices = @transform_7, window_bounds = array<i64: 1, 32>}, {pipeline_mode = #tpu.pipeline_mode<synchronous>, transform_indices = @transform_8, window_bounds = array<i64: 1, 32>}, {pipeline_mode = #tpu.pipeline_mode<synchronous>, transform_indices = @transform_9, window_bounds = array<i64: 32, 128>}, {pipeline_mode = #tpu.pipeline_mode<synchronous>, transform_indices = @transform_10, window_bounds = array<i64: 1, 128>}, {pipeline_mode = #tpu.pipeline_mode<synchronous>, transform_indices = @transform_11, window_bounds = array<i64: 128, 32>}, {pipeline_mode = #tpu.pipeline_mode<synchronous>, transform_indices = @transform_12, window_bounds = array<i64: 1, 32>}, {transform_indices = @transform_13, window_bounds = array<i64: 4, 16, 32>}]} {
    %c0 = arith.constant 0 : index
    %c0_0 = arith.constant 0 : index
    %c0_1 = arith.constant 0 : index
    %0 = vector.load %arg1[%c0, %c0_0, %c0_1] : memref<4x16x32xf32, #tpu.memory_space<vmem>>, vector<4x16x32xf32>
    %1 = vector.shape_cast %0 : vector<4x16x32xf32> to vector<64x32xf32>
    %cst = arith.constant dense<0.000000e+00> : vector<64xf32>
    %2 = vector.multi_reduction <add>, %1, %cst [1] : vector<64x32xf32> to vector<64xf32>
    %3 = vector.shape_cast %2 : vector<64xf32> to vector<64x1xf32>
    %cst_2 = arith.constant 3.200000e+01 : f32
    %4 = vector.broadcast %cst_2 : f32 to vector<64x1xf32>
    %5 = arith.divf %3, %4 : vector<64x1xf32>
    %6 = vector.broadcast %5 : vector<64x1xf32> to vector<64x32xf32>
    %7 = arith.subf %1, %6 : vector<64x32xf32>
    %8 = arith.mulf %7, %7 : vector<64x32xf32>
    %cst_3 = arith.constant dense<0.000000e+00> : vector<64xf32>
    %9 = vector.multi_reduction <add>, %8, %cst_3 [1] : vector<64x32xf32> to vector<64xf32>
    %10 = vector.shape_cast %9 : vector<64xf32> to vector<64x1xf32>
    %cst_4 = arith.constant 3.200000e+01 : f32
    %11 = vector.broadcast %cst_4 : f32 to vector<64x1xf32>
    %12 = arith.divf %10, %11 : vector<64x1xf32>
    %13 = vector.broadcast %5 : vector<64x1xf32> to vector<64x32xf32>
    %14 = arith.subf %1, %13 : vector<64x32xf32>
    %cst_5 = arith.constant 9.99999974E-6 : f32
    %15 = vector.broadcast %cst_5 : f32 to vector<64x1xf32>
    %16 = arith.addf %12, %15 : vector<64x1xf32>
    %17 = math.rsqrt %16 : vector<64x1xf32>
    %18 = vector.broadcast %17 : vector<64x1xf32> to vector<64x32xf32>
    %19 = arith.mulf %14, %18 : vector<64x32xf32>
    %c0_6 = arith.constant 0 : index
    %c0_7 = arith.constant 0 : index
    %20 = vector.load %arg3[%c0_6, %c0_7] : memref<1x32xf32, #tpu.memory_space<vmem>>, vector<1x32xf32>
    %21 = vector.shape_cast %20 : vector<1x32xf32> to vector<32xf32>
    %22 = vector.shape_cast %21 : vector<32xf32> to vector<1x32xf32>
    %23 = vector.broadcast %22 : vector<1x32xf32> to vector<64x32xf32>
    %24 = arith.mulf %19, %23 : vector<64x32xf32>
    %c0_8 = arith.constant 0 : index
    %c0_9 = arith.constant 0 : index
    %25 = vector.load %arg4[%c0_8, %c0_9] : memref<1x32xf32, #tpu.memory_space<vmem>>, vector<1x32xf32>
    %26 = vector.shape_cast %25 : vector<1x32xf32> to vector<32xf32>
    %27 = vector.shape_cast %26 : vector<32xf32> to vector<1x32xf32>
    %28 = vector.broadcast %27 : vector<1x32xf32> to vector<64x32xf32>
    %29 = arith.addf %24, %28 : vector<64x32xf32>
    %30 = arith.truncf %29 : vector<64x32xf32> to vector<64x32xbf16>
    %c0_10 = arith.constant 0 : index
    %c0_11 = arith.constant 0 : index
    %31 = vector.load %arg5[%c0_10, %c0_11] : memref<32x96xbf16, #tpu.memory_space<vmem>>, vector<32x96xbf16>
    %cst_12 = arith.constant dense<0.000000e+00> : vector<64x96xf32>
    %32 = tpu.matmul %30, %31, %cst_12 {dimension_numbers = #tpu.dot_dimension_numbers<[1], [0], [0], [1], [0, 0, 1, 1], [], []>} : vector<64x32xbf16>, vector<32x96xbf16>, vector<64x96xf32> -> vector<64x96xf32>
    %33 = vector.extract_strided_slice %32 {offsets = [0, 0], sizes = [64, 8], strides = [1, 1]} : vector<64x96xf32> to vector<64x8xf32>
    %34 = vector.shape_cast %33 : vector<64x8xf32> to vector<4x16x8xf32>
    %35 = vector.extract_strided_slice %32 {offsets = [0, 32], sizes = [64, 8], strides = [1, 1]} : vector<64x96xf32> to vector<64x8xf32>
    %36 = vector.shape_cast %35 : vector<64x8xf32> to vector<4x16x8xf32>
    %37 = vector.extract_strided_slice %32 {offsets = [0, 64], sizes = [64, 8], strides = [1, 1]} : vector<64x96xf32> to vector<64x8xf32>
    %38 = vector.shape_cast %37 : vector<64x8xf32> to vector<4x16x8xf32>
    %39 = arith.truncf %34 : vector<4x16x8xf32> to vector<4x16x8xbf16>
    %40 = arith.truncf %36 : vector<4x16x8xf32> to vector<4x16x8xbf16>
    "tpu.trace_start"() <{level = 10 : i32, message = "tnd,tmd->tnm"}> : () -> ()
    %cst_13 = arith.constant dense<0.000000e+00> : vector<4x16x16xf32>
    %41 = tpu.matmul %39, %40, %cst_13 {dimension_numbers = #tpu.dot_dimension_numbers<[2], [2], [1], [1], [0, 0, 0, 1, 1, 1], [0], [0]>} : vector<4x16x8xbf16>, vector<4x16x8xbf16>, vector<4x16x16xf32> -> vector<4x16x16xf32>
    "tpu.trace_stop"() : () -> ()
    %c0_14 = arith.constant 0 : index
    %c0_15 = arith.constant 0 : index
    %c0_16 = arith.constant 0 : index
    %42 = vector.load %arg2[%c0_14, %c0_15, %c0_16] : memref<4x16x16xbf16, #tpu.memory_space<vmem>>, vector<1x16x16xbf16>
    %43 = vector.shape_cast %42 : vector<1x16x16xbf16> to vector<16x16xbf16>
    %44 = arith.extf %43 : vector<16x16xbf16> to vector<16x16xf32>
    %45 = vector.shape_cast %44 : vector<16x16xf32> to vector<1x16x16xf32>
    %46 = vector.broadcast %45 : vector<1x16x16xf32> to vector<4x16x16xf32>
    %47 = arith.addf %41, %46 : vector<4x16x16xf32>
    %cst_17 = arith.constant dense<0xFF800000> : vector<4x16xf32>
    %48 = vector.multi_reduction <maximumf>, %47, %cst_17 [2] : vector<4x16x16xf32> to vector<4x16xf32>
    %49 = vector.shape_cast %48 : vector<4x16xf32> to vector<4x16x1xf32>
    %50 = vector.broadcast %49 : vector<4x16x1xf32> to vector<4x16x16xf32>
    %51 = arith.subf %47, %50 : vector<4x16x16xf32>
    %52 = math.exp %51 : vector<4x16x16xf32>
    %cst_18 = arith.constant dense<0.000000e+00> : vector<4x16xf32>
    %53 = vector.multi_reduction <add>, %52, %cst_18 [2] : vector<4x16x16xf32> to vector<4x16xf32>
    %54 = vector.shape_cast %53 : vector<4x16xf32> to vector<4x16x1xf32>
    %55 = tpu.reciprocal %54 {approx = true} : vector<4x16x1xf32> -> vector<4x16x1xf32>
    %56 = vector.broadcast %55 : vector<4x16x1xf32> to vector<4x16x16xf32>
    %57 = arith.mulf %52, %56 : vector<4x16x16xf32>
    %58 = arith.truncf %57 : vector<4x16x16xf32> to vector<4x16x16xbf16>
    %59 = arith.truncf %38 : vector<4x16x8xf32> to vector<4x16x8xbf16>
    "tpu.trace_start"() <{level = 10 : i32, message = "tnm,tmd->tnd"}> : () -> ()
    %cst_19 = arith.constant dense<0.000000e+00> : vector<4x16x8xf32>
    %60 = tpu.matmul %58, %59, %cst_19 {dimension_numbers = #tpu.dot_dimension_numbers<[2], [1], [1], [2], [0, 0, 0, 1, 1, 2], [0], [0]>} : vector<4x16x16xbf16>, vector<4x16x8xbf16>, vector<4x16x8xf32> -> vector<4x16x8xf32>
    "tpu.trace_stop"() : () -> ()
    %61 = vector.shape_cast %60 : vector<4x16x8xf32> to vector<64x8xf32>
    %62 = arith.truncf %61 : vector<64x8xf32> to vector<64x8xbf16>
    %c0_20 = arith.constant 0 : index
    %c0_21 = arith.constant 0 : index
    %63 = vector.load %arg15[%c0_20, %c0_21] : memref<64x32xbf16, #tpu.memory_space<vmem>>, vector<64x8xbf16>
    tpu.vector_store %arg15[%c0_20, %c0_21], %62 {strides = array<i32>} : memref<64x32xbf16, #tpu.memory_space<vmem>>, vector<64x8xbf16>,
    %64 = vector.extract_strided_slice %32 {offsets = [0, 8], sizes = [64, 8], strides = [1, 1]} : vector<64x96xf32> to vector<64x8xf32>
    %65 = vector.shape_cast %64 : vector<64x8xf32> to vector<4x16x8xf32>
    %66 = vector.extract_strided_slice %32 {offsets = [0, 40], sizes = [64, 8], strides = [1, 1]} : vector<64x96xf32> to vector<64x8xf32>
    %67 = vector.shape_cast %66 : vector<64x8xf32> to vector<4x16x8xf32>
    %68 = vector.extract_strided_slice %32 {offsets = [0, 72], sizes = [64, 8], strides = [1, 1]} : vector<64x96xf32> to vector<64x8xf32>
    %69 = vector.shape_cast %68 : vector<64x8xf32> to vector<4x16x8xf32>
    %70 = arith.truncf %65 : vector<4x16x8xf32> to vector<4x16x8xbf16>
    %71 = arith.truncf %67 : vector<4x16x8xf32> to vector<4x16x8xbf16>
    "tpu.trace_start"() <{level = 10 : i32, message = "tnd,tmd->tnm"}> : () -> ()
    %cst_22 = arith.constant dense<0.000000e+00> : vector<4x16x16xf32>
    %72 = tpu.matmul %70, %71, %cst_22 {dimension_numbers = #tpu.dot_dimension_numbers<[2], [2], [1], [1], [0, 0, 0, 1, 1, 1], [0], [0]>} : vector<4x16x8xbf16>, vector<4x16x8xbf16>, vector<4x16x16xf32> -> vector<4x16x16xf32>
    "tpu.trace_stop"() : () -> ()
    %c1 = arith.constant 1 : index
    %c0_23 = arith.constant 0 : index
    %c0_24 = arith.constant 0 : index
    %73 = vector.load %arg2[%c1, %c0_23, %c0_24] : memref<4x16x16xbf16, #tpu.memory_space<vmem>>, vector<1x16x16xbf16>
    %74 = vector.shape_cast %73 : vector<1x16x16xbf16> to vector<16x16xbf16>
    %75 = arith.extf %74 : vector<16x16xbf16> to vector<16x16xf32>
    %76 = vector.shape_cast %75 : vector<16x16xf32> to vector<1x16x16xf32>
    %77 = vector.broadcast %76 : vector<1x16x16xf32> to vector<4x16x16xf32>
    %78 = arith.addf %72, %77 : vector<4x16x16xf32>
    %cst_25 = arith.constant dense<0xFF800000> : vector<4x16xf32>
    %79 = vector.multi_reduction <maximumf>, %78, %cst_25 [2] : vector<4x16x16xf32> to vector<4x16xf32>
    %80 = vector.shape_cast %79 : vector<4x16xf32> to vector<4x16x1xf32>
    %81 = vector.broadcast %80 : vector<4x16x1xf32> to vector<4x16x16xf32>
    %82 = arith.subf %78, %81 : vector<4x16x16xf32>
    %83 = math.exp %82 : vector<4x16x16xf32>
    %cst_26 = arith.constant dense<0.000000e+00> : vector<4x16xf32>
    %84 = vector.multi_reduction <add>, %83, %cst_26 [2] : vector<4x16x16xf32> to vector<4x16xf32>
    %85 = vector.shape_cast %84 : vector<4x16xf32> to vector<4x16x1xf32>
    %86 = tpu.reciprocal %85 {approx = true} : vector<4x16x1xf32> -> vector<4x16x1xf32>
    %87 = vector.broadcast %86 : vector<4x16x1xf32> to vector<4x16x16xf32>
    %88 = arith.mulf %83, %87 : vector<4x16x16xf32>
    %89 = arith.truncf %88 : vector<4x16x16xf32> to vector<4x16x16xbf16>
    %90 = arith.truncf %69 : vector<4x16x8xf32> to vector<4x16x8xbf16>
    "tpu.trace_start"() <{level = 10 : i32, message = "tnm,tmd->tnd"}> : () -> ()
    %cst_27 = arith.constant dense<0.000000e+00> : vector<4x16x8xf32>
    %91 = tpu.matmul %89, %90, %cst_27 {dimension_numbers = #tpu.dot_dimension_numbers<[2], [1], [1], [2], [0, 0, 0, 1, 1, 2], [0], [0]>} : vector<4x16x16xbf16>, vector<4x16x8xbf16>, vector<4x16x8xf32> -> vector<4x16x8xf32>
    "tpu.trace_stop"() : () -> ()
    %92 = vector.shape_cast %91 : vector<4x16x8xf32> to vector<64x8xf32>
    %93 = arith.truncf %92 : vector<64x8xf32> to vector<64x8xbf16>
    %c0_28 = arith.constant 0 : index
    %c8 = arith.constant 8 : index
    %94 = vector.load %arg15[%c0_28, %c8] : memref<64x32xbf16, #tpu.memory_space<vmem>>, vector<64x8xbf16>
    tpu.vector_store %arg15[%c0_28, %c8], %93 {strides = array<i32>} : memref<64x32xbf16, #tpu.memory_space<vmem>>, vector<64x8xbf16>,
    %95 = vector.extract_strided_slice %32 {offsets = [0, 16], sizes = [64, 8], strides = [1, 1]} : vector<64x96xf32> to vector<64x8xf32>
    %96 = vector.shape_cast %95 : vector<64x8xf32> to vector<4x16x8xf32>
    %97 = vector.extract_strided_slice %32 {offsets = [0, 48], sizes = [64, 8], strides = [1, 1]} : vector<64x96xf32> to vector<64x8xf32>
    %98 = vector.shape_cast %97 : vector<64x8xf32> to vector<4x16x8xf32>
    %99 = vector.extract_strided_slice %32 {offsets = [0, 80], sizes = [64, 8], strides = [1, 1]} : vector<64x96xf32> to vector<64x8xf32>
    %100 = vector.shape_cast %99 : vector<64x8xf32> to vector<4x16x8xf32>
    %101 = arith.truncf %96 : vector<4x16x8xf32> to vector<4x16x8xbf16>
    %102 = arith.truncf %98 : vector<4x16x8xf32> to vector<4x16x8xbf16>
    "tpu.trace_start"() <{level = 10 : i32, message = "tnd,tmd->tnm"}> : () -> ()
    %cst_29 = arith.constant dense<0.000000e+00> : vector<4x16x16xf32>
    %103 = tpu.matmul %101, %102, %cst_29 {dimension_numbers = #tpu.dot_dimension_numbers<[2], [2], [1], [1], [0, 0, 0, 1, 1, 1], [0], [0]>} : vector<4x16x8xbf16>, vector<4x16x8xbf16>, vector<4x16x16xf32> -> vector<4x16x16xf32>
    "tpu.trace_stop"() : () -> ()
    %c2 = arith.constant 2 : index
    %c0_30 = arith.constant 0 : index
    %c0_31 = arith.constant 0 : index
    %104 = vector.load %arg2[%c2, %c0_30, %c0_31] : memref<4x16x16xbf16, #tpu.memory_space<vmem>>, vector<1x16x16xbf16>
    %105 = vector.shape_cast %104 : vector<1x16x16xbf16> to vector<16x16xbf16>
    %106 = arith.extf %105 : vector<16x16xbf16> to vector<16x16xf32>
    %107 = vector.shape_cast %106 : vector<16x16xf32> to vector<1x16x16xf32>
    %108 = vector.broadcast %107 : vector<1x16x16xf32> to vector<4x16x16xf32>
    %109 = arith.addf %103, %108 : vector<4x16x16xf32>
    %cst_32 = arith.constant dense<0xFF800000> : vector<4x16xf32>
    %110 = vector.multi_reduction <maximumf>, %109, %cst_32 [2] : vector<4x16x16xf32> to vector<4x16xf32>
    %111 = vector.shape_cast %110 : vector<4x16xf32> to vector<4x16x1xf32>
    %112 = vector.broadcast %111 : vector<4x16x1xf32> to vector<4x16x16xf32>
    %113 = arith.subf %109, %112 : vector<4x16x16xf32>
    %114 = math.exp %113 : vector<4x16x16xf32>
    %cst_33 = arith.constant dense<0.000000e+00> : vector<4x16xf32>
    %115 = vector.multi_reduction <add>, %114, %cst_33 [2] : vector<4x16x16xf32> to vector<4x16xf32>
    %116 = vector.shape_cast %115 : vector<4x16xf32> to vector<4x16x1xf32>
    %117 = tpu.reciprocal %116 {approx = true} : vector<4x16x1xf32> -> vector<4x16x1xf32>
    %118 = vector.broadcast %117 : vector<4x16x1xf32> to vector<4x16x16xf32>
    %119 = arith.mulf %114, %118 : vector<4x16x16xf32>
    %120 = arith.truncf %119 : vector<4x16x16xf32> to vector<4x16x16xbf16>
    %121 = arith.truncf %100 : vector<4x16x8xf32> to vector<4x16x8xbf16>
    "tpu.trace_start"() <{level = 10 : i32, message = "tnm,tmd->tnd"}> : () -> ()
    %cst_34 = arith.constant dense<0.000000e+00> : vector<4x16x8xf32>
    %122 = tpu.matmul %120, %121, %cst_34 {dimension_numbers = #tpu.dot_dimension_numbers<[2], [1], [1], [2], [0, 0, 0, 1, 1, 2], [0], [0]>} : vector<4x16x16xbf16>, vector<4x16x8xbf16>, vector<4x16x8xf32> -> vector<4x16x8xf32>
    "tpu.trace_stop"() : () -> ()
    %123 = vector.shape_cast %122 : vector<4x16x8xf32> to vector<64x8xf32>
    %124 = arith.truncf %123 : vector<64x8xf32> to vector<64x8xbf16>
    %c0_35 = arith.constant 0 : index
    %c16 = arith.constant 16 : index
    %125 = vector.load %arg15[%c0_35, %c16] : memref<64x32xbf16, #tpu.memory_space<vmem>>, vector<64x8xbf16>
    tpu.vector_store %arg15[%c0_35, %c16], %124 {strides = array<i32>} : memref<64x32xbf16, #tpu.memory_space<vmem>>, vector<64x8xbf16>,
    %126 = vector.extract_strided_slice %32 {offsets = [0, 24], sizes = [64, 8], strides = [1, 1]} : vector<64x96xf32> to vector<64x8xf32>
    %127 = vector.shape_cast %126 : vector<64x8xf32> to vector<4x16x8xf32>
    %128 = vector.extract_strided_slice %32 {offsets = [0, 56], sizes = [64, 8], strides = [1, 1]} : vector<64x96xf32> to vector<64x8xf32>
    %129 = vector.shape_cast %128 : vector<64x8xf32> to vector<4x16x8xf32>
    %130 = vector.extract_strided_slice %32 {offsets = [0, 88], sizes = [64, 8], strides = [1, 1]} : vector<64x96xf32> to vector<64x8xf32>
    %131 = vector.shape_cast %130 : vector<64x8xf32> to vector<4x16x8xf32>
    %132 = arith.truncf %127 : vector<4x16x8xf32> to vector<4x16x8xbf16>
    %133 = arith.truncf %129 : vector<4x16x8xf32> to vector<4x16x8xbf16>
    "tpu.trace_start"() <{level = 10 : i32, message = "tnd,tmd->tnm"}> : () -> ()
    %cst_36 = arith.constant dense<0.000000e+00> : vector<4x16x16xf32>
    %134 = tpu.matmul %132, %133, %cst_36 {dimension_numbers = #tpu.dot_dimension_numbers<[2], [2], [1], [1], [0, 0, 0, 1, 1, 1], [0], [0]>} : vector<4x16x8xbf16>, vector<4x16x8xbf16>, vector<4x16x16xf32> -> vector<4x16x16xf32>
    "tpu.trace_stop"() : () -> ()
    %c3 = arith.constant 3 : index
    %c0_37 = arith.constant 0 : index
    %c0_38 = arith.constant 0 : index
    %135 = vector.load %arg2[%c3, %c0_37, %c0_38] : memref<4x16x16xbf16, #tpu.memory_space<vmem>>, vector<1x16x16xbf16>
    %136 = vector.shape_cast %135 : vector<1x16x16xbf16> to vector<16x16xbf16>
    %137 = arith.extf %136 : vector<16x16xbf16> to vector<16x16xf32>
    %138 = vector.shape_cast %137 : vector<16x16xf32> to vector<1x16x16xf32>
    %139 = vector.broadcast %138 : vector<1x16x16xf32> to vector<4x16x16xf32>
    %140 = arith.addf %134, %139 : vector<4x16x16xf32>
    %cst_39 = arith.constant dense<0xFF800000> : vector<4x16xf32>
    %141 = vector.multi_reduction <maximumf>, %140, %cst_39 [2] : vector<4x16x16xf32> to vector<4x16xf32>
    %142 = vector.shape_cast %141 : vector<4x16xf32> to vector<4x16x1xf32>
    %143 = vector.broadcast %142 : vector<4x16x1xf32> to vector<4x16x16xf32>
    %144 = arith.subf %140, %143 : vector<4x16x16xf32>
    %145 = math.exp %144 : vector<4x16x16xf32>
    %cst_40 = arith.constant dense<0.000000e+00> : vector<4x16xf32>
    %146 = vector.multi_reduction <add>, %145, %cst_40 [2] : vector<4x16x16xf32> to vector<4x16xf32>
    %147 = vector.shape_cast %146 : vector<4x16xf32> to vector<4x16x1xf32>
    %148 = tpu.reciprocal %147 {approx = true} : vector<4x16x1xf32> -> vector<4x16x1xf32>
    %149 = vector.broadcast %148 : vector<4x16x1xf32> to vector<4x16x16xf32>
    %150 = arith.mulf %145, %149 : vector<4x16x16xf32>
    %151 = arith.truncf %150 : vector<4x16x16xf32> to vector<4x16x16xbf16>
    %152 = arith.truncf %131 : vector<4x16x8xf32> to vector<4x16x8xbf16>
    "tpu.trace_start"() <{level = 10 : i32, message = "tnm,tmd->tnd"}> : () -> ()
    %cst_41 = arith.constant dense<0.000000e+00> : vector<4x16x8xf32>
    %153 = tpu.matmul %151, %152, %cst_41 {dimension_numbers = #tpu.dot_dimension_numbers<[2], [1], [1], [2], [0, 0, 0, 1, 1, 2], [0], [0]>} : vector<4x16x16xbf16>, vector<4x16x8xbf16>, vector<4x16x8xf32> -> vector<4x16x8xf32>
    "tpu.trace_stop"() : () -> ()
    %154 = vector.shape_cast %153 : vector<4x16x8xf32> to vector<64x8xf32>
    %155 = arith.truncf %154 : vector<64x8xf32> to vector<64x8xbf16>
    %c0_42 = arith.constant 0 : index
    %c24 = arith.constant 24 : index
    %156 = vector.load %arg15[%c0_42, %c24] : memref<64x32xbf16, #tpu.memory_space<vmem>>, vector<64x8xbf16>
    tpu.vector_store %arg15[%c0_42, %c24], %155 {strides = array<i32>} : memref<64x32xbf16, #tpu.memory_space<vmem>>, vector<64x8xbf16>,
    %c0_43 = arith.constant 0 : index
    %c0_44 = arith.constant 0 : index
    %157 = vector.load %arg15[%c0_43, %c0_44] : memref<64x32xbf16, #tpu.memory_space<vmem>>, vector<64x32xbf16>
    %c0_45 = arith.constant 0 : index
    %c0_46 = arith.constant 0 : index
    %158 = vector.load %arg6[%c0_45, %c0_46] : memref<32x32xbf16, #tpu.memory_space<vmem>>, vector<32x32xbf16>
    %cst_47 = arith.constant dense<0.000000e+00> : vector<64x32xf32>
    %159 = tpu.matmul %157, %158, %cst_47 {dimension_numbers = #tpu.dot_dimension_numbers<[1], [0], [0], [1], [0, 0, 1, 1], [], []>} : vector<64x32xbf16>, vector<32x32xbf16>, vector<64x32xf32> -> vector<64x32xf32>
    %160 = arith.addf %1, %159 : vector<64x32xf32>
    %c0_48 = arith.constant 0 : index
    %c0_49 = arith.constant 0 : index
    %161 = vector.load %arg7[%c0_48, %c0_49] : memref<1x32xf32, #tpu.memory_space<vmem>>, vector<1x32xf32>
    %162 = vector.shape_cast %161 : vector<1x32xf32> to vector<32xf32>
    %163 = vector.shape_cast %162 : vector<32xf32> to vector<1x32xf32>
    %164 = vector.broadcast %163 : vector<1x32xf32> to vector<64x32xf32>
    %165 = arith.addf %160, %164 : vector<64x32xf32>
    %cst_50 = arith.constant dense<0.000000e+00> : vector<64xf32>
    %166 = vector.multi_reduction <add>, %165, %cst_50 [1] : vector<64x32xf32> to vector<64xf32>
    %167 = vector.shape_cast %166 : vector<64xf32> to vector<64x1xf32>
    %cst_51 = arith.constant 3.200000e+01 : f32
    %168 = vector.broadcast %cst_51 : f32 to vector<64x1xf32>
    %169 = arith.divf %167, %168 : vector<64x1xf32>
    %170 = vector.broadcast %169 : vector<64x1xf32> to vector<64x32xf32>
    %171 = arith.subf %165, %170 : vector<64x32xf32>
    %172 = arith.mulf %171, %171 : vector<64x32xf32>
    %cst_52 = arith.constant dense<0.000000e+00> : vector<64xf32>
    %173 = vector.multi_reduction <add>, %172, %cst_52 [1] : vector<64x32xf32> to vector<64xf32>
    %174 = vector.shape_cast %173 : vector<64xf32> to vector<64x1xf32>
    %cst_53 = arith.constant 3.200000e+01 : f32
    %175 = vector.broadcast %cst_53 : f32 to vector<64x1xf32>
    %176 = arith.divf %174, %175 : vector<64x1xf32>
    %177 = vector.broadcast %169 : vector<64x1xf32> to vector<64x32xf32>
    %178 = arith.subf %165, %177 : vector<64x32xf32>
    %cst_54 = arith.constant 9.99999974E-6 : f32
    %179 = vector.broadcast %cst_54 : f32 to vector<64x1xf32>
    %180 = arith.addf %176, %179 : vector<64x1xf32>
    %181 = math.rsqrt %180 : vector<64x1xf32>
    %182 = vector.broadcast %181 : vector<64x1xf32> to vector<64x32xf32>
    %183 = arith.mulf %178, %182 : vector<64x32xf32>
    %c0_55 = arith.constant 0 : index
    %c0_56 = arith.constant 0 : index
    %184 = vector.load %arg8[%c0_55, %c0_56] : memref<1x32xf32, #tpu.memory_space<vmem>>, vector<1x32xf32>
    %185 = vector.shape_cast %184 : vector<1x32xf32> to vector<32xf32>
    %186 = vector.shape_cast %185 : vector<32xf32> to vector<1x32xf32>
    %187 = vector.broadcast %186 : vector<1x32xf32> to vector<64x32xf32>
    %188 = arith.mulf %183, %187 : vector<64x32xf32>
    %c0_57 = arith.constant 0 : index
    %c0_58 = arith.constant 0 : index
    %189 = vector.load %arg9[%c0_57, %c0_58] : memref<1x32xf32, #tpu.memory_space<vmem>>, vector<1x32xf32>
    %190 = vector.shape_cast %189 : vector<1x32xf32> to vector<32xf32>
    %191 = vector.shape_cast %190 : vector<32xf32> to vector<1x32xf32>
    %192 = vector.broadcast %191 : vector<1x32xf32> to vector<64x32xf32>
    %193 = arith.addf %188, %192 : vector<64x32xf32>
    %194 = arith.truncf %193 : vector<64x32xf32> to vector<64x32xbf16>
    %c0_59 = arith.constant 0 : index
    %c0_60 = arith.constant 0 : index
    %195 = vector.load %arg10[%c0_59, %c0_60] : memref<32x128xbf16, #tpu.memory_space<vmem>>, vector<32x128xbf16>
    %cst_61 = arith.constant dense<0.000000e+00> : vector<64x128xf32>
    %196 = tpu.matmul %194, %195, %cst_61 {dimension_numbers = #tpu.dot_dimension_numbers<[1], [0], [0], [1], [0, 0, 1, 1], [], []>} : vector<64x32xbf16>, vector<32x128xbf16>, vector<64x128xf32> -> vector<64x128xf32>
    %c0_62 = arith.constant 0 : index
    %c0_63 = arith.constant 0 : index
    %197 = vector.load %arg11[%c0_62, %c0_63] : memref<1x128xf32, #tpu.memory_space<vmem>>, vector<1x128xf32>
    %198 = vector.shape_cast %197 : vector<1x128xf32> to vector<128xf32>
    %199 = vector.shape_cast %198 : vector<128xf32> to vector<1x128xf32>
    %200 = vector.broadcast %199 : vector<1x128xf32> to vector<64x128xf32>
    %201 = arith.addf %196, %200 : vector<64x128xf32>
    %cst_64 = arith.constant 5.000000e-01 : f32
    %202 = vector.broadcast %cst_64 : f32 to vector<64x128xf32>
    %203 = arith.mulf %202, %201 : vector<64x128xf32>
    %cst_65 = arith.constant 0.707106769 : f32
    %204 = vector.broadcast %cst_65 : f32 to vector<64x128xf32>
    %205 = arith.mulf %201, %204 : vector<64x128xf32>
    %206 = math.erf %205 : vector<64x128xf32>
    %cst_66 = arith.constant 1.000000e+00 : f32
    %207 = vector.broadcast %cst_66 : f32 to vector<64x128xf32>
    %208 = arith.addf %207, %206 : vector<64x128xf32>
    %209 = arith.mulf %203, %208 : vector<64x128xf32>
    %210 = arith.truncf %209 : vector<64x128xf32> to vector<64x128xbf16>
    %c0_67 = arith.constant 0 : index
    %c0_68 = arith.constant 0 : index
    %211 = vector.load %arg12[%c0_67, %c0_68] : memref<128x32xbf16, #tpu.memory_space<vmem>>, vector<128x32xbf16>
    %cst_69 = arith.constant dense<0.000000e+00> : vector<64x32xf32>
    %212 = tpu.matmul %210, %211, %cst_69 {dimension_numbers = #tpu.dot_dimension_numbers<[1], [0], [0], [1], [0, 0, 1, 1], [], []>} : vector<64x128xbf16>, vector<128x32xbf16>, vector<64x32xf32> -> vector<64x32xf32>
    %c0_70 = arith.constant 0 : index
    %c0_71 = arith.constant 0 : index
    %213 = vector.load %arg13[%c0_70, %c0_71] : memref<1x32xf32, #tpu.memory_space<vmem>>, vector<1x32xf32>
    %214 = vector.shape_cast %213 : vector<1x32xf32> to vector<32xf32>
    %215 = vector.shape_cast %214 : vector<32xf32> to vector<1x32xf32>
    %216 = vector.broadcast %215 : vector<1x32xf32> to vector<64x32xf32>
    %217 = arith.addf %212, %216 : vector<64x32xf32>
    %218 = arith.addf %165, %217 : vector<64x32xf32>
    %219 = vector.shape_cast %218 : vector<64x32xf32> to vector<4x16x32xf32>
    %c0_72 = arith.constant 0 : index
    %c0_73 = arith.constant 0 : index
    %c0_74 = arith.constant 0 : index
    %220 = vector.load %arg14[%c0_72, %c0_73, %c0_74] : memref<4x16x32xf32, #tpu.memory_space<vmem>>, vector<4x16x32xf32>
    tpu.vector_store %arg14[%c0_72, %c0_73, %c0_74], %219 {strides = array<i32>} : memref<4x16x32xf32, #tpu.memory_space<vmem>>, vector<4x16x32xf32>,
    return
  }
  func.func @transform_0(%arg0: i32) -> (i32, i32, i32) {
    %c0_i32 = arith.constant 0 : i32
    %c0_i32_0 = arith.constant 0 : i32
    %c0_i32_1 = arith.constant 0 : i32
    return %arg0, %c0_i32, %c0_i32_0 : i32, i32, i32
  }
  func.func @transform_1(%arg0: i32) -> (i32, i32, i32) {
    %c0_i32 = arith.constant 0 : i32
    %c0_i32_0 = arith.constant 0 : i32
    %c0_i32_1 = arith.constant 0 : i32
    %c0_i32_2 = arith.constant 0 : i32
    return %c0_i32, %c0_i32_0, %c0_i32_1 : i32, i32, i32
  }
  func.func @transform_2(%arg0: i32) -> (i32, i32) {
    %c0_i32 = arith.constant 0 : i32
    %c0_i32_0 = arith.constant 0 : i32
    %c0_i32_1 = arith.constant 0 : i32
    return %c0_i32, %c0_i32_0 : i32, i32
  }
  func.func @transform_3(%arg0: i32) -> (i32, i32) {
    %c0_i32 = arith.constant 0 : i32
    %c0_i32_0 = arith.constant 0 : i32
    %c0_i32_1 = arith.constant 0 : i32
    return %c0_i32, %c0_i32_0 : i32, i32
  }
  func.func @transform_4(%arg0: i32) -> (i32, i32) {
    %c0_i32 = arith.constant 0 : i32
    %c0_i32_0 = arith.constant 0 : i32
    %c0_i32_1 = arith.constant 0 : i32
    return %c0_i32, %c0_i32_0 : i32, i32
  }
  func.func @transform_5(%arg0: i32) -> (i32, i32) {
    %c0_i32 = arith.constant 0 : i32
    %c0_i32_0 = arith.constant 0 : i32
    %c0_i32_1 = arith.constant 0 : i32
    return %c0_i32, %c0_i32_0 : i32, i32
  }
  func.func @transform_6(%arg0: i32) -> (i32, i32) {
    %c0_i32 = arith.constant 0 : i32
    %c0_i32_0 = arith.constant 0 : i32
    %c0_i32_1 = arith.constant 0 : i32
    return %c0_i32, %c0_i32_0 : i32, i32
  }
  func.func @transform_7(%arg0: i32) -> (i32, i32) {
    %c0_i32 = arith.constant 0 : i32
    %c0_i32_0 = arith.constant 0 : i32
    %c0_i32_1 = arith.constant 0 : i32
    return %c0_i32, %c0_i32_0 : i32, i32
  }
  func.func @transform_8(%arg0: i32) -> (i32, i32) {
    %c0_i32 = arith.constant 0 : i32
    %c0_i32_0 = arith.constant 0 : i32
    %c0_i32_1 = arith.constant 0 : i32
    return %c0_i32, %c0_i32_0 : i32, i32
  }
  func.func @transform_9(%arg0: i32) -> (i32, i32) {
    %c0_i32 = arith.constant 0 : i32
    %c0_i32_0 = arith.constant 0 : i32
    %c0_i32_1 = arith.constant 0 : i32
    return %c0_i32, %c0_i32_0 : i32, i32
  }
  func.func @transform_10(%arg0: i32) -> (i32, i32) {
    %c0_i32 = arith.constant 0 : i32
    %c0_i32_0 = arith.constant 0 : i32
    %c0_i32_1 = arith.constant 0 : i32
    return %c0_i32, %c0_i32_0 : i32, i32
  }
  func.func @transform_11(%arg0: i32) -> (i32, i32) {
    %c0_i32 = arith.constant 0 : i32
    %c0_i32_0 = arith.constant 0 : i32
    %c0_i32_1 = arith.constant 0 : i32
    return %c0_i32, %c0_i32_0 : i32, i32
  }
  func.func @transform_12(%arg0: i32) -> (i32, i32) {
    %c0_i32 = arith.constant 0 : i32
    %c0_i32_0 = arith.constant 0 : i32
    %c0_i32_1 = arith.constant 0 : i32
    return %c0_i32, %c0_i32_0 : i32, i32
  }
  func.func @transform_13(%arg0: i32) -> (i32, i32, i32) {
    %c0_i32 = arith.constant 0 : i32
    %c0_i32_0 = arith.constant 0 : i32
    %c0_i32_1 = arith.constant 0 : i32
    return %arg0, %c0_i32, %c0_i32_0 : i32, i32, i32
  }
}

module attributes {stable_mosaic.version = 11 : i64} {
  func.func @transformer_layer_kernel(%arg0: i32, %arg1: memref<4x16x32xf32, #tpu.memory_space<vmem>>, %arg2: memref<4x16x16xbf16, #tpu.memory_space<vmem>>, %arg3: memref<1x32xf32, #tpu.memory_space<vmem>>, %arg4: memref<1x32xf32, #tpu.memory_space<vmem>>, %arg5: memref<32x96xbf16, #tpu.memory_space<vmem>>, %arg6: memref<32x32xbf16, #tpu.memory_space<vmem>>, %arg7: memref<1x32xf32, #tpu.memory_space<vmem>>, %arg8: memref<1x32xf32, #tpu.memory_space<vmem>>, %arg9: memref<1x32xf32, #tpu.memory_space<vmem>>, %arg10: memref<32x128xbf16, #tpu.memory_space<vmem>>, %arg11: memref<1x128xf32, #tpu.memory_space<vmem>>, %arg12: memref<128x32xbf16, #tpu.memory_space<vmem>>, %arg13: memref<1x32xf32, #tpu.memory_space<vmem>>, %arg14: memref<4x16x32xf32, #tpu.memory_space<vmem>>, %arg15: memref<64x32xbf16, #tpu.memory_space<vmem>>) attributes {dimension_semantics = [#tpu.dimension_semantics<parallel>], iteration_bounds = array<i64: 1>, scalar_prefetch = 0 : i64, scratch_operands = 1 : i64, tpu.core_type = #tpu.core_type<tc>, window_params = [{transform_indices = @transform_0, window_bounds = array<i64: 4, 16, 32>}, {pipeline_mode = #tpu.pipeline_mode<synchronous>, transform_indices = @transform_1, window_bounds = array<i64: 4, 16, 16>}, {pipeline_mode = #tpu.pipeline_mode<synchronous>, transform_indices = @transform_2, window_bounds = array<i64: 1, 32>}, {pipeline_mode = #tpu.pipeline_mode<synchronous>, transform_indices = @transform_3, window_bounds = array<i64: 1, 32>}, {pipeline_mode = #tpu.pipeline_mode<synchronous>, transform_indices = @transform_4, window_bounds = array<i64: 32, 96>}, {pipeline_mode = #tpu.pipeline_mode<synchronous>, transform_indices = @transform_5, window_bounds = array<i64: 32, 32>}, {pipeline_mode = #tpu.pipeline_mode<synchronous>, transform_indices = @transform_6, window_bounds = array<i64: 1, 32>}, {pipeline_mode = #tpu.pipeline_mode<synchronous>, transform_indices = @transform_7, window_bounds = array<i64: 1, 32>}, {pipeline_mode = #tpu.pipeline_mode<synchronous>, transform_indices = @transform_8, window_bounds = array<i64: 1, 32>}, {pipeline_mode = #tpu.pipeline_mode<synchronous>, transform_indices = @transform_9, window_bounds = array<i64: 32, 128>}, {pipeline_mode = #tpu.pipeline_mode<synchronous>, transform_indices = @transform_10, window_bounds = array<i64: 1, 128>}, {pipeline_mode = #tpu.pipeline_mode<synchronous>, transform_indices = @transform_11, window_bounds = array<i64: 128, 32>}, {pipeline_mode = #tpu.pipeline_mode<synchronous>, transform_indices = @transform_12, window_bounds = array<i64: 1, 32>}, {transform_indices = @transform_13, window_bounds = array<i64: 4, 16, 32>}]} {
    %c0 = arith.constant 0 : index
    %c0_0 = arith.constant 0 : index
    %c0_1 = arith.constant 0 : index
    %0 = vector.load %arg1[%c0, %c0_0, %c0_1] : memref<4x16x32xf32, #tpu.memory_space<vmem>>, vector<4x16x32xf32>
    %1 = vector.shape_cast %0 : vector<4x16x32xf32> to vector<64x32xf32>
    %cst = arith.constant dense<0.000000e+00> : vector<64xf32>
    %2 = vector.multi_reduction <add>, %1, %cst [1] : vector<64x32xf32> to vector<64xf32>
    %3 = vector.shape_cast %2 : vector<64xf32> to vector<64x1xf32>
    %cst_2 = arith.constant 3.200000e+01 : f32
    %4 = vector.broadcast %cst_2 : f32 to vector<64x1xf32>
    %5 = arith.divf %3, %4 : vector<64x1xf32>
    %6 = vector.broadcast %5 : vector<64x1xf32> to vector<64x32xf32>
    %7 = arith.subf %1, %6 : vector<64x32xf32>
    %8 = arith.mulf %7, %7 : vector<64x32xf32>
    %cst_3 = arith.constant dense<0.000000e+00> : vector<64xf32>
    %9 = vector.multi_reduction <add>, %8, %cst_3 [1] : vector<64x32xf32> to vector<64xf32>
    %10 = vector.shape_cast %9 : vector<64xf32> to vector<64x1xf32>
    %cst_4 = arith.constant 3.200000e+01 : f32
    %11 = vector.broadcast %cst_4 : f32 to vector<64x1xf32>
    %12 = arith.divf %10, %11 : vector<64x1xf32>
    %13 = vector.broadcast %5 : vector<64x1xf32> to vector<64x32xf32>
    %14 = arith.subf %1, %13 : vector<64x32xf32>
    %cst_5 = arith.constant 9.99999974E-6 : f32
    %15 = vector.broadcast %cst_5 : f32 to vector<64x1xf32>
    %16 = arith.addf %12, %15 : vector<64x1xf32>
    %17 = math.rsqrt %16 : vector<64x1xf32>
    %18 = vector.broadcast %17 : vector<64x1xf32> to vector<64x32xf32>
    %19 = arith.mulf %14, %18 : vector<64x32xf32>
    %c0_6 = arith.constant 0 : index
    %c0_7 = arith.constant 0 : index
    %20 = vector.load %arg3[%c0_6, %c0_7] : memref<1x32xf32, #tpu.memory_space<vmem>>, vector<1x32xf32>
    %21 = vector.shape_cast %20 : vector<1x32xf32> to vector<32xf32>
    %22 = vector.shape_cast %21 : vector<32xf32> to vector<1x32xf32>
    %23 = vector.broadcast %22 : vector<1x32xf32> to vector<64x32xf32>
    %24 = arith.mulf %19, %23 : vector<64x32xf32>
    %c0_8 = arith.constant 0 : index
    %c0_9 = arith.constant 0 : index
    %25 = vector.load %arg4[%c0_8, %c0_9] : memref<1x32xf32, #tpu.memory_space<vmem>>, vector<1x32xf32>
    %26 = vector.shape_cast %25 : vector<1x32xf32> to vector<32xf32>
    %27 = vector.shape_cast %26 : vector<32xf32> to vector<1x32xf32>
    %28 = vector.broadcast %27 : vector<1x32xf32> to vector<64x32xf32>
    %29 = arith.addf %24, %28 : vector<64x32xf32>
    %30 = arith.truncf %29 : vector<64x32xf32> to vector<64x32xbf16>
    %c0_10 = arith.constant 0 : index
    %c0_11 = arith.constant 0 : index
    %31 = vector.load %arg5[%c0_10, %c0_11] : memref<32x96xbf16, #tpu.memory_space<vmem>>, vector<32x96xbf16>
    %cst_12 = arith.constant dense<0.000000e+00> : vector<64x96xf32>
    %32 = tpu.matmul %30, %31, %cst_12 {dimension_numbers = #tpu.dot_dimension_numbers<[1], [0], [0], [1], [0, 0, 1, 1], [], []>} : vector<64x32xbf16>, vector<32x96xbf16>, vector<64x96xf32> -> vector<64x96xf32>
    %33 = vector.extract_strided_slice %32 {offsets = [0, 0], sizes = [64, 8], strides = [1, 1]} : vector<64x96xf32> to vector<64x8xf32>
    %34 = vector.shape_cast %33 : vector<64x8xf32> to vector<4x16x8xf32>
    %35 = vector.extract_strided_slice %32 {offsets = [0, 32], sizes = [64, 8], strides = [1, 1]} : vector<64x96xf32> to vector<64x8xf32>
    %36 = vector.shape_cast %35 : vector<64x8xf32> to vector<4x16x8xf32>
    %37 = vector.extract_strided_slice %32 {offsets = [0, 64], sizes = [64, 8], strides = [1, 1]} : vector<64x96xf32> to vector<64x8xf32>
    %38 = vector.shape_cast %37 : vector<64x8xf32> to vector<4x16x8xf32>
    %39 = arith.truncf %34 : vector<4x16x8xf32> to vector<4x16x8xbf16>
    %40 = arith.truncf %36 : vector<4x16x8xf32> to vector<4x16x8xbf16>
    "tpu.trace_start"() <{level = 10 : i32, message = "tnd,tmd->tnm"}> : () -> ()
    %cst_13 = arith.constant dense<0.000000e+00> : vector<4x16x16xf32>
    %41 = tpu.matmul %39, %40, %cst_13 {dimension_numbers = #tpu.dot_dimension_numbers<[2], [2], [1], [1], [0, 0, 0, 1, 1, 1], [0], [0]>} : vector<4x16x8xbf16>, vector<4x16x8xbf16>, vector<4x16x16xf32> -> vector<4x16x16xf32>
    "tpu.trace_stop"() : () -> ()
    %c0_14 = arith.constant 0 : index
    %c0_15 = arith.constant 0 : index
    %c0_16 = arith.constant 0 : index
    %42 = vector.load %arg2[%c0_14, %c0_15, %c0_16] : memref<4x16x16xbf16, #tpu.memory_space<vmem>>, vector<1x16x16xbf16>
    %43 = vector.shape_cast %42 : vector<1x16x16xbf16> to vector<16x16xbf16>
    %44 = arith.extf %43 : vector<16x16xbf16> to vector<16x16xf32>
    %45 = vector.shape_cast %44 : vector<16x16xf32> to vector<1x16x16xf32>
    %46 = vector.broadcast %45 : vector<1x16x16xf32> to vector<4x16x16xf32>
    %47 = arith.addf %41, %46 : vector<4x16x16xf32>
    %cst_17 = arith.constant dense<0xFF800000> : vector<4x16xf32>
    %48 = vector.multi_reduction <maximumf>, %47, %cst_17 [2] : vector<4x16x16xf32> to vector<4x16xf32>
    %49 = vector.shape_cast %48 : vector<4x16xf32> to vector<4x16x1xf32>
    %50 = vector.broadcast %49 : vector<4x16x1xf32> to vector<4x16x16xf32>
    %51 = arith.subf %47, %50 : vector<4x16x16xf32>
    %52 = math.exp %51 : vector<4x16x16xf32>
    %cst_18 = arith.constant dense<0.000000e+00> : vector<4x16xf32>
    %53 = vector.multi_reduction <add>, %52, %cst_18 [2] : vector<4x16x16xf32> to vector<4x16xf32>
    %54 = vector.shape_cast %53 : vector<4x16xf32> to vector<4x16x1xf32>
    %55 = tpu.reciprocal %54 {approx = true} : vector<4x16x1xf32> -> vector<4x16x1xf32>
    %56 = vector.broadcast %55 : vector<4x16x1xf32> to vector<4x16x16xf32>
    %57 = arith.mulf %52, %56 : vector<4x16x16xf32>
    %58 = arith.truncf %57 : vector<4x16x16xf32> to vector<4x16x16xbf16>
    %59 = arith.truncf %38 : vector<4x16x8xf32> to vector<4x16x8xbf16>
    "tpu.trace_start"() <{level = 10 : i32, message = "tnm,tmd->tnd"}> : () -> ()
    %cst_19 = arith.constant dense<0.000000e+00> : vector<4x16x8xf32>
    %60 = tpu.matmul %58, %59, %cst_19 {dimension_numbers = #tpu.dot_dimension_numbers<[2], [1], [1], [2], [0, 0, 0, 1, 1, 2], [0], [0]>} : vector<4x16x16xbf16>, vector<4x16x8xbf16>, vector<4x16x8xf32> -> vector<4x16x8xf32>
    "tpu.trace_stop"() : () -> ()
    %61 = vector.shape_cast %60 : vector<4x16x8xf32> to vector<64x8xf32>
    %62 = arith.truncf %61 : vector<64x8xf32> to vector<64x8xbf16>
    %c0_20 = arith.constant 0 : index
    %c0_21 = arith.constant 0 : index
    %63 = vector.load %arg15[%c0_20, %c0_21] : memref<64x32xbf16, #tpu.memory_space<vmem>>, vector<64x8xbf16>
    tpu.vector_store %arg15[%c0_20, %c0_21], %62 {strides = array<i32>} : memref<64x32xbf16, #tpu.memory_space<vmem>>, vector<64x8xbf16>,
    %64 = vector.extract_strided_slice %32 {offsets = [0, 8], sizes = [64, 8], strides = [1, 1]} : vector<64x96xf32> to vector<64x8xf32>
    %65 = vector.shape_cast %64 : vector<64x8xf32> to vector<4x16x8xf32>
    %66 = vector.extract_strided_slice %32 {offsets = [0, 40], sizes = [64, 8], strides = [1, 1]} : vector<64x96xf32> to vector<64x8xf32>
    %67 = vector.shape_cast %66 : vector<64x8xf32> to vector<4x16x8xf32>
    %68 = vector.extract_strided_slice %32 {offsets = [0, 72], sizes = [64, 8], strides = [1, 1]} : vector<64x96xf32> to vector<64x8xf32>
    %69 = vector.shape_cast %68 : vector<64x8xf32> to vector<4x16x8xf32>
    %70 = arith.truncf %65 : vector<4x16x8xf32> to vector<4x16x8xbf16>
    %71 = arith.truncf %67 : vector<4x16x8xf32> to vector<4x16x8xbf16>
    "tpu.trace_start"() <{level = 10 : i32, message = "tnd,tmd->tnm"}> : () -> ()
    %cst_22 = arith.constant dense<0.000000e+00> : vector<4x16x16xf32>
    %72 = tpu.matmul %70, %71, %cst_22 {dimension_numbers = #tpu.dot_dimension_numbers<[2], [2], [1], [1], [0, 0, 0, 1, 1, 1], [0], [0]>} : vector<4x16x8xbf16>, vector<4x16x8xbf16>, vector<4x16x16xf32> -> vector<4x16x16xf32>
    "tpu.trace_stop"() : () -> ()
    %c1 = arith.constant 1 : index
    %c0_23 = arith.constant 0 : index
    %c0_24 = arith.constant 0 : index
    %73 = vector.load %arg2[%c1, %c0_23, %c0_24] : memref<4x16x16xbf16, #tpu.memory_space<vmem>>, vector<1x16x16xbf16>
    %74 = vector.shape_cast %73 : vector<1x16x16xbf16> to vector<16x16xbf16>
    %75 = arith.extf %74 : vector<16x16xbf16> to vector<16x16xf32>
    %76 = vector.shape_cast %75 : vector<16x16xf32> to vector<1x16x16xf32>
    %77 = vector.broadcast %76 : vector<1x16x16xf32> to vector<4x16x16xf32>
    %78 = arith.addf %72, %77 : vector<4x16x16xf32>
    %cst_25 = arith.constant dense<0xFF800000> : vector<4x16xf32>
    %79 = vector.multi_reduction <maximumf>, %78, %cst_25 [2] : vector<4x16x16xf32> to vector<4x16xf32>
    %80 = vector.shape_cast %79 : vector<4x16xf32> to vector<4x16x1xf32>
    %81 = vector.broadcast %80 : vector<4x16x1xf32> to vector<4x16x16xf32>
    %82 = arith.subf %78, %81 : vector<4x16x16xf32>
    %83 = math.exp %82 : vector<4x16x16xf32>
    %cst_26 = arith.constant dense<0.000000e+00> : vector<4x16xf32>
    %84 = vector.multi_reduction <add>, %83, %cst_26 [2] : vector<4x16x16xf32> to vector<4x16xf32>
    %85 = vector.shape_cast %84 : vector<4x16xf32> to vector<4x16x1xf32>
    %86 = tpu.reciprocal %85 {approx = true} : vector<4x16x1xf32> -> vector<4x16x1xf32>
    %87 = vector.broadcast %86 : vector<4x16x1xf32> to vector<4x16x16xf32>
    %88 = arith.mulf %83, %87 : vector<4x16x16xf32>
    %89 = arith.truncf %88 : vector<4x16x16xf32> to vector<4x16x16xbf16>
    %90 = arith.truncf %69 : vector<4x16x8xf32> to vector<4x16x8xbf16>
    "tpu.trace_start"() <{level = 10 : i32, message = "tnm,tmd->tnd"}> : () -> ()
    %cst_27 = arith.constant dense<0.000000e+00> : vector<4x16x8xf32>
    %91 = tpu.matmul %89, %90, %cst_27 {dimension_numbers = #tpu.dot_dimension_numbers<[2], [1], [1], [2], [0, 0, 0, 1, 1, 2], [0], [0]>} : vector<4x16x16xbf16>, vector<4x16x8xbf16>, vector<4x16x8xf32> -> vector<4x16x8xf32>
    "tpu.trace_stop"() : () -> ()
    %92 = vector.shape_cast %91 : vector<4x16x8xf32> to vector<64x8xf32>
    %93 = arith.truncf %92 : vector<64x8xf32> to vector<64x8xbf16>
    %c0_28 = arith.constant 0 : index
    %c8 = arith.constant 8 : index
    %94 = vector.load %arg15[%c0_28, %c8] : memref<64x32xbf16, #tpu.memory_space<vmem>>, vector<64x8xbf16>
    tpu.vector_store %arg15[%c0_28, %c8], %93 {strides = array<i32>} : memref<64x32xbf16, #tpu.memory_space<vmem>>, vector<64x8xbf16>,
    %95 = vector.extract_strided_slice %32 {offsets = [0, 16], sizes = [64, 8], strides = [1, 1]} : vector<64x96xf32> to vector<64x8xf32>
    %96 = vector.shape_cast %95 : vector<64x8xf32> to vector<4x16x8xf32>
    %97 = vector.extract_strided_slice %32 {offsets = [0, 48], sizes = [64, 8], strides = [1, 1]} : vector<64x96xf32> to vector<64x8xf32>
    %98 = vector.shape_cast %97 : vector<64x8xf32> to vector<4x16x8xf32>
    %99 = vector.extract_strided_slice %32 {offsets = [0, 80], sizes = [64, 8], strides = [1, 1]} : vector<64x96xf32> to vector<64x8xf32>
    %100 = vector.shape_cast %99 : vector<64x8xf32> to vector<4x16x8xf32>
    %101 = arith.truncf %96 : vector<4x16x8xf32> to vector<4x16x8xbf16>
    %102 = arith.truncf %98 : vector<4x16x8xf32> to vector<4x16x8xbf16>
    "tpu.trace_start"() <{level = 10 : i32, message = "tnd,tmd->tnm"}> : () -> ()
    %cst_29 = arith.constant dense<0.000000e+00> : vector<4x16x16xf32>
    %103 = tpu.matmul %101, %102, %cst_29 {dimension_numbers = #tpu.dot_dimension_numbers<[2], [2], [1], [1], [0, 0, 0, 1, 1, 1], [0], [0]>} : vector<4x16x8xbf16>, vector<4x16x8xbf16>, vector<4x16x16xf32> -> vector<4x16x16xf32>
    "tpu.trace_stop"() : () -> ()
    %c2 = arith.constant 2 : index
    %c0_30 = arith.constant 0 : index
    %c0_31 = arith.constant 0 : index
    %104 = vector.load %arg2[%c2, %c0_30, %c0_31] : memref<4x16x16xbf16, #tpu.memory_space<vmem>>, vector<1x16x16xbf16>
    %105 = vector.shape_cast %104 : vector<1x16x16xbf16> to vector<16x16xbf16>
    %106 = arith.extf %105 : vector<16x16xbf16> to vector<16x16xf32>
    %107 = vector.shape_cast %106 : vector<16x16xf32> to vector<1x16x16xf32>
    %108 = vector.broadcast %107 : vector<1x16x16xf32> to vector<4x16x16xf32>
    %109 = arith.addf %103, %108 : vector<4x16x16xf32>
    %cst_32 = arith.constant dense<0xFF800000> : vector<4x16xf32>
    %110 = vector.multi_reduction <maximumf>, %109, %cst_32 [2] : vector<4x16x16xf32> to vector<4x16xf32>
    %111 = vector.shape_cast %110 : vector<4x16xf32> to vector<4x16x1xf32>
    %112 = vector.broadcast %111 : vector<4x16x1xf32> to vector<4x16x16xf32>
    %113 = arith.subf %109, %112 : vector<4x16x16xf32>
    %114 = math.exp %113 : vector<4x16x16xf32>
    %cst_33 = arith.constant dense<0.000000e+00> : vector<4x16xf32>
    %115 = vector.multi_reduction <add>, %114, %cst_33 [2] : vector<4x16x16xf32> to vector<4x16xf32>
    %116 = vector.shape_cast %115 : vector<4x16xf32> to vector<4x16x1xf32>
    %117 = tpu.reciprocal %116 {approx = true} : vector<4x16x1xf32> -> vector<4x16x1xf32>
    %118 = vector.broadcast %117 : vector<4x16x1xf32> to vector<4x16x16xf32>
    %119 = arith.mulf %114, %118 : vector<4x16x16xf32>
    %120 = arith.truncf %119 : vector<4x16x16xf32> to vector<4x16x16xbf16>
    %121 = arith.truncf %100 : vector<4x16x8xf32> to vector<4x16x8xbf16>
    "tpu.trace_start"() <{level = 10 : i32, message = "tnm,tmd->tnd"}> : () -> ()
    %cst_34 = arith.constant dense<0.000000e+00> : vector<4x16x8xf32>
    %122 = tpu.matmul %120, %121, %cst_34 {dimension_numbers = #tpu.dot_dimension_numbers<[2], [1], [1], [2], [0, 0, 0, 1, 1, 2], [0], [0]>} : vector<4x16x16xbf16>, vector<4x16x8xbf16>, vector<4x16x8xf32> -> vector<4x16x8xf32>
    "tpu.trace_stop"() : () -> ()
    %123 = vector.shape_cast %122 : vector<4x16x8xf32> to vector<64x8xf32>
    %124 = arith.truncf %123 : vector<64x8xf32> to vector<64x8xbf16>
    %c0_35 = arith.constant 0 : index
    %c16 = arith.constant 16 : index
    %125 = vector.load %arg15[%c0_35, %c16] : memref<64x32xbf16, #tpu.memory_space<vmem>>, vector<64x8xbf16>
    tpu.vector_store %arg15[%c0_35, %c16], %124 {strides = array<i32>} : memref<64x32xbf16, #tpu.memory_space<vmem>>, vector<64x8xbf16>,
    %126 = vector.extract_strided_slice %32 {offsets = [0, 24], sizes = [64, 8], strides = [1, 1]} : vector<64x96xf32> to vector<64x8xf32>
    %127 = vector.shape_cast %126 : vector<64x8xf32> to vector<4x16x8xf32>
    %128 = vector.extract_strided_slice %32 {offsets = [0, 56], sizes = [64, 8], strides = [1, 1]} : vector<64x96xf32> to vector<64x8xf32>
    %129 = vector.shape_cast %128 : vector<64x8xf32> to vector<4x16x8xf32>
    %130 = vector.extract_strided_slice %32 {offsets = [0, 88], sizes = [64, 8], strides = [1, 1]} : vector<64x96xf32> to vector<64x8xf32>
    %131 = vector.shape_cast %130 : vector<64x8xf32> to vector<4x16x8xf32>
    %132 = arith.truncf %127 : vector<4x16x8xf32> to vector<4x16x8xbf16>
    %133 = arith.truncf %129 : vector<4x16x8xf32> to vector<4x16x8xbf16>
    "tpu.trace_start"() <{level = 10 : i32, message = "tnd,tmd->tnm"}> : () -> ()
    %cst_36 = arith.constant dense<0.000000e+00> : vector<4x16x16xf32>
    %134 = tpu.matmul %132, %133, %cst_36 {dimension_numbers = #tpu.dot_dimension_numbers<[2], [2], [1], [1], [0, 0, 0, 1, 1, 1], [0], [0]>} : vector<4x16x8xbf16>, vector<4x16x8xbf16>, vector<4x16x16xf32> -> vector<4x16x16xf32>
    "tpu.trace_stop"() : () -> ()
    %c3 = arith.constant 3 : index
    %c0_37 = arith.constant 0 : index
    %c0_38 = arith.constant 0 : index
    %135 = vector.load %arg2[%c3, %c0_37, %c0_38] : memref<4x16x16xbf16, #tpu.memory_space<vmem>>, vector<1x16x16xbf16>
    %136 = vector.shape_cast %135 : vector<1x16x16xbf16> to vector<16x16xbf16>
    %137 = arith.extf %136 : vector<16x16xbf16> to vector<16x16xf32>
    %138 = vector.shape_cast %137 : vector<16x16xf32> to vector<1x16x16xf32>
    %139 = vector.broadcast %138 : vector<1x16x16xf32> to vector<4x16x16xf32>
    %140 = arith.addf %134, %139 : vector<4x16x16xf32>
    %cst_39 = arith.constant dense<0xFF800000> : vector<4x16xf32>
    %141 = vector.multi_reduction <maximumf>, %140, %cst_39 [2] : vector<4x16x16xf32> to vector<4x16xf32>
    %142 = vector.shape_cast %141 : vector<4x16xf32> to vector<4x16x1xf32>
    %143 = vector.broadcast %142 : vector<4x16x1xf32> to vector<4x16x16xf32>
    %144 = arith.subf %140, %143 : vector<4x16x16xf32>
    %145 = math.exp %144 : vector<4x16x16xf32>
    %cst_40 = arith.constant dense<0.000000e+00> : vector<4x16xf32>
    %146 = vector.multi_reduction <add>, %145, %cst_40 [2] : vector<4x16x16xf32> to vector<4x16xf32>
    %147 = vector.shape_cast %146 : vector<4x16xf32> to vector<4x16x1xf32>
    %148 = tpu.reciprocal %147 {approx = true} : vector<4x16x1xf32> -> vector<4x16x1xf32>
    %149 = vector.broadcast %148 : vector<4x16x1xf32> to vector<4x16x16xf32>
    %150 = arith.mulf %145, %149 : vector<4x16x16xf32>
    %151 = arith.truncf %150 : vector<4x16x16xf32> to vector<4x16x16xbf16>
    %152 = arith.truncf %131 : vector<4x16x8xf32> to vector<4x16x8xbf16>
    "tpu.trace_start"() <{level = 10 : i32, message = "tnm,tmd->tnd"}> : () -> ()
    %cst_41 = arith.constant dense<0.000000e+00> : vector<4x16x8xf32>
    %153 = tpu.matmul %151, %152, %cst_41 {dimension_numbers = #tpu.dot_dimension_numbers<[2], [1], [1], [2], [0, 0, 0, 1, 1, 2], [0], [0]>} : vector<4x16x16xbf16>, vector<4x16x8xbf16>, vector<4x16x8xf32> -> vector<4x16x8xf32>
    "tpu.trace_stop"() : () -> ()
    %154 = vector.shape_cast %153 : vector<4x16x8xf32> to vector<64x8xf32>
    %155 = arith.truncf %154 : vector<64x8xf32> to vector<64x8xbf16>
    %c0_42 = arith.constant 0 : index
    %c24 = arith.constant 24 : index
    %156 = vector.load %arg15[%c0_42, %c24] : memref<64x32xbf16, #tpu.memory_space<vmem>>, vector<64x8xbf16>
    tpu.vector_store %arg15[%c0_42, %c24], %155 {strides = array<i32>} : memref<64x32xbf16, #tpu.memory_space<vmem>>, vector<64x8xbf16>,
    %c0_43 = arith.constant 0 : index
    %c0_44 = arith.constant 0 : index
    %157 = vector.load %arg15[%c0_43, %c0_44] : memref<64x32xbf16, #tpu.memory_space<vmem>>, vector<64x32xbf16>
    %c0_45 = arith.constant 0 : index
    %c0_46 = arith.constant 0 : index
    %158 = vector.load %arg6[%c0_45, %c0_46] : memref<32x32xbf16, #tpu.memory_space<vmem>>, vector<32x32xbf16>
    %cst_47 = arith.constant dense<0.000000e+00> : vector<64x32xf32>
    %159 = tpu.matmul %157, %158, %cst_47 {dimension_numbers = #tpu.dot_dimension_numbers<[1], [0], [0], [1], [0, 0, 1, 1], [], []>} : vector<64x32xbf16>, vector<32x32xbf16>, vector<64x32xf32> -> vector<64x32xf32>
    %160 = arith.addf %1, %159 : vector<64x32xf32>
    %c0_48 = arith.constant 0 : index
    %c0_49 = arith.constant 0 : index
    %161 = vector.load %arg7[%c0_48, %c0_49] : memref<1x32xf32, #tpu.memory_space<vmem>>, vector<1x32xf32>
    %162 = vector.shape_cast %161 : vector<1x32xf32> to vector<32xf32>
    %163 = vector.shape_cast %162 : vector<32xf32> to vector<1x32xf32>
    %164 = vector.broadcast %163 : vector<1x32xf32> to vector<64x32xf32>
    %165 = arith.addf %160, %164 : vector<64x32xf32>
    %cst_50 = arith.constant dense<0.000000e+00> : vector<64xf32>
    %166 = vector.multi_reduction <add>, %165, %cst_50 [1] : vector<64x32xf32> to vector<64xf32>
    %167 = vector.shape_cast %166 : vector<64xf32> to vector<64x1xf32>
    %cst_51 = arith.constant 3.200000e+01 : f32
    %168 = vector.broadcast %cst_51 : f32 to vector<64x1xf32>
    %169 = arith.divf %167, %168 : vector<64x1xf32>
    %170 = vector.broadcast %169 : vector<64x1xf32> to vector<64x32xf32>
    %171 = arith.subf %165, %170 : vector<64x32xf32>
    %172 = arith.mulf %171, %171 : vector<64x32xf32>
    %cst_52 = arith.constant dense<0.000000e+00> : vector<64xf32>
    %173 = vector.multi_reduction <add>, %172, %cst_52 [1] : vector<64x32xf32> to vector<64xf32>
    %174 = vector.shape_cast %173 : vector<64xf32> to vector<64x1xf32>
    %cst_53 = arith.constant 3.200000e+01 : f32
    %175 = vector.broadcast %cst_53 : f32 to vector<64x1xf32>
    %176 = arith.divf %174, %175 : vector<64x1xf32>
    %177 = vector.broadcast %169 : vector<64x1xf32> to vector<64x32xf32>
    %178 = arith.subf %165, %177 : vector<64x32xf32>
    %cst_54 = arith.constant 9.99999974E-6 : f32
    %179 = vector.broadcast %cst_54 : f32 to vector<64x1xf32>
    %180 = arith.addf %176, %179 : vector<64x1xf32>
    %181 = math.rsqrt %180 : vector<64x1xf32>
    %182 = vector.broadcast %181 : vector<64x1xf32> to vector<64x32xf32>
    %183 = arith.mulf %178, %182 : vector<64x32xf32>
    %c0_55 = arith.constant 0 : index
    %c0_56 = arith.constant 0 : index
    %184 = vector.load %arg8[%c0_55, %c0_56] : memref<1x32xf32, #tpu.memory_space<vmem>>, vector<1x32xf32>
    %185 = vector.shape_cast %184 : vector<1x32xf32> to vector<32xf32>
    %186 = vector.shape_cast %185 : vector<32xf32> to vector<1x32xf32>
    %187 = vector.broadcast %186 : vector<1x32xf32> to vector<64x32xf32>
    %188 = arith.mulf %183, %187 : vector<64x32xf32>
    %c0_57 = arith.constant 0 : index
    %c0_58 = arith.constant 0 : index
    %189 = vector.load %arg9[%c0_57, %c0_58] : memref<1x32xf32, #tpu.memory_space<vmem>>, vector<1x32xf32>
    %190 = vector.shape_cast %189 : vector<1x32xf32> to vector<32xf32>
    %191 = vector.shape_cast %190 : vector<32xf32> to vector<1x32xf32>
    %192 = vector.broadcast %191 : vector<1x32xf32> to vector<64x32xf32>
    %193 = arith.addf %188, %192 : vector<64x32xf32>
    %194 = arith.truncf %193 : vector<64x32xf32> to vector<64x32xbf16>
    %c0_59 = arith.constant 0 : index
    %c0_60 = arith.constant 0 : index
    %195 = vector.load %arg10[%c0_59, %c0_60] : memref<32x128xbf16, #tpu.memory_space<vmem>>, vector<32x128xbf16>
    %cst_61 = arith.constant dense<0.000000e+00> : vector<64x128xf32>
    %196 = tpu.matmul %194, %195, %cst_61 {dimension_numbers = #tpu.dot_dimension_numbers<[1], [0], [0], [1], [0, 0, 1, 1], [], []>} : vector<64x32xbf16>, vector<32x128xbf16>, vector<64x128xf32> -> vector<64x128xf32>
    %c0_62 = arith.constant 0 : index
    %c0_63 = arith.constant 0 : index
    %197 = vector.load %arg11[%c0_62, %c0_63] : memref<1x128xf32, #tpu.memory_space<vmem>>, vector<1x128xf32>
    %198 = vector.shape_cast %197 : vector<1x128xf32> to vector<128xf32>
    %199 = vector.shape_cast %198 : vector<128xf32> to vector<1x128xf32>
    %200 = vector.broadcast %199 : vector<1x128xf32> to vector<64x128xf32>
    %201 = arith.addf %196, %200 : vector<64x128xf32>
    %cst_64 = arith.constant 5.000000e-01 : f32
    %202 = vector.broadcast %cst_64 : f32 to vector<64x128xf32>
    %203 = arith.mulf %202, %201 : vector<64x128xf32>
    %cst_65 = arith.constant 0.707106769 : f32
    %204 = vector.broadcast %cst_65 : f32 to vector<64x128xf32>
    %205 = arith.mulf %201, %204 : vector<64x128xf32>
    %206 = math.erf %205 : vector<64x128xf32>
    %cst_66 = arith.constant 1.000000e+00 : f32
    %207 = vector.broadcast %cst_66 : f32 to vector<64x128xf32>
    %208 = arith.addf %207, %206 : vector<64x128xf32>
    %209 = arith.mulf %203, %208 : vector<64x128xf32>
    %210 = arith.truncf %209 : vector<64x128xf32> to vector<64x128xbf16>
    %c0_67 = arith.constant 0 : index
    %c0_68 = arith.constant 0 : index
    %211 = vector.load %arg12[%c0_67, %c0_68] : memref<128x32xbf16, #tpu.memory_space<vmem>>, vector<128x32xbf16>
    %cst_69 = arith.constant dense<0.000000e+00> : vector<64x32xf32>
    %212 = tpu.matmul %210, %211, %cst_69 {dimension_numbers = #tpu.dot_dimension_numbers<[1], [0], [0], [1], [0, 0, 1, 1], [], []>} : vector<64x128xbf16>, vector<128x32xbf16>, vector<64x32xf32> -> vector<64x32xf32>
    %c0_70 = arith.constant 0 : index
    %c0_71 = arith.constant 0 : index
    %213 = vector.load %arg13[%c0_70, %c0_71] : memref<1x32xf32, #tpu.memory_space<vmem>>, vector<1x32xf32>
    %214 = vector.shape_cast %213 : vector<1x32xf32> to vector<32xf32>
    %215 = vector.shape_cast %214 : vector<32xf32> to vector<1x32xf32>
    %216 = vector.broadcast %215 : vector<1x32xf32> to vector<64x32xf32>
    %217 = arith.addf %212, %216 : vector<64x32xf32>
    %218 = arith.addf %165, %217 : vector<64x32xf32>
    %219 = vector.shape_cast %218 : vector<64x32xf32> to vector<4x16x32xf32>
    %c0_72 = arith.constant 0 : index
    %c0_73 = arith.constant 0 : index
    %c0_74 = arith.constant 0 : index
    %220 = vector.load %arg14[%c0_72, %c0_73, %c0_74] : memref<4x16x32xf32, #tpu.memory_space<vmem>>, vector<4x16x32xf32>
    tpu.vector_store %arg14[%c0_72, %c0_73, %c0_74], %219 {strides = array<i32>} : memref<4x16x32xf32, #tpu.memory_space<vmem>>, vector<4x16x32xf32>,
    return
  }
  func.func @transform_0(%arg0: i32) -> (i32, i32, i32) {
    %c0_i32 = arith.constant 0 : i32
    %c0_i32_0 = arith.constant 0 : i32
    %c0_i32_1 = arith.constant 0 : i32
    return %arg0, %c0_i32, %c0_i32_0 : i32, i32, i32
  }
  func.func @transform_1(%arg0: i32) -> (i32, i32, i32) {
    %c0_i32 = arith.constant 0 : i32
    %c0_i32_0 = arith.constant 0 : i32
    %c0_i32_1 = arith.constant 0 : i32
    %c0_i32_2 = arith.constant 0 : i32
    return %c0_i32, %c0_i32_0, %c0_i32_1 : i32, i32, i32
  }
  func.func @transform_2(%arg0: i32) -> (i32, i32) {
    %c0_i32 = arith.constant 0 : i32
    %c0_i32_0 = arith.constant 0 : i32
    %c0_i32_1 = arith.constant 0 : i32
    return %c0_i32, %c0_i32_0 : i32, i32
  }
  func.func @transform_3(%arg0: i32) -> (i32, i32) {
    %c0_i32 = arith.constant 0 : i32
    %c0_i32_0 = arith.constant 0 : i32
    %c0_i32_1 = arith.constant 0 : i32
    return %c0_i32, %c0_i32_0 : i32, i32
  }
  func.func @transform_4(%arg0: i32) -> (i32, i32) {
    %c0_i32 = arith.constant 0 : i32
    %c0_i32_0 = arith.constant 0 : i32
    %c0_i32_1 = arith.constant 0 : i32
    return %c0_i32, %c0_i32_0 : i32, i32
  }
  func.func @transform_5(%arg0: i32) -> (i32, i32) {
    %c0_i32 = arith.constant 0 : i32
    %c0_i32_0 = arith.constant 0 : i32
    %c0_i32_1 = arith.constant 0 : i32
    return %c0_i32, %c0_i32_0 : i32, i32
  }
  func.func @transform_6(%arg0: i32) -> (i32, i32) {
    %c0_i32 = arith.constant 0 : i32
    %c0_i32_0 = arith.constant 0 : i32
    %c0_i32_1 = arith.constant 0 : i32
    return %c0_i32, %c0_i32_0 : i32, i32
  }
  func.func @transform_7(%arg0: i32) -> (i32, i32) {
    %c0_i32 = arith.constant 0 : i32
    %c0_i32_0 = arith.constant 0 : i32
    %c0_i32_1 = arith.constant 0 : i32
    return %c0_i32, %c0_i32_0 : i32, i32
  }
  func.func @transform_8(%arg0: i32) -> (i32, i32) {
    %c0_i32 = arith.constant 0 : i32
    %c0_i32_0 = arith.constant 0 : i32
    %c0_i32_1 = arith.constant 0 : i32
    return %c0_i32, %c0_i32_0 : i32, i32
  }
  func.func @transform_9(%arg0: i32) -> (i32, i32) {
    %c0_i32 = arith.constant 0 : i32
    %c0_i32_0 = arith.constant 0 : i32
    %c0_i32_1 = arith.constant 0 : i32
    return %c0_i32, %c0_i32_0 : i32, i32
  }
  func.func @transform_10(%arg0: i32) -> (i32, i32) {
    %c0_i32 = arith.constant 0 : i32
    %c0_i32_0 = arith.constant 0 : i32
    %c0_i32_1 = arith.constant 0 : i32
    return %c0_i32, %c0_i32_0 : i32, i32
  }
  func.func @transform_11(%arg0: i32) -> (i32, i32) {
    %c0_i32 = arith.constant 0 : i32
    %c0_i32_0 = arith.constant 0 : i32
    %c0_i32_1 = arith.constant 0 : i32
    return %c0_i32, %c0_i32_0 : i32, i32
  }
  func.func @transform_12(%arg0: i32) -> (i32, i32) {
    %c0_i32 = arith.constant 0 : i32
    %c0_i32_0 = arith.constant 0 : i32
    %c0_i32_1 = arith.constant 0 : i32
    return %c0_i32, %c0_i32_0 : i32, i32
  }
  func.func @transform_13(%arg0: i32) -> (i32, i32, i32) {
    %c0_i32 = arith.constant 0 : i32
    %c0_i32_0 = arith.constant 0 : i32
    %c0_i32_1 = arith.constant 0 : i32
    return %arg0, %c0_i32, %c0_i32_0 : i32, i32, i32
  }
}

</mosaic_0001>

<llo_original>
// kernel: tpu_custom_call.1
$region0: #{tpu_custom_call.1}
  #allocation0 [shape = 'u32[]', space=smem, size = 0x4, offset = 0x4, fixed_abs, tag = 'smem constant byte address 0x4 - core index']
  #allocation1 [shape = 'u32[144,128]{1,0:T(1,128)}', space=vmem, size = 0x12000, scoped, tag = 'internal scratch']
  #allocation2 [shape = 'bf16[64,32]{1,0:T(16,128)(2,1)}', space=vmem, size = 0x4000, scoped, tag = 'scratch operand']
  %s0 = inlined_call_operand.vmem [shape: f32[4,16,32], index: 0, kind: input, shape index: {}]
  %s1 = inlined_call_operand.hbm [shape: bf16[4,16,16], index: 1, kind: input, shape index: {}]
  %s2 = inlined_call_operand.vmem [shape: f32[1,32], index: 2, kind: input, shape index: {}]
  %s3 = inlined_call_operand.vmem [shape: f32[1,32], index: 3, kind: input, shape index: {}]
  %s4 = inlined_call_operand.vmem [shape: bf16[32,96], index: 4, kind: input, shape index: {}]
  %s5 = inlined_call_operand.hbm [shape: bf16[32,32], index: 5, kind: input, shape index: {}]
  %s6 = inlined_call_operand.hbm [shape: f32[1,32], index: 6, kind: input, shape index: {}]
  %s7 = inlined_call_operand.hbm [shape: f32[1,32], index: 7, kind: input, shape index: {}]
  %s8 = inlined_call_operand.hbm [shape: f32[1,32], index: 8, kind: input, shape index: {}]
  %s9 = inlined_call_operand.vmem [shape: bf16[32,128], index: 9, kind: input, shape index: {}]
  %s10 = inlined_call_operand.vmem [shape: f32[1,128], index: 10, kind: input, shape index: {}]
  %s11 = inlined_call_operand.vmem [shape: bf16[128,32], index: 11, kind: input, shape index: {}]
  %s12 = inlined_call_operand.vmem [shape: f32[1,32], index: 12, kind: input, shape index: {}]
  %s13 = inlined_call_operand.hbm [shape: f32[4,16,32], index: 13, kind: output, shape index: {}]
  %s14 = sld [smem:[#allocation0]]
  $region82: #{tpu_custom_call.1} parent=0
    _
  %s16 = ssub.s32 1, %s14
  %s17 = scalar_select 0, %s16, %s14
  $region1: #{tpu_custom_call.1} parent=0
    #allocation3 [shape = 'u8[16384]{0}', space=vmem, size = 0x4000, scoped, tag = 'input window, operand 1, single buffered']
    #allocation4 [shape = 's32[1]{0}', space=sflag, size = 0x4, scoped, tag = 'scoped memory for tpu_custom_call.1']
    #allocation5 [shape = 's32[1]{0}', space=sflag, size = 0x4, scoped, tag = 'scoped memory for tpu_custom_call.1']
    #allocation6 [shape = 'u8[8192]{0}', space=vmem, size = 0x2000, scoped, tag = 'input window, operand 5, single buffered']
    #allocation7 [shape = 's32[1]{0}', space=sflag, size = 0x4, scoped, tag = 'scoped memory for tpu_custom_call.1']
    #allocation8 [shape = 'u8[512]{0}', space=vmem, size = 0x400, scoped, tag = 'input window, operand 6, single buffered']
    #allocation9 [shape = 'u8[512]{0}', space=vmem, size = 0x400, scoped, tag = 'input window, operand 7, single buffered']
    #allocation10 [shape = 's32[1]{0}', space=sflag, size = 0x4, scoped, tag = 'scoped memory for tpu_custom_call.1']
    #allocation11 [shape = 'u8[512]{0}', space=vmem, size = 0x400, scoped, tag = 'input window, operand 8, single buffered']
    #allocation12 [shape = 'u8[32768]{0}', space=vmem, size = 0x8000, scoped, tag = 'output window, operand 0, single buffered']
    %18 = vsyncpa [#allocation4], 0
    %19 = vsyncpa [#allocation7], 0
    %20 = vsyncpa [#allocation10], 0
    %21 = vsyncpa [#allocation5], 0
    // Predicated region
    $region2: #{tpu_custom_call.1} parent=1 // pred_check
      _
    $region3: #{tpu_custom_call.1} parent=1 // pred_check_branch
      %23 = sbr.rel (0) target = $region5
    $region4: #{tpu_custom_call.1} parent=1 // pred_region
      _
    $region5: #{tpu_custom_call.1} parent=1 // pred_fallthru
      _
    // Predicated region
    $region6: #{tpu_custom_call.1} parent=1 // pred_check
      _
    $region7: #{tpu_custom_call.1} parent=1 // pred_check_branch
      %25 = sbr.rel (0) target = $region9
    $region8: #{tpu_custom_call.1} parent=1 // pred_region
      %s27 = ssub.s32 512, 512
      %28 = vsyncadd [#allocation4], %s27
      %s29 = sshll.u32 [#allocation3], 4
      %s30 = int_to_ptr.vmem [resolvable:$true] %s29
      %35 = dma.hbm_to_vmem [thread:$0]  %s1, 512, %s30, [#allocation4], 64, 64, 4
    $region9: #{tpu_custom_call.1} parent=1 // pred_fallthru
      _
    // Predicated region
    $region10: #{tpu_custom_call.1} parent=1 // pred_check
      _
    $region11: #{tpu_custom_call.1} parent=1 // pred_check_branch
      %37 = sbr.rel (0) target = $region13
    $region12: #{tpu_custom_call.1} parent=1 // pred_region
      _
    $region13: #{tpu_custom_call.1} parent=1 // pred_fallthru
      _
    // Predicated region
    $region14: #{tpu_custom_call.1} parent=1 // pred_check
      _
    $region15: #{tpu_custom_call.1} parent=1 // pred_check_branch
      %39 = sbr.rel (0) target = $region17
    $region16: #{tpu_custom_call.1} parent=1 // pred_region
      _
    $region17: #{tpu_custom_call.1} parent=1 // pred_fallthru
      _
    // Predicated region
    $region18: #{tpu_custom_call.1} parent=1 // pred_check
      _
    $region19: #{tpu_custom_call.1} parent=1 // pred_check_branch
      %41 = sbr.rel (0) target = $region21
    $region20: #{tpu_custom_call.1} parent=1 // pred_region
      _
    $region21: #{tpu_custom_call.1} parent=1 // pred_fallthru
      _
    // Predicated region
    $region22: #{tpu_custom_call.1} parent=1 // pred_check
      _
    $region23: #{tpu_custom_call.1} parent=1 // pred_check_branch
      %43 = sbr.rel (0) target = $region25
    $region24: #{tpu_custom_call.1} parent=1 // pred_region
      %s45 = ssub.s32 256, 256
      %46 = vsyncadd [#allocation7], %s45
      %s47 = sshll.u32 [#allocation6], 4
      %s48 = int_to_ptr.vmem [resolvable:$true] %s47
      %53 = dma.hbm_to_vmem [thread:$0]  %s5, 256, %s48, [#allocation7], 64, 64, 4
    $region25: #{tpu_custom_call.1} parent=1 // pred_fallthru
      _
    // Predicated region
    $region26: #{tpu_custom_call.1} parent=1 // pred_check
      _
    $region27: #{tpu_custom_call.1} parent=1 // pred_check_branch
      %55 = sbr.rel (0) target = $region29
    $region28: #{tpu_custom_call.1} parent=1 // pred_region
      %s57 = ssub.s32 16, 16
      %58 = vsyncadd [#allocation7], %s57
      %s60 = sshll.u32 [#allocation8], 4
      %s61 = int_to_ptr.vmem [resolvable:$true] %s60
      %63 = dma.hbm_to_vmem [thread:$0]  %s6, 16, %s61, [#allocation7]
    $region29: #{tpu_custom_call.1} parent=1 // pred_fallthru
      _
    // Predicated region
    $region30: #{tpu_custom_call.1} parent=1 // pred_check
      _
    $region31: #{tpu_custom_call.1} parent=1 // pred_check_branch
      %65 = sbr.rel (0) target = $region33
    $region32: #{tpu_custom_call.1} parent=1 // pred_region
      %s67 = ssub.s32 16, 16
      %68 = vsyncadd [#allocation10], %s67
      %s70 = sshll.u32 [#allocation9], 4
      %s71 = int_to_ptr.vmem [resolvable:$true] %s70
      %73 = dma.hbm_to_vmem [thread:$0]  %s7, 16, %s71, [#allocation10]
    $region33: #{tpu_custom_call.1} parent=1 // pred_fallthru
      _
    // Predicated region
    $region34: #{tpu_custom_call.1} parent=1 // pred_check
      _
    $region35: #{tpu_custom_call.1} parent=1 // pred_check_branch
      %75 = sbr.rel (0) target = $region37
    $region36: #{tpu_custom_call.1} parent=1 // pred_region
      %s77 = ssub.s32 16, 16
      %78 = vsyncadd [#allocation10], %s77
      %s80 = sshll.u32 [#allocation11], 4
      %s81 = int_to_ptr.vmem [resolvable:$true] %s80
      %83 = dma.hbm_to_vmem [thread:$0]  %s8, 16, %s81, [#allocation10]
    $region37: #{tpu_custom_call.1} parent=1 // pred_fallthru
      _
    // Predicated region
    $region38: #{tpu_custom_call.1} parent=1 // pred_check
      _
    $region39: #{tpu_custom_call.1} parent=1 // pred_check_branch
      %85 = sbr.rel (0) target = $region41
    $region40: #{tpu_custom_call.1} parent=1 // pred_region
      _
    $region41: #{tpu_custom_call.1} parent=1 // pred_fallthru
      _
    // Predicated region
    $region42: #{tpu_custom_call.1} parent=1 // pred_check
      _
    $region43: #{tpu_custom_call.1} parent=1 // pred_check_branch
      %87 = sbr.rel (0) target = $region45
    $region44: #{tpu_custom_call.1} parent=1 // pred_region
      _
    $region45: #{tpu_custom_call.1} parent=1 // pred_fallthru
      _
    // Predicated region
    $region46: #{tpu_custom_call.1} parent=1 // pred_check
      _
    $region47: #{tpu_custom_call.1} parent=1 // pred_check_branch
      %89 = sbr.rel (0) target = $region49
    $region48: #{tpu_custom_call.1} parent=1 // pred_region
      _
    $region49: #{tpu_custom_call.1} parent=1 // pred_fallthru
      _
    // Predicated region
    $region50: #{tpu_custom_call.1} parent=1 // pred_check
      _
    $region51: #{tpu_custom_call.1} parent=1 // pred_check_branch
      %91 = sbr.rel (0) target = $region53
    $region52: #{tpu_custom_call.1} parent=1 // pred_region
      _
    $region53: #{tpu_custom_call.1} parent=1 // pred_fallthru
      _
    // Predicated region
    $region54: #{tpu_custom_call.1} parent=1 // pred_check
      _
    $region55: #{tpu_custom_call.1} parent=1 // pred_check_branch
      %93 = sbr.rel (0) target = $region57
    $region56: #{tpu_custom_call.1} parent=1 // pred_region
      %94 = dma.done [#allocation4], 512
    $region57: #{tpu_custom_call.1} parent=1 // pred_fallthru
      _
    // Predicated region
    $region58: #{tpu_custom_call.1} parent=1 // pred_check
      _
    $region59: #{tpu_custom_call.1} parent=1 // pred_check_branch
      %96 = sbr.rel (0) target = $region61
    $region60: #{tpu_custom_call.1} parent=1 // pred_region
      %97 = dma.done [#allocation7], 256
    $region61: #{tpu_custom_call.1} parent=1 // pred_fallthru
      _
    // Predicated region
    $region62: #{tpu_custom_call.1} parent=1 // pred_check
      _
    $region63: #{tpu_custom_call.1} parent=1 // pred_check_branch
      %99 = sbr.rel (0) target = $region65
    $region64: #{tpu_custom_call.1} parent=1 // pred_region
      %100 = dma.done [#allocation7], 16
    $region65: #{tpu_custom_call.1} parent=1 // pred_fallthru
      _
    // Predicated region
    $region66: #{tpu_custom_call.1} parent=1 // pred_check
      _
    $region67: #{tpu_custom_call.1} parent=1 // pred_check_branch
      %102 = sbr.rel (0) target = $region69
    $region68: #{tpu_custom_call.1} parent=1 // pred_region
      %103 = dma.done [#allocation10], 16
    $region69: #{tpu_custom_call.1} parent=1 // pred_fallthru
      _
    // Predicated region
    $region70: #{tpu_custom_call.1} parent=1 // pred_check
      _
    $region71: #{tpu_custom_call.1} parent=1 // pred_check_branch
      %105 = sbr.rel (0) target = $region73
    $region72: #{tpu_custom_call.1} parent=1 // pred_region
      %106 = dma.done [#allocation10], 16
    $region73: #{tpu_custom_call.1} parent=1 // pred_fallthru
      _
    %v108 = vld [vmem:[%s0] sm:$0xff]
    %v109 = vld [vmem:[%s0 + $0x8] sm:$0xff]
    %v110 = vld [vmem:[%s0 + $0x10] sm:$0xff]
    %v111 = vld [vmem:[%s0 + $0x18] sm:$0xff]
    %v112 = vld [vmem:[%s0 + $0x20] sm:$0xff]
    %v113 = vld [vmem:[%s0 + $0x28] sm:$0xff]
    %v114 = vld [vmem:[%s0 + $0x30] sm:$0xff]
    %v115 = vld [vmem:[%s0 + $0x38] sm:$0xff]
    %vm116 = vcmask 261120
    %v117 = vsel %vm116, %v108, 0.0
    %118 = vadd.xlane.f32.xlu0 %v117
    %v119 = vpop.xlane.xlu0 %118
    %v120 = vsel %vm116, %v109, 0.0
    %121 = vadd.xlane.f32.xlu0 %v120
    %v122 = vpop.xlane.xlu0 %121
    %v123 = vsel %vm116, %v110, 0.0
    %124 = vadd.xlane.f32.xlu0 %v123
    %v125 = vpop.xlane.xlu0 %124
    %v126 = vsel %vm116, %v111, 0.0
    %127 = vadd.xlane.f32.xlu0 %v126
    %v128 = vpop.xlane.xlu0 %127
    %v129 = vsel %vm116, %v112, 0.0
    %130 = vadd.xlane.f32.xlu0 %v129
    %v131 = vpop.xlane.xlu0 %130
    %v132 = vsel %vm116, %v113, 0.0
    %133 = vadd.xlane.f32.xlu0 %v132
    %v134 = vpop.xlane.xlu0 %133
    %v135 = vsel %vm116, %v114, 0.0
    %136 = vadd.xlane.f32.xlu0 %v135
    %v137 = vpop.xlane.xlu0 %136
    %v138 = vsel %vm116, %v115, 0.0
    %139 = vadd.xlane.f32.xlu0 %v138
    %v140 = vpop.xlane.xlu0 %139
    %v141 = vrcp.pop 32.0
    %v142 = vmul.f32 %v119, %v141
    %v143 = vmul.f32 %v122, %v141
    %v144 = vmul.f32 %v125, %v141
    %v145 = vmul.f32 %v128, %v141
    %v146 = vmul.f32 %v131, %v141
    %v147 = vmul.f32 %v134, %v141
    %v148 = vmul.f32 %v137, %v141
    %v149 = vmul.f32 %v140, %v141
    %v150 = vsub.f32 %v108, %v142
    %v151 = vsub.f32 %v109, %v143
    %v152 = vsub.f32 %v110, %v144
    %v153 = vsub.f32 %v111, %v145
    %v154 = vsub.f32 %v112, %v146
    %v155 = vsub.f32 %v113, %v147
    %v156 = vsub.f32 %v114, %v148
    %v157 = vsub.f32 %v115, %v149
    %v158 = vmul.f32 %v150, %v150
    %v159 = vmul.f32 %v151, %v151
    %v160 = vmul.f32 %v152, %v152
    %v161 = vmul.f32 %v153, %v153
    %v162 = vmul.f32 %v154, %v154
    %v163 = vmul.f32 %v155, %v155
    %v164 = vmul.f32 %v156, %v156
    %v165 = vmul.f32 %v157, %v157
    %v166 = vsel %vm116, %v158, 0.0
    %167 = vadd.xlane.f32.xlu0 %v166
    %v168 = vpop.xlane.xlu0 %167
    %v169 = vsel %vm116, %v159, 0.0
    %170 = vadd.xlane.f32.xlu0 %v169
    %v171 = vpop.xlane.xlu0 %170
    %v172 = vsel %vm116, %v160, 0.0
    %173 = vadd.xlane.f32.xlu0 %v172
    %v174 = vpop.xlane.xlu0 %173
    %v175 = vsel %vm116, %v161, 0.0
    %176 = vadd.xlane.f32.xlu0 %v175
    %v177 = vpop.xlane.xlu0 %176
    %v178 = vsel %vm116, %v162, 0.0
    %179 = vadd.xlane.f32.xlu0 %v178
    %v180 = vpop.xlane.xlu0 %179
    %v181 = vsel %vm116, %v163, 0.0
    %182 = vadd.xlane.f32.xlu0 %v181
    %v183 = vpop.xlane.xlu0 %182
    %v184 = vsel %vm116, %v164, 0.0
    %185 = vadd.xlane.f32.xlu0 %v184
    %v186 = vpop.xlane.xlu0 %185
    %v187 = vsel %vm116, %v165, 0.0
    %188 = vadd.xlane.f32.xlu0 %v187
    %v189 = vpop.xlane.xlu0 %188
    %v190 = vmul.f32 %v168, %v141
    %v191 = vmul.f32 %v171, %v141
    %v192 = vmul.f32 %v174, %v141
    %v193 = vmul.f32 %v177, %v141
    %v194 = vmul.f32 %v180, %v141
    %v195 = vmul.f32 %v183, %v141
    %v196 = vmul.f32 %v186, %v141
    %v197 = vmul.f32 %v189, %v141
    %v198 = vadd.f32 %v190, 1e-05
    %v199 = vadd.f32 %v191, 1e-05
    %v200 = vadd.f32 %v192, 1e-05
    %v201 = vadd.f32 %v193, 1e-05
    %v202 = vadd.f32 %v194, 1e-05
    %v203 = vadd.f32 %v195, 1e-05
    %v204 = vadd.f32 %v196, 1e-05
    %v205 = vadd.f32 %v197, 1e-05
    %v206 = vrsqrt.pop %v198
    %v207 = vrsqrt.pop %v199
    %v208 = vrsqrt.pop %v200
    %v209 = vrsqrt.pop %v201
    %v210 = vrsqrt.pop %v202
    %v211 = vrsqrt.pop %v203
    %v212 = vrsqrt.pop %v204
    %v213 = vrsqrt.pop %v205
    %v214 = vmul.f32 %v150, %v206
    %v215 = vmul.f32 %v151, %v207
    %v216 = vmul.f32 %v152, %v208
    %v217 = vmul.f32 %v153, %v209
    %v218 = vmul.f32 %v154, %v210
    %v219 = vmul.f32 %v155, %v211
    %v220 = vmul.f32 %v156, %v212
    %v221 = vmul.f32 %v157, %v213
    %v222 = vld [vmem:[%s2] sm:$0x1]
    %v224 = vlaneseq
    %v225 = vshrl.u32 %v224, 7
    %v226 = vsub.s32 0, %v225
    %v227 = vrot.slane %v222, %v226
    %v229 = vmul.f32 %v214, %v227
    %v230 = vmul.f32 %v215, %v227
    %v231 = vmul.f32 %v216, %v227
    %v232 = vmul.f32 %v217, %v227
    %v233 = vmul.f32 %v218, %v227
    %v234 = vmul.f32 %v219, %v227
    %v235 = vmul.f32 %v220, %v227
    %v236 = vmul.f32 %v221, %v227
    %v237 = vld [vmem:[%s3] sm:$0x1]
    %v239 = vlaneseq
    %v240 = vshrl.u32 %v239, 7
    %v241 = vsub.s32 0, %v240
    %v242 = vrot.slane %v237, %v241
    %v244 = vadd.f32 %v229, %v242
    %v245 = vadd.f32 %v230, %v242
    %v246 = vadd.f32 %v231, %v242
    %v247 = vadd.f32 %v232, %v242
    %v248 = vadd.f32 %v233, %v242
    %v249 = vadd.f32 %v234, %v242
    %v250 = vadd.f32 %v235, %v242
    %v251 = vadd.f32 %v236, %v242
    %v252 = vpack.c.bf16 %v245, %v244
    %v253 = vpack.c.bf16 %v247, %v246
    %v254 = vpack.c.bf16 %v249, %v248
    %v255 = vpack.c.bf16 %v251, %v250
    %v256 = vld [vmem:[%s4] sm:$0xf]
    %v257 = vld [vmem:[%s4 + $0x4] sm:$0xf]
    %v258 = vld [vmem:[%s4 + $0x8] sm:$0xf]
    %v259 = vld [vmem:[%s4 + $0xc] sm:$0xf]
    %v264 = vunpack.c.l.b16 %v256
    %v265 = vunpack.c.l.b16 %v257
    %v266 = vunpack.c.l.b16 %v258
    %v267 = vunpack.c.l.b16 %v259
    %v268 = vpack.c.b16 %v265, %v264
    %v269 = vpack.c.b16 %v267, %v266
    %v273 = vsel %vm116, %v252, 0
    %v276 = vsel %vm116, %v253, 0
    %v279 = vsel %vm116, %v254, 0
    %v282 = vsel %vm116, %v255, 0
    %284 = vmatprep.subr.bf16.mxu0 0
    %285 = vmatpush1.bf16.msra.mxu0 %v268
    %286 = vmatprep.subr.bf16.mxu0 0
    %287 = vmatpush1.bf16.msra.mxu0 %v269
    %288 = vmatprep.subr.bf16.mxu0 0
    %289 = vmatpush1.bf16.msra.mxu0 0
    %290 = vmatprep.subr.bf16.mxu0 0
    %291 = vmatpush1.bf16.msra.mxu0 0
    %292 = vmatprep.subr.bf16.mxu0 0
    %293 = vmatpush1.bf16.msra.mxu0 0
    %294 = vmatprep.subr.bf16.mxu0 0
    %295 = vmatpush1.bf16.msra.mxu0 0
    %296 = vmatprep.subr.bf16.mxu0 0
    %297 = vmatpush1.bf16.msra.mxu0 0
    %298 = vmatprep.subr.bf16.mxu0 0
    %299 = vmatpush1.bf16.msra.mxu0 0
    %300 = vmatprep.subr.bf16.mxu0 0
    %301 = vmatpush1.bf16.msra.mxu0 0
    %302 = vmatprep.subr.bf16.mxu0 0
    %303 = vmatpush1.bf16.msra.mxu0 0
    %304 = vmatprep.subr.bf16.mxu0 0
    %305 = vmatpush1.bf16.msra.mxu0 0
    %306 = vmatprep.subr.bf16.mxu0 0
    %307 = vmatpush1.bf16.msra.mxu0 0
    %308 = vmatprep.subr.bf16.mxu0 0
    %309 = vmatpush1.bf16.msra.mxu0 0
    %310 = vmatprep.subr.bf16.mxu0 0
    %311 = vmatpush1.bf16.msra.mxu0 0
    %312 = vmatprep.subr.bf16.mxu0 0
    %313 = vmatpush1.bf16.msra.mxu0 0
    %314 = vmatprep.subr.bf16.mxu0 0
    %315 = vmatpush1.bf16.msra.mxu0 0
    %316 = vmatprep.mubr.bf16.mxu0 0
    %317 = vmatmul.mubr.bf16.gmra.mrb[0].mxu0 %v273
    %v318 = vpop.f32.mrb[0].mxu0
    %v319 = vadd.f32 0.0, %v318
    %v320 = vpop.f32.mrb[0].mxu0
    %v321 = vpop.f32.mrb[0].mxu0
    %v322 = vadd.f32 0.0, %v321
    %v323 = vpop.f32.mrb[0].mxu0
    %324 = vmatprep.mubr.bf16.mxu0 0
    %325 = vmatmul.mubr.bf16.gmra.mrb[0].mxu0 %v276
    %v326 = vpop.f32.mrb[0].mxu0
    %v327 = vadd.f32 0.0, %v326
    %v328 = vpop.f32.mrb[0].mxu0
    %v329 = vpop.f32.mrb[0].mxu0
    %v330 = vadd.f32 0.0, %v329
    %v331 = vpop.f32.mrb[0].mxu0
    %332 = vmatprep.mubr.bf16.mxu0 0
    %333 = vmatmul.mubr.bf16.gmra.mrb[0].mxu0 %v279
    %v334 = vpop.f32.mrb[0].mxu0
    %v335 = vadd.f32 0.0, %v334
    %v336 = vpop.f32.mrb[0].mxu0
    %v337 = vpop.f32.mrb[0].mxu0
    %v338 = vadd.f32 0.0, %v337
    %v339 = vpop.f32.mrb[0].mxu0
    %340 = vmatprep.mubr.bf16.mxu0 0
    %341 = vmatmul.mubr.bf16.gmra.mrb[0].mxu0 %v282
    %v342 = vpop.f32.mrb[0].mxu0
    %v343 = vadd.f32 0.0, %v342
    %v344 = vpop.f32.mrb[0].mxu0
    %v345 = vpop.f32.mrb[0].mxu0
    %v346 = vadd.f32 0.0, %v345
    %v347 = vpop.f32.mrb[0].mxu0
    %348 = vdwg.mxu0
    %v349 = vpack.c.bf16 %v322, %v319
    %v350 = vpack.c.bf16 %v330, %v327
    %v351 = vpack.c.bf16 %v338, %v335
    %v352 = vpack.c.bf16 %v346, %v343
    %v353 = vld [vmem:[#allocation3] sm:$0xf]
    %v354 = vld [vmem:[#allocation3 + $0x4] sm:$0xf]
    %v355 = vunpack.c.l.bf16 %v353
    %v356 = vunpack.c.l.bf16 %v354
    %358 = vrot.lane.b32.xlu0 %v349, 96
    %v359 = vpop.permute.xlu0 %358
    %vm360 = vcmask 64512
    %v362 = vsel %vm360, %v349, 0
    %v365 = vsel %vm360, %v359, 0
    %367 = vmatprep.subr.bf16.mxu0 0
    %368 = vmatpush1.bf16.xpose.msra.mxu0 %v365
    %369 = vmatprep.subr.bf16.mxu0 0
    %370 = vmatpush1.bf16.xpose.msra.mxu0 0
    %371 = vmatprep.subr.bf16.mxu0 0
    %372 = vmatpush1.bf16.xpose.msra.mxu0 0
    %373 = vmatprep.subr.bf16.mxu0 0
    %374 = vmatpush1.bf16.xpose.msra.mxu0 0
    %375 = vmatprep.subr.bf16.mxu0 0
    %376 = vmatpush1.bf16.xpose.msra.mxu0 0
    %377 = vmatprep.subr.bf16.mxu0 0
    %378 = vmatpush1.bf16.xpose.msra.mxu0 0
    %379 = vmatprep.subr.bf16.mxu0 0
    %380 = vmatpush1.bf16.xpose.msra.mxu0 0
    %381 = vmatprep.subr.bf16.mxu0 0
    %382 = vmatpush1.bf16.xpose.msra.mxu0 0
    %383 = vmatprep.subr.bf16.mxu0 0
    %384 = vmatpush1.bf16.xpose.msra.mxu0 0
    %385 = vmatprep.subr.bf16.mxu0 0
    %386 = vmatpush1.bf16.xpose.msra.mxu0 0
    %387 = vmatprep.subr.bf16.mxu0 0
    %388 = vmatpush1.bf16.xpose.msra.mxu0 0
    %389 = vmatprep.subr.bf16.mxu0 0
    %390 = vmatpush1.bf16.xpose.msra.mxu0 0
    %391 = vmatprep.subr.bf16.mxu0 0
    %392 = vmatpush1.bf16.xpose.msra.mxu0 0
    %393 = vmatprep.subr.bf16.mxu0 0
    %394 = vmatpush1.bf16.xpose.msra.mxu0 0
    %395 = vmatprep.subr.bf16.mxu0 0
    %396 = vmatpush1.bf16.xpose.msra.mxu0 0
    %397 = vmatprep.subr.bf16.mxu0 0
    %398 = vmatpush1.bf16.xpose.msra.mxu0 0
    %399 = vmatprep.mubr.bf16.mxu0 0
    %400 = vmatmul.mubr.bf16.gmra.mrb[0].mxu0 %v362
    %v401 = vpop.f32.mrb[0].mxu0
    %v402 = vadd.f32 %v355, %v401
    %v403 = vpop.f32.mrb[0].mxu0
    %v404 = vpop.f32.mrb[0].mxu0
    %v405 = vadd.f32 %v356, %v404
    %v406 = vpop.f32.mrb[0].mxu0
    %407 = vdwg.mxu0
    %409 = vrot.lane.b32.xlu0 %v350, 96
    %v410 = vpop.permute.xlu0 %409
    %v412 = vsel %vm360, %v350, 0
    %v415 = vsel %vm360, %v410, 0
    %417 = vmatprep.subr.bf16.mxu0 0
    %418 = vmatpush1.bf16.xpose.msra.mxu0 %v415
    %419 = vmatprep.subr.bf16.mxu0 0
    %420 = vmatpush1.bf16.xpose.msra.mxu0 0
    %421 = vmatprep.subr.bf16.mxu0 0
    %422 = vmatpush1.bf16.xpose.msra.mxu0 0
    %423 = vmatprep.subr.bf16.mxu0 0
    %424 = vmatpush1.bf16.xpose.msra.mxu0 0
    %425 = vmatprep.subr.bf16.mxu0 0
    %426 = vmatpush1.bf16.xpose.msra.mxu0 0
    %427 = vmatprep.subr.bf16.mxu0 0
    %428 = vmatpush1.bf16.xpose.msra.mxu0 0
    %429 = vmatprep.subr.bf16.mxu0 0
    %430 = vmatpush1.bf16.xpose.msra.mxu0 0
    %431 = vmatprep.subr.bf16.mxu0 0
    %432 = vmatpush1.bf16.xpose.msra.mxu0 0
    %433 = vmatprep.subr.bf16.mxu0 0
    %434 = vmatpush1.bf16.xpose.msra.mxu0 0
    %435 = vmatprep.subr.bf16.mxu0 0
    %436 = vmatpush1.bf16.xpose.msra.mxu0 0
    %437 = vmatprep.subr.bf16.mxu0 0
    %438 = vmatpush1.bf16.xpose.msra.mxu0 0
    %439 = vmatprep.subr.bf16.mxu0 0
    %440 = vmatpush1.bf16.xpose.msra.mxu0 0
    %441 = vmatprep.subr.bf16.mxu0 0
    %442 = vmatpush1.bf16.xpose.msra.mxu0 0
    %443 = vmatprep.subr.bf16.mxu0 0
    %444 = vmatpush1.bf16.xpose.msra.mxu0 0
    %445 = vmatprep.subr.bf16.mxu0 0
    %446 = vmatpush1.bf16.xpose.msra.mxu0 0
    %447 = vmatprep.subr.bf16.mxu0 0
    %448 = vmatpush1.bf16.xpose.msra.mxu0 0
    %449 = vmatprep.mubr.bf16.mxu0 0
    %450 = vmatmul.mubr.bf16.gmra.mrb[0].mxu0 %v412
    %v451 = vpop.f32.mrb[0].mxu0
    %v452 = vadd.f32 %v355, %v451
    %v453 = vpop.f32.mrb[0].mxu0
    %v454 = vpop.f32.mrb[0].mxu0
    %v455 = vadd.f32 %v356, %v454
    %v456 = vpop.f32.mrb[0].mxu0
    %457 = vdwg.mxu0
    %459 = vrot.lane.b32.xlu0 %v351, 96
    %v460 = vpop.permute.xlu0 %459
    %v462 = vsel %vm360, %v351, 0
    %v465 = vsel %vm360, %v460, 0
    %467 = vmatprep.subr.bf16.mxu0 0
    %468 = vmatpush1.bf16.xpose.msra.mxu0 %v465
    %469 = vmatprep.subr.bf16.mxu0 0
    %470 = vmatpush1.bf16.xpose.msra.mxu0 0
    %471 = vmatprep.subr.bf16.mxu0 0
    %472 = vmatpush1.bf16.xpose.msra.mxu0 0
    %473 = vmatprep.subr.bf16.mxu0 0
    %474 = vmatpush1.bf16.xpose.msra.mxu0 0
    %475 = vmatprep.subr.bf16.mxu0 0
    %476 = vmatpush1.bf16.xpose.msra.mxu0 0
    %477 = vmatprep.subr.bf16.mxu0 0
    %478 = vmatpush1.bf16.xpose.msra.mxu0 0
    %479 = vmatprep.subr.bf16.mxu0 0
    %480 = vmatpush1.bf16.xpose.msra.mxu0 0
    %481 = vmatprep.subr.bf16.mxu0 0
    %482 = vmatpush1.bf16.xpose.msra.mxu0 0
    %483 = vmatprep.subr.bf16.mxu0 0
    %484 = vmatpush1.bf16.xpose.msra.mxu0 0
    %485 = vmatprep.subr.bf16.mxu0 0
    %486 = vmatpush1.bf16.xpose.msra.mxu0 0
    %487 = vmatprep.subr.bf16.mxu0 0
    %488 = vmatpush1.bf16.xpose.msra.mxu0 0
    %489 = vmatprep.subr.bf16.mxu0 0
    %490 = vmatpush1.bf16.xpose.msra.mxu0 0
    %491 = vmatprep.subr.bf16.mxu0 0
    %492 = vmatpush1.bf16.xpose.msra.mxu0 0
    %493 = vmatprep.subr.bf16.mxu0 0
    %494 = vmatpush1.bf16.xpose.msra.mxu0 0
    %495 = vmatprep.subr.bf16.mxu0 0
    %496 = vmatpush1.bf16.xpose.msra.mxu0 0
    %497 = vmatprep.subr.bf16.mxu0 0
    %498 = vmatpush1.bf16.xpose.msra.mxu0 0
    %499 = vmatprep.mubr.bf16.mxu0 0
    %500 = vmatmul.mubr.bf16.gmra.mrb[0].mxu0 %v462
    %v501 = vpop.f32.mrb[0].mxu0
    %v502 = vadd.f32 %v355, %v501
    %v503 = vpop.f32.mrb[0].mxu0
    %v504 = vpop.f32.mrb[0].mxu0
    %v505 = vadd.f32 %v356, %v504
    %v506 = vpop.f32.mrb[0].mxu0
    %507 = vdwg.mxu0
    %509 = vrot.lane.b32.xlu0 %v352, 96
    %v510 = vpop.permute.xlu0 %509
    %v512 = vsel %vm360, %v352, 0
    %v515 = vsel %vm360, %v510, 0
    %517 = vmatprep.subr.bf16.mxu0 0
    %518 = vmatpush1.bf16.xpose.msra.mxu0 %v515
    %519 = vmatprep.subr.bf16.mxu0 0
    %520 = vmatpush1.bf16.xpose.msra.mxu0 0
    %521 = vmatprep.subr.bf16.mxu0 0
    %522 = vmatpush1.bf16.xpose.msra.mxu0 0
    %523 = vmatprep.subr.bf16.mxu0 0
    %524 = vmatpush1.bf16.xpose.msra.mxu0 0
    %525 = vmatprep.subr.bf16.mxu0 0
    %526 = vmatpush1.bf16.xpose.msra.mxu0 0
    %527 = vmatprep.subr.bf16.mxu0 0
    %528 = vmatpush1.bf16.xpose.msra.mxu0 0
    %529 = vmatprep.subr.bf16.mxu0 0
    %530 = vmatpush1.bf16.xpose.msra.mxu0 0
    %531 = vmatprep.subr.bf16.mxu0 0
    %532 = vmatpush1.bf16.xpose.msra.mxu0 0
    %533 = vmatprep.subr.bf16.mxu0 0
    %534 = vmatpush1.bf16.xpose.msra.mxu0 0
    %535 = vmatprep.subr.bf16.mxu0 0
    %536 = vmatpush1.bf16.xpose.msra.mxu0 0
    %537 = vmatprep.subr.bf16.mxu0 0
    %538 = vmatpush1.bf16.xpose.msra.mxu0 0
    %539 = vmatprep.subr.bf16.mxu0 0
    %540 = vmatpush1.bf16.xpose.msra.mxu0 0
    %541 = vmatprep.subr.bf16.mxu0 0
    %542 = vmatpush1.bf16.xpose.msra.mxu0 0
    %543 = vmatprep.subr.bf16.mxu0 0
    %544 = vmatpush1.bf16.xpose.msra.mxu0 0
    %545 = vmatprep.subr.bf16.mxu0 0
    %546 = vmatpush1.bf16.xpose.msra.mxu0 0
    %547 = vmatprep.subr.bf16.mxu0 0
    %548 = vmatpush1.bf16.xpose.msra.mxu0 0
    %549 = vmatprep.mubr.bf16.mxu0 0
    %550 = vmatmul.mubr.bf16.gmra.mrb[0].mxu0 %v512
    %v551 = vpop.f32.mrb[0].mxu0
    %v552 = vadd.f32 %v355, %v551
    %v553 = vpop.f32.mrb[0].mxu0
    %v554 = vpop.f32.mrb[0].mxu0
    %v555 = vadd.f32 %v356, %v554
    %v556 = vpop.f32.mrb[0].mxu0
    %557 = vdwg.mxu0
    %vm558 = vcmask 130048
    %v559 = vsel %vm558, %v402, -inf
    %560 = vmax.xlane.f32.xlu0 %v559
    %v561 = vpop.xlane.xlu0 %560
    %v562 = vsel %vm558, %v405, -inf
    %563 = vmax.xlane.f32.xlu0 %v562
    %v564 = vpop.xlane.xlu0 %563
    %v565 = vsel %vm558, %v452, -inf
    %566 = vmax.xlane.f32.xlu0 %v565
    %v567 = vpop.xlane.xlu0 %566
    %v568 = vsel %vm558, %v455, -inf
    %569 = vmax.xlane.f32.xlu0 %v568
    %v570 = vpop.xlane.xlu0 %569
    %v571 = vsel %vm558, %v502, -inf
    %572 = vmax.xlane.f32.xlu0 %v571
    %v573 = vpop.xlane.xlu0 %572
    %v574 = vsel %vm558, %v505, -inf
    %575 = vmax.xlane.f32.xlu0 %v574
    %v576 = vpop.xlane.xlu0 %575
    %v577 = vsel %vm558, %v552, -inf
    %578 = vmax.xlane.f32.xlu0 %v577
    %v579 = vpop.xlane.xlu0 %578
    %v580 = vsel %vm558, %v555, -inf
    %581 = vmax.xlane.f32.xlu0 %v580
    %v582 = vpop.xlane.xlu0 %581
    %v583 = vsub.f32 %v402, %v561
    %v584 = vsub.f32 %v405, %v564
    %v585 = vsub.f32 %v452, %v567
    %v586 = vsub.f32 %v455, %v570
    %v587 = vsub.f32 %v502, %v573
    %v588 = vsub.f32 %v505, %v576
    %v589 = vsub.f32 %v552, %v579
    %v590 = vsub.f32 %v555, %v582
    %v591 = vmul.f32 %v583, 1.442695
    %v592 = vpow.pop %v591
    %v593 = vmul.f32 %v584, 1.442695
    %v594 = vpow.pop %v593
    %v595 = vmul.f32 %v585, 1.442695
    %v596 = vpow.pop %v595
    %v597 = vmul.f32 %v586, 1.442695
    %v598 = vpow.pop %v597
    %v599 = vmul.f32 %v587, 1.442695
    %v600 = vpow.pop %v599
    %v601 = vmul.f32 %v588, 1.442695
    %v602 = vpow.pop %v601
    %v603 = vmul.f32 %v589, 1.442695
    %v604 = vpow.pop %v603
    %v605 = vmul.f32 %v590, 1.442695
    %v606 = vpow.pop %v605
    %v607 = vsel %vm558, %v592, 0.0
    %608 = vadd.xlane.f32.xlu0 %v607
    %v609 = vpop.xlane.xlu0 %608
    %v610 = vsel %vm558, %v594, 0.0
    %611 = vadd.xlane.f32.xlu0 %v610
    %v612 = vpop.xlane.xlu0 %611
    %v613 = vsel %vm558, %v596, 0.0
    %614 = vadd.xlane.f32.xlu0 %v613
    %v615 = vpop.xlane.xlu0 %614
    %v616 = vsel %vm558, %v598, 0.0
    %617 = vadd.xlane.f32.xlu0 %v616
    %v618 = vpop.xlane.xlu0 %617
    %v619 = vsel %vm558, %v600, 0.0
    %620 = vadd.xlane.f32.xlu0 %v619
    %v621 = vpop.xlane.xlu0 %620
    %v622 = vsel %vm558, %v602, 0.0
    %623 = vadd.xlane.f32.xlu0 %v622
    %v624 = vpop.xlane.xlu0 %623
    %v625 = vsel %vm558, %v604, 0.0
    %626 = vadd.xlane.f32.xlu0 %v625
    %v627 = vpop.xlane.xlu0 %626
    %v628 = vsel %vm558, %v606, 0.0
    %629 = vadd.xlane.f32.xlu0 %v628
    %v630 = vpop.xlane.xlu0 %629
    %v631 = vrcp.pop %v609
    %v632 = vrcp.pop %v612
    %v633 = vrcp.pop %v615
    %v634 = vrcp.pop %v618
    %v635 = vrcp.pop %v621
    %v636 = vrcp.pop %v624
    %v637 = vrcp.pop %v627
    %v638 = vrcp.pop %v630
    %v639 = vmul.f32 %v592, %v631
    %v640 = vmul.f32 %v594, %v632
    %v641 = vmul.f32 %v596, %v633
    %v642 = vmul.f32 %v598, %v634
    %v643 = vmul.f32 %v600, %v635
    %v644 = vmul.f32 %v602, %v636
    %v645 = vmul.f32 %v604, %v637
    %v646 = vmul.f32 %v606, %v638
    %v647 = vpack.c.bf16 %v640, %v639
    %v648 = vpack.c.bf16 %v642, %v641
    %v649 = vpack.c.bf16 %v644, %v643
    %v650 = vpack.c.bf16 %v646, %v645
    %651 = vrot.lane.b32.xlu0 %v349, 64
    %v652 = vpop.permute.xlu0 %651
    %v655 = vsel %vm558, %v647, 0
    %657 = vmatprep.subr.bf16.mxu0 0
    %658 = vmatpush1.bf16.msra.mxu0 %v652
    %659 = vmatprep.subr.bf16.mxu0 0
    %660 = vmatpush1.bf16.msra.mxu0 0
    %661 = vmatprep.subr.bf16.mxu0 0
    %662 = vmatpush1.bf16.msra.mxu0 0
    %663 = vmatprep.subr.bf16.mxu0 0
    %664 = vmatpush1.bf16.msra.mxu0 0
    %665 = vmatprep.subr.bf16.mxu0 0
    %666 = vmatpush1.bf16.msra.mxu0 0
    %667 = vmatprep.subr.bf16.mxu0 0
    %668 = vmatpush1.bf16.msra.mxu0 0
    %669 = vmatprep.subr.bf16.mxu0 0
    %670 = vmatpush1.bf16.msra.mxu0 0
    %671 = vmatprep.subr.bf16.mxu0 0
    %672 = vmatpush1.bf16.msra.mxu0 0
    %673 = vmatprep.subr.bf16.mxu0 0
    %674 = vmatpush1.bf16.msra.mxu0 0
    %675 = vmatprep.subr.bf16.mxu0 0
    %676 = vmatpush1.bf16.msra.mxu0 0
    %677 = vmatprep.subr.bf16.mxu0 0
    %678 = vmatpush1.bf16.msra.mxu0 0
    %679 = vmatprep.subr.bf16.mxu0 0
    %680 = vmatpush1.bf16.msra.mxu0 0
    %681 = vmatprep.subr.bf16.mxu0 0
    %682 = vmatpush1.bf16.msra.mxu0 0
    %683 = vmatprep.subr.bf16.mxu0 0
    %684 = vmatpush1.bf16.msra.mxu0 0
    %685 = vmatprep.subr.bf16.mxu0 0
    %686 = vmatpush1.bf16.msra.mxu0 0
    %687 = vmatprep.subr.bf16.mxu0 0
    %688 = vmatpush1.bf16.msra.mxu0 0
    %689 = vmatprep.mubr.bf16.mxu0 0
    %690 = vmatmul.mubr.bf16.gmra.mrb[0].mxu0 %v655
    %v691 = vpop.f32.mrb[0].mxu0
    %v692 = vadd.f32 0.0, %v691
    %v693 = vpop.f32.mrb[0].mxu0
    %v694 = vpop.f32.mrb[0].mxu0
    %v695 = vadd.f32 0.0, %v694
    %v696 = vpop.f32.mrb[0].mxu0
    %697 = vdwg.mxu0
    %698 = vrot.lane.b32.xlu0 %v350, 64
    %v699 = vpop.permute.xlu0 %698
    %v702 = vsel %vm558, %v648, 0
    %704 = vmatprep.subr.bf16.mxu0 0
    %705 = vmatpush1.bf16.msra.mxu0 %v699
    %706 = vmatprep.subr.bf16.mxu0 0
    %707 = vmatpush1.bf16.msra.mxu0 0
    %708 = vmatprep.subr.bf16.mxu0 0
    %709 = vmatpush1.bf16.msra.mxu0 0
    %710 = vmatprep.subr.bf16.mxu0 0
    %711 = vmatpush1.bf16.msra.mxu0 0
    %712 = vmatprep.subr.bf16.mxu0 0
    %713 = vmatpush1.bf16.msra.mxu0 0
    %714 = vmatprep.subr.bf16.mxu0 0
    %715 = vmatpush1.bf16.msra.mxu0 0
    %716 = vmatprep.subr.bf16.mxu0 0
    %717 = vmatpush1.bf16.msra.mxu0 0
    %718 = vmatprep.subr.bf16.mxu0 0
    %719 = vmatpush1.bf16.msra.mxu0 0
    %720 = vmatprep.subr.bf16.mxu0 0
    %721 = vmatpush1.bf16.msra.mxu0 0
    %722 = vmatprep.subr.bf16.mxu0 0
    %723 = vmatpush1.bf16.msra.mxu0 0
    %724 = vmatprep.subr.bf16.mxu0 0
    %725 = vmatpush1.bf16.msra.mxu0 0
    %726 = vmatprep.subr.bf16.mxu0 0
    %727 = vmatpush1.bf16.msra.mxu0 0
    %728 = vmatprep.subr.bf16.mxu0 0
    %729 = vmatpush1.bf16.msra.mxu0 0
    %730 = vmatprep.subr.bf16.mxu0 0
    %731 = vmatpush1.bf16.msra.mxu0 0
    %732 = vmatprep.subr.bf16.mxu0 0
    %733 = vmatpush1.bf16.msra.mxu0 0
    %734 = vmatprep.subr.bf16.mxu0 0
    %735 = vmatpush1.bf16.msra.mxu0 0
    %736 = vmatprep.mubr.bf16.mxu0 0
    %737 = vmatmul.mubr.bf16.gmra.mrb[0].mxu0 %v702
    %v738 = vpop.f32.mrb[0].mxu0
    %v739 = vadd.f32 0.0, %v738
    %v740 = vpop.f32.mrb[0].mxu0
    %v741 = vpop.f32.mrb[0].mxu0
    %v742 = vadd.f32 0.0, %v741
    %v743 = vpop.f32.mrb[0].mxu0
    %744 = vdwg.mxu0
    %745 = vrot.lane.b32.xlu0 %v351, 64
    %v746 = vpop.permute.xlu0 %745
    %v749 = vsel %vm558, %v649, 0
    %751 = vmatprep.subr.bf16.mxu0 0
    %752 = vmatpush1.bf16.msra.mxu0 %v746
    %753 = vmatprep.subr.bf16.mxu0 0
    %754 = vmatpush1.bf16.msra.mxu0 0
    %755 = vmatprep.subr.bf16.mxu0 0
    %756 = vmatpush1.bf16.msra.mxu0 0
    %757 = vmatprep.subr.bf16.mxu0 0
    %758 = vmatpush1.bf16.msra.mxu0 0
    %759 = vmatprep.subr.bf16.mxu0 0
    %760 = vmatpush1.bf16.msra.mxu0 0
    %761 = vmatprep.subr.bf16.mxu0 0
    %762 = vmatpush1.bf16.msra.mxu0 0
    %763 = vmatprep.subr.bf16.mxu0 0
    %764 = vmatpush1.bf16.msra.mxu0 0
    %765 = vmatprep.subr.bf16.mxu0 0
    %766 = vmatpush1.bf16.msra.mxu0 0
    %767 = vmatprep.subr.bf16.mxu0 0
    %768 = vmatpush1.bf16.msra.mxu0 0
    %769 = vmatprep.subr.bf16.mxu0 0
    %770 = vmatpush1.bf16.msra.mxu0 0
    %771 = vmatprep.subr.bf16.mxu0 0
    %772 = vmatpush1.bf16.msra.mxu0 0
    %773 = vmatprep.subr.bf16.mxu0 0
    %774 = vmatpush1.bf16.msra.mxu0 0
    %775 = vmatprep.subr.bf16.mxu0 0
    %776 = vmatpush1.bf16.msra.mxu0 0
    %777 = vmatprep.subr.bf16.mxu0 0
    %778 = vmatpush1.bf16.msra.mxu0 0
    %779 = vmatprep.subr.bf16.mxu0 0
    %780 = vmatpush1.bf16.msra.mxu0 0
    %781 = vmatprep.subr.bf16.mxu0 0
    %782 = vmatpush1.bf16.msra.mxu0 0
    %783 = vmatprep.mubr.bf16.mxu0 0
    %784 = vmatmul.mubr.bf16.gmra.mrb[0].mxu0 %v749
    %v785 = vpop.f32.mrb[0].mxu0
    %v786 = vadd.f32 0.0, %v785
    %v787 = vpop.f32.mrb[0].mxu0
    %v788 = vpop.f32.mrb[0].mxu0
    %v789 = vadd.f32 0.0, %v788
    %v790 = vpop.f32.mrb[0].mxu0
    %791 = vdwg.mxu0
    %792 = vrot.lane.b32.xlu0 %v352, 64
    %v793 = vpop.permute.xlu0 %792
    %v796 = vsel %vm558, %v650, 0
    %798 = vmatprep.subr.bf16.mxu0 0
    %799 = vmatpush1.bf16.msra.mxu0 %v793
    %800 = vmatprep.subr.bf16.mxu0 0
    %801 = vmatpush1.bf16.msra.mxu0 0
    %802 = vmatprep.subr.bf16.mxu0 0
    %803 = vmatpush1.bf16.msra.mxu0 0
    %804 = vmatprep.subr.bf16.mxu0 0
    %805 = vmatpush1.bf16.msra.mxu0 0
    %806 = vmatprep.subr.bf16.mxu0 0
    %807 = vmatpush1.bf16.msra.mxu0 0
    %808 = vmatprep.subr.bf16.mxu0 0
    %809 = vmatpush1.bf16.msra.mxu0 0
    %810 = vmatprep.subr.bf16.mxu0 0
    %811 = vmatpush1.bf16.msra.mxu0 0
    %812 = vmatprep.subr.bf16.mxu0 0
    %813 = vmatpush1.bf16.msra.mxu0 0
    %814 = vmatprep.subr.bf16.mxu0 0
    %815 = vmatpush1.bf16.msra.mxu0 0
    %816 = vmatprep.subr.bf16.mxu0 0
    %817 = vmatpush1.bf16.msra.mxu0 0
    %818 = vmatprep.subr.bf16.mxu0 0
    %819 = vmatpush1.bf16.msra.mxu0 0
    %820 = vmatprep.subr.bf16.mxu0 0
    %821 = vmatpush1.bf16.msra.mxu0 0
    %822 = vmatprep.subr.bf16.mxu0 0
    %823 = vmatpush1.bf16.msra.mxu0 0
    %824 = vmatprep.subr.bf16.mxu0 0
    %825 = vmatpush1.bf16.msra.mxu0 0
    %826 = vmatprep.subr.bf16.mxu0 0
    %827 = vmatpush1.bf16.msra.mxu0 0
    %828 = vmatprep.subr.bf16.mxu0 0
    %829 = vmatpush1.bf16.msra.mxu0 0
    %830 = vmatprep.mubr.bf16.mxu0 0
    %831 = vmatmul.mubr.bf16.gmra.mrb[0].mxu0 %v796
    %v832 = vpop.f32.mrb[0].mxu0
    %v833 = vadd.f32 0.0, %v832
    %v834 = vpop.f32.mrb[0].mxu0
    %v835 = vpop.f32.mrb[0].mxu0
    %v836 = vadd.f32 0.0, %v835
    %v837 = vpop.f32.mrb[0].mxu0
    %838 = vdwg.mxu0
    %v839 = vpack.c.bf16 %v695, %v692
    %v840 = vpack.c.bf16 %v742, %v739
    %v841 = vpack.c.bf16 %v789, %v786
    %v842 = vpack.c.bf16 %v836, %v833
    %843 = vst.msk [vmem:[#allocation2] sm:$0xff] %vm360, %v839
    %844 = vst.msk [vmem:[#allocation2 + $0x8] sm:$0xff] %vm360, %v840
    %845 = vst.msk [vmem:[#allocation2 + $0x10] sm:$0xff] %vm360, %v841
    %846 = vst.msk [vmem:[#allocation2 + $0x18] sm:$0xff] %vm360, %v842
    %s847 = scalar_lea.vmem [#allocation3], 8
    %v848 = vld [vmem:[%s847] sm:$0xf]
    %v849 = vld [vmem:[%s847 + $0x4] sm:$0xf]
    %v850 = vunpack.c.l.bf16 %v848
    %v851 = vunpack.c.l.bf16 %v849
    %852 = vrot.lane.b32.xlu0 %v349, 120
    %v853 = vpop.permute.xlu0 %852
    %854 = vrot.lane.b32.xlu0 %v349, 88
    %v855 = vpop.permute.xlu0 %854
    %v857 = vsel %vm360, %v853, 0
    %v860 = vsel %vm360, %v855, 0
    %862 = vmatprep.subr.bf16.mxu0 0
    %863 = vmatpush1.bf16.xpose.msra.mxu0 %v860
    %864 = vmatprep.subr.bf16.mxu0 0
    %865 = vmatpush1.bf16.xpose.msra.mxu0 0
    %866 = vmatprep.subr.bf16.mxu0 0
    %867 = vmatpush1.bf16.xpose.msra.mxu0 0
    %868 = vmatprep.subr.bf16.mxu0 0
    %869 = vmatpush1.bf16.xpose.msra.mxu0 0
    %870 = vmatprep.subr.bf16.mxu0 0
    %871 = vmatpush1.bf16.xpose.msra.mxu0 0
    %872 = vmatprep.subr.bf16.mxu0 0
    %873 = vmatpush1.bf16.xpose.msra.mxu0 0
    %874 = vmatprep.subr.bf16.mxu0 0
    %875 = vmatpush1.bf16.xpose.msra.mxu0 0
    %876 = vmatprep.subr.bf16.mxu0 0
    %877 = vmatpush1.bf16.xpose.msra.mxu0 0
    %878 = vmatprep.subr.bf16.mxu0 0
    %879 = vmatpush1.bf16.xpose.msra.mxu0 0
    %880 = vmatprep.subr.bf16.mxu0 0
    %881 = vmatpush1.bf16.xpose.msra.mxu0 0
    %882 = vmatprep.subr.bf16.mxu0 0
    %883 = vmatpush1.bf16.xpose.msra.mxu0 0
    %884 = vmatprep.subr.bf16.mxu0 0
    %885 = vmatpush1.bf16.xpose.msra.mxu0 0
    %886 = vmatprep.subr.bf16.mxu0 0
    %887 = vmatpush1.bf16.xpose.msra.mxu0 0
    %888 = vmatprep.subr.bf16.mxu0 0
    %889 = vmatpush1.bf16.xpose.msra.mxu0 0
    %890 = vmatprep.subr.bf16.mxu0 0
    %891 = vmatpush1.bf16.xpose.msra.mxu0 0
    %892 = vmatprep.subr.bf16.mxu0 0
    %893 = vmatpush1.bf16.xpose.msra.mxu0 0
    %894 = vmatprep.mubr.bf16.mxu0 0
    %895 = vmatmul.mubr.bf16.gmra.mrb[0].mxu0 %v857
    %v896 = vpop.f32.mrb[0].mxu0
    %v897 = vadd.f32 %v850, %v896
    %v898 = vpop.f32.mrb[0].mxu0
    %v899 = vpop.f32.mrb[0].mxu0
    %v900 = vadd.f32 %v851, %v899
    %v901 = vpop.f32.mrb[0].mxu0
    %902 = vdwg.mxu0
    %903 = vrot.lane.b32.xlu0 %v350, 120
    %v904 = vpop.permute.xlu0 %903
    %905 = vrot.lane.b32.xlu0 %v350, 88
    %v906 = vpop.permute.xlu0 %905
    %v908 = vsel %vm360, %v904, 0
    %v911 = vsel %vm360, %v906, 0
    %913 = vmatprep.subr.bf16.mxu0 0
    %914 = vmatpush1.bf16.xpose.msra.mxu0 %v911
    %915 = vmatprep.subr.bf16.mxu0 0
    %916 = vmatpush1.bf16.xpose.msra.mxu0 0
    %917 = vmatprep.subr.bf16.mxu0 0
    %918 = vmatpush1.bf16.xpose.msra.mxu0 0
    %919 = vmatprep.subr.bf16.mxu0 0
    %920 = vmatpush1.bf16.xpose.msra.mxu0 0
    %921 = vmatprep.subr.bf16.mxu0 0
    %922 = vmatpush1.bf16.xpose.msra.mxu0 0
    %923 = vmatprep.subr.bf16.mxu0 0
    %924 = vmatpush1.bf16.xpose.msra.mxu0 0
    %925 = vmatprep.subr.bf16.mxu0 0
    %926 = vmatpush1.bf16.xpose.msra.mxu0 0
    %927 = vmatprep.subr.bf16.mxu0 0
    %928 = vmatpush1.bf16.xpose.msra.mxu0 0
    %929 = vmatprep.subr.bf16.mxu0 0
    %930 = vmatpush1.bf16.xpose.msra.mxu0 0
    %931 = vmatprep.subr.bf16.mxu0 0
    %932 = vmatpush1.bf16.xpose.msra.mxu0 0
    %933 = vmatprep.subr.bf16.mxu0 0
    %934 = vmatpush1.bf16.xpose.msra.mxu0 0
    %935 = vmatprep.subr.bf16.mxu0 0
    %936 = vmatpush1.bf16.xpose.msra.mxu0 0
    %937 = vmatprep.subr.bf16.mxu0 0
    %938 = vmatpush1.bf16.xpose.msra.mxu0 0
    %939 = vmatprep.subr.bf16.mxu0 0
    %940 = vmatpush1.bf16.xpose.msra.mxu0 0
    %941 = vmatprep.subr.bf16.mxu0 0
    %942 = vmatpush1.bf16.xpose.msra.mxu0 0
    %943 = vmatprep.subr.bf16.mxu0 0
    %944 = vmatpush1.bf16.xpose.msra.mxu0 0
    %945 = vmatprep.mubr.bf16.mxu0 0
    %946 = vmatmul.mubr.bf16.gmra.mrb[0].mxu0 %v908
    %v947 = vpop.f32.mrb[0].mxu0
    %v948 = vadd.f32 %v850, %v947
    %v949 = vpop.f32.mrb[0].mxu0
    %v950 = vpop.f32.mrb[0].mxu0
    %v951 = vadd.f32 %v851, %v950
    %v952 = vpop.f32.mrb[0].mxu0
    %953 = vdwg.mxu0
    %954 = vrot.lane.b32.xlu0 %v351, 120
    %v955 = vpop.permute.xlu0 %954
    %956 = vrot.lane.b32.xlu0 %v351, 88
    %v957 = vpop.permute.xlu0 %956
    %v959 = vsel %vm360, %v955, 0
    %v962 = vsel %vm360, %v957, 0
    %964 = vmatprep.subr.bf16.mxu0 0
    %965 = vmatpush1.bf16.xpose.msra.mxu0 %v962
    %966 = vmatprep.subr.bf16.mxu0 0
    %967 = vmatpush1.bf16.xpose.msra.mxu0 0
    %968 = vmatprep.subr.bf16.mxu0 0
    %969 = vmatpush1.bf16.xpose.msra.mxu0 0
    %970 = vmatprep.subr.bf16.mxu0 0
    %971 = vmatpush1.bf16.xpose.msra.mxu0 0
    %972 = vmatprep.subr.bf16.mxu0 0
    %973 = vmatpush1.bf16.xpose.msra.mxu0 0
    %974 = vmatprep.subr.bf16.mxu0 0
    %975 = vmatpush1.bf16.xpose.msra.mxu0 0
    %976 = vmatprep.subr.bf16.mxu0 0
    %977 = vmatpush1.bf16.xpose.msra.mxu0 0
    %978 = vmatprep.subr.bf16.mxu0 0
    %979 = vmatpush1.bf16.xpose.msra.mxu0 0
    %980 = vmatprep.subr.bf16.mxu0 0
    %981 = vmatpush1.bf16.xpose.msra.mxu0 0
    %982 = vmatprep.subr.bf16.mxu0 0
    %983 = vmatpush1.bf16.xpose.msra.mxu0 0
    %984 = vmatprep.subr.bf16.mxu0 0
    %985 = vmatpush1.bf16.xpose.msra.mxu0 0
    %986 = vmatprep.subr.bf16.mxu0 0
    %987 = vmatpush1.bf16.xpose.msra.mxu0 0
    %988 = vmatprep.subr.bf16.mxu0 0
    %989 = vmatpush1.bf16.xpose.msra.mxu0 0
    %990 = vmatprep.subr.bf16.mxu0 0
    %991 = vmatpush1.bf16.xpose.msra.mxu0 0
    %992 = vmatprep.subr.bf16.mxu0 0
    %993 = vmatpush1.bf16.xpose.msra.mxu0 0
    %994 = vmatprep.subr.bf16.mxu0 0
    %995 = vmatpush1.bf16.xpose.msra.mxu0 0
    %996 = vmatprep.mubr.bf16.mxu0 0
    %997 = vmatmul.mubr.bf16.gmra.mrb[0].mxu0 %v959
    %v998 = vpop.f32.mrb[0].mxu0
    %v999 = vadd.f32 %v850, %v998
    %v1000 = vpop.f32.mrb[0].mxu0
    %v1001 = vpop.f32.mrb[0].mxu0
    %v1002 = vadd.f32 %v851, %v1001
    %v1003 = vpop.f32.mrb[0].mxu0
    %1004 = vdwg.mxu0
    %1005 = vrot.lane.b32.xlu0 %v352, 120
    %v1006 = vpop.permute.xlu0 %1005
    %1007 = vrot.lane.b32.xlu0 %v352, 88
    %v1008 = vpop.permute.xlu0 %1007
    %v1010 = vsel %vm360, %v1006, 0
    %v1013 = vsel %vm360, %v1008, 0
    %1015 = vmatprep.subr.bf16.mxu0 0
    %1016 = vmatpush1.bf16.xpose.msra.mxu0 %v1013
    %1017 = vmatprep.subr.bf16.mxu0 0
    %1018 = vmatpush1.bf16.xpose.msra.mxu0 0
    %1019 = vmatprep.subr.bf16.mxu0 0
    %1020 = vmatpush1.bf16.xpose.msra.mxu0 0
    %1021 = vmatprep.subr.bf16.mxu0 0
    %1022 = vmatpush1.bf16.xpose.msra.mxu0 0
    %1023 = vmatprep.subr.bf16.mxu0 0
    %1024 = vmatpush1.bf16.xpose.msra.mxu0 0
    %1025 = vmatprep.subr.bf16.mxu0 0
    %1026 = vmatpush1.bf16.xpose.msra.mxu0 0
    %1027 = vmatprep.subr.bf16.mxu0 0
    %1028 = vmatpush1.bf16.xpose.msra.mxu0 0
    %1029 = vmatprep.subr.bf16.mxu0 0
    %1030 = vmatpush1.bf16.xpose.msra.mxu0 0
    %1031 = vmatprep.subr.bf16.mxu0 0
    %1032 = vmatpush1.bf16.xpose.msra.mxu0 0
    %1033 = vmatprep.subr.bf16.mxu0 0
    %1034 = vmatpush1.bf16.xpose.msra.mxu0 0
    %1035 = vmatprep.subr.bf16.mxu0 0
    %1036 = vmatpush1.bf16.xpose.msra.mxu0 0
    %1037 = vmatprep.subr.bf16.mxu0 0
    %1038 = vmatpush1.bf16.xpose.msra.mxu0 0
    %1039 = vmatprep.subr.bf16.mxu0 0
    %1040 = vmatpush1.bf16.xpose.msra.mxu0 0
    %1041 = vmatprep.subr.bf16.mxu0 0
    %1042 = vmatpush1.bf16.xpose.msra.mxu0 0
    %1043 = vmatprep.subr.bf16.mxu0 0
    %1044 = vmatpush1.bf16.xpose.msra.mxu0 0
    %1045 = vmatprep.subr.bf16.mxu0 0
    %1046 = vmatpush1.bf16.xpose.msra.mxu0 0
    %1047 = vmatprep.mubr.bf16.mxu0 0
    %1048 = vmatmul.mubr.bf16.gmra.mrb[0].mxu0 %v1010
    %v1049 = vpop.f32.mrb[0].mxu0
    %v1050 = vadd.f32 %v850, %v1049
    %v1051 = vpop.f32.mrb[0].mxu0
    %v1052 = vpop.f32.mrb[0].mxu0
    %v1053 = vadd.f32 %v851, %v1052
    %v1054 = vpop.f32.mrb[0].mxu0
    %1055 = vdwg.mxu0
    %v1056 = vsel %vm558, %v897, -inf
    %1057 = vmax.xlane.f32.xlu0 %v1056
    %v1058 = vpop.xlane.xlu0 %1057
    %v1059 = vsel %vm558, %v900, -inf
    %1060 = vmax.xlane.f32.xlu0 %v1059
    %v1061 = vpop.xlane.xlu0 %1060
    %v1062 = vsel %vm558, %v948, -inf
    %1063 = vmax.xlane.f32.xlu0 %v1062
    %v1064 = vpop.xlane.xlu0 %1063
    %v1065 = vsel %vm558, %v951, -inf
    %1066 = vmax.xlane.f32.xlu0 %v1065
    %v1067 = vpop.xlane.xlu0 %1066
    %v1068 = vsel %vm558, %v999, -inf
    %1069 = vmax.xlane.f32.xlu0 %v1068
    %v1070 = vpop.xlane.xlu0 %1069
    %v1071 = vsel %vm558, %v1002, -inf
    %1072 = vmax.xlane.f32.xlu0 %v1071
    %v1073 = vpop.xlane.xlu0 %1072
    %v1074 = vsel %vm558, %v1050, -inf
    %1075 = vmax.xlane.f32.xlu0 %v1074
    %v1076 = vpop.xlane.xlu0 %1075
    %v1077 = vsel %vm558, %v1053, -inf
    %1078 = vmax.xlane.f32.xlu0 %v1077
    %v1079 = vpop.xlane.xlu0 %1078
    %v1080 = vsub.f32 %v897, %v1058
    %v1081 = vsub.f32 %v900, %v1061
    %v1082 = vsub.f32 %v948, %v1064
    %v1083 = vsub.f32 %v951, %v1067
    %v1084 = vsub.f32 %v999, %v1070
    %v1085 = vsub.f32 %v1002, %v1073
    %v1086 = vsub.f32 %v1050, %v1076
    %v1087 = vsub.f32 %v1053, %v1079
    %v1088 = vmul.f32 %v1080, 1.442695
    %v1089 = vpow.pop %v1088
    %v1090 = vmul.f32 %v1081, 1.442695
    %v1091 = vpow.pop %v1090
    %v1092 = vmul.f32 %v1082, 1.442695
    %v1093 = vpow.pop %v1092
    %v1094 = vmul.f32 %v1083, 1.442695
    %v1095 = vpow.pop %v1094
    %v1096 = vmul.f32 %v1084, 1.442695
    %v1097 = vpow.pop %v1096
    %v1098 = vmul.f32 %v1085, 1.442695
    %v1099 = vpow.pop %v1098
    %v1100 = vmul.f32 %v1086, 1.442695
    %v1101 = vpow.pop %v1100
    %v1102 = vmul.f32 %v1087, 1.442695
    %v1103 = vpow.pop %v1102
    %v1104 = vsel %vm558, %v1089, 0.0
    %1105 = vadd.xlane.f32.xlu0 %v1104
    %v1106 = vpop.xlane.xlu0 %1105
    %v1107 = vsel %vm558, %v1091, 0.0
    %1108 = vadd.xlane.f32.xlu0 %v1107
    %v1109 = vpop.xlane.xlu0 %1108
    %v1110 = vsel %vm558, %v1093, 0.0
    %1111 = vadd.xlane.f32.xlu0 %v1110
    %v1112 = vpop.xlane.xlu0 %1111
    %v1113 = vsel %vm558, %v1095, 0.0
    %1114 = vadd.xlane.f32.xlu0 %v1113
    %v1115 = vpop.xlane.xlu0 %1114
    %v1116 = vsel %vm558, %v1097, 0.0
    %1117 = vadd.xlane.f32.xlu0 %v1116
    %v1118 = vpop.xlane.xlu0 %1117
    %v1119 = vsel %vm558, %v1099, 0.0
    %1120 = vadd.xlane.f32.xlu0 %v1119
    %v1121 = vpop.xlane.xlu0 %1120
    %v1122 = vsel %vm558, %v1101, 0.0
    %1123 = vadd.xlane.f32.xlu0 %v1122
    %v1124 = vpop.xlane.xlu0 %1123
    %v1125 = vsel %vm558, %v1103, 0.0
    %1126 = vadd.xlane.f32.xlu0 %v1125
    %v1127 = vpop.xlane.xlu0 %1126
    %v1128 = vrcp.pop %v1106
    %v1129 = vrcp.pop %v1109
    %v1130 = vrcp.pop %v1112
    %v1131 = vrcp.pop %v1115
    %v1132 = vrcp.pop %v1118
    %v1133 = vrcp.pop %v1121
    %v1134 = vrcp.pop %v1124
    %v1135 = vrcp.pop %v1127
    %v1136 = vmul.f32 %v1089, %v1128
    %v1137 = vmul.f32 %v1091, %v1129
    %v1138 = vmul.f32 %v1093, %v1130
    %v1139 = vmul.f32 %v1095, %v1131
    %v1140 = vmul.f32 %v1097, %v1132
    %v1141 = vmul.f32 %v1099, %v1133
    %v1142 = vmul.f32 %v1101, %v1134
    %v1143 = vmul.f32 %v1103, %v1135
    %v1144 = vpack.c.bf16 %v1137, %v1136
    %v1145 = vpack.c.bf16 %v1139, %v1138
    %v1146 = vpack.c.bf16 %v1141, %v1140
    %v1147 = vpack.c.bf16 %v1143, %v1142
    %1148 = vrot.lane.b32.xlu0 %v349, 56
    %v1149 = vpop.permute.xlu0 %1148
    %v1152 = vsel %vm558, %v1144, 0
    %1154 = vmatprep.subr.bf16.mxu0 0
    %1155 = vmatpush1.bf16.msra.mxu0 %v1149
    %1156 = vmatprep.subr.bf16.mxu0 0
    %1157 = vmatpush1.bf16.msra.mxu0 0
    %1158 = vmatprep.subr.bf16.mxu0 0
    %1159 = vmatpush1.bf16.msra.mxu0 0
    %1160 = vmatprep.subr.bf16.mxu0 0
    %1161 = vmatpush1.bf16.msra.mxu0 0
    %1162 = vmatprep.subr.bf16.mxu0 0
    %1163 = vmatpush1.bf16.msra.mxu0 0
    %1164 = vmatprep.subr.bf16.mxu0 0
    %1165 = vmatpush1.bf16.msra.mxu0 0
    %1166 = vmatprep.subr.bf16.mxu0 0
    %1167 = vmatpush1.bf16.msra.mxu0 0
    %1168 = vmatprep.subr.bf16.mxu0 0
    %1169 = vmatpush1.bf16.msra.mxu0 0
    %1170 = vmatprep.subr.bf16.mxu0 0
    %1171 = vmatpush1.bf16.msra.mxu0 0
    %1172 = vmatprep.subr.bf16.mxu0 0
    %1173 = vmatpush1.bf16.msra.mxu0 0
    %1174 = vmatprep.subr.bf16.mxu0 0
    %1175 = vmatpush1.bf16.msra.mxu0 0
    %1176 = vmatprep.subr.bf16.mxu0 0
    %1177 = vmatpush1.bf16.msra.mxu0 0
    %1178 = vmatprep.subr.bf16.mxu0 0
    %1179 = vmatpush1.bf16.msra.mxu0 0
    %1180 = vmatprep.subr.bf16.mxu0 0
    %1181 = vmatpush1.bf16.msra.mxu0 0
    %1182 = vmatprep.subr.bf16.mxu0 0
    %1183 = vmatpush1.bf16.msra.mxu0 0
    %1184 = vmatprep.subr.bf16.mxu0 0
    %1185 = vmatpush1.bf16.msra.mxu0 0
    %1186 = vmatprep.mubr.bf16.mxu0 0
    %1187 = vmatmul.mubr.bf16.gmra.mrb[0].mxu0 %v1152
    %v1188 = vpop.f32.mrb[0].mxu0
    %v1189 = vadd.f32 0.0, %v1188
    %v1190 = vpop.f32.mrb[0].mxu0
    %v1191 = vpop.f32.mrb[0].mxu0
    %v1192 = vadd.f32 0.0, %v1191
    %v1193 = vpop.f32.mrb[0].mxu0
    %1194 = vdwg.mxu0
    %1195 = vrot.lane.b32.xlu0 %v350, 56
    %v1196 = vpop.permute.xlu0 %1195
    %v1199 = vsel %vm558, %v1145, 0
    %1201 = vmatprep.subr.bf16.mxu0 0
    %1202 = vmatpush1.bf16.msra.mxu0 %v1196
    %1203 = vmatprep.subr.bf16.mxu0 0
    %1204 = vmatpush1.bf16.msra.mxu0 0
    %1205 = vmatprep.subr.bf16.mxu0 0
    %1206 = vmatpush1.bf16.msra.mxu0 0
    %1207 = vmatprep.subr.bf16.mxu0 0
    %1208 = vmatpush1.bf16.msra.mxu0 0
    %1209 = vmatprep.subr.bf16.mxu0 0
    %1210 = vmatpush1.bf16.msra.mxu0 0
    %1211 = vmatprep.subr.bf16.mxu0 0
    %1212 = vmatpush1.bf16.msra.mxu0 0
    %1213 = vmatprep.subr.bf16.mxu0 0
    %1214 = vmatpush1.bf16.msra.mxu0 0
    %1215 = vmatprep.subr.bf16.mxu0 0
    %1216 = vmatpush1.bf16.msra.mxu0 0
    %1217 = vmatprep.subr.bf16.mxu0 0
    %1218 = vmatpush1.bf16.msra.mxu0 0
    %1219 = vmatprep.subr.bf16.mxu0 0
    %1220 = vmatpush1.bf16.msra.mxu0 0
    %1221 = vmatprep.subr.bf16.mxu0 0
    %1222 = vmatpush1.bf16.msra.mxu0 0
    %1223 = vmatprep.subr.bf16.mxu0 0
    %1224 = vmatpush1.bf16.msra.mxu0 0
    %1225 = vmatprep.subr.bf16.mxu0 0
    %1226 = vmatpush1.bf16.msra.mxu0 0
    %1227 = vmatprep.subr.bf16.mxu0 0
    %1228 = vmatpush1.bf16.msra.mxu0 0
    %1229 = vmatprep.subr.bf16.mxu0 0
    %1230 = vmatpush1.bf16.msra.mxu0 0
    %1231 = vmatprep.subr.bf16.mxu0 0
    %1232 = vmatpush1.bf16.msra.mxu0 0
    %1233 = vmatprep.mubr.bf16.mxu0 0
    %1234 = vmatmul.mubr.bf16.gmra.mrb[0].mxu0 %v1199
    %v1235 = vpop.f32.mrb[0].mxu0
    %v1236 = vadd.f32 0.0, %v1235
    %v1237 = vpop.f32.mrb[0].mxu0
    %v1238 = vpop.f32.mrb[0].mxu0
    %v1239 = vadd.f32 0.0, %v1238
    %v1240 = vpop.f32.mrb[0].mxu0
    %1241 = vdwg.mxu0
    %1242 = vrot.lane.b32.xlu0 %v351, 56
    %v1243 = vpop.permute.xlu0 %1242
    %v1246 = vsel %vm558, %v1146, 0
    %1248 = vmatprep.subr.bf16.mxu0 0
    %1249 = vmatpush1.bf16.msra.mxu0 %v1243
    %1250 = vmatprep.subr.bf16.mxu0 0
    %1251 = vmatpush1.bf16.msra.mxu0 0
    %1252 = vmatprep.subr.bf16.mxu0 0
    %1253 = vmatpush1.bf16.msra.mxu0 0
    %1254 = vmatprep.subr.bf16.mxu0 0
    %1255 = vmatpush1.bf16.msra.mxu0 0
    %1256 = vmatprep.subr.bf16.mxu0 0
    %1257 = vmatpush1.bf16.msra.mxu0 0
    %1258 = vmatprep.subr.bf16.mxu0 0
    %1259 = vmatpush1.bf16.msra.mxu0 0
    %1260 = vmatprep.subr.bf16.mxu0 0
    %1261 = vmatpush1.bf16.msra.mxu0 0
    %1262 = vmatprep.subr.bf16.mxu0 0
    %1263 = vmatpush1.bf16.msra.mxu0 0
    %1264 = vmatprep.subr.bf16.mxu0 0
    %1265 = vmatpush1.bf16.msra.mxu0 0
    %1266 = vmatprep.subr.bf16.mxu0 0
    %1267 = vmatpush1.bf16.msra.mxu0 0
    %1268 = vmatprep.subr.bf16.mxu0 0
    %1269 = vmatpush1.bf16.msra.mxu0 0
    %1270 = vmatprep.subr.bf16.mxu0 0
    %1271 = vmatpush1.bf16.msra.mxu0 0
    %1272 = vmatprep.subr.bf16.mxu0 0
    %1273 = vmatpush1.bf16.msra.mxu0 0
    %1274 = vmatprep.subr.bf16.mxu0 0
    %1275 = vmatpush1.bf16.msra.mxu0 0
    %1276 = vmatprep.subr.bf16.mxu0 0
    %1277 = vmatpush1.bf16.msra.mxu0 0
    %1278 = vmatprep.subr.bf16.mxu0 0
    %1279 = vmatpush1.bf16.msra.mxu0 0
    %1280 = vmatprep.mubr.bf16.mxu0 0
    %1281 = vmatmul.mubr.bf16.gmra.mrb[0].mxu0 %v1246
    %v1282 = vpop.f32.mrb[0].mxu0
    %v1283 = vadd.f32 0.0, %v1282
    %v1284 = vpop.f32.mrb[0].mxu0
    %v1285 = vpop.f32.mrb[0].mxu0
    %v1286 = vadd.f32 0.0, %v1285
    %v1287 = vpop.f32.mrb[0].mxu0
    %1288 = vdwg.mxu0
    %1289 = vrot.lane.b32.xlu0 %v352, 56
    %v1290 = vpop.permute.xlu0 %1289
    %v1293 = vsel %vm558, %v1147, 0
    %1295 = vmatprep.subr.bf16.mxu0 0
    %1296 = vmatpush1.bf16.msra.mxu0 %v1290
    %1297 = vmatprep.subr.bf16.mxu0 0
    %1298 = vmatpush1.bf16.msra.mxu0 0
    %1299 = vmatprep.subr.bf16.mxu0 0
    %1300 = vmatpush1.bf16.msra.mxu0 0
    %1301 = vmatprep.subr.bf16.mxu0 0
    %1302 = vmatpush1.bf16.msra.mxu0 0
    %1303 = vmatprep.subr.bf16.mxu0 0
    %1304 = vmatpush1.bf16.msra.mxu0 0
    %1305 = vmatprep.subr.bf16.mxu0 0
    %1306 = vmatpush1.bf16.msra.mxu0 0
    %1307 = vmatprep.subr.bf16.mxu0 0
    %1308 = vmatpush1.bf16.msra.mxu0 0
    %1309 = vmatprep.subr.bf16.mxu0 0
    %1310 = vmatpush1.bf16.msra.mxu0 0
    %1311 = vmatprep.subr.bf16.mxu0 0
    %1312 = vmatpush1.bf16.msra.mxu0 0
    %1313 = vmatprep.subr.bf16.mxu0 0
    %1314 = vmatpush1.bf16.msra.mxu0 0
    %1315 = vmatprep.subr.bf16.mxu0 0
    %1316 = vmatpush1.bf16.msra.mxu0 0
    %1317 = vmatprep.subr.bf16.mxu0 0
    %1318 = vmatpush1.bf16.msra.mxu0 0
    %1319 = vmatprep.subr.bf16.mxu0 0
    %1320 = vmatpush1.bf16.msra.mxu0 0
    %1321 = vmatprep.subr.bf16.mxu0 0
    %1322 = vmatpush1.bf16.msra.mxu0 0
    %1323 = vmatprep.subr.bf16.mxu0 0
    %1324 = vmatpush1.bf16.msra.mxu0 0
    %1325 = vmatprep.subr.bf16.mxu0 0
    %1326 = vmatpush1.bf16.msra.mxu0 0
    %1327 = vmatprep.mubr.bf16.mxu0 0
    %1328 = vmatmul.mubr.bf16.gmra.mrb[0].mxu0 %v1293
    %v1329 = vpop.f32.mrb[0].mxu0
    %v1330 = vadd.f32 0.0, %v1329
    %v1331 = vpop.f32.mrb[0].mxu0
    %v1332 = vpop.f32.mrb[0].mxu0
    %v1333 = vadd.f32 0.0, %v1332
    %v1334 = vpop.f32.mrb[0].mxu0
    %1335 = vdwg.mxu0
    %v1336 = vpack.c.bf16 %v1192, %v1189
    %v1337 = vpack.c.bf16 %v1239, %v1236
    %v1338 = vpack.c.bf16 %v1286, %v1283
    %v1339 = vpack.c.bf16 %v1333, %v1330
    %1344 = vrot.lane.b32.xlu0 %v1336, 8
    %v1345 = vpop.permute.xlu0 %1344
    %1346 = vrot.lane.b32.xlu0 %v1337, 8
    %v1347 = vpop.permute.xlu0 %1346
    %1348 = vrot.lane.b32.xlu0 %v1338, 8
    %v1349 = vpop.permute.xlu0 %1348
    %1350 = vrot.lane.b32.xlu0 %v1339, 8
    %v1351 = vpop.permute.xlu0 %1350
    %vm1356 = vcmask 130112
    %1357 = vst.msk [vmem:[#allocation2] sm:$0xff] %vm1356, %v1345
    %1358 = vst.msk [vmem:[#allocation2 + $0x8] sm:$0xff] %vm1356, %v1347
    %1359 = vst.msk [vmem:[#allocation2 + $0x10] sm:$0xff] %vm1356, %v1349
    %1360 = vst.msk [vmem:[#allocation2 + $0x18] sm:$0xff] %vm1356, %v1351
    %s1361 = scalar_lea.vmem [#allocation3], 16
    %v1362 = vld [vmem:[%s1361] sm:$0xf]
    %v1363 = vld [vmem:[%s1361 + $0x4] sm:$0xf]
    %v1364 = vunpack.c.l.bf16 %v1362
    %v1365 = vunpack.c.l.bf16 %v1363
    %1366 = vrot.lane.b32.xlu0 %v349, 112
    %v1367 = vpop.permute.xlu0 %1366
    %1368 = vrot.lane.b32.xlu0 %v349, 80
    %v1369 = vpop.permute.xlu0 %1368
    %v1371 = vsel %vm360, %v1367, 0
    %v1374 = vsel %vm360, %v1369, 0
    %1376 = vmatprep.subr.bf16.mxu0 0
    %1377 = vmatpush1.bf16.xpose.msra.mxu0 %v1374
    %1378 = vmatprep.subr.bf16.mxu0 0
    %1379 = vmatpush1.bf16.xpose.msra.mxu0 0
    %1380 = vmatprep.subr.bf16.mxu0 0
    %1381 = vmatpush1.bf16.xpose.msra.mxu0 0
    %1382 = vmatprep.subr.bf16.mxu0 0
    %1383 = vmatpush1.bf16.xpose.msra.mxu0 0
    %1384 = vmatprep.subr.bf16.mxu0 0
    %1385 = vmatpush1.bf16.xpose.msra.mxu0 0
    %1386 = vmatprep.subr.bf16.mxu0 0
    %1387 = vmatpush1.bf16.xpose.msra.mxu0 0
    %1388 = vmatprep.subr.bf16.mxu0 0
    %1389 = vmatpush1.bf16.xpose.msra.mxu0 0
    %1390 = vmatprep.subr.bf16.mxu0 0
    %1391 = vmatpush1.bf16.xpose.msra.mxu0 0
    %1392 = vmatprep.subr.bf16.mxu0 0
    %1393 = vmatpush1.bf16.xpose.msra.mxu0 0
    %1394 = vmatprep.subr.bf16.mxu0 0
    %1395 = vmatpush1.bf16.xpose.msra.mxu0 0
    %1396 = vmatprep.subr.bf16.mxu0 0
    %1397 = vmatpush1.bf16.xpose.msra.mxu0 0
    %1398 = vmatprep.subr.bf16.mxu0 0
    %1399 = vmatpush1.bf16.xpose.msra.mxu0 0
    %1400 = vmatprep.subr.bf16.mxu0 0
    %1401 = vmatpush1.bf16.xpose.msra.mxu0 0
    %1402 = vmatprep.subr.bf16.mxu0 0
    %1403 = vmatpush1.bf16.xpose.msra.mxu0 0
    %1404 = vmatprep.subr.bf16.mxu0 0
    %1405 = vmatpush1.bf16.xpose.msra.mxu0 0
    %1406 = vmatprep.subr.bf16.mxu0 0
    %1407 = vmatpush1.bf16.xpose.msra.mxu0 0
    %1408 = vmatprep.mubr.bf16.mxu0 0
    %1409 = vmatmul.mubr.bf16.gmra.mrb[0].mxu0 %v1371
    %v1410 = vpop.f32.mrb[0].mxu0
    %v1411 = vadd.f32 %v1364, %v1410
    %v1412 = vpop.f32.mrb[0].mxu0
    %v1413 = vpop.f32.mrb[0].mxu0
    %v1414 = vadd.f32 %v1365, %v1413
    %v1415 = vpop.f32.mrb[0].mxu0
    %1416 = vdwg.mxu0
    %1417 = vrot.lane.b32.xlu0 %v350, 112
    %v1418 = vpop.permute.xlu0 %1417
    %1419 = vrot.lane.b32.xlu0 %v350, 80
    %v1420 = vpop.permute.xlu0 %1419
    %v1422 = vsel %vm360, %v1418, 0
    %v1425 = vsel %vm360, %v1420, 0
    %1427 = vmatprep.subr.bf16.mxu0 0
    %1428 = vmatpush1.bf16.xpose.msra.mxu0 %v1425
    %1429 = vmatprep.subr.bf16.mxu0 0
    %1430 = vmatpush1.bf16.xpose.msra.mxu0 0
    %1431 = vmatprep.subr.bf16.mxu0 0
    %1432 = vmatpush1.bf16.xpose.msra.mxu0 0
    %1433 = vmatprep.subr.bf16.mxu0 0
    %1434 = vmatpush1.bf16.xpose.msra.mxu0 0
    %1435 = vmatprep.subr.bf16.mxu0 0
    %1436 = vmatpush1.bf16.xpose.msra.mxu0 0
    %1437 = vmatprep.subr.bf16.mxu0 0
    %1438 = vmatpush1.bf16.xpose.msra.mxu0 0
    %1439 = vmatprep.subr.bf16.mxu0 0
    %1440 = vmatpush1.bf16.xpose.msra.mxu0 0
    %1441 = vmatprep.subr.bf16.mxu0 0
    %1442 = vmatpush1.bf16.xpose.msra.mxu0 0
    %1443 = vmatprep.subr.bf16.mxu0 0
    %1444 = vmatpush1.bf16.xpose.msra.mxu0 0
    %1445 = vmatprep.subr.bf16.mxu0 0
    %1446 = vmatpush1.bf16.xpose.msra.mxu0 0
    %1447 = vmatprep.subr.bf16.mxu0 0
    %1448 = vmatpush1.bf16.xpose.msra.mxu0 0
    %1449 = vmatprep.subr.bf16.mxu0 0
    %1450 = vmatpush1.bf16.xpose.msra.mxu0 0
    %1451 = vmatprep.subr.bf16.mxu0 0
    %1452 = vmatpush1.bf16.xpose.msra.mxu0 0
    %1453 = vmatprep.subr.bf16.mxu0 0
    %1454 = vmatpush1.bf16.xpose.msra.mxu0 0
    %1455 = vmatprep.subr.bf16.mxu0 0
    %1456 = vmatpush1.bf16.xpose.msra.mxu0 0
    %1457 = vmatprep.subr.bf16.mxu0 0
    %1458 = vmatpush1.bf16.xpose.msra.mxu0 0
    %1459 = vmatprep.mubr.bf16.mxu0 0
    %1460 = vmatmul.mubr.bf16.gmra.mrb[0].mxu0 %v1422
    %v1461 = vpop.f32.mrb[0].mxu0
    %v1462 = vadd.f32 %v1364, %v1461
    %v1463 = vpop.f32.mrb[0].mxu0
    %v1464 = vpop.f32.mrb[0].mxu0
    %v1465 = vadd.f32 %v1365, %v1464
    %v1466 = vpop.f32.mrb[0].mxu0
    %1467 = vdwg.mxu0
    %1468 = vrot.lane.b32.xlu0 %v351, 112
    %v1469 = vpop.permute.xlu0 %1468
    %1470 = vrot.lane.b32.xlu0 %v351, 80
    %v1471 = vpop.permute.xlu0 %1470
    %v1473 = vsel %vm360, %v1469, 0
    %v1476 = vsel %vm360, %v1471, 0
    %1478 = vmatprep.subr.bf16.mxu0 0
    %1479 = vmatpush1.bf16.xpose.msra.mxu0 %v1476
    %1480 = vmatprep.subr.bf16.mxu0 0
    %1481 = vmatpush1.bf16.xpose.msra.mxu0 0
    %1482 = vmatprep.subr.bf16.mxu0 0
    %1483 = vmatpush1.bf16.xpose.msra.mxu0 0
    %1484 = vmatprep.subr.bf16.mxu0 0
    %1485 = vmatpush1.bf16.xpose.msra.mxu0 0
    %1486 = vmatprep.subr.bf16.mxu0 0
    %1487 = vmatpush1.bf16.xpose.msra.mxu0 0
    %1488 = vmatprep.subr.bf16.mxu0 0
    %1489 = vmatpush1.bf16.xpose.msra.mxu0 0
    %1490 = vmatprep.subr.bf16.mxu0 0
    %1491 = vmatpush1.bf16.xpose.msra.mxu0 0
    %1492 = vmatprep.subr.bf16.mxu0 0
    %1493 = vmatpush1.bf16.xpose.msra.mxu0 0
    %1494 = vmatprep.subr.bf16.mxu0 0
    %1495 = vmatpush1.bf16.xpose.msra.mxu0 0
    %1496 = vmatprep.subr.bf16.mxu0 0
    %1497 = vmatpush1.bf16.xpose.msra.mxu0 0
    %1498 = vmatprep.subr.bf16.mxu0 0
    %1499 = vmatpush1.bf16.xpose.msra.mxu0 0
    %1500 = vmatprep.subr.bf16.mxu0 0
    %1501 = vmatpush1.bf16.xpose.msra.mxu0 0
    %1502 = vmatprep.subr.bf16.mxu0 0
    %1503 = vmatpush1.bf16.xpose.msra.mxu0 0
    %1504 = vmatprep.subr.bf16.mxu0 0
    %1505 = vmatpush1.bf16.xpose.msra.mxu0 0
    %1506 = vmatprep.subr.bf16.mxu0 0
    %1507 = vmatpush1.bf16.xpose.msra.mxu0 0
    %1508 = vmatprep.subr.bf16.mxu0 0
    %1509 = vmatpush1.bf16.xpose.msra.mxu0 0
    %1510 = vmatprep.mubr.bf16.mxu0 0
    %1511 = vmatmul.mubr.bf16.gmra.mrb[0].mxu0 %v1473
    %v1512 = vpop.f32.mrb[0].mxu0
    %v1513 = vadd.f32 %v1364, %v1512
    %v1514 = vpop.f32.mrb[0].mxu0
    %v1515 = vpop.f32.mrb[0].mxu0
    %v1516 = vadd.f32 %v1365, %v1515
    %v1517 = vpop.f32.mrb[0].mxu0
    %1518 = vdwg.mxu0
    %1519 = vrot.lane.b32.xlu0 %v352, 112
    %v1520 = vpop.permute.xlu0 %1519
    %1521 = vrot.lane.b32.xlu0 %v352, 80
    %v1522 = vpop.permute.xlu0 %1521
    %v1524 = vsel %vm360, %v1520, 0
    %v1527 = vsel %vm360, %v1522, 0
    %1529 = vmatprep.subr.bf16.mxu0 0
    %1530 = vmatpush1.bf16.xpose.msra.mxu0 %v1527
    %1531 = vmatprep.subr.bf16.mxu0 0
    %1532 = vmatpush1.bf16.xpose.msra.mxu0 0
    %1533 = vmatprep.subr.bf16.mxu0 0
    %1534 = vmatpush1.bf16.xpose.msra.mxu0 0
    %1535 = vmatprep.subr.bf16.mxu0 0
    %1536 = vmatpush1.bf16.xpose.msra.mxu0 0
    %1537 = vmatprep.subr.bf16.mxu0 0
    %1538 = vmatpush1.bf16.xpose.msra.mxu0 0
    %1539 = vmatprep.subr.bf16.mxu0 0
    %1540 = vmatpush1.bf16.xpose.msra.mxu0 0
    %1541 = vmatprep.subr.bf16.mxu0 0
    %1542 = vmatpush1.bf16.xpose.msra.mxu0 0
    %1543 = vmatprep.subr.bf16.mxu0 0
    %1544 = vmatpush1.bf16.xpose.msra.mxu0 0
    %1545 = vmatprep.subr.bf16.mxu0 0
    %1546 = vmatpush1.bf16.xpose.msra.mxu0 0
    %1547 = vmatprep.subr.bf16.mxu0 0
    %1548 = vmatpush1.bf16.xpose.msra.mxu0 0
    %1549 = vmatprep.subr.bf16.mxu0 0
    %1550 = vmatpush1.bf16.xpose.msra.mxu0 0
    %1551 = vmatprep.subr.bf16.mxu0 0
    %1552 = vmatpush1.bf16.xpose.msra.mxu0 0
    %1553 = vmatprep.subr.bf16.mxu0 0
    %1554 = vmatpush1.bf16.xpose.msra.mxu0 0
    %1555 = vmatprep.subr.bf16.mxu0 0
    %1556 = vmatpush1.bf16.xpose.msra.mxu0 0
    %1557 = vmatprep.subr.bf16.mxu0 0
    %1558 = vmatpush1.bf16.xpose.msra.mxu0 0
    %1559 = vmatprep.subr.bf16.mxu0 0
    %1560 = vmatpush1.bf16.xpose.msra.mxu0 0
    %1561 = vmatprep.mubr.bf16.mxu0 0
    %1562 = vmatmul.mubr.bf16.gmra.mrb[0].mxu0 %v1524
    %v1563 = vpop.f32.mrb[0].mxu0
    %v1564 = vadd.f32 %v1364, %v1563
    %v1565 = vpop.f32.mrb[0].mxu0
    %v1566 = vpop.f32.mrb[0].mxu0
    %v1567 = vadd.f32 %v1365, %v1566
    %v1568 = vpop.f32.mrb[0].mxu0
    %1569 = vdwg.mxu0
    %v1570 = vsel %vm558, %v1411, -inf
    %1571 = vmax.xlane.f32.xlu0 %v1570
    %v1572 = vpop.xlane.xlu0 %1571
    %v1573 = vsel %vm558, %v1414, -inf
    %1574 = vmax.xlane.f32.xlu0 %v1573
    %v1575 = vpop.xlane.xlu0 %1574
    %v1576 = vsel %vm558, %v1462, -inf
    %1577 = vmax.xlane.f32.xlu0 %v1576
    %v1578 = vpop.xlane.xlu0 %1577
    %v1579 = vsel %vm558, %v1465, -inf
    %1580 = vmax.xlane.f32.xlu0 %v1579
    %v1581 = vpop.xlane.xlu0 %1580
    %v1582 = vsel %vm558, %v1513, -inf
    %1583 = vmax.xlane.f32.xlu0 %v1582
    %v1584 = vpop.xlane.xlu0 %1583
    %v1585 = vsel %vm558, %v1516, -inf
    %1586 = vmax.xlane.f32.xlu0 %v1585
    %v1587 = vpop.xlane.xlu0 %1586
    %v1588 = vsel %vm558, %v1564, -inf
    %1589 = vmax.xlane.f32.xlu0 %v1588
    %v1590 = vpop.xlane.xlu0 %1589
    %v1591 = vsel %vm558, %v1567, -inf
    %1592 = vmax.xlane.f32.xlu0 %v1591
    %v1593 = vpop.xlane.xlu0 %1592
    %v1594 = vsub.f32 %v1411, %v1572
    %v1595 = vsub.f32 %v1414, %v1575
    %v1596 = vsub.f32 %v1462, %v1578
    %v1597 = vsub.f32 %v1465, %v1581
    %v1598 = vsub.f32 %v1513, %v1584
    %v1599 = vsub.f32 %v1516, %v1587
    %v1600 = vsub.f32 %v1564, %v1590
    %v1601 = vsub.f32 %v1567, %v1593
    %v1602 = vmul.f32 %v1594, 1.442695
    %v1603 = vpow.pop %v1602
    %v1604 = vmul.f32 %v1595, 1.442695
    %v1605 = vpow.pop %v1604
    %v1606 = vmul.f32 %v1596, 1.442695
    %v1607 = vpow.pop %v1606
    %v1608 = vmul.f32 %v1597, 1.442695
    %v1609 = vpow.pop %v1608
    %v1610 = vmul.f32 %v1598, 1.442695
    %v1611 = vpow.pop %v1610
    %v1612 = vmul.f32 %v1599, 1.442695
    %v1613 = vpow.pop %v1612
    %v1614 = vmul.f32 %v1600, 1.442695
    %v1615 = vpow.pop %v1614
    %v1616 = vmul.f32 %v1601, 1.442695
    %v1617 = vpow.pop %v1616
    %v1618 = vsel %vm558, %v1603, 0.0
    %1619 = vadd.xlane.f32.xlu0 %v1618
    %v1620 = vpop.xlane.xlu0 %1619
    %v1621 = vsel %vm558, %v1605, 0.0
    %1622 = vadd.xlane.f32.xlu0 %v1621
    %v1623 = vpop.xlane.xlu0 %1622
    %v1624 = vsel %vm558, %v1607, 0.0
    %1625 = vadd.xlane.f32.xlu0 %v1624
    %v1626 = vpop.xlane.xlu0 %1625
    %v1627 = vsel %vm558, %v1609, 0.0
    %1628 = vadd.xlane.f32.xlu0 %v1627
    %v1629 = vpop.xlane.xlu0 %1628
    %v1630 = vsel %vm558, %v1611, 0.0
    %1631 = vadd.xlane.f32.xlu0 %v1630
    %v1632 = vpop.xlane.xlu0 %1631
    %v1633 = vsel %vm558, %v1613, 0.0
    %1634 = vadd.xlane.f32.xlu0 %v1633
    %v1635 = vpop.xlane.xlu0 %1634
    %v1636 = vsel %vm558, %v1615, 0.0
    %1637 = vadd.xlane.f32.xlu0 %v1636
    %v1638 = vpop.xlane.xlu0 %1637
    %v1639 = vsel %vm558, %v1617, 0.0
    %1640 = vadd.xlane.f32.xlu0 %v1639
    %v1641 = vpop.xlane.xlu0 %1640
    %v1642 = vrcp.pop %v1620
    %v1643 = vrcp.pop %v1623
    %v1644 = vrcp.pop %v1626
    %v1645 = vrcp.pop %v1629
    %v1646 = vrcp.pop %v1632
    %v1647 = vrcp.pop %v1635
    %v1648 = vrcp.pop %v1638
    %v1649 = vrcp.pop %v1641
    %v1650 = vmul.f32 %v1603, %v1642
    %v1651 = vmul.f32 %v1605, %v1643
    %v1652 = vmul.f32 %v1607, %v1644
    %v1653 = vmul.f32 %v1609, %v1645
    %v1654 = vmul.f32 %v1611, %v1646
    %v1655 = vmul.f32 %v1613, %v1647
    %v1656 = vmul.f32 %v1615, %v1648
    %v1657 = vmul.f32 %v1617, %v1649
    %v1658 = vpack.c.bf16 %v1651, %v1650
    %v1659 = vpack.c.bf16 %v1653, %v1652
    %v1660 = vpack.c.bf16 %v1655, %v1654
    %v1661 = vpack.c.bf16 %v1657, %v1656
    %1662 = vrot.lane.b32.xlu0 %v349, 48
    %v1663 = vpop.permute.xlu0 %1662
    %v1666 = vsel %vm558, %v1658, 0
    %1668 = vmatprep.subr.bf16.mxu0 0
    %1669 = vmatpush1.bf16.msra.mxu0 %v1663
    %1670 = vmatprep.subr.bf16.mxu0 0
    %1671 = vmatpush1.bf16.msra.mxu0 0
    %1672 = vmatprep.subr.bf16.mxu0 0
    %1673 = vmatpush1.bf16.msra.mxu0 0
    %1674 = vmatprep.subr.bf16.mxu0 0
    %1675 = vmatpush1.bf16.msra.mxu0 0
    %1676 = vmatprep.subr.bf16.mxu0 0
    %1677 = vmatpush1.bf16.msra.mxu0 0
    %1678 = vmatprep.subr.bf16.mxu0 0
    %1679 = vmatpush1.bf16.msra.mxu0 0
    %1680 = vmatprep.subr.bf16.mxu0 0
    %1681 = vmatpush1.bf16.msra.mxu0 0
    %1682 = vmatprep.subr.bf16.mxu0 0
    %1683 = vmatpush1.bf16.msra.mxu0 0
    %1684 = vmatprep.subr.bf16.mxu0 0
    %1685 = vmatpush1.bf16.msra.mxu0 0
    %1686 = vmatprep.subr.bf16.mxu0 0
    %1687 = vmatpush1.bf16.msra.mxu0 0
    %1688 = vmatprep.subr.bf16.mxu0 0
    %1689 = vmatpush1.bf16.msra.mxu0 0
    %1690 = vmatprep.subr.bf16.mxu0 0
    %1691 = vmatpush1.bf16.msra.mxu0 0
    %1692 = vmatprep.subr.bf16.mxu0 0
    %1693 = vmatpush1.bf16.msra.mxu0 0
    %1694 = vmatprep.subr.bf16.mxu0 0
    %1695 = vmatpush1.bf16.msra.mxu0 0
    %1696 = vmatprep.subr.bf16.mxu0 0
    %1697 = vmatpush1.bf16.msra.mxu0 0
    %1698 = vmatprep.subr.bf16.mxu0 0
    %1699 = vmatpush1.bf16.msra.mxu0 0
    %1700 = vmatprep.mubr.bf16.mxu0 0
    %1701 = vmatmul.mubr.bf16.gmra.mrb[0].mxu0 %v1666
    %v1702 = vpop.f32.mrb[0].mxu0
    %v1703 = vadd.f32 0.0, %v1702
    %v1704 = vpop.f32.mrb[0].mxu0
    %v1705 = vpop.f32.mrb[0].mxu0
    %v1706 = vadd.f32 0.0, %v1705
    %v1707 = vpop.f32.mrb[0].mxu0
    %1708 = vdwg.mxu0
    %1709 = vrot.lane.b32.xlu0 %v350, 48
    %v1710 = vpop.permute.xlu0 %1709
    %v1713 = vsel %vm558, %v1659, 0
    %1715 = vmatprep.subr.bf16.mxu0 0
    %1716 = vmatpush1.bf16.msra.mxu0 %v1710
    %1717 = vmatprep.subr.bf16.mxu0 0
    %1718 = vmatpush1.bf16.msra.mxu0 0
    %1719 = vmatprep.subr.bf16.mxu0 0
    %1720 = vmatpush1.bf16.msra.mxu0 0
    %1721 = vmatprep.subr.bf16.mxu0 0
    %1722 = vmatpush1.bf16.msra.mxu0 0
    %1723 = vmatprep.subr.bf16.mxu0 0
    %1724 = vmatpush1.bf16.msra.mxu0 0
    %1725 = vmatprep.subr.bf16.mxu0 0
    %1726 = vmatpush1.bf16.msra.mxu0 0
    %1727 = vmatprep.subr.bf16.mxu0 0
    %1728 = vmatpush1.bf16.msra.mxu0 0
    %1729 = vmatprep.subr.bf16.mxu0 0
    %1730 = vmatpush1.bf16.msra.mxu0 0
    %1731 = vmatprep.subr.bf16.mxu0 0
    %1732 = vmatpush1.bf16.msra.mxu0 0
    %1733 = vmatprep.subr.bf16.mxu0 0
    %1734 = vmatpush1.bf16.msra.mxu0 0
    %1735 = vmatprep.subr.bf16.mxu0 0
    %1736 = vmatpush1.bf16.msra.mxu0 0
    %1737 = vmatprep.subr.bf16.mxu0 0
    %1738 = vmatpush1.bf16.msra.mxu0 0
    %1739 = vmatprep.subr.bf16.mxu0 0
    %1740 = vmatpush1.bf16.msra.mxu0 0
    %1741 = vmatprep.subr.bf16.mxu0 0
    %1742 = vmatpush1.bf16.msra.mxu0 0
    %1743 = vmatprep.subr.bf16.mxu0 0
    %1744 = vmatpush1.bf16.msra.mxu0 0
    %1745 = vmatprep.subr.bf16.mxu0 0
    %1746 = vmatpush1.bf16.msra.mxu0 0
    %1747 = vmatprep.mubr.bf16.mxu0 0
    %1748 = vmatmul.mubr.bf16.gmra.mrb[0].mxu0 %v1713
    %v1749 = vpop.f32.mrb[0].mxu0
    %v1750 = vadd.f32 0.0, %v1749
    %v1751 = vpop.f32.mrb[0].mxu0
    %v1752 = vpop.f32.mrb[0].mxu0
    %v1753 = vadd.f32 0.0, %v1752
    %v1754 = vpop.f32.mrb[0].mxu0
    %1755 = vdwg.mxu0
    %1756 = vrot.lane.b32.xlu0 %v351, 48
    %v1757 = vpop.permute.xlu0 %1756
    %v1760 = vsel %vm558, %v1660, 0
    %1762 = vmatprep.subr.bf16.mxu0 0
    %1763 = vmatpush1.bf16.msra.mxu0 %v1757
    %1764 = vmatprep.subr.bf16.mxu0 0
    %1765 = vmatpush1.bf16.msra.mxu0 0
    %1766 = vmatprep.subr.bf16.mxu0 0
    %1767 = vmatpush1.bf16.msra.mxu0 0
    %1768 = vmatprep.subr.bf16.mxu0 0
    %1769 = vmatpush1.bf16.msra.mxu0 0
    %1770 = vmatprep.subr.bf16.mxu0 0
    %1771 = vmatpush1.bf16.msra.mxu0 0
    %1772 = vmatprep.subr.bf16.mxu0 0
    %1773 = vmatpush1.bf16.msra.mxu0 0
    %1774 = vmatprep.subr.bf16.mxu0 0
    %1775 = vmatpush1.bf16.msra.mxu0 0
    %1776 = vmatprep.subr.bf16.mxu0 0
    %1777 = vmatpush1.bf16.msra.mxu0 0
    %1778 = vmatprep.subr.bf16.mxu0 0
    %1779 = vmatpush1.bf16.msra.mxu0 0
    %1780 = vmatprep.subr.bf16.mxu0 0
    %1781 = vmatpush1.bf16.msra.mxu0 0
    %1782 = vmatprep.subr.bf16.mxu0 0
    %1783 = vmatpush1.bf16.msra.mxu0 0
    %1784 = vmatprep.subr.bf16.mxu0 0
    %1785 = vmatpush1.bf16.msra.mxu0 0
    %1786 = vmatprep.subr.bf16.mxu0 0
    %1787 = vmatpush1.bf16.msra.mxu0 0
    %1788 = vmatprep.subr.bf16.mxu0 0
    %1789 = vmatpush1.bf16.msra.mxu0 0
    %1790 = vmatprep.subr.bf16.mxu0 0
    %1791 = vmatpush1.bf16.msra.mxu0 0
    %1792 = vmatprep.subr.bf16.mxu0 0
    %1793 = vmatpush1.bf16.msra.mxu0 0
    %1794 = vmatprep.mubr.bf16.mxu0 0
    %1795 = vmatmul.mubr.bf16.gmra.mrb[0].mxu0 %v1760
    %v1796 = vpop.f32.mrb[0].mxu0
    %v1797 = vadd.f32 0.0, %v1796
    %v1798 = vpop.f32.mrb[0].mxu0
    %v1799 = vpop.f32.mrb[0].mxu0
    %v1800 = vadd.f32 0.0, %v1799
    %v1801 = vpop.f32.mrb[0].mxu0
    %1802 = vdwg.mxu0
    %1803 = vrot.lane.b32.xlu0 %v352, 48
    %v1804 = vpop.permute.xlu0 %1803
    %v1807 = vsel %vm558, %v1661, 0
    %1809 = vmatprep.subr.bf16.mxu0 0
    %1810 = vmatpush1.bf16.msra.mxu0 %v1804
    %1811 = vmatprep.subr.bf16.mxu0 0
    %1812 = vmatpush1.bf16.msra.mxu0 0
    %1813 = vmatprep.subr.bf16.mxu0 0
    %1814 = vmatpush1.bf16.msra.mxu0 0
    %1815 = vmatprep.subr.bf16.mxu0 0
    %1816 = vmatpush1.bf16.msra.mxu0 0
    %1817 = vmatprep.subr.bf16.mxu0 0
    %1818 = vmatpush1.bf16.msra.mxu0 0
    %1819 = vmatprep.subr.bf16.mxu0 0
    %1820 = vmatpush1.bf16.msra.mxu0 0
    %1821 = vmatprep.subr.bf16.mxu0 0
    %1822 = vmatpush1.bf16.msra.mxu0 0
    %1823 = vmatprep.subr.bf16.mxu0 0
    %1824 = vmatpush1.bf16.msra.mxu0 0
    %1825 = vmatprep.subr.bf16.mxu0 0
    %1826 = vmatpush1.bf16.msra.mxu0 0
    %1827 = vmatprep.subr.bf16.mxu0 0
    %1828 = vmatpush1.bf16.msra.mxu0 0
    %1829 = vmatprep.subr.bf16.mxu0 0
    %1830 = vmatpush1.bf16.msra.mxu0 0
    %1831 = vmatprep.subr.bf16.mxu0 0
    %1832 = vmatpush1.bf16.msra.mxu0 0
    %1833 = vmatprep.subr.bf16.mxu0 0
    %1834 = vmatpush1.bf16.msra.mxu0 0
    %1835 = vmatprep.subr.bf16.mxu0 0
    %1836 = vmatpush1.bf16.msra.mxu0 0
    %1837 = vmatprep.subr.bf16.mxu0 0
    %1838 = vmatpush1.bf16.msra.mxu0 0
    %1839 = vmatprep.subr.bf16.mxu0 0
    %1840 = vmatpush1.bf16.msra.mxu0 0
    %1841 = vmatprep.mubr.bf16.mxu0 0
    %1842 = vmatmul.mubr.bf16.gmra.mrb[0].mxu0 %v1807
    %v1843 = vpop.f32.mrb[0].mxu0
    %v1844 = vadd.f32 0.0, %v1843
    %v1845 = vpop.f32.mrb[0].mxu0
    %v1846 = vpop.f32.mrb[0].mxu0
    %v1847 = vadd.f32 0.0, %v1846
    %v1848 = vpop.f32.mrb[0].mxu0
    %1849 = vdwg.mxu0
    %v1850 = vpack.c.bf16 %v1706, %v1703
    %v1851 = vpack.c.bf16 %v1753, %v1750
    %v1852 = vpack.c.bf16 %v1800, %v1797
    %v1853 = vpack.c.bf16 %v1847, %v1844
    %1858 = vrot.lane.b32.xlu0 %v1850, 16
    %v1859 = vpop.permute.xlu0 %1858
    %1860 = vrot.lane.b32.xlu0 %v1851, 16
    %v1861 = vpop.permute.xlu0 %1860
    %1862 = vrot.lane.b32.xlu0 %v1852, 16
    %v1863 = vpop.permute.xlu0 %1862
    %1864 = vrot.lane.b32.xlu0 %v1853, 16
    %v1865 = vpop.permute.xlu0 %1864
    %vm1870 = vcmask 195712
    %1871 = vst.msk [vmem:[#allocation2] sm:$0xff] %vm1870, %v1859
    %1872 = vst.msk [vmem:[#allocation2 + $0x8] sm:$0xff] %vm1870, %v1861
    %1873 = vst.msk [vmem:[#allocation2 + $0x10] sm:$0xff] %vm1870, %v1863
    %1874 = vst.msk [vmem:[#allocation2 + $0x18] sm:$0xff] %vm1870, %v1865
    %s1875 = scalar_lea.vmem [#allocation3], 24
    %v1876 = vld [vmem:[%s1875] sm:$0xf]
    %v1877 = vld [vmem:[%s1875 + $0x4] sm:$0xf]
    %v1878 = vunpack.c.l.bf16 %v1876
    %v1879 = vunpack.c.l.bf16 %v1877
    %1880 = vrot.lane.b32.xlu0 %v349, 104
    %v1881 = vpop.permute.xlu0 %1880
    %1882 = vrot.lane.b32.xlu0 %v349, 72
    %v1883 = vpop.permute.xlu0 %1882
    %v1885 = vsel %vm360, %v1881, 0
    %v1888 = vsel %vm360, %v1883, 0
    %1890 = vmatprep.subr.bf16.mxu0 0
    %1891 = vmatpush1.bf16.xpose.msra.mxu0 %v1888
    %1892 = vmatprep.subr.bf16.mxu0 0
    %1893 = vmatpush1.bf16.xpose.msra.mxu0 0
    %1894 = vmatprep.subr.bf16.mxu0 0
    %1895 = vmatpush1.bf16.xpose.msra.mxu0 0
    %1896 = vmatprep.subr.bf16.mxu0 0
    %1897 = vmatpush1.bf16.xpose.msra.mxu0 0
    %1898 = vmatprep.subr.bf16.mxu0 0
    %1899 = vmatpush1.bf16.xpose.msra.mxu0 0
    %1900 = vmatprep.subr.bf16.mxu0 0
    %1901 = vmatpush1.bf16.xpose.msra.mxu0 0
    %1902 = vmatprep.subr.bf16.mxu0 0
    %1903 = vmatpush1.bf16.xpose.msra.mxu0 0
    %1904 = vmatprep.subr.bf16.mxu0 0
    %1905 = vmatpush1.bf16.xpose.msra.mxu0 0
    %1906 = vmatprep.subr.bf16.mxu0 0
    %1907 = vmatpush1.bf16.xpose.msra.mxu0 0
    %1908 = vmatprep.subr.bf16.mxu0 0
    %1909 = vmatpush1.bf16.xpose.msra.mxu0 0
    %1910 = vmatprep.subr.bf16.mxu0 0
    %1911 = vmatpush1.bf16.xpose.msra.mxu0 0
    %1912 = vmatprep.subr.bf16.mxu0 0
    %1913 = vmatpush1.bf16.xpose.msra.mxu0 0
    %1914 = vmatprep.subr.bf16.mxu0 0
    %1915 = vmatpush1.bf16.xpose.msra.mxu0 0
    %1916 = vmatprep.subr.bf16.mxu0 0
    %1917 = vmatpush1.bf16.xpose.msra.mxu0 0
    %1918 = vmatprep.subr.bf16.mxu0 0
    %1919 = vmatpush1.bf16.xpose.msra.mxu0 0
    %1920 = vmatprep.subr.bf16.mxu0 0
    %1921 = vmatpush1.bf16.xpose.msra.mxu0 0
    %1922 = vmatprep.mubr.bf16.mxu0 0
    %1923 = vmatmul.mubr.bf16.gmra.mrb[0].mxu0 %v1885
    %v1924 = vpop.f32.mrb[0].mxu0
    %v1925 = vadd.f32 %v1878, %v1924
    %v1926 = vpop.f32.mrb[0].mxu0
    %v1927 = vpop.f32.mrb[0].mxu0
    %v1928 = vadd.f32 %v1879, %v1927
    %v1929 = vpop.f32.mrb[0].mxu0
    %1930 = vdwg.mxu0
    %1931 = vrot.lane.b32.xlu0 %v350, 104
    %v1932 = vpop.permute.xlu0 %1931
    %1933 = vrot.lane.b32.xlu0 %v350, 72
    %v1934 = vpop.permute.xlu0 %1933
    %v1936 = vsel %vm360, %v1932, 0
    %v1939 = vsel %vm360, %v1934, 0
    %1941 = vmatprep.subr.bf16.mxu0 0
    %1942 = vmatpush1.bf16.xpose.msra.mxu0 %v1939
    %1943 = vmatprep.subr.bf16.mxu0 0
    %1944 = vmatpush1.bf16.xpose.msra.mxu0 0
    %1945 = vmatprep.subr.bf16.mxu0 0
    %1946 = vmatpush1.bf16.xpose.msra.mxu0 0
    %1947 = vmatprep.subr.bf16.mxu0 0
    %1948 = vmatpush1.bf16.xpose.msra.mxu0 0
    %1949 = vmatprep.subr.bf16.mxu0 0
    %1950 = vmatpush1.bf16.xpose.msra.mxu0 0
    %1951 = vmatprep.subr.bf16.mxu0 0
    %1952 = vmatpush1.bf16.xpose.msra.mxu0 0
    %1953 = vmatprep.subr.bf16.mxu0 0
    %1954 = vmatpush1.bf16.xpose.msra.mxu0 0
    %1955 = vmatprep.subr.bf16.mxu0 0
    %1956 = vmatpush1.bf16.xpose.msra.mxu0 0
    %1957 = vmatprep.subr.bf16.mxu0 0
    %1958 = vmatpush1.bf16.xpose.msra.mxu0 0
    %1959 = vmatprep.subr.bf16.mxu0 0
    %1960 = vmatpush1.bf16.xpose.msra.mxu0 0
    %1961 = vmatprep.subr.bf16.mxu0 0
    %1962 = vmatpush1.bf16.xpose.msra.mxu0 0
    %1963 = vmatprep.subr.bf16.mxu0 0
    %1964 = vmatpush1.bf16.xpose.msra.mxu0 0
    %1965 = vmatprep.subr.bf16.mxu0 0
    %1966 = vmatpush1.bf16.xpose.msra.mxu0 0
    %1967 = vmatprep.subr.bf16.mxu0 0
    %1968 = vmatpush1.bf16.xpose.msra.mxu0 0
    %1969 = vmatprep.subr.bf16.mxu0 0
    %1970 = vmatpush1.bf16.xpose.msra.mxu0 0
    %1971 = vmatprep.subr.bf16.mxu0 0
    %1972 = vmatpush1.bf16.xpose.msra.mxu0 0
    %1973 = vmatprep.mubr.bf16.mxu0 0
    %1974 = vmatmul.mubr.bf16.gmra.mrb[0].mxu0 %v1936
    %v1975 = vpop.f32.mrb[0].mxu0
    %v1976 = vadd.f32 %v1878, %v1975
    %v1977 = vpop.f32.mrb[0].mxu0
    %v1978 = vpop.f32.mrb[0].mxu0
    %v1979 = vadd.f32 %v1879, %v1978
    %v1980 = vpop.f32.mrb[0].mxu0
    %1981 = vdwg.mxu0
    %1982 = vrot.lane.b32.xlu0 %v351, 104
    %v1983 = vpop.permute.xlu0 %1982
    %1984 = vrot.lane.b32.xlu0 %v351, 72
    %v1985 = vpop.permute.xlu0 %1984
    %v1987 = vsel %vm360, %v1983, 0
    %v1990 = vsel %vm360, %v1985, 0
    %1992 = vmatprep.subr.bf16.mxu0 0
    %1993 = vmatpush1.bf16.xpose.msra.mxu0 %v1990
    %1994 = vmatprep.subr.bf16.mxu0 0
    %1995 = vmatpush1.bf16.xpose.msra.mxu0 0
    %1996 = vmatprep.subr.bf16.mxu0 0
    %1997 = vmatpush1.bf16.xpose.msra.mxu0 0
    %1998 = vmatprep.subr.bf16.mxu0 0
    %1999 = vmatpush1.bf16.xpose.msra.mxu0 0
    %2000 = vmatprep.subr.bf16.mxu0 0
    %2001 = vmatpush1.bf16.xpose.msra.mxu0 0
    %2002 = vmatprep.subr.bf16.mxu0 0
    %2003 = vmatpush1.bf16.xpose.msra.mxu0 0
    %2004 = vmatprep.subr.bf16.mxu0 0
    %2005 = vmatpush1.bf16.xpose.msra.mxu0 0
    %2006 = vmatprep.subr.bf16.mxu0 0
    %2007 = vmatpush1.bf16.xpose.msra.mxu0 0
    %2008 = vmatprep.subr.bf16.mxu0 0
    %2009 = vmatpush1.bf16.xpose.msra.mxu0 0
    %2010 = vmatprep.subr.bf16.mxu0 0
    %2011 = vmatpush1.bf16.xpose.msra.mxu0 0
    %2012 = vmatprep.subr.bf16.mxu0 0
    %2013 = vmatpush1.bf16.xpose.msra.mxu0 0
    %2014 = vmatprep.subr.bf16.mxu0 0
    %2015 = vmatpush1.bf16.xpose.msra.mxu0 0
    %2016 = vmatprep.subr.bf16.mxu0 0
    %2017 = vmatpush1.bf16.xpose.msra.mxu0 0
    %2018 = vmatprep.subr.bf16.mxu0 0
    %2019 = vmatpush1.bf16.xpose.msra.mxu0 0
    %2020 = vmatprep.subr.bf16.mxu0 0
    %2021 = vmatpush1.bf16.xpose.msra.mxu0 0
    %2022 = vmatprep.subr.bf16.mxu0 0
    %2023 = vmatpush1.bf16.xpose.msra.mxu0 0
    %2024 = vmatprep.mubr.bf16.mxu0 0
    %2025 = vmatmul.mubr.bf16.gmra.mrb[0].mxu0 %v1987
    %v2026 = vpop.f32.mrb[0].mxu0
    %v2027 = vadd.f32 %v1878, %v2026
    %v2028 = vpop.f32.mrb[0].mxu0
    %v2029 = vpop.f32.mrb[0].mxu0
    %v2030 = vadd.f32 %v1879, %v2029
    %v2031 = vpop.f32.mrb[0].mxu0
    %2032 = vdwg.mxu0
    %2033 = vrot.lane.b32.xlu0 %v352, 104
    %v2034 = vpop.permute.xlu0 %2033
    %2035 = vrot.lane.b32.xlu0 %v352, 72
    %v2036 = vpop.permute.xlu0 %2035
    %v2038 = vsel %vm360, %v2034, 0
    %v2041 = vsel %vm360, %v2036, 0
    %2043 = vmatprep.subr.bf16.mxu0 0
    %2044 = vmatpush1.bf16.xpose.msra.mxu0 %v2041
    %2045 = vmatprep.subr.bf16.mxu0 0
    %2046 = vmatpush1.bf16.xpose.msra.mxu0 0
    %2047 = vmatprep.subr.bf16.mxu0 0
    %2048 = vmatpush1.bf16.xpose.msra.mxu0 0
    %2049 = vmatprep.subr.bf16.mxu0 0
    %2050 = vmatpush1.bf16.xpose.msra.mxu0 0
    %2051 = vmatprep.subr.bf16.mxu0 0
    %2052 = vmatpush1.bf16.xpose.msra.mxu0 0
    %2053 = vmatprep.subr.bf16.mxu0 0
    %2054 = vmatpush1.bf16.xpose.msra.mxu0 0
    %2055 = vmatprep.subr.bf16.mxu0 0
    %2056 = vmatpush1.bf16.xpose.msra.mxu0 0
    %2057 = vmatprep.subr.bf16.mxu0 0
    %2058 = vmatpush1.bf16.xpose.msra.mxu0 0
    %2059 = vmatprep.subr.bf16.mxu0 0
    %2060 = vmatpush1.bf16.xpose.msra.mxu0 0
    %2061 = vmatprep.subr.bf16.mxu0 0
    %2062 = vmatpush1.bf16.xpose.msra.mxu0 0
    %2063 = vmatprep.subr.bf16.mxu0 0
    %2064 = vmatpush1.bf16.xpose.msra.mxu0 0
    %2065 = vmatprep.subr.bf16.mxu0 0
    %2066 = vmatpush1.bf16.xpose.msra.mxu0 0
    %2067 = vmatprep.subr.bf16.mxu0 0
    %2068 = vmatpush1.bf16.xpose.msra.mxu0 0
    %2069 = vmatprep.subr.bf16.mxu0 0
    %2070 = vmatpush1.bf16.xpose.msra.mxu0 0
    %2071 = vmatprep.subr.bf16.mxu0 0
    %2072 = vmatpush1.bf16.xpose.msra.mxu0 0
    %2073 = vmatprep.subr.bf16.mxu0 0
    %2074 = vmatpush1.bf16.xpose.msra.mxu0 0
    %2075 = vmatprep.mubr.bf16.mxu0 0
    %2076 = vmatmul.mubr.bf16.gmra.mrb[0].mxu0 %v2038
    %v2077 = vpop.f32.mrb[0].mxu0
    %v2078 = vadd.f32 %v1878, %v2077
    %v2079 = vpop.f32.mrb[0].mxu0
    %v2080 = vpop.f32.mrb[0].mxu0
    %v2081 = vadd.f32 %v1879, %v2080
    %v2082 = vpop.f32.mrb[0].mxu0
    %2083 = vdwg.mxu0
    %v2084 = vsel %vm558, %v1925, -inf
    %2085 = vmax.xlane.f32.xlu0 %v2084
    %v2086 = vpop.xlane.xlu0 %2085
    %v2087 = vsel %vm558, %v1928, -inf
    %2088 = vmax.xlane.f32.xlu0 %v2087
    %v2089 = vpop.xlane.xlu0 %2088
    %v2090 = vsel %vm558, %v1976, -inf
    %2091 = vmax.xlane.f32.xlu0 %v2090
    %v2092 = vpop.xlane.xlu0 %2091
    %v2093 = vsel %vm558, %v1979, -inf
    %2094 = vmax.xlane.f32.xlu0 %v2093
    %v2095 = vpop.xlane.xlu0 %2094
    %v2096 = vsel %vm558, %v2027, -inf
    %2097 = vmax.xlane.f32.xlu0 %v2096
    %v2098 = vpop.xlane.xlu0 %2097
    %v2099 = vsel %vm558, %v2030, -inf
    %2100 = vmax.xlane.f32.xlu0 %v2099
    %v2101 = vpop.xlane.xlu0 %2100
    %v2102 = vsel %vm558, %v2078, -inf
    %2103 = vmax.xlane.f32.xlu0 %v2102
    %v2104 = vpop.xlane.xlu0 %2103
    %v2105 = vsel %vm558, %v2081, -inf
    %2106 = vmax.xlane.f32.xlu0 %v2105
    %v2107 = vpop.xlane.xlu0 %2106
    %v2108 = vsub.f32 %v1925, %v2086
    %v2109 = vsub.f32 %v1928, %v2089
    %v2110 = vsub.f32 %v1976, %v2092
    %v2111 = vsub.f32 %v1979, %v2095
    %v2112 = vsub.f32 %v2027, %v2098
    %v2113 = vsub.f32 %v2030, %v2101
    %v2114 = vsub.f32 %v2078, %v2104
    %v2115 = vsub.f32 %v2081, %v2107
    %v2116 = vmul.f32 %v2108, 1.442695
    %v2117 = vpow.pop %v2116
    %v2118 = vmul.f32 %v2109, 1.442695
    %v2119 = vpow.pop %v2118
    %v2120 = vmul.f32 %v2110, 1.442695
    %v2121 = vpow.pop %v2120
    %v2122 = vmul.f32 %v2111, 1.442695
    %v2123 = vpow.pop %v2122
    %v2124 = vmul.f32 %v2112, 1.442695
    %v2125 = vpow.pop %v2124
    %v2126 = vmul.f32 %v2113, 1.442695
    %v2127 = vpow.pop %v2126
    %v2128 = vmul.f32 %v2114, 1.442695
    %v2129 = vpow.pop %v2128
    %v2130 = vmul.f32 %v2115, 1.442695
    %v2131 = vpow.pop %v2130
    %v2132 = vsel %vm558, %v2117, 0.0
    %2133 = vadd.xlane.f32.xlu0 %v2132
    %v2134 = vpop.xlane.xlu0 %2133
    %v2135 = vsel %vm558, %v2119, 0.0
    %2136 = vadd.xlane.f32.xlu0 %v2135
    %v2137 = vpop.xlane.xlu0 %2136
    %v2138 = vsel %vm558, %v2121, 0.0
    %2139 = vadd.xlane.f32.xlu0 %v2138
    %v2140 = vpop.xlane.xlu0 %2139
    %v2141 = vsel %vm558, %v2123, 0.0
    %2142 = vadd.xlane.f32.xlu0 %v2141
    %v2143 = vpop.xlane.xlu0 %2142
    %v2144 = vsel %vm558, %v2125, 0.0
    %2145 = vadd.xlane.f32.xlu0 %v2144
    %v2146 = vpop.xlane.xlu0 %2145
    %v2147 = vsel %vm558, %v2127, 0.0
    %2148 = vadd.xlane.f32.xlu0 %v2147
    %v2149 = vpop.xlane.xlu0 %2148
    %v2150 = vsel %vm558, %v2129, 0.0
    %2151 = vadd.xlane.f32.xlu0 %v2150
    %v2152 = vpop.xlane.xlu0 %2151
    %v2153 = vsel %vm558, %v2131, 0.0
    %2154 = vadd.xlane.f32.xlu0 %v2153
    %v2155 = vpop.xlane.xlu0 %2154
    %v2156 = vrcp.pop %v2134
    %v2157 = vrcp.pop %v2137
    %v2158 = vrcp.pop %v2140
    %v2159 = vrcp.pop %v2143
    %v2160 = vrcp.pop %v2146
    %v2161 = vrcp.pop %v2149
    %v2162 = vrcp.pop %v2152
    %v2163 = vrcp.pop %v2155
    %v2164 = vmul.f32 %v2117, %v2156
    %v2165 = vmul.f32 %v2119, %v2157
    %v2166 = vmul.f32 %v2121, %v2158
    %v2167 = vmul.f32 %v2123, %v2159
    %v2168 = vmul.f32 %v2125, %v2160
    %v2169 = vmul.f32 %v2127, %v2161
    %v2170 = vmul.f32 %v2129, %v2162
    %v2171 = vmul.f32 %v2131, %v2163
    %v2172 = vpack.c.bf16 %v2165, %v2164
    %v2173 = vpack.c.bf16 %v2167, %v2166
    %v2174 = vpack.c.bf16 %v2169, %v2168
    %v2175 = vpack.c.bf16 %v2171, %v2170
    %2176 = vrot.lane.b32.xlu0 %v349, 40
    %v2177 = vpop.permute.xlu0 %2176
    %v2180 = vsel %vm558, %v2172, 0
    %2182 = vmatprep.subr.bf16.mxu0 0
    %2183 = vmatpush1.bf16.msra.mxu0 %v2177
    %2184 = vmatprep.subr.bf16.mxu0 0
    %2185 = vmatpush1.bf16.msra.mxu0 0
    %2186 = vmatprep.subr.bf16.mxu0 0
    %2187 = vmatpush1.bf16.msra.mxu0 0
    %2188 = vmatprep.subr.bf16.mxu0 0
    %2189 = vmatpush1.bf16.msra.mxu0 0
    %2190 = vmatprep.subr.bf16.mxu0 0
    %2191 = vmatpush1.bf16.msra.mxu0 0
    %2192 = vmatprep.subr.bf16.mxu0 0
    %2193 = vmatpush1.bf16.msra.mxu0 0
    %2194 = vmatprep.subr.bf16.mxu0 0
    %2195 = vmatpush1.bf16.msra.mxu0 0
    %2196 = vmatprep.subr.bf16.mxu0 0
    %2197 = vmatpush1.bf16.msra.mxu0 0
    %2198 = vmatprep.subr.bf16.mxu0 0
    %2199 = vmatpush1.bf16.msra.mxu0 0
    %2200 = vmatprep.subr.bf16.mxu0 0
    %2201 = vmatpush1.bf16.msra.mxu0 0
    %2202 = vmatprep.subr.bf16.mxu0 0
    %2203 = vmatpush1.bf16.msra.mxu0 0
    %2204 = vmatprep.subr.bf16.mxu0 0
    %2205 = vmatpush1.bf16.msra.mxu0 0
    %2206 = vmatprep.subr.bf16.mxu0 0
    %2207 = vmatpush1.bf16.msra.mxu0 0
    %2208 = vmatprep.subr.bf16.mxu0 0
    %2209 = vmatpush1.bf16.msra.mxu0 0
    %2210 = vmatprep.subr.bf16.mxu0 0
    %2211 = vmatpush1.bf16.msra.mxu0 0
    %2212 = vmatprep.subr.bf16.mxu0 0
    %2213 = vmatpush1.bf16.msra.mxu0 0
    %2214 = vmatprep.mubr.bf16.mxu0 0
    %2215 = vmatmul.mubr.bf16.gmra.mrb[0].mxu0 %v2180
    %v2216 = vpop.f32.mrb[0].mxu0
    %v2217 = vadd.f32 0.0, %v2216
    %v2218 = vpop.f32.mrb[0].mxu0
    %v2219 = vpop.f32.mrb[0].mxu0
    %v2220 = vadd.f32 0.0, %v2219
    %v2221 = vpop.f32.mrb[0].mxu0
    %2222 = vdwg.mxu0
    %2223 = vrot.lane.b32.xlu0 %v350, 40
    %v2224 = vpop.permute.xlu0 %2223
    %v2227 = vsel %vm558, %v2173, 0
    %2229 = vmatprep.subr.bf16.mxu0 0
    %2230 = vmatpush1.bf16.msra.mxu0 %v2224
    %2231 = vmatprep.subr.bf16.mxu0 0
    %2232 = vmatpush1.bf16.msra.mxu0 0
    %2233 = vmatprep.subr.bf16.mxu0 0
    %2234 = vmatpush1.bf16.msra.mxu0 0
    %2235 = vmatprep.subr.bf16.mxu0 0
    %2236 = vmatpush1.bf16.msra.mxu0 0
    %2237 = vmatprep.subr.bf16.mxu0 0
    %2238 = vmatpush1.bf16.msra.mxu0 0
    %2239 = vmatprep.subr.bf16.mxu0 0
    %2240 = vmatpush1.bf16.msra.mxu0 0
    %2241 = vmatprep.subr.bf16.mxu0 0
    %2242 = vmatpush1.bf16.msra.mxu0 0
    %2243 = vmatprep.subr.bf16.mxu0 0
    %2244 = vmatpush1.bf16.msra.mxu0 0
    %2245 = vmatprep.subr.bf16.mxu0 0
    %2246 = vmatpush1.bf16.msra.mxu0 0
    %2247 = vmatprep.subr.bf16.mxu0 0
    %2248 = vmatpush1.bf16.msra.mxu0 0
    %2249 = vmatprep.subr.bf16.mxu0 0
    %2250 = vmatpush1.bf16.msra.mxu0 0
    %2251 = vmatprep.subr.bf16.mxu0 0
    %2252 = vmatpush1.bf16.msra.mxu0 0
    %2253 = vmatprep.subr.bf16.mxu0 0
    %2254 = vmatpush1.bf16.msra.mxu0 0
    %2255 = vmatprep.subr.bf16.mxu0 0
    %2256 = vmatpush1.bf16.msra.mxu0 0
    %2257 = vmatprep.subr.bf16.mxu0 0
    %2258 = vmatpush1.bf16.msra.mxu0 0
    %2259 = vmatprep.subr.bf16.mxu0 0
    %2260 = vmatpush1.bf16.msra.mxu0 0
    %2261 = vmatprep.mubr.bf16.mxu0 0
    %2262 = vmatmul.mubr.bf16.gmra.mrb[0].mxu0 %v2227
    %v2263 = vpop.f32.mrb[0].mxu0
    %v2264 = vadd.f32 0.0, %v2263
    %v2265 = vpop.f32.mrb[0].mxu0
    %v2266 = vpop.f32.mrb[0].mxu0
    %v2267 = vadd.f32 0.0, %v2266
    %v2268 = vpop.f32.mrb[0].mxu0
    %2269 = vdwg.mxu0
    %2270 = vrot.lane.b32.xlu0 %v351, 40
    %v2271 = vpop.permute.xlu0 %2270
    %v2274 = vsel %vm558, %v2174, 0
    %2276 = vmatprep.subr.bf16.mxu0 0
    %2277 = vmatpush1.bf16.msra.mxu0 %v2271
    %2278 = vmatprep.subr.bf16.mxu0 0
    %2279 = vmatpush1.bf16.msra.mxu0 0
    %2280 = vmatprep.subr.bf16.mxu0 0
    %2281 = vmatpush1.bf16.msra.mxu0 0
    %2282 = vmatprep.subr.bf16.mxu0 0
    %2283 = vmatpush1.bf16.msra.mxu0 0
    %2284 = vmatprep.subr.bf16.mxu0 0
    %2285 = vmatpush1.bf16.msra.mxu0 0
    %2286 = vmatprep.subr.bf16.mxu0 0
    %2287 = vmatpush1.bf16.msra.mxu0 0
    %2288 = vmatprep.subr.bf16.mxu0 0
    %2289 = vmatpush1.bf16.msra.mxu0 0
    %2290 = vmatprep.subr.bf16.mxu0 0
    %2291 = vmatpush1.bf16.msra.mxu0 0
    %2292 = vmatprep.subr.bf16.mxu0 0
    %2293 = vmatpush1.bf16.msra.mxu0 0
    %2294 = vmatprep.subr.bf16.mxu0 0
    %2295 = vmatpush1.bf16.msra.mxu0 0
    %2296 = vmatprep.subr.bf16.mxu0 0
    %2297 = vmatpush1.bf16.msra.mxu0 0
    %2298 = vmatprep.subr.bf16.mxu0 0
    %2299 = vmatpush1.bf16.msra.mxu0 0
    %2300 = vmatprep.subr.bf16.mxu0 0
    %2301 = vmatpush1.bf16.msra.mxu0 0
    %2302 = vmatprep.subr.bf16.mxu0 0
    %2303 = vmatpush1.bf16.msra.mxu0 0
    %2304 = vmatprep.subr.bf16.mxu0 0
    %2305 = vmatpush1.bf16.msra.mxu0 0
    %2306 = vmatprep.subr.bf16.mxu0 0
    %2307 = vmatpush1.bf16.msra.mxu0 0
    %2308 = vmatprep.mubr.bf16.mxu0 0
    %2309 = vmatmul.mubr.bf16.gmra.mrb[0].mxu0 %v2274
    %v2310 = vpop.f32.mrb[0].mxu0
    %v2311 = vadd.f32 0.0, %v2310
    %v2312 = vpop.f32.mrb[0].mxu0
    %v2313 = vpop.f32.mrb[0].mxu0
    %v2314 = vadd.f32 0.0, %v2313
    %v2315 = vpop.f32.mrb[0].mxu0
    %2316 = vdwg.mxu0
    %2317 = vrot.lane.b32.xlu0 %v352, 40
    %v2318 = vpop.permute.xlu0 %2317
    %v2321 = vsel %vm558, %v2175, 0
    %2323 = vmatprep.subr.bf16.mxu0 0
    %2324 = vmatpush1.bf16.msra.mxu0 %v2318
    %2325 = vmatprep.subr.bf16.mxu0 0
    %2326 = vmatpush1.bf16.msra.mxu0 0
    %2327 = vmatprep.subr.bf16.mxu0 0
    %2328 = vmatpush1.bf16.msra.mxu0 0
    %2329 = vmatprep.subr.bf16.mxu0 0
    %2330 = vmatpush1.bf16.msra.mxu0 0
    %2331 = vmatprep.subr.bf16.mxu0 0
    %2332 = vmatpush1.bf16.msra.mxu0 0
    %2333 = vmatprep.subr.bf16.mxu0 0
    %2334 = vmatpush1.bf16.msra.mxu0 0
    %2335 = vmatprep.subr.bf16.mxu0 0
    %2336 = vmatpush1.bf16.msra.mxu0 0
    %2337 = vmatprep.subr.bf16.mxu0 0
    %2338 = vmatpush1.bf16.msra.mxu0 0
    %2339 = vmatprep.subr.bf16.mxu0 0
    %2340 = vmatpush1.bf16.msra.mxu0 0
    %2341 = vmatprep.subr.bf16.mxu0 0
    %2342 = vmatpush1.bf16.msra.mxu0 0
    %2343 = vmatprep.subr.bf16.mxu0 0
    %2344 = vmatpush1.bf16.msra.mxu0 0
    %2345 = vmatprep.subr.bf16.mxu0 0
    %2346 = vmatpush1.bf16.msra.mxu0 0
    %2347 = vmatprep.subr.bf16.mxu0 0
    %2348 = vmatpush1.bf16.msra.mxu0 0
    %2349 = vmatprep.subr.bf16.mxu0 0
    %2350 = vmatpush1.bf16.msra.mxu0 0
    %2351 = vmatprep.subr.bf16.mxu0 0
    %2352 = vmatpush1.bf16.msra.mxu0 0
    %2353 = vmatprep.subr.bf16.mxu0 0
    %2354 = vmatpush1.bf16.msra.mxu0 0
    %2355 = vmatprep.mubr.bf16.mxu0 0
    %2356 = vmatmul.mubr.bf16.gmra.mrb[0].mxu0 %v2321
    %v2357 = vpop.f32.mrb[0].mxu0
    %v2358 = vadd.f32 0.0, %v2357
    %v2359 = vpop.f32.mrb[0].mxu0
    %v2360 = vpop.f32.mrb[0].mxu0
    %v2361 = vadd.f32 0.0, %v2360
    %v2362 = vpop.f32.mrb[0].mxu0
    %2363 = vdwg.mxu0
    %v2364 = vpack.c.bf16 %v2220, %v2217
    %v2365 = vpack.c.bf16 %v2267, %v2264
    %v2366 = vpack.c.bf16 %v2314, %v2311
    %v2367 = vpack.c.bf16 %v2361, %v2358
    %2372 = vrot.lane.b32.xlu0 %v2364, 24
    %v2373 = vpop.permute.xlu0 %2372
    %2374 = vrot.lane.b32.xlu0 %v2365, 24
    %v2375 = vpop.permute.xlu0 %2374
    %2376 = vrot.lane.b32.xlu0 %v2366, 24
    %v2377 = vpop.permute.xlu0 %2376
    %2378 = vrot.lane.b32.xlu0 %v2367, 24
    %v2379 = vpop.permute.xlu0 %2378
    %vm2384 = vcmask 261312
    %2385 = vst.msk [vmem:[#allocation2] sm:$0xff] %vm2384, %v2373
    %2386 = vst.msk [vmem:[#allocation2 + $0x8] sm:$0xff] %vm2384, %v2375
    %2387 = vst.msk [vmem:[#allocation2 + $0x10] sm:$0xff] %vm2384, %v2377
    %2388 = vst.msk [vmem:[#allocation2 + $0x18] sm:$0xff] %vm2384, %v2379
    %v2389 = vld [vmem:[#allocation2] sm:$0xff]
    %v2390 = vld [vmem:[#allocation2 + $0x8] sm:$0xff]
    %v2391 = vld [vmem:[#allocation2 + $0x10] sm:$0xff]
    %v2392 = vld [vmem:[#allocation2 + $0x18] sm:$0xff]
    %v2393 = vld [vmem:[#allocation6] sm:$0xf]
    %v2394 = vld [vmem:[#allocation6 + $0x4] sm:$0xf]
    %v2395 = vld [vmem:[#allocation6 + $0x8] sm:$0xf]
    %v2396 = vld [vmem:[#allocation6 + $0xc] sm:$0xf]
    %v2401 = vunpack.c.l.b16 %v2393
    %v2402 = vunpack.c.l.b16 %v2394
    %v2403 = vunpack.c.l.b16 %v2395
    %v2404 = vunpack.c.l.b16 %v2396
    %v2405 = vpack.c.b16 %v2402, %v2401
    %v2406 = vpack.c.b16 %v2404, %v2403
    %v2410 = vsel %vm116, %v2389, 0
    %v2413 = vsel %vm116, %v2390, 0
    %v2416 = vsel %vm116, %v2391, 0
    %v2419 = vsel %vm116, %v2392, 0
    %2421 = vmatprep.subr.bf16.mxu0 0
    %2422 = vmatpush1.bf16.msra.mxu0 %v2405
    %2423 = vmatprep.subr.bf16.mxu0 0
    %2424 = vmatpush1.bf16.msra.mxu0 %v2406
    %2425 = vmatprep.subr.bf16.mxu0 0
    %2426 = vmatpush1.bf16.msra.mxu0 0
    %2427 = vmatprep.subr.bf16.mxu0 0
    %2428 = vmatpush1.bf16.msra.mxu0 0
    %2429 = vmatprep.subr.bf16.mxu0 0
    %2430 = vmatpush1.bf16.msra.mxu0 0
    %2431 = vmatprep.subr.bf16.mxu0 0
    %2432 = vmatpush1.bf16.msra.mxu0 0
    %2433 = vmatprep.subr.bf16.mxu0 0
    %2434 = vmatpush1.bf16.msra.mxu0 0
    %2435 = vmatprep.subr.bf16.mxu0 0
    %2436 = vmatpush1.bf16.msra.mxu0 0
    %2437 = vmatprep.subr.bf16.mxu0 0
    %2438 = vmatpush1.bf16.msra.mxu0 0
    %2439 = vmatprep.subr.bf16.mxu0 0
    %2440 = vmatpush1.bf16.msra.mxu0 0
    %2441 = vmatprep.subr.bf16.mxu0 0
    %2442 = vmatpush1.bf16.msra.mxu0 0
    %2443 = vmatprep.subr.bf16.mxu0 0
    %2444 = vmatpush1.bf16.msra.mxu0 0
    %2445 = vmatprep.subr.bf16.mxu0 0
    %2446 = vmatpush1.bf16.msra.mxu0 0
    %2447 = vmatprep.subr.bf16.mxu0 0
    %2448 = vmatpush1.bf16.msra.mxu0 0
    %2449 = vmatprep.subr.bf16.mxu0 0
    %2450 = vmatpush1.bf16.msra.mxu0 0
    %2451 = vmatprep.subr.bf16.mxu0 0
    %2452 = vmatpush1.bf16.msra.mxu0 0
    %2453 = vmatprep.mubr.bf16.mxu0 0
    %2454 = vmatmul.mubr.bf16.gmra.mrb[0].mxu0 %v2410
    %v2455 = vpop.f32.mrb[0].mxu0
    %v2456 = vadd.f32 0.0, %v2455
    %v2457 = vpop.f32.mrb[0].mxu0
    %v2458 = vpop.f32.mrb[0].mxu0
    %v2459 = vadd.f32 0.0, %v2458
    %v2460 = vpop.f32.mrb[0].mxu0
    %2461 = vmatprep.mubr.bf16.mxu0 0
    %2462 = vmatmul.mubr.bf16.gmra.mrb[0].mxu0 %v2413
    %v2463 = vpop.f32.mrb[0].mxu0
    %v2464 = vadd.f32 0.0, %v2463
    %v2465 = vpop.f32.mrb[0].mxu0
    %v2466 = vpop.f32.mrb[0].mxu0
    %v2467 = vadd.f32 0.0, %v2466
    %v2468 = vpop.f32.mrb[0].mxu0
    %2469 = vmatprep.mubr.bf16.mxu0 0
    %2470 = vmatmul.mubr.bf16.gmra.mrb[0].mxu0 %v2416
    %v2471 = vpop.f32.mrb[0].mxu0
    %v2472 = vadd.f32 0.0, %v2471
    %v2473 = vpop.f32.mrb[0].mxu0
    %v2474 = vpop.f32.mrb[0].mxu0
    %v2475 = vadd.f32 0.0, %v2474
    %v2476 = vpop.f32.mrb[0].mxu0
    %2477 = vmatprep.mubr.bf16.mxu0 0
    %2478 = vmatmul.mubr.bf16.gmra.mrb[0].mxu0 %v2419
    %v2479 = vpop.f32.mrb[0].mxu0
    %v2480 = vadd.f32 0.0, %v2479
    %v2481 = vpop.f32.mrb[0].mxu0
    %v2482 = vpop.f32.mrb[0].mxu0
    %v2483 = vadd.f32 0.0, %v2482
    %v2484 = vpop.f32.mrb[0].mxu0
    %2485 = vdwg.mxu0
    %v2486 = vadd.f32 %v108, %v2456
    %v2487 = vadd.f32 %v109, %v2459
    %v2488 = vadd.f32 %v110, %v2464
    %v2489 = vadd.f32 %v111, %v2467
    %v2490 = vadd.f32 %v112, %v2472
    %v2491 = vadd.f32 %v113, %v2475
    %v2492 = vadd.f32 %v114, %v2480
    %v2493 = vadd.f32 %v115, %v2483
    %v2494 = vld [vmem:[#allocation8] sm:$0x1]
    %v2496 = vlaneseq
    %v2497 = vshrl.u32 %v2496, 7
    %v2498 = vsub.s32 0, %v2497
    %v2499 = vrot.slane %v2494, %v2498
    %v2501 = vadd.f32 %v2486, %v2499
    %v2502 = vadd.f32 %v2487, %v2499
    %v2503 = vadd.f32 %v2488, %v2499
    %v2504 = vadd.f32 %v2489, %v2499
    %v2505 = vadd.f32 %v2490, %v2499
    %v2506 = vadd.f32 %v2491, %v2499
    %v2507 = vadd.f32 %v2492, %v2499
    %v2508 = vadd.f32 %v2493, %v2499
    %v2509 = vsel %vm116, %v2501, 0.0
    %2510 = vadd.xlane.f32.xlu0 %v2509
    %v2511 = vpop.xlane.xlu0 %2510
    %v2512 = vsel %vm116, %v2502, 0.0
    %2513 = vadd.xlane.f32.xlu0 %v2512
    %v2514 = vpop.xlane.xlu0 %2513
    %v2515 = vsel %vm116, %v2503, 0.0
    %2516 = vadd.xlane.f32.xlu0 %v2515
    %v2517 = vpop.xlane.xlu0 %2516
    %v2518 = vsel %vm116, %v2504, 0.0
    %2519 = vadd.xlane.f32.xlu0 %v2518
    %v2520 = vpop.xlane.xlu0 %2519
    %v2521 = vsel %vm116, %v2505, 0.0
    %2522 = vadd.xlane.f32.xlu0 %v2521
    %v2523 = vpop.xlane.xlu0 %2522
    %v2524 = vsel %vm116, %v2506, 0.0
    %2525 = vadd.xlane.f32.xlu0 %v2524
    %v2526 = vpop.xlane.xlu0 %2525
    %v2527 = vsel %vm116, %v2507, 0.0
    %2528 = vadd.xlane.f32.xlu0 %v2527
    %v2529 = vpop.xlane.xlu0 %2528
    %v2530 = vsel %vm116, %v2508, 0.0
    %2531 = vadd.xlane.f32.xlu0 %v2530
    %v2532 = vpop.xlane.xlu0 %2531
    %v2533 = vmul.f32 %v2511, %v141
    %v2534 = vmul.f32 %v2514, %v141
    %v2535 = vmul.f32 %v2517, %v141
    %v2536 = vmul.f32 %v2520, %v141
    %v2537 = vmul.f32 %v2523, %v141
    %v2538 = vmul.f32 %v2526, %v141
    %v2539 = vmul.f32 %v2529, %v141
    %v2540 = vmul.f32 %v2532, %v141
    %v2541 = vsub.f32 %v2501, %v2533
    %v2542 = vsub.f32 %v2502, %v2534
    %v2543 = vsub.f32 %v2503, %v2535
    %v2544 = vsub.f32 %v2504, %v2536
    %v2545 = vsub.f32 %v2505, %v2537
    %v2546 = vsub.f32 %v2506, %v2538
    %v2547 = vsub.f32 %v2507, %v2539
    %v2548 = vsub.f32 %v2508, %v2540
    %v2549 = vmul.f32 %v2541, %v2541
    %v2550 = vmul.f32 %v2542, %v2542
    %v2551 = vmul.f32 %v2543, %v2543
    %v2552 = vmul.f32 %v2544, %v2544
    %v2553 = vmul.f32 %v2545, %v2545
    %v2554 = vmul.f32 %v2546, %v2546
    %v2555 = vmul.f32 %v2547, %v2547
    %v2556 = vmul.f32 %v2548, %v2548
    %v2557 = vsel %vm116, %v2549, 0.0
    %2558 = vadd.xlane.f32.xlu0 %v2557
    %v2559 = vpop.xlane.xlu0 %2558
    %v2560 = vsel %vm116, %v2550, 0.0
    %2561 = vadd.xlane.f32.xlu0 %v2560
    %v2562 = vpop.xlane.xlu0 %2561
    %v2563 = vsel %vm116, %v2551, 0.0
    %2564 = vadd.xlane.f32.xlu0 %v2563
    %v2565 = vpop.xlane.xlu0 %2564
    %v2566 = vsel %vm116, %v2552, 0.0
    %2567 = vadd.xlane.f32.xlu0 %v2566
    %v2568 = vpop.xlane.xlu0 %2567
    %v2569 = vsel %vm116, %v2553, 0.0
    %2570 = vadd.xlane.f32.xlu0 %v2569
    %v2571 = vpop.xlane.xlu0 %2570
    %v2572 = vsel %vm116, %v2554, 0.0
    %2573 = vadd.xlane.f32.xlu0 %v2572
    %v2574 = vpop.xlane.xlu0 %2573
    %v2575 = vsel %vm116, %v2555, 0.0
    %2576 = vadd.xlane.f32.xlu0 %v2575
    %v2577 = vpop.xlane.xlu0 %2576
    %v2578 = vsel %vm116, %v2556, 0.0
    %2579 = vadd.xlane.f32.xlu0 %v2578
    %v2580 = vpop.xlane.xlu0 %2579
    %v2581 = vmul.f32 %v2559, %v141
    %v2582 = vmul.f32 %v2562, %v141
    %v2583 = vmul.f32 %v2565, %v141
    %v2584 = vmul.f32 %v2568, %v141
    %v2585 = vmul.f32 %v2571, %v141
    %v2586 = vmul.f32 %v2574, %v141
    %v2587 = vmul.f32 %v2577, %v141
    %v2588 = vmul.f32 %v2580, %v141
    %v2589 = vadd.f32 %v2581, 1e-05
    %v2590 = vadd.f32 %v2582, 1e-05
    %v2591 = vadd.f32 %v2583, 1e-05
    %v2592 = vadd.f32 %v2584, 1e-05
    %v2593 = vadd.f32 %v2585, 1e-05
    %v2594 = vadd.f32 %v2586, 1e-05
    %v2595 = vadd.f32 %v2587, 1e-05
    %v2596 = vadd.f32 %v2588, 1e-05
    %v2597 = vrsqrt.pop %v2589
    %v2598 = vrsqrt.pop %v2590
    %v2599 = vrsqrt.pop %v2591
    %v2600 = vrsqrt.pop %v2592
    %v2601 = vrsqrt.pop %v2593
    %v2602 = vrsqrt.pop %v2594
    %v2603 = vrsqrt.pop %v2595
    %v2604 = vrsqrt.pop %v2596
    %v2605 = vmul.f32 %v2541, %v2597
    %v2606 = vmul.f32 %v2542, %v2598
    %v2607 = vmul.f32 %v2543, %v2599
    %v2608 = vmul.f32 %v2544, %v2600
    %v2609 = vmul.f32 %v2545, %v2601
    %v2610 = vmul.f32 %v2546, %v2602
    %v2611 = vmul.f32 %v2547, %v2603
    %v2612 = vmul.f32 %v2548, %v2604
    %v2613 = vld [vmem:[#allocation9] sm:$0x1]
    %v2615 = vlaneseq
    %v2616 = vshrl.u32 %v2615, 7
    %v2617 = vsub.s32 0, %v2616
    %v2618 = vrot.slane %v2613, %v2617
    %v2620 = vmul.f32 %v2605, %v2618
    %v2621 = vmul.f32 %v2606, %v2618
    %v2622 = vmul.f32 %v2607, %v2618
    %v2623 = vmul.f32 %v2608, %v2618
    %v2624 = vmul.f32 %v2609, %v2618
    %v2625 = vmul.f32 %v2610, %v2618
    %v2626 = vmul.f32 %v2611, %v2618
    %v2627 = vmul.f32 %v2612, %v2618
    %v2628 = vld [vmem:[#allocation11] sm:$0x1]
    %v2630 = vlaneseq
    %v2631 = vshrl.u32 %v2630, 7
    %v2632 = vsub.s32 0, %v2631
    %v2633 = vrot.slane %v2628, %v2632
    %v2635 = vadd.f32 %v2620, %v2633
    %v2636 = vadd.f32 %v2621, %v2633
    %v2637 = vadd.f32 %v2622, %v2633
    %v2638 = vadd.f32 %v2623, %v2633
    %v2639 = vadd.f32 %v2624, %v2633
    %v2640 = vadd.f32 %v2625, %v2633
    %v2641 = vadd.f32 %v2626, %v2633
    %v2642 = vadd.f32 %v2627, %v2633
    %v2643 = vpack.c.bf16 %v2636, %v2635
    %v2644 = vpack.c.bf16 %v2638, %v2637
    %v2645 = vpack.c.bf16 %v2640, %v2639
    %v2646 = vpack.c.bf16 %v2642, %v2641
    %v2647 = vld [vmem:[%s9] sm:$0xf]
    %v2648 = vld [vmem:[%s9 + $0x4] sm:$0xf]
    %v2649 = vld [vmem:[%s9 + $0x8] sm:$0xf]
    %v2650 = vld [vmem:[%s9 + $0xc] sm:$0xf]
    %v2651 = vld [vmem:[%s10] sm:$0x1]
    %v2653 = vlaneseq
    %v2654 = vshrl.u32 %v2653, 7
    %v2655 = vsub.s32 0, %v2654
    %v2656 = vrot.slane %v2651, %v2655
    %v2662 = vunpack.c.l.b16 %v2647
    %v2663 = vunpack.c.l.b16 %v2648
    %v2664 = vunpack.c.l.b16 %v2649
    %v2665 = vunpack.c.l.b16 %v2650
    %v2666 = vpack.c.b16 %v2663, %v2662
    %v2667 = vpack.c.b16 %v2665, %v2664
    %v2671 = vsel %vm116, %v2643, 0
    %v2674 = vsel %vm116, %v2644, 0
    %v2677 = vsel %vm116, %v2645, 0
    %v2680 = vsel %vm116, %v2646, 0
    %2682 = vmatprep.subr.bf16.mxu0 0
    %2683 = vmatpush1.bf16.msra.mxu0 %v2666
    %2684 = vmatprep.subr.bf16.mxu0 0
    %2685 = vmatpush1.bf16.msra.mxu0 %v2667
    %2686 = vmatprep.subr.bf16.mxu0 0
    %2687 = vmatpush1.bf16.msra.mxu0 0
    %2688 = vmatprep.subr.bf16.mxu0 0
    %2689 = vmatpush1.bf16.msra.mxu0 0
    %2690 = vmatprep.subr.bf16.mxu0 0
    %2691 = vmatpush1.bf16.msra.mxu0 0
    %2692 = vmatprep.subr.bf16.mxu0 0
    %2693 = vmatpush1.bf16.msra.mxu0 0
    %2694 = vmatprep.subr.bf16.mxu0 0
    %2695 = vmatpush1.bf16.msra.mxu0 0
    %2696 = vmatprep.subr.bf16.mxu0 0
    %2697 = vmatpush1.bf16.msra.mxu0 0
    %2698 = vmatprep.subr.bf16.mxu0 0
    %2699 = vmatpush1.bf16.msra.mxu0 0
    %2700 = vmatprep.subr.bf16.mxu0 0
    %2701 = vmatpush1.bf16.msra.mxu0 0
    %2702 = vmatprep.subr.bf16.mxu0 0
    %2703 = vmatpush1.bf16.msra.mxu0 0
    %2704 = vmatprep.subr.bf16.mxu0 0
    %2705 = vmatpush1.bf16.msra.mxu0 0
    %2706 = vmatprep.subr.bf16.mxu0 0
    %2707 = vmatpush1.bf16.msra.mxu0 0
    %2708 = vmatprep.subr.bf16.mxu0 0
    %2709 = vmatpush1.bf16.msra.mxu0 0
    %2710 = vmatprep.subr.bf16.mxu0 0
    %2711 = vmatpush1.bf16.msra.mxu0 0
    %2712 = vmatprep.subr.bf16.mxu0 0
    %2713 = vmatpush1.bf16.msra.mxu0 0
    %2714 = vmatprep.mubr.bf16.mxu0 0
    %2715 = vmatmul.mubr.bf16.gmra.mrb[0].mxu0 %v2671
    %v2716 = vpop.f32.mrb[0].mxu0
    %v2717 = vadd.f32 %v2656, %v2716
    %v2718 = vpop.f32.mrb[0].mxu0
    %v2719 = vpop.f32.mrb[0].mxu0
    %v2720 = vadd.f32 %v2656, %v2719
    %v2721 = vpop.f32.mrb[0].mxu0
    %2722 = vmatprep.mubr.bf16.mxu0 0
    %2723 = vmatmul.mubr.bf16.gmra.mrb[0].mxu0 %v2674
    %v2724 = vpop.f32.mrb[0].mxu0
    %v2725 = vadd.f32 %v2656, %v2724
    %v2726 = vpop.f32.mrb[0].mxu0
    %v2727 = vpop.f32.mrb[0].mxu0
    %v2728 = vadd.f32 %v2656, %v2727
    %v2729 = vpop.f32.mrb[0].mxu0
    %2730 = vmatprep.mubr.bf16.mxu0 0
    %2731 = vmatmul.mubr.bf16.gmra.mrb[0].mxu0 %v2677
    %v2732 = vpop.f32.mrb[0].mxu0
    %v2733 = vadd.f32 %v2656, %v2732
    %v2734 = vpop.f32.mrb[0].mxu0
    %v2735 = vpop.f32.mrb[0].mxu0
    %v2736 = vadd.f32 %v2656, %v2735
    %v2737 = vpop.f32.mrb[0].mxu0
    %2738 = vmatprep.mubr.bf16.mxu0 0
    %2739 = vmatmul.mubr.bf16.gmra.mrb[0].mxu0 %v2680
    %v2740 = vpop.f32.mrb[0].mxu0
    %v2741 = vadd.f32 %v2656, %v2740
    %v2742 = vpop.f32.mrb[0].mxu0
    %v2743 = vpop.f32.mrb[0].mxu0
    %v2744 = vadd.f32 %v2656, %v2743
    %v2745 = vpop.f32.mrb[0].mxu0
    %2746 = vdwg.mxu0
    %v2747 = vmul.f32 %v2717, 0.5
    %v2748 = vmul.f32 %v2720, 0.5
    %v2749 = vmul.f32 %v2725, 0.5
    %v2750 = vmul.f32 %v2728, 0.5
    %v2751 = vmul.f32 %v2733, 0.5
    %v2752 = vmul.f32 %v2736, 0.5
    %v2753 = vmul.f32 %v2741, 0.5
    %v2754 = vmul.f32 %v2744, 0.5
    %v2755 = vmul.f32 %v2717, 0.70710677
    %v2756 = vmul.f32 %v2720, 0.70710677
    %v2757 = vmul.f32 %v2725, 0.70710677
    %v2758 = vmul.f32 %v2728, 0.70710677
    %v2759 = vmul.f32 %v2733, 0.70710677
    %v2760 = vmul.f32 %v2736, 0.70710677
    %v2761 = vmul.f32 %v2741, 0.70710677
    %v2762 = vmul.f32 %v2744, 0.70710677
    %v2763 = verf.f32.pop %v2755
    %v2764 = verf.f32.pop %v2756
    %v2765 = verf.f32.pop %v2757
    %v2766 = verf.f32.pop %v2758
    %v2767 = verf.f32.pop %v2759
    %v2768 = verf.f32.pop %v2760
    %v2769 = verf.f32.pop %v2761
    %v2770 = verf.f32.pop %v2762
    %v2771 = vadd.f32 %v2763, 1.0
    %v2772 = vadd.f32 %v2764, 1.0
    %v2773 = vadd.f32 %v2765, 1.0
    %v2774 = vadd.f32 %v2766, 1.0
    %v2775 = vadd.f32 %v2767, 1.0
    %v2776 = vadd.f32 %v2768, 1.0
    %v2777 = vadd.f32 %v2769, 1.0
    %v2778 = vadd.f32 %v2770, 1.0
    %v2779 = vmul.f32 %v2747, %v2771
    %v2780 = vmul.f32 %v2748, %v2772
    %v2781 = vmul.f32 %v2749, %v2773
    %v2782 = vmul.f32 %v2750, %v2774
    %v2783 = vmul.f32 %v2751, %v2775
    %v2784 = vmul.f32 %v2752, %v2776
    %v2785 = vmul.f32 %v2753, %v2777
    %v2786 = vmul.f32 %v2754, %v2778
    %v2787 = vpack.c.bf16 %v2780, %v2779
    %v2788 = vpack.c.bf16 %v2782, %v2781
    %v2789 = vpack.c.bf16 %v2784, %v2783
    %v2790 = vpack.c.bf16 %v2786, %v2785
    %v2791 = vld [vmem:[%s11] sm:$0xf]
    %v2792 = vld [vmem:[%s11 + $0x4] sm:$0xf]
    %v2793 = vld [vmem:[%s11 + $0x8] sm:$0xf]
    %v2794 = vld [vmem:[%s11 + $0xc] sm:$0xf]
    %v2795 = vld [vmem:[%s11 + $0x10] sm:$0xf]
    %v2796 = vld [vmem:[%s11 + $0x14] sm:$0xf]
    %v2797 = vld [vmem:[%s11 + $0x18] sm:$0xf]
    %v2798 = vld [vmem:[%s11 + $0x1c] sm:$0xf]
    %v2799 = vld [vmem:[%s11 + $0x20] sm:$0xf]
    %v2800 = vld [vmem:[%s11 + $0x24] sm:$0xf]
    %v2801 = vld [vmem:[%s11 + $0x28] sm:$0xf]
    %v2802 = vld [vmem:[%s11 + $0x2c] sm:$0xf]
    %v2803 = vld [vmem:[%s11 + $0x30] sm:$0xf]
    %v2804 = vld [vmem:[%s11 + $0x34] sm:$0xf]
    %v2805 = vld [vmem:[%s11 + $0x38] sm:$0xf]
    %v2806 = vld [vmem:[%s11 + $0x3c] sm:$0xf]
    %v2807 = vld [vmem:[%s12] sm:$0x1]
    %v2809 = vlaneseq
    %v2810 = vshrl.u32 %v2809, 7
    %v2811 = vsub.s32 0, %v2810
    %v2812 = vrot.slane %v2807, %v2811
    %v2830 = vunpack.c.l.b16 %v2791
    %v2831 = vunpack.c.l.b16 %v2792
    %v2832 = vunpack.c.l.b16 %v2793
    %v2833 = vunpack.c.l.b16 %v2794
    %v2834 = vunpack.c.l.b16 %v2795
    %v2835 = vunpack.c.l.b16 %v2796
    %v2836 = vunpack.c.l.b16 %v2797
    %v2837 = vunpack.c.l.b16 %v2798
    %v2838 = vunpack.c.l.b16 %v2799
    %v2839 = vunpack.c.l.b16 %v2800
    %v2840 = vunpack.c.l.b16 %v2801
    %v2841 = vunpack.c.l.b16 %v2802
    %v2842 = vunpack.c.l.b16 %v2803
    %v2843 = vunpack.c.l.b16 %v2804
    %v2844 = vunpack.c.l.b16 %v2805
    %v2845 = vunpack.c.l.b16 %v2806
    %v2846 = vpack.c.b16 %v2831, %v2830
    %v2847 = vpack.c.b16 %v2833, %v2832
    %v2848 = vpack.c.b16 %v2835, %v2834
    %v2849 = vpack.c.b16 %v2837, %v2836
    %v2850 = vpack.c.b16 %v2839, %v2838
    %v2851 = vpack.c.b16 %v2841, %v2840
    %v2852 = vpack.c.b16 %v2843, %v2842
    %v2853 = vpack.c.b16 %v2845, %v2844
    %2862 = vmatprep.subr.bf16.mxu0 0
    %2863 = vmatpush1.bf16.msra.mxu0 %v2846
    %2864 = vmatprep.subr.bf16.mxu0 0
    %2865 = vmatpush1.bf16.msra.mxu0 %v2847
    %2866 = vmatprep.subr.bf16.mxu0 0
    %2867 = vmatpush1.bf16.msra.mxu0 %v2848
    %2868 = vmatprep.subr.bf16.mxu0 0
    %2869 = vmatpush1.bf16.msra.mxu0 %v2849
    %2870 = vmatprep.subr.bf16.mxu0 0
    %2871 = vmatpush1.bf16.msra.mxu0 %v2850
    %2872 = vmatprep.subr.bf16.mxu0 0
    %2873 = vmatpush1.bf16.msra.mxu0 %v2851
    %2874 = vmatprep.subr.bf16.mxu0 0
    %2875 = vmatpush1.bf16.msra.mxu0 %v2852
    %2876 = vmatprep.subr.bf16.mxu0 0
    %2877 = vmatpush1.bf16.msra.mxu0 %v2853
    %2878 = vmatprep.subr.bf16.mxu0 0
    %2879 = vmatpush1.bf16.msra.mxu0 0
    %2880 = vmatprep.subr.bf16.mxu0 0
    %2881 = vmatpush1.bf16.msra.mxu0 0
    %2882 = vmatprep.subr.bf16.mxu0 0
    %2883 = vmatpush1.bf16.msra.mxu0 0
    %2884 = vmatprep.subr.bf16.mxu0 0
    %2885 = vmatpush1.bf16.msra.mxu0 0
    %2886 = vmatprep.subr.bf16.mxu0 0
    %2887 = vmatpush1.bf16.msra.mxu0 0
    %2888 = vmatprep.subr.bf16.mxu0 0
    %2889 = vmatpush1.bf16.msra.mxu0 0
    %2890 = vmatprep.subr.bf16.mxu0 0
    %2891 = vmatpush1.bf16.msra.mxu0 0
    %2892 = vmatprep.subr.bf16.mxu0 0
    %2893 = vmatpush1.bf16.msra.mxu0 0
    %2894 = vmatprep.mubr.bf16.mxu0 0
    %2895 = vmatmul.mubr.bf16.gmra.mrb[0].mxu0 %v2787
    %v2896 = vpop.f32.mrb[0].mxu0
    %v2897 = vadd.f32 %v2812, %v2896
    %v2898 = vpop.f32.mrb[0].mxu0
    %v2899 = vpop.f32.mrb[0].mxu0
    %v2900 = vadd.f32 %v2812, %v2899
    %v2901 = vpop.f32.mrb[0].mxu0
    %2902 = vmatprep.mubr.bf16.mxu0 0
    %2903 = vmatmul.mubr.bf16.gmra.mrb[0].mxu0 %v2788
    %v2904 = vpop.f32.mrb[0].mxu0
    %v2905 = vadd.f32 %v2812, %v2904
    %v2906 = vpop.f32.mrb[0].mxu0
    %v2907 = vpop.f32.mrb[0].mxu0
    %v2908 = vadd.f32 %v2812, %v2907
    %v2909 = vpop.f32.mrb[0].mxu0
    %2910 = vmatprep.mubr.bf16.mxu0 0
    %2911 = vmatmul.mubr.bf16.gmra.mrb[0].mxu0 %v2789
    %v2912 = vpop.f32.mrb[0].mxu0
    %v2913 = vadd.f32 %v2812, %v2912
    %v2914 = vpop.f32.mrb[0].mxu0
    %v2915 = vpop.f32.mrb[0].mxu0
    %v2916 = vadd.f32 %v2812, %v2915
    %v2917 = vpop.f32.mrb[0].mxu0
    %2918 = vmatprep.mubr.bf16.mxu0 0
    %2919 = vmatmul.mubr.bf16.gmra.mrb[0].mxu0 %v2790
    %v2920 = vpop.f32.mrb[0].mxu0
    %v2921 = vadd.f32 %v2812, %v2920
    %v2922 = vpop.f32.mrb[0].mxu0
    %v2923 = vpop.f32.mrb[0].mxu0
    %v2924 = vadd.f32 %v2812, %v2923
    %v2925 = vpop.f32.mrb[0].mxu0
    %2926 = vdwg.mxu0
    %v2927 = vadd.f32 %v2501, %v2897
    %v2928 = vadd.f32 %v2502, %v2900
    %v2929 = vadd.f32 %v2503, %v2905
    %v2930 = vadd.f32 %v2504, %v2908
    %v2931 = vadd.f32 %v2505, %v2913
    %v2932 = vadd.f32 %v2506, %v2916
    %v2933 = vadd.f32 %v2507, %v2921
    %v2934 = vadd.f32 %v2508, %v2924
    %2935 = vst.msk [vmem:[#allocation12] sm:$0xff] %vm116, %v2927
    %2936 = vst.msk [vmem:[#allocation12 + $0x8] sm:$0xff] %vm116, %v2928
    %2937 = vst.msk [vmem:[#allocation12 + $0x10] sm:$0xff] %vm116, %v2929
    %2938 = vst.msk [vmem:[#allocation12 + $0x18] sm:$0xff] %vm116, %v2930
    %2939 = vst.msk [vmem:[#allocation12 + $0x20] sm:$0xff] %vm116, %v2931
    %2940 = vst.msk [vmem:[#allocation12 + $0x28] sm:$0xff] %vm116, %v2932
    %2941 = vst.msk [vmem:[#allocation12 + $0x30] sm:$0xff] %vm116, %v2933
    %2942 = vst.msk [vmem:[#allocation12 + $0x38] sm:$0xff] %vm116, %v2934
    // Predicated region
    $region74: #{tpu_custom_call.1} parent=1 // pred_check
      _
    $region75: #{tpu_custom_call.1} parent=1 // pred_check_branch
      %2944 = sbr.rel (0) target = $region77
    $region76: #{tpu_custom_call.1} parent=1 // pred_region
      %s2946 = ssub.s32 1024, 1024
      %2947 = vsyncadd [#allocation5], %s2946
      %s2948 = sshll.u32 [#allocation12], 4
      %s2949 = int_to_ptr.vmem [resolvable:$true] %s2948
      %2954 = dma.vmem_to_hbm [thread:$0]  %s2949, 1024, %s13, [#allocation5], 128, 128, 8
    $region77: #{tpu_custom_call.1} parent=1 // pred_fallthru
      _
    // Predicated region
    $region78: #{tpu_custom_call.1} parent=1 // pred_check
      _
    $region79: #{tpu_custom_call.1} parent=1 // pred_check_branch
      %2956 = sbr.rel (0) target = $region81
    $region80: #{tpu_custom_call.1} parent=1 // pred_region
      %2957 = dma.done [#allocation5], 1024
    $region81: #{tpu_custom_call.1} parent=1 // pred_fallthru
      _
    %2958 = vsyncpa [#allocation4], 1
    %2959 = vsyncpa [#allocation7], 1
    %2960 = vsyncpa [#allocation10], 1
    %2961 = vsyncpa [#allocation5], 1

// kernel: tpu_custom_call.1
$region0: #{tpu_custom_call.1}
  #allocation0 [shape = 'u32[]', space=smem, size = 0x4, offset = 0x4, fixed_abs, tag = 'smem constant byte address 0x4 - core index']
  #allocation1 [shape = 'u32[144,128]{1,0:T(1,128)}', space=vmem, size = 0x12000, scoped, tag = 'internal scratch']
  #allocation2 [shape = 'bf16[64,32]{1,0:T(16,128)(2,1)}', space=vmem, size = 0x4000, scoped, tag = 'scratch operand']
  %s0 = inlined_call_operand.vmem [shape: f32[4,16,32], index: 0, kind: input, shape index: {}]
  %s1 = inlined_call_operand.hbm [shape: bf16[4,16,16], index: 1, kind: input, shape index: {}]
  %s2 = inlined_call_operand.vmem [shape: f32[1,32], index: 2, kind: input, shape index: {}]
  %s3 = inlined_call_operand.vmem [shape: f32[1,32], index: 3, kind: input, shape index: {}]
  %s4 = inlined_call_operand.vmem [shape: bf16[32,96], index: 4, kind: input, shape index: {}]
  %s5 = inlined_call_operand.hbm [shape: bf16[32,32], index: 5, kind: input, shape index: {}]
  %s6 = inlined_call_operand.hbm [shape: f32[1,32], index: 6, kind: input, shape index: {}]
  %s7 = inlined_call_operand.hbm [shape: f32[1,32], index: 7, kind: input, shape index: {}]
  %s8 = inlined_call_operand.hbm [shape: f32[1,32], index: 8, kind: input, shape index: {}]
  %s9 = inlined_call_operand.vmem [shape: bf16[32,128], index: 9, kind: input, shape index: {}]
  %s10 = inlined_call_operand.vmem [shape: f32[1,128], index: 10, kind: input, shape index: {}]
  %s11 = inlined_call_operand.vmem [shape: bf16[128,32], index: 11, kind: input, shape index: {}]
  %s12 = inlined_call_operand.vmem [shape: f32[1,32], index: 12, kind: input, shape index: {}]
  %s13 = inlined_call_operand.hbm [shape: f32[4,16,32], index: 13, kind: output, shape index: {}]
  %s14 = sld [smem:[#allocation0]]
  $region82: #{tpu_custom_call.1} parent=0
    _
  %s16 = ssub.s32 1, %s14
  %s17 = scalar_select 0, %s16, %s14
  $region1: #{tpu_custom_call.1} parent=0
    #allocation3 [shape = 'u8[16384]{0}', space=vmem, size = 0x4000, scoped, tag = 'input window, operand 1, single buffered']
    #allocation4 [shape = 's32[1]{0}', space=sflag, size = 0x4, scoped, tag = 'scoped memory for tpu_custom_call.1']
    #allocation5 [shape = 's32[1]{0}', space=sflag, size = 0x4, scoped, tag = 'scoped memory for tpu_custom_call.1']
    #allocation6 [shape = 'u8[8192]{0}', space=vmem, size = 0x2000, scoped, tag = 'input window, operand 5, single buffered']
    #allocation7 [shape = 's32[1]{0}', space=sflag, size = 0x4, scoped, tag = 'scoped memory for tpu_custom_call.1']
    #allocation8 [shape = 'u8[512]{0}', space=vmem, size = 0x400, scoped, tag = 'input window, operand 6, single buffered']
    #allocation9 [shape = 'u8[512]{0}', space=vmem, size = 0x400, scoped, tag = 'input window, operand 7, single buffered']
    #allocation10 [shape = 's32[1]{0}', space=sflag, size = 0x4, scoped, tag = 'scoped memory for tpu_custom_call.1']
    #allocation11 [shape = 'u8[512]{0}', space=vmem, size = 0x400, scoped, tag = 'input window, operand 8, single buffered']
    #allocation12 [shape = 'u8[32768]{0}', space=vmem, size = 0x8000, scoped, tag = 'output window, operand 0, single buffered']
    %18 = vsyncpa [#allocation4], 0
    %19 = vsyncpa [#allocation7], 0
    %20 = vsyncpa [#allocation10], 0
    %21 = vsyncpa [#allocation5], 0
    // Predicated region
    $region2: #{tpu_custom_call.1} parent=1 // pred_check
      _
    $region3: #{tpu_custom_call.1} parent=1 // pred_check_branch
      %23 = sbr.rel (0) target = $region5
    $region4: #{tpu_custom_call.1} parent=1 // pred_region
      _
    $region5: #{tpu_custom_call.1} parent=1 // pred_fallthru
      _
    // Predicated region
    $region6: #{tpu_custom_call.1} parent=1 // pred_check
      _
    $region7: #{tpu_custom_call.1} parent=1 // pred_check_branch
      %25 = sbr.rel (0) target = $region9
    $region8: #{tpu_custom_call.1} parent=1 // pred_region
      %s27 = ssub.s32 512, 512
      %28 = vsyncadd [#allocation4], %s27
      %s29 = sshll.u32 [#allocation3], 4
      %s30 = int_to_ptr.vmem [resolvable:$true] %s29
      %35 = dma.hbm_to_vmem [thread:$0]  %s1, 512, %s30, [#allocation4], 64, 64, 4
    $region9: #{tpu_custom_call.1} parent=1 // pred_fallthru
      _
    // Predicated region
    $region10: #{tpu_custom_call.1} parent=1 // pred_check
      _
    $region11: #{tpu_custom_call.1} parent=1 // pred_check_branch
      %37 = sbr.rel (0) target = $region13
    $region12: #{tpu_custom_call.1} parent=1 // pred_region
      _
    $region13: #{tpu_custom_call.1} parent=1 // pred_fallthru
      _
    // Predicated region
    $region14: #{tpu_custom_call.1} parent=1 // pred_check
      _
    $region15: #{tpu_custom_call.1} parent=1 // pred_check_branch
      %39 = sbr.rel (0) target = $region17
    $region16: #{tpu_custom_call.1} parent=1 // pred_region
      _
    $region17: #{tpu_custom_call.1} parent=1 // pred_fallthru
      _
    // Predicated region
    $region18: #{tpu_custom_call.1} parent=1 // pred_check
      _
    $region19: #{tpu_custom_call.1} parent=1 // pred_check_branch
      %41 = sbr.rel (0) target = $region21
    $region20: #{tpu_custom_call.1} parent=1 // pred_region
      _
    $region21: #{tpu_custom_call.1} parent=1 // pred_fallthru
      _
    // Predicated region
    $region22: #{tpu_custom_call.1} parent=1 // pred_check
      _
    $region23: #{tpu_custom_call.1} parent=1 // pred_check_branch
      %43 = sbr.rel (0) target = $region25
    $region24: #{tpu_custom_call.1} parent=1 // pred_region
      %s45 = ssub.s32 256, 256
      %46 = vsyncadd [#allocation7], %s45
      %s47 = sshll.u32 [#allocation6], 4
      %s48 = int_to_ptr.vmem [resolvable:$true] %s47
      %53 = dma.hbm_to_vmem [thread:$0]  %s5, 256, %s48, [#allocation7], 64, 64, 4
    $region25: #{tpu_custom_call.1} parent=1 // pred_fallthru
      _
    // Predicated region
    $region26: #{tpu_custom_call.1} parent=1 // pred_check
      _
    $region27: #{tpu_custom_call.1} parent=1 // pred_check_branch
      %55 = sbr.rel (0) target = $region29
    $region28: #{tpu_custom_call.1} parent=1 // pred_region
      %s57 = ssub.s32 16, 16
      %58 = vsyncadd [#allocation7], %s57
      %s60 = sshll.u32 [#allocation8], 4
      %s61 = int_to_ptr.vmem [resolvable:$true] %s60
      %63 = dma.hbm_to_vmem [thread:$0]  %s6, 16, %s61, [#allocation7]
    $region29: #{tpu_custom_call.1} parent=1 // pred_fallthru
      _
    // Predicated region
    $region30: #{tpu_custom_call.1} parent=1 // pred_check
      _
    $region31: #{tpu_custom_call.1} parent=1 // pred_check_branch
      %65 = sbr.rel (0) target = $region33
    $region32: #{tpu_custom_call.1} parent=1 // pred_region
      %s67 = ssub.s32 16, 16
      %68 = vsyncadd [#allocation10], %s67
      %s70 = sshll.u32 [#allocation9], 4
      %s71 = int_to_ptr.vmem [resolvable:$true] %s70
      %73 = dma.hbm_to_vmem [thread:$0]  %s7, 16, %s71, [#allocation10]
    $region33: #{tpu_custom_call.1} parent=1 // pred_fallthru
      _
    // Predicated region
    $region34: #{tpu_custom_call.1} parent=1 // pred_check
      _
    $region35: #{tpu_custom_call.1} parent=1 // pred_check_branch
      %75 = sbr.rel (0) target = $region37
    $region36: #{tpu_custom_call.1} parent=1 // pred_region
      %s77 = ssub.s32 16, 16
      %78 = vsyncadd [#allocation10], %s77
      %s80 = sshll.u32 [#allocation11], 4
      %s81 = int_to_ptr.vmem [resolvable:$true] %s80
      %83 = dma.hbm_to_vmem [thread:$0]  %s8, 16, %s81, [#allocation10]
    $region37: #{tpu_custom_call.1} parent=1 // pred_fallthru
      _
    // Predicated region
    $region38: #{tpu_custom_call.1} parent=1 // pred_check
      _
    $region39: #{tpu_custom_call.1} parent=1 // pred_check_branch
      %85 = sbr.rel (0) target = $region41
    $region40: #{tpu_custom_call.1} parent=1 // pred_region
      _
    $region41: #{tpu_custom_call.1} parent=1 // pred_fallthru
      _
    // Predicated region
    $region42: #{tpu_custom_call.1} parent=1 // pred_check
      _
    $region43: #{tpu_custom_call.1} parent=1 // pred_check_branch
      %87 = sbr.rel (0) target = $region45
    $region44: #{tpu_custom_call.1} parent=1 // pred_region
      _
    $region45: #{tpu_custom_call.1} parent=1 // pred_fallthru
      _
    // Predicated region
    $region46: #{tpu_custom_call.1} parent=1 // pred_check
      _
    $region47: #{tpu_custom_call.1} parent=1 // pred_check_branch
      %89 = sbr.rel (0) target = $region49
    $region48: #{tpu_custom_call.1} parent=1 // pred_region
      _
    $region49: #{tpu_custom_call.1} parent=1 // pred_fallthru
      _
    // Predicated region
    $region50: #{tpu_custom_call.1} parent=1 // pred_check
      _
    $region51: #{tpu_custom_call.1} parent=1 // pred_check_branch
      %91 = sbr.rel (0) target = $region53
    $region52: #{tpu_custom_call.1} parent=1 // pred_region
      _
    $region53: #{tpu_custom_call.1} parent=1 // pred_fallthru
      _
    // Predicated region
    $region54: #{tpu_custom_call.1} parent=1 // pred_check
      _
    $region55: #{tpu_custom_call.1} parent=1 // pred_check_branch
      %93 = sbr.rel (0) target = $region57
    $region56: #{tpu_custom_call.1} parent=1 // pred_region
      %94 = dma.done [#allocation4], 512
    $region57: #{tpu_custom_call.1} parent=1 // pred_fallthru
      _
    // Predicated region
    $region58: #{tpu_custom_call.1} parent=1 // pred_check
      _
    $region59: #{tpu_custom_call.1} parent=1 // pred_check_branch
      %96 = sbr.rel (0) target = $region61
    $region60: #{tpu_custom_call.1} parent=1 // pred_region
      %97 = dma.done [#allocation7], 256
    $region61: #{tpu_custom_call.1} parent=1 // pred_fallthru
      _
    // Predicated region
    $region62: #{tpu_custom_call.1} parent=1 // pred_check
      _
    $region63: #{tpu_custom_call.1} parent=1 // pred_check_branch
      %99 = sbr.rel (0) target = $region65
    $region64: #{tpu_custom_call.1} parent=1 // pred_region
      %100 = dma.done [#allocation7], 16
    $region65: #{tpu_custom_call.1} parent=1 // pred_fallthru
      _
    // Predicated region
    $region66: #{tpu_custom_call.1} parent=1 // pred_check
      _
    $region67: #{tpu_custom_call.1} parent=1 // pred_check_branch
      %102 = sbr.rel (0) target = $region69
    $region68: #{tpu_custom_call.1} parent=1 // pred_region
      %103 = dma.done [#allocation10], 16
    $region69: #{tpu_custom_call.1} parent=1 // pred_fallthru
      _
    // Predicated region
    $region70: #{tpu_custom_call.1} parent=1 // pred_check
      _
    $region71: #{tpu_custom_call.1} parent=1 // pred_check_branch
      %105 = sbr.rel (0) target = $region73
    $region72: #{tpu_custom_call.1} parent=1 // pred_region
      %106 = dma.done [#allocation10], 16
    $region73: #{tpu_custom_call.1} parent=1 // pred_fallthru
      _
    %v108 = vld [vmem:[%s0] sm:$0xff]
    %v109 = vld [vmem:[%s0 + $0x8] sm:$0xff]
    %v110 = vld [vmem:[%s0 + $0x10] sm:$0xff]
    %v111 = vld [vmem:[%s0 + $0x18] sm:$0xff]
    %v112 = vld [vmem:[%s0 + $0x20] sm:$0xff]
    %v113 = vld [vmem:[%s0 + $0x28] sm:$0xff]
    %v114 = vld [vmem:[%s0 + $0x30] sm:$0xff]
    %v115 = vld [vmem:[%s0 + $0x38] sm:$0xff]
    %vm116 = vcmask 261120
    %v117 = vsel %vm116, %v108, 0.0
    %118 = vadd.xlane.f32.xlu0 %v117
    %v119 = vpop.xlane.xlu0 %118
    %v120 = vsel %vm116, %v109, 0.0
    %121 = vadd.xlane.f32.xlu0 %v120
    %v122 = vpop.xlane.xlu0 %121
    %v123 = vsel %vm116, %v110, 0.0
    %124 = vadd.xlane.f32.xlu0 %v123
    %v125 = vpop.xlane.xlu0 %124
    %v126 = vsel %vm116, %v111, 0.0
    %127 = vadd.xlane.f32.xlu0 %v126
    %v128 = vpop.xlane.xlu0 %127
    %v129 = vsel %vm116, %v112, 0.0
    %130 = vadd.xlane.f32.xlu0 %v129
    %v131 = vpop.xlane.xlu0 %130
    %v132 = vsel %vm116, %v113, 0.0
    %133 = vadd.xlane.f32.xlu0 %v132
    %v134 = vpop.xlane.xlu0 %133
    %v135 = vsel %vm116, %v114, 0.0
    %136 = vadd.xlane.f32.xlu0 %v135
    %v137 = vpop.xlane.xlu0 %136
    %v138 = vsel %vm116, %v115, 0.0
    %139 = vadd.xlane.f32.xlu0 %v138
    %v140 = vpop.xlane.xlu0 %139
    %v141 = vrcp.pop 32.0
    %v142 = vmul.f32 %v119, %v141
    %v143 = vmul.f32 %v122, %v141
    %v144 = vmul.f32 %v125, %v141
    %v145 = vmul.f32 %v128, %v141
    %v146 = vmul.f32 %v131, %v141
    %v147 = vmul.f32 %v134, %v141
    %v148 = vmul.f32 %v137, %v141
    %v149 = vmul.f32 %v140, %v141
    %v150 = vsub.f32 %v108, %v142
    %v151 = vsub.f32 %v109, %v143
    %v152 = vsub.f32 %v110, %v144
    %v153 = vsub.f32 %v111, %v145
    %v154 = vsub.f32 %v112, %v146
    %v155 = vsub.f32 %v113, %v147
    %v156 = vsub.f32 %v114, %v148
    %v157 = vsub.f32 %v115, %v149
    %v158 = vmul.f32 %v150, %v150
    %v159 = vmul.f32 %v151, %v151
    %v160 = vmul.f32 %v152, %v152
    %v161 = vmul.f32 %v153, %v153
    %v162 = vmul.f32 %v154, %v154
    %v163 = vmul.f32 %v155, %v155
    %v164 = vmul.f32 %v156, %v156
    %v165 = vmul.f32 %v157, %v157
    %v166 = vsel %vm116, %v158, 0.0
    %167 = vadd.xlane.f32.xlu0 %v166
    %v168 = vpop.xlane.xlu0 %167
    %v169 = vsel %vm116, %v159, 0.0
    %170 = vadd.xlane.f32.xlu0 %v169
    %v171 = vpop.xlane.xlu0 %170
    %v172 = vsel %vm116, %v160, 0.0
    %173 = vadd.xlane.f32.xlu0 %v172
    %v174 = vpop.xlane.xlu0 %173
    %v175 = vsel %vm116, %v161, 0.0
    %176 = vadd.xlane.f32.xlu0 %v175
    %v177 = vpop.xlane.xlu0 %176
    %v178 = vsel %vm116, %v162, 0.0
    %179 = vadd.xlane.f32.xlu0 %v178
    %v180 = vpop.xlane.xlu0 %179
    %v181 = vsel %vm116, %v163, 0.0
    %182 = vadd.xlane.f32.xlu0 %v181
    %v183 = vpop.xlane.xlu0 %182
    %v184 = vsel %vm116, %v164, 0.0
    %185 = vadd.xlane.f32.xlu0 %v184
    %v186 = vpop.xlane.xlu0 %185
    %v187 = vsel %vm116, %v165, 0.0
    %188 = vadd.xlane.f32.xlu0 %v187
    %v189 = vpop.xlane.xlu0 %188
    %v190 = vmul.f32 %v168, %v141
    %v191 = vmul.f32 %v171, %v141
    %v192 = vmul.f32 %v174, %v141
    %v193 = vmul.f32 %v177, %v141
    %v194 = vmul.f32 %v180, %v141
    %v195 = vmul.f32 %v183, %v141
    %v196 = vmul.f32 %v186, %v141
    %v197 = vmul.f32 %v189, %v141
    %v198 = vadd.f32 %v190, 1e-05
    %v199 = vadd.f32 %v191, 1e-05
    %v200 = vadd.f32 %v192, 1e-05
    %v201 = vadd.f32 %v193, 1e-05
    %v202 = vadd.f32 %v194, 1e-05
    %v203 = vadd.f32 %v195, 1e-05
    %v204 = vadd.f32 %v196, 1e-05
    %v205 = vadd.f32 %v197, 1e-05
    %v206 = vrsqrt.pop %v198
    %v207 = vrsqrt.pop %v199
    %v208 = vrsqrt.pop %v200
    %v209 = vrsqrt.pop %v201
    %v210 = vrsqrt.pop %v202
    %v211 = vrsqrt.pop %v203
    %v212 = vrsqrt.pop %v204
    %v213 = vrsqrt.pop %v205
    %v214 = vmul.f32 %v150, %v206
    %v215 = vmul.f32 %v151, %v207
    %v216 = vmul.f32 %v152, %v208
    %v217 = vmul.f32 %v153, %v209
    %v218 = vmul.f32 %v154, %v210
    %v219 = vmul.f32 %v155, %v211
    %v220 = vmul.f32 %v156, %v212
    %v221 = vmul.f32 %v157, %v213
    %v222 = vld [vmem:[%s2] sm:$0x1]
    %v224 = vlaneseq
    %v225 = vshrl.u32 %v224, 7
    %v226 = vsub.s32 0, %v225
    %v227 = vrot.slane %v222, %v226
    %v229 = vmul.f32 %v214, %v227
    %v230 = vmul.f32 %v215, %v227
    %v231 = vmul.f32 %v216, %v227
    %v232 = vmul.f32 %v217, %v227
    %v233 = vmul.f32 %v218, %v227
    %v234 = vmul.f32 %v219, %v227
    %v235 = vmul.f32 %v220, %v227
    %v236 = vmul.f32 %v221, %v227
    %v237 = vld [vmem:[%s3] sm:$0x1]
    %v239 = vlaneseq
    %v240 = vshrl.u32 %v239, 7
    %v241 = vsub.s32 0, %v240
    %v242 = vrot.slane %v237, %v241
    %v244 = vadd.f32 %v229, %v242
    %v245 = vadd.f32 %v230, %v242
    %v246 = vadd.f32 %v231, %v242
    %v247 = vadd.f32 %v232, %v242
    %v248 = vadd.f32 %v233, %v242
    %v249 = vadd.f32 %v234, %v242
    %v250 = vadd.f32 %v235, %v242
    %v251 = vadd.f32 %v236, %v242
    %v252 = vpack.c.bf16 %v245, %v244
    %v253 = vpack.c.bf16 %v247, %v246
    %v254 = vpack.c.bf16 %v249, %v248
    %v255 = vpack.c.bf16 %v251, %v250
    %v256 = vld [vmem:[%s4] sm:$0xf]
    %v257 = vld [vmem:[%s4 + $0x4] sm:$0xf]
    %v258 = vld [vmem:[%s4 + $0x8] sm:$0xf]
    %v259 = vld [vmem:[%s4 + $0xc] sm:$0xf]
    %v264 = vunpack.c.l.b16 %v256
    %v265 = vunpack.c.l.b16 %v257
    %v266 = vunpack.c.l.b16 %v258
    %v267 = vunpack.c.l.b16 %v259
    %v268 = vpack.c.b16 %v265, %v264
    %v269 = vpack.c.b16 %v267, %v266
    %v273 = vsel %vm116, %v252, 0
    %v276 = vsel %vm116, %v253, 0
    %v279 = vsel %vm116, %v254, 0
    %v282 = vsel %vm116, %v255, 0
    %284 = vmatprep.subr.bf16.mxu0 0
    %285 = vmatpush1.bf16.msra.mxu0 %v268
    %286 = vmatprep.subr.bf16.mxu0 0
    %287 = vmatpush1.bf16.msra.mxu0 %v269
    %288 = vmatprep.subr.bf16.mxu0 0
    %289 = vmatpush1.bf16.msra.mxu0 0
    %290 = vmatprep.subr.bf16.mxu0 0
    %291 = vmatpush1.bf16.msra.mxu0 0
    %292 = vmatprep.subr.bf16.mxu0 0
    %293 = vmatpush1.bf16.msra.mxu0 0
    %294 = vmatprep.subr.bf16.mxu0 0
    %295 = vmatpush1.bf16.msra.mxu0 0
    %296 = vmatprep.subr.bf16.mxu0 0
    %297 = vmatpush1.bf16.msra.mxu0 0
    %298 = vmatprep.subr.bf16.mxu0 0
    %299 = vmatpush1.bf16.msra.mxu0 0
    %300 = vmatprep.subr.bf16.mxu0 0
    %301 = vmatpush1.bf16.msra.mxu0 0
    %302 = vmatprep.subr.bf16.mxu0 0
    %303 = vmatpush1.bf16.msra.mxu0 0
    %304 = vmatprep.subr.bf16.mxu0 0
    %305 = vmatpush1.bf16.msra.mxu0 0
    %306 = vmatprep.subr.bf16.mxu0 0
    %307 = vmatpush1.bf16.msra.mxu0 0
    %308 = vmatprep.subr.bf16.mxu0 0
    %309 = vmatpush1.bf16.msra.mxu0 0
    %310 = vmatprep.subr.bf16.mxu0 0
    %311 = vmatpush1.bf16.msra.mxu0 0
    %312 = vmatprep.subr.bf16.mxu0 0
    %313 = vmatpush1.bf16.msra.mxu0 0
    %314 = vmatprep.subr.bf16.mxu0 0
    %315 = vmatpush1.bf16.msra.mxu0 0
    %316 = vmatprep.mubr.bf16.mxu0 0
    %317 = vmatmul.mubr.bf16.gmra.mrb[0].mxu0 %v273
    %v318 = vpop.f32.mrb[0].mxu0
    %v319 = vadd.f32 0.0, %v318
    %v320 = vpop.f32.mrb[0].mxu0
    %v321 = vpop.f32.mrb[0].mxu0
    %v322 = vadd.f32 0.0, %v321
    %v323 = vpop.f32.mrb[0].mxu0
    %324 = vmatprep.mubr.bf16.mxu0 0
    %325 = vmatmul.mubr.bf16.gmra.mrb[0].mxu0 %v276
    %v326 = vpop.f32.mrb[0].mxu0
    %v327 = vadd.f32 0.0, %v326
    %v328 = vpop.f32.mrb[0].mxu0
    %v329 = vpop.f32.mrb[0].mxu0
    %v330 = vadd.f32 0.0, %v329
    %v331 = vpop.f32.mrb[0].mxu0
    %332 = vmatprep.mubr.bf16.mxu0 0
    %333 = vmatmul.mubr.bf16.gmra.mrb[0].mxu0 %v279
    %v334 = vpop.f32.mrb[0].mxu0
    %v335 = vadd.f32 0.0, %v334
    %v336 = vpop.f32.mrb[0].mxu0
    %v337 = vpop.f32.mrb[0].mxu0
    %v338 = vadd.f32 0.0, %v337
    %v339 = vpop.f32.mrb[0].mxu0
    %340 = vmatprep.mubr.bf16.mxu0 0
    %341 = vmatmul.mubr.bf16.gmra.mrb[0].mxu0 %v282
    %v342 = vpop.f32.mrb[0].mxu0
    %v343 = vadd.f32 0.0, %v342
    %v344 = vpop.f32.mrb[0].mxu0
    %v345 = vpop.f32.mrb[0].mxu0
    %v346 = vadd.f32 0.0, %v345
    %v347 = vpop.f32.mrb[0].mxu0
    %348 = vdwg.mxu0
    %v349 = vpack.c.bf16 %v322, %v319
    %v350 = vpack.c.bf16 %v330, %v327
    %v351 = vpack.c.bf16 %v338, %v335
    %v352 = vpack.c.bf16 %v346, %v343
    %v353 = vld [vmem:[#allocation3] sm:$0xf]
    %v354 = vld [vmem:[#allocation3 + $0x4] sm:$0xf]
    %v355 = vunpack.c.l.bf16 %v353
    %v356 = vunpack.c.l.bf16 %v354
    %358 = vrot.lane.b32.xlu0 %v349, 96
    %v359 = vpop.permute.xlu0 %358
    %vm360 = vcmask 64512
    %v362 = vsel %vm360, %v349, 0
    %v365 = vsel %vm360, %v359, 0
    %367 = vmatprep.subr.bf16.mxu0 0
    %368 = vmatpush1.bf16.xpose.msra.mxu0 %v365
    %369 = vmatprep.subr.bf16.mxu0 0
    %370 = vmatpush1.bf16.xpose.msra.mxu0 0
    %371 = vmatprep.subr.bf16.mxu0 0
    %372 = vmatpush1.bf16.xpose.msra.mxu0 0
    %373 = vmatprep.subr.bf16.mxu0 0
    %374 = vmatpush1.bf16.xpose.msra.mxu0 0
    %375 = vmatprep.subr.bf16.mxu0 0
    %376 = vmatpush1.bf16.xpose.msra.mxu0 0
    %377 = vmatprep.subr.bf16.mxu0 0
    %378 = vmatpush1.bf16.xpose.msra.mxu0 0
    %379 = vmatprep.subr.bf16.mxu0 0
    %380 = vmatpush1.bf16.xpose.msra.mxu0 0
    %381 = vmatprep.subr.bf16.mxu0 0
    %382 = vmatpush1.bf16.xpose.msra.mxu0 0
    %383 = vmatprep.subr.bf16.mxu0 0
    %384 = vmatpush1.bf16.xpose.msra.mxu0 0
    %385 = vmatprep.subr.bf16.mxu0 0
    %386 = vmatpush1.bf16.xpose.msra.mxu0 0
    %387 = vmatprep.subr.bf16.mxu0 0
    %388 = vmatpush1.bf16.xpose.msra.mxu0 0
    %389 = vmatprep.subr.bf16.mxu0 0
    %390 = vmatpush1.bf16.xpose.msra.mxu0 0
    %391 = vmatprep.subr.bf16.mxu0 0
    %392 = vmatpush1.bf16.xpose.msra.mxu0 0
    %393 = vmatprep.subr.bf16.mxu0 0
    %394 = vmatpush1.bf16.xpose.msra.mxu0 0
    %395 = vmatprep.subr.bf16.mxu0 0
    %396 = vmatpush1.bf16.xpose.msra.mxu0 0
    %397 = vmatprep.subr.bf16.mxu0 0
    %398 = vmatpush1.bf16.xpose.msra.mxu0 0
    %399 = vmatprep.mubr.bf16.mxu0 0
    %400 = vmatmul.mubr.bf16.gmra.mrb[0].mxu0 %v362
    %v401 = vpop.f32.mrb[0].mxu0
    %v402 = vadd.f32 %v355, %v401
    %v403 = vpop.f32.mrb[0].mxu0
    %v404 = vpop.f32.mrb[0].mxu0
    %v405 = vadd.f32 %v356, %v404
    %v406 = vpop.f32.mrb[0].mxu0
    %407 = vdwg.mxu0
    %409 = vrot.lane.b32.xlu0 %v350, 96
    %v410 = vpop.permute.xlu0 %409
    %v412 = vsel %vm360, %v350, 0
    %v415 = vsel %vm360, %v410, 0
    %417 = vmatprep.subr.bf16.mxu0 0
    %418 = vmatpush1.bf16.xpose.msra.mxu0 %v415
    %419 = vmatprep.subr.bf16.mxu0 0
    %420 = vmatpush1.bf16.xpose.msra.mxu0 0
    %421 = vmatprep.subr.bf16.mxu0 0
    %422 = vmatpush1.bf16.xpose.msra.mxu0 0
    %423 = vmatprep.subr.bf16.mxu0 0
    %424 = vmatpush1.bf16.xpose.msra.mxu0 0
    %425 = vmatprep.subr.bf16.mxu0 0
    %426 = vmatpush1.bf16.xpose.msra.mxu0 0
    %427 = vmatprep.subr.bf16.mxu0 0
    %428 = vmatpush1.bf16.xpose.msra.mxu0 0
    %429 = vmatprep.subr.bf16.mxu0 0
    %430 = vmatpush1.bf16.xpose.msra.mxu0 0
    %431 = vmatprep.subr.bf16.mxu0 0
    %432 = vmatpush1.bf16.xpose.msra.mxu0 0
    %433 = vmatprep.subr.bf16.mxu0 0
    %434 = vmatpush1.bf16.xpose.msra.mxu0 0
    %435 = vmatprep.subr.bf16.mxu0 0
    %436 = vmatpush1.bf16.xpose.msra.mxu0 0
    %437 = vmatprep.subr.bf16.mxu0 0
    %438 = vmatpush1.bf16.xpose.msra.mxu0 0
    %439 = vmatprep.subr.bf16.mxu0 0
    %440 = vmatpush1.bf16.xpose.msra.mxu0 0
    %441 = vmatprep.subr.bf16.mxu0 0
    %442 = vmatpush1.bf16.xpose.msra.mxu0 0
    %443 = vmatprep.subr.bf16.mxu0 0
    %444 = vmatpush1.bf16.xpose.msra.mxu0 0
    %445 = vmatprep.subr.bf16.mxu0 0
    %446 = vmatpush1.bf16.xpose.msra.mxu0 0
    %447 = vmatprep.subr.bf16.mxu0 0
    %448 = vmatpush1.bf16.xpose.msra.mxu0 0
    %449 = vmatprep.mubr.bf16.mxu0 0
    %450 = vmatmul.mubr.bf16.gmra.mrb[0].mxu0 %v412
    %v451 = vpop.f32.mrb[0].mxu0
    %v452 = vadd.f32 %v355, %v451
    %v453 = vpop.f32.mrb[0].mxu0
    %v454 = vpop.f32.mrb[0].mxu0
    %v455 = vadd.f32 %v356, %v454
    %v456 = vpop.f32.mrb[0].mxu0
    %457 = vdwg.mxu0
    %459 = vrot.lane.b32.xlu0 %v351, 96
    %v460 = vpop.permute.xlu0 %459
    %v462 = vsel %vm360, %v351, 0
    %v465 = vsel %vm360, %v460, 0
    %467 = vmatprep.subr.bf16.mxu0 0
    %468 = vmatpush1.bf16.xpose.msra.mxu0 %v465
    %469 = vmatprep.subr.bf16.mxu0 0
    %470 = vmatpush1.bf16.xpose.msra.mxu0 0
    %471 = vmatprep.subr.bf16.mxu0 0
    %472 = vmatpush1.bf16.xpose.msra.mxu0 0
    %473 = vmatprep.subr.bf16.mxu0 0
    %474 = vmatpush1.bf16.xpose.msra.mxu0 0
    %475 = vmatprep.subr.bf16.mxu0 0
    %476 = vmatpush1.bf16.xpose.msra.mxu0 0
    %477 = vmatprep.subr.bf16.mxu0 0
    %478 = vmatpush1.bf16.xpose.msra.mxu0 0
    %479 = vmatprep.subr.bf16.mxu0 0
    %480 = vmatpush1.bf16.xpose.msra.mxu0 0
    %481 = vmatprep.subr.bf16.mxu0 0
    %482 = vmatpush1.bf16.xpose.msra.mxu0 0
    %483 = vmatprep.subr.bf16.mxu0 0
    %484 = vmatpush1.bf16.xpose.msra.mxu0 0
    %485 = vmatprep.subr.bf16.mxu0 0
    %486 = vmatpush1.bf16.xpose.msra.mxu0 0
    %487 = vmatprep.subr.bf16.mxu0 0
    %488 = vmatpush1.bf16.xpose.msra.mxu0 0
    %489 = vmatprep.subr.bf16.mxu0 0
    %490 = vmatpush1.bf16.xpose.msra.mxu0 0
    %491 = vmatprep.subr.bf16.mxu0 0
    %492 = vmatpush1.bf16.xpose.msra.mxu0 0
    %493 = vmatprep.subr.bf16.mxu0 0
    %494 = vmatpush1.bf16.xpose.msra.mxu0 0
    %495 = vmatprep.subr.bf16.mxu0 0
    %496 = vmatpush1.bf16.xpose.msra.mxu0 0
    %497 = vmatprep.subr.bf16.mxu0 0
    %498 = vmatpush1.bf16.xpose.msra.mxu0 0
    %499 = vmatprep.mubr.bf16.mxu0 0
    %500 = vmatmul.mubr.bf16.gmra.mrb[0].mxu0 %v462
    %v501 = vpop.f32.mrb[0].mxu0
    %v502 = vadd.f32 %v355, %v501
    %v503 = vpop.f32.mrb[0].mxu0
    %v504 = vpop.f32.mrb[0].mxu0
    %v505 = vadd.f32 %v356, %v504
    %v506 = vpop.f32.mrb[0].mxu0
    %507 = vdwg.mxu0
    %509 = vrot.lane.b32.xlu0 %v352, 96
    %v510 = vpop.permute.xlu0 %509
    %v512 = vsel %vm360, %v352, 0
    %v515 = vsel %vm360, %v510, 0
    %517 = vmatprep.subr.bf16.mxu0 0
    %518 = vmatpush1.bf16.xpose.msra.mxu0 %v515
    %519 = vmatprep.subr.bf16.mxu0 0
    %520 = vmatpush1.bf16.xpose.msra.mxu0 0
    %521 = vmatprep.subr.bf16.mxu0 0
    %522 = vmatpush1.bf16.xpose.msra.mxu0 0
    %523 = vmatprep.subr.bf16.mxu0 0
    %524 = vmatpush1.bf16.xpose.msra.mxu0 0
    %525 = vmatprep.subr.bf16.mxu0 0
    %526 = vmatpush1.bf16.xpose.msra.mxu0 0
    %527 = vmatprep.subr.bf16.mxu0 0
    %528 = vmatpush1.bf16.xpose.msra.mxu0 0
    %529 = vmatprep.subr.bf16.mxu0 0
    %530 = vmatpush1.bf16.xpose.msra.mxu0 0
    %531 = vmatprep.subr.bf16.mxu0 0
    %532 = vmatpush1.bf16.xpose.msra.mxu0 0
    %533 = vmatprep.subr.bf16.mxu0 0
    %534 = vmatpush1.bf16.xpose.msra.mxu0 0
    %535 = vmatprep.subr.bf16.mxu0 0
    %536 = vmatpush1.bf16.xpose.msra.mxu0 0
    %537 = vmatprep.subr.bf16.mxu0 0
    %538 = vmatpush1.bf16.xpose.msra.mxu0 0
    %539 = vmatprep.subr.bf16.mxu0 0
    %540 = vmatpush1.bf16.xpose.msra.mxu0 0
    %541 = vmatprep.subr.bf16.mxu0 0
    %542 = vmatpush1.bf16.xpose.msra.mxu0 0
    %543 = vmatprep.subr.bf16.mxu0 0
    %544 = vmatpush1.bf16.xpose.msra.mxu0 0
    %545 = vmatprep.subr.bf16.mxu0 0
    %546 = vmatpush1.bf16.xpose.msra.mxu0 0
    %547 = vmatprep.subr.bf16.mxu0 0
    %548 = vmatpush1.bf16.xpose.msra.mxu0 0
    %549 = vmatprep.mubr.bf16.mxu0 0
    %550 = vmatmul.mubr.bf16.gmra.mrb[0].mxu0 %v512
    %v551 = vpop.f32.mrb[0].mxu0
    %v552 = vadd.f32 %v355, %v551
    %v553 = vpop.f32.mrb[0].mxu0
    %v554 = vpop.f32.mrb[0].mxu0
    %v555 = vadd.f32 %v356, %v554
    %v556 = vpop.f32.mrb[0].mxu0
    %557 = vdwg.mxu0
    %vm558 = vcmask 130048
    %v559 = vsel %vm558, %v402, -inf
    %560 = vmax.xlane.f32.xlu0 %v559
    %v561 = vpop.xlane.xlu0 %560
    %v562 = vsel %vm558, %v405, -inf
    %563 = vmax.xlane.f32.xlu0 %v562
    %v564 = vpop.xlane.xlu0 %563
    %v565 = vsel %vm558, %v452, -inf
    %566 = vmax.xlane.f32.xlu0 %v565
    %v567 = vpop.xlane.xlu0 %566
    %v568 = vsel %vm558, %v455, -inf
    %569 = vmax.xlane.f32.xlu0 %v568
    %v570 = vpop.xlane.xlu0 %569
    %v571 = vsel %vm558, %v502, -inf
    %572 = vmax.xlane.f32.xlu0 %v571
    %v573 = vpop.xlane.xlu0 %572
    %v574 = vsel %vm558, %v505, -inf
    %575 = vmax.xlane.f32.xlu0 %v574
    %v576 = vpop.xlane.xlu0 %575
    %v577 = vsel %vm558, %v552, -inf
    %578 = vmax.xlane.f32.xlu0 %v577
    %v579 = vpop.xlane.xlu0 %578
    %v580 = vsel %vm558, %v555, -inf
    %581 = vmax.xlane.f32.xlu0 %v580
    %v582 = vpop.xlane.xlu0 %581
    %v583 = vsub.f32 %v402, %v561
    %v584 = vsub.f32 %v405, %v564
    %v585 = vsub.f32 %v452, %v567
    %v586 = vsub.f32 %v455, %v570
    %v587 = vsub.f32 %v502, %v573
    %v588 = vsub.f32 %v505, %v576
    %v589 = vsub.f32 %v552, %v579
    %v590 = vsub.f32 %v555, %v582
    %v591 = vmul.f32 %v583, 1.442695
    %v592 = vpow.pop %v591
    %v593 = vmul.f32 %v584, 1.442695
    %v594 = vpow.pop %v593
    %v595 = vmul.f32 %v585, 1.442695
    %v596 = vpow.pop %v595
    %v597 = vmul.f32 %v586, 1.442695
    %v598 = vpow.pop %v597
    %v599 = vmul.f32 %v587, 1.442695
    %v600 = vpow.pop %v599
    %v601 = vmul.f32 %v588, 1.442695
    %v602 = vpow.pop %v601
    %v603 = vmul.f32 %v589, 1.442695
    %v604 = vpow.pop %v603
    %v605 = vmul.f32 %v590, 1.442695
    %v606 = vpow.pop %v605
    %v607 = vsel %vm558, %v592, 0.0
    %608 = vadd.xlane.f32.xlu0 %v607
    %v609 = vpop.xlane.xlu0 %608
    %v610 = vsel %vm558, %v594, 0.0
    %611 = vadd.xlane.f32.xlu0 %v610
    %v612 = vpop.xlane.xlu0 %611
    %v613 = vsel %vm558, %v596, 0.0
    %614 = vadd.xlane.f32.xlu0 %v613
    %v615 = vpop.xlane.xlu0 %614
    %v616 = vsel %vm558, %v598, 0.0
    %617 = vadd.xlane.f32.xlu0 %v616
    %v618 = vpop.xlane.xlu0 %617
    %v619 = vsel %vm558, %v600, 0.0
    %620 = vadd.xlane.f32.xlu0 %v619
    %v621 = vpop.xlane.xlu0 %620
    %v622 = vsel %vm558, %v602, 0.0
    %623 = vadd.xlane.f32.xlu0 %v622
    %v624 = vpop.xlane.xlu0 %623
    %v625 = vsel %vm558, %v604, 0.0
    %626 = vadd.xlane.f32.xlu0 %v625
    %v627 = vpop.xlane.xlu0 %626
    %v628 = vsel %vm558, %v606, 0.0
    %629 = vadd.xlane.f32.xlu0 %v628
    %v630 = vpop.xlane.xlu0 %629
    %v631 = vrcp.pop %v609
    %v632 = vrcp.pop %v612
    %v633 = vrcp.pop %v615
    %v634 = vrcp.pop %v618
    %v635 = vrcp.pop %v621
    %v636 = vrcp.pop %v624
    %v637 = vrcp.pop %v627
    %v638 = vrcp.pop %v630
    %v639 = vmul.f32 %v592, %v631
    %v640 = vmul.f32 %v594, %v632
    %v641 = vmul.f32 %v596, %v633
    %v642 = vmul.f32 %v598, %v634
    %v643 = vmul.f32 %v600, %v635
    %v644 = vmul.f32 %v602, %v636
    %v645 = vmul.f32 %v604, %v637
    %v646 = vmul.f32 %v606, %v638
    %v647 = vpack.c.bf16 %v640, %v639
    %v648 = vpack.c.bf16 %v642, %v641
    %v649 = vpack.c.bf16 %v644, %v643
    %v650 = vpack.c.bf16 %v646, %v645
    %651 = vrot.lane.b32.xlu0 %v349, 64
    %v652 = vpop.permute.xlu0 %651
    %v655 = vsel %vm558, %v647, 0
    %657 = vmatprep.subr.bf16.mxu0 0
    %658 = vmatpush1.bf16.msra.mxu0 %v652
    %659 = vmatprep.subr.bf16.mxu0 0
    %660 = vmatpush1.bf16.msra.mxu0 0
    %661 = vmatprep.subr.bf16.mxu0 0
    %662 = vmatpush1.bf16.msra.mxu0 0
    %663 = vmatprep.subr.bf16.mxu0 0
    %664 = vmatpush1.bf16.msra.mxu0 0
    %665 = vmatprep.subr.bf16.mxu0 0
    %666 = vmatpush1.bf16.msra.mxu0 0
    %667 = vmatprep.subr.bf16.mxu0 0
    %668 = vmatpush1.bf16.msra.mxu0 0
    %669 = vmatprep.subr.bf16.mxu0 0
    %670 = vmatpush1.bf16.msra.mxu0 0
    %671 = vmatprep.subr.bf16.mxu0 0
    %672 = vmatpush1.bf16.msra.mxu0 0
    %673 = vmatprep.subr.bf16.mxu0 0
    %674 = vmatpush1.bf16.msra.mxu0 0
    %675 = vmatprep.subr.bf16.mxu0 0
    %676 = vmatpush1.bf16.msra.mxu0 0
    %677 = vmatprep.subr.bf16.mxu0 0
    %678 = vmatpush1.bf16.msra.mxu0 0
    %679 = vmatprep.subr.bf16.mxu0 0
    %680 = vmatpush1.bf16.msra.mxu0 0
    %681 = vmatprep.subr.bf16.mxu0 0
    %682 = vmatpush1.bf16.msra.mxu0 0
    %683 = vmatprep.subr.bf16.mxu0 0
    %684 = vmatpush1.bf16.msra.mxu0 0
    %685 = vmatprep.subr.bf16.mxu0 0
    %686 = vmatpush1.bf16.msra.mxu0 0
    %687 = vmatprep.subr.bf16.mxu0 0
    %688 = vmatpush1.bf16.msra.mxu0 0
    %689 = vmatprep.mubr.bf16.mxu0 0
    %690 = vmatmul.mubr.bf16.gmra.mrb[0].mxu0 %v655
    %v691 = vpop.f32.mrb[0].mxu0
    %v692 = vadd.f32 0.0, %v691
    %v693 = vpop.f32.mrb[0].mxu0
    %v694 = vpop.f32.mrb[0].mxu0
    %v695 = vadd.f32 0.0, %v694
    %v696 = vpop.f32.mrb[0].mxu0
    %697 = vdwg.mxu0
    %698 = vrot.lane.b32.xlu0 %v350, 64
    %v699 = vpop.permute.xlu0 %698
    %v702 = vsel %vm558, %v648, 0
    %704 = vmatprep.subr.bf16.mxu0 0
    %705 = vmatpush1.bf16.msra.mxu0 %v699
    %706 = vmatprep.subr.bf16.mxu0 0
    %707 = vmatpush1.bf16.msra.mxu0 0
    %708 = vmatprep.subr.bf16.mxu0 0
    %709 = vmatpush1.bf16.msra.mxu0 0
    %710 = vmatprep.subr.bf16.mxu0 0
    %711 = vmatpush1.bf16.msra.mxu0 0
    %712 = vmatprep.subr.bf16.mxu0 0
    %713 = vmatpush1.bf16.msra.mxu0 0
    %714 = vmatprep.subr.bf16.mxu0 0
    %715 = vmatpush1.bf16.msra.mxu0 0
    %716 = vmatprep.subr.bf16.mxu0 0
    %717 = vmatpush1.bf16.msra.mxu0 0
    %718 = vmatprep.subr.bf16.mxu0 0
    %719 = vmatpush1.bf16.msra.mxu0 0
    %720 = vmatprep.subr.bf16.mxu0 0
    %721 = vmatpush1.bf16.msra.mxu0 0
    %722 = vmatprep.subr.bf16.mxu0 0
    %723 = vmatpush1.bf16.msra.mxu0 0
    %724 = vmatprep.subr.bf16.mxu0 0
    %725 = vmatpush1.bf16.msra.mxu0 0
    %726 = vmatprep.subr.bf16.mxu0 0
    %727 = vmatpush1.bf16.msra.mxu0 0
    %728 = vmatprep.subr.bf16.mxu0 0
    %729 = vmatpush1.bf16.msra.mxu0 0
    %730 = vmatprep.subr.bf16.mxu0 0
    %731 = vmatpush1.bf16.msra.mxu0 0
    %732 = vmatprep.subr.bf16.mxu0 0
    %733 = vmatpush1.bf16.msra.mxu0 0
    %734 = vmatprep.subr.bf16.mxu0 0
    %735 = vmatpush1.bf16.msra.mxu0 0
    %736 = vmatprep.mubr.bf16.mxu0 0
    %737 = vmatmul.mubr.bf16.gmra.mrb[0].mxu0 %v702
    %v738 = vpop.f32.mrb[0].mxu0
    %v739 = vadd.f32 0.0, %v738
    %v740 = vpop.f32.mrb[0].mxu0
    %v741 = vpop.f32.mrb[0].mxu0
    %v742 = vadd.f32 0.0, %v741
    %v743 = vpop.f32.mrb[0].mxu0
    %744 = vdwg.mxu0
    %745 = vrot.lane.b32.xlu0 %v351, 64
    %v746 = vpop.permute.xlu0 %745
    %v749 = vsel %vm558, %v649, 0
    %751 = vmatprep.subr.bf16.mxu0 0
    %752 = vmatpush1.bf16.msra.mxu0 %v746
    %753 = vmatprep.subr.bf16.mxu0 0
    %754 = vmatpush1.bf16.msra.mxu0 0
    %755 = vmatprep.subr.bf16.mxu0 0
    %756 = vmatpush1.bf16.msra.mxu0 0
    %757 = vmatprep.subr.bf16.mxu0 0
    %758 = vmatpush1.bf16.msra.mxu0 0
    %759 = vmatprep.subr.bf16.mxu0 0
    %760 = vmatpush1.bf16.msra.mxu0 0
    %761 = vmatprep.subr.bf16.mxu0 0
    %762 = vmatpush1.bf16.msra.mxu0 0
    %763 = vmatprep.subr.bf16.mxu0 0
    %764 = vmatpush1.bf16.msra.mxu0 0
    %765 = vmatprep.subr.bf16.mxu0 0
    %766 = vmatpush1.bf16.msra.mxu0 0
    %767 = vmatprep.subr.bf16.mxu0 0
    %768 = vmatpush1.bf16.msra.mxu0 0
    %769 = vmatprep.subr.bf16.mxu0 0
    %770 = vmatpush1.bf16.msra.mxu0 0
    %771 = vmatprep.subr.bf16.mxu0 0
    %772 = vmatpush1.bf16.msra.mxu0 0
    %773 = vmatprep.subr.bf16.mxu0 0
    %774 = vmatpush1.bf16.msra.mxu0 0
    %775 = vmatprep.subr.bf16.mxu0 0
    %776 = vmatpush1.bf16.msra.mxu0 0
    %777 = vmatprep.subr.bf16.mxu0 0
    %778 = vmatpush1.bf16.msra.mxu0 0
    %779 = vmatprep.subr.bf16.mxu0 0
    %780 = vmatpush1.bf16.msra.mxu0 0
    %781 = vmatprep.subr.bf16.mxu0 0
    %782 = vmatpush1.bf16.msra.mxu0 0
    %783 = vmatprep.mubr.bf16.mxu0 0
    %784 = vmatmul.mubr.bf16.gmra.mrb[0].mxu0 %v749
    %v785 = vpop.f32.mrb[0].mxu0
    %v786 = vadd.f32 0.0, %v785
    %v787 = vpop.f32.mrb[0].mxu0
    %v788 = vpop.f32.mrb[0].mxu0
    %v789 = vadd.f32 0.0, %v788
    %v790 = vpop.f32.mrb[0].mxu0
    %791 = vdwg.mxu0
    %792 = vrot.lane.b32.xlu0 %v352, 64
    %v793 = vpop.permute.xlu0 %792
    %v796 = vsel %vm558, %v650, 0
    %798 = vmatprep.subr.bf16.mxu0 0
    %799 = vmatpush1.bf16.msra.mxu0 %v793
    %800 = vmatprep.subr.bf16.mxu0 0
    %801 = vmatpush1.bf16.msra.mxu0 0
    %802 = vmatprep.subr.bf16.mxu0 0
    %803 = vmatpush1.bf16.msra.mxu0 0
    %804 = vmatprep.subr.bf16.mxu0 0
    %805 = vmatpush1.bf16.msra.mxu0 0
    %806 = vmatprep.subr.bf16.mxu0 0
    %807 = vmatpush1.bf16.msra.mxu0 0
    %808 = vmatprep.subr.bf16.mxu0 0
    %809 = vmatpush1.bf16.msra.mxu0 0
    %810 = vmatprep.subr.bf16.mxu0 0
    %811 = vmatpush1.bf16.msra.mxu0 0
    %812 = vmatprep.subr.bf16.mxu0 0
    %813 = vmatpush1.bf16.msra.mxu0 0
    %814 = vmatprep.subr.bf16.mxu0 0
    %815 = vmatpush1.bf16.msra.mxu0 0
    %816 = vmatprep.subr.bf16.mxu0 0
    %817 = vmatpush1.bf16.msra.mxu0 0
    %818 = vmatprep.subr.bf16.mxu0 0
    %819 = vmatpush1.bf16.msra.mxu0 0
    %820 = vmatprep.subr.bf16.mxu0 0
    %821 = vmatpush1.bf16.msra.mxu0 0
    %822 = vmatprep.subr.bf16.mxu0 0
    %823 = vmatpush1.bf16.msra.mxu0 0
    %824 = vmatprep.subr.bf16.mxu0 0
    %825 = vmatpush1.bf16.msra.mxu0 0
    %826 = vmatprep.subr.bf16.mxu0 0
    %827 = vmatpush1.bf16.msra.mxu0 0
    %828 = vmatprep.subr.bf16.mxu0 0
    %829 = vmatpush1.bf16.msra.mxu0 0
    %830 = vmatprep.mubr.bf16.mxu0 0
    %831 = vmatmul.mubr.bf16.gmra.mrb[0].mxu0 %v796
    %v832 = vpop.f32.mrb[0].mxu0
    %v833 = vadd.f32 0.0, %v832
    %v834 = vpop.f32.mrb[0].mxu0
    %v835 = vpop.f32.mrb[0].mxu0
    %v836 = vadd.f32 0.0, %v835
    %v837 = vpop.f32.mrb[0].mxu0
    %838 = vdwg.mxu0
    %v839 = vpack.c.bf16 %v695, %v692
    %v840 = vpack.c.bf16 %v742, %v739
    %v841 = vpack.c.bf16 %v789, %v786
    %v842 = vpack.c.bf16 %v836, %v833
    %843 = vst.msk [vmem:[#allocation2] sm:$0xff] %vm360, %v839
    %844 = vst.msk [vmem:[#allocation2 + $0x8] sm:$0xff] %vm360, %v840
    %845 = vst.msk [vmem:[#allocation2 + $0x10] sm:$0xff] %vm360, %v841
    %846 = vst.msk [vmem:[#allocation2 + $0x18] sm:$0xff] %vm360, %v842
    %s847 = scalar_lea.vmem [#allocation3], 8
    %v848 = vld [vmem:[%s847] sm:$0xf]
    %v849 = vld [vmem:[%s847 + $0x4] sm:$0xf]
    %v850 = vunpack.c.l.bf16 %v848
    %v851 = vunpack.c.l.bf16 %v849
    %852 = vrot.lane.b32.xlu0 %v349, 120
    %v853 = vpop.permute.xlu0 %852
    %854 = vrot.lane.b32.xlu0 %v349, 88
    %v855 = vpop.permute.xlu0 %854
    %v857 = vsel %vm360, %v853, 0
    %v860 = vsel %vm360, %v855, 0
    %862 = vmatprep.subr.bf16.mxu0 0
    %863 = vmatpush1.bf16.xpose.msra.mxu0 %v860
    %864 = vmatprep.subr.bf16.mxu0 0
    %865 = vmatpush1.bf16.xpose.msra.mxu0 0
    %866 = vmatprep.subr.bf16.mxu0 0
    %867 = vmatpush1.bf16.xpose.msra.mxu0 0
    %868 = vmatprep.subr.bf16.mxu0 0
    %869 = vmatpush1.bf16.xpose.msra.mxu0 0
    %870 = vmatprep.subr.bf16.mxu0 0
    %871 = vmatpush1.bf16.xpose.msra.mxu0 0
    %872 = vmatprep.subr.bf16.mxu0 0
    %873 = vmatpush1.bf16.xpose.msra.mxu0 0
    %874 = vmatprep.subr.bf16.mxu0 0
    %875 = vmatpush1.bf16.xpose.msra.mxu0 0
    %876 = vmatprep.subr.bf16.mxu0 0
    %877 = vmatpush1.bf16.xpose.msra.mxu0 0
    %878 = vmatprep.subr.bf16.mxu0 0
    %879 = vmatpush1.bf16.xpose.msra.mxu0 0
    %880 = vmatprep.subr.bf16.mxu0 0
    %881 = vmatpush1.bf16.xpose.msra.mxu0 0
    %882 = vmatprep.subr.bf16.mxu0 0
    %883 = vmatpush1.bf16.xpose.msra.mxu0 0
    %884 = vmatprep.subr.bf16.mxu0 0
    %885 = vmatpush1.bf16.xpose.msra.mxu0 0
    %886 = vmatprep.subr.bf16.mxu0 0
    %887 = vmatpush1.bf16.xpose.msra.mxu0 0
    %888 = vmatprep.subr.bf16.mxu0 0
    %889 = vmatpush1.bf16.xpose.msra.mxu0 0
    %890 = vmatprep.subr.bf16.mxu0 0
    %891 = vmatpush1.bf16.xpose.msra.mxu0 0
    %892 = vmatprep.subr.bf16.mxu0 0
    %893 = vmatpush1.bf16.xpose.msra.mxu0 0
    %894 = vmatprep.mubr.bf16.mxu0 0
    %895 = vmatmul.mubr.bf16.gmra.mrb[0].mxu0 %v857
    %v896 = vpop.f32.mrb[0].mxu0
    %v897 = vadd.f32 %v850, %v896
    %v898 = vpop.f32.mrb[0].mxu0
    %v899 = vpop.f32.mrb[0].mxu0
    %v900 = vadd.f32 %v851, %v899
    %v901 = vpop.f32.mrb[0].mxu0
    %902 = vdwg.mxu0
    %903 = vrot.lane.b32.xlu0 %v350, 120
    %v904 = vpop.permute.xlu0 %903
    %905 = vrot.lane.b32.xlu0 %v350, 88
    %v906 = vpop.permute.xlu0 %905
    %v908 = vsel %vm360, %v904, 0
    %v911 = vsel %vm360, %v906, 0
    %913 = vmatprep.subr.bf16.mxu0 0
    %914 = vmatpush1.bf16.xpose.msra.mxu0 %v911
    %915 = vmatprep.subr.bf16.mxu0 0
    %916 = vmatpush1.bf16.xpose.msra.mxu0 0
    %917 = vmatprep.subr.bf16.mxu0 0
    %918 = vmatpush1.bf16.xpose.msra.mxu0 0
    %919 = vmatprep.subr.bf16.mxu0 0
    %920 = vmatpush1.bf16.xpose.msra.mxu0 0
    %921 = vmatprep.subr.bf16.mxu0 0
    %922 = vmatpush1.bf16.xpose.msra.mxu0 0
    %923 = vmatprep.subr.bf16.mxu0 0
    %924 = vmatpush1.bf16.xpose.msra.mxu0 0
    %925 = vmatprep.subr.bf16.mxu0 0
    %926 = vmatpush1.bf16.xpose.msra.mxu0 0
    %927 = vmatprep.subr.bf16.mxu0 0
    %928 = vmatpush1.bf16.xpose.msra.mxu0 0
    %929 = vmatprep.subr.bf16.mxu0 0
    %930 = vmatpush1.bf16.xpose.msra.mxu0 0
    %931 = vmatprep.subr.bf16.mxu0 0
    %932 = vmatpush1.bf16.xpose.msra.mxu0 0
    %933 = vmatprep.subr.bf16.mxu0 0
    %934 = vmatpush1.bf16.xpose.msra.mxu0 0
    %935 = vmatprep.subr.bf16.mxu0 0
    %936 = vmatpush1.bf16.xpose.msra.mxu0 0
    %937 = vmatprep.subr.bf16.mxu0 0
    %938 = vmatpush1.bf16.xpose.msra.mxu0 0
    %939 = vmatprep.subr.bf16.mxu0 0
    %940 = vmatpush1.bf16.xpose.msra.mxu0 0
    %941 = vmatprep.subr.bf16.mxu0 0
    %942 = vmatpush1.bf16.xpose.msra.mxu0 0
    %943 = vmatprep.subr.bf16.mxu0 0
    %944 = vmatpush1.bf16.xpose.msra.mxu0 0
    %945 = vmatprep.mubr.bf16.mxu0 0
    %946 = vmatmul.mubr.bf16.gmra.mrb[0].mxu0 %v908
    %v947 = vpop.f32.mrb[0].mxu0
    %v948 = vadd.f32 %v850, %v947
    %v949 = vpop.f32.mrb[0].mxu0
    %v950 = vpop.f32.mrb[0].mxu0
    %v951 = vadd.f32 %v851, %v950
    %v952 = vpop.f32.mrb[0].mxu0
    %953 = vdwg.mxu0
    %954 = vrot.lane.b32.xlu0 %v351, 120
    %v955 = vpop.permute.xlu0 %954
    %956 = vrot.lane.b32.xlu0 %v351, 88
    %v957 = vpop.permute.xlu0 %956
    %v959 = vsel %vm360, %v955, 0
    %v962 = vsel %vm360, %v957, 0
    %964 = vmatprep.subr.bf16.mxu0 0
    %965 = vmatpush1.bf16.xpose.msra.mxu0 %v962
    %966 = vmatprep.subr.bf16.mxu0 0
    %967 = vmatpush1.bf16.xpose.msra.mxu0 0
    %968 = vmatprep.subr.bf16.mxu0 0
    %969 = vmatpush1.bf16.xpose.msra.mxu0 0
    %970 = vmatprep.subr.bf16.mxu0 0
    %971 = vmatpush1.bf16.xpose.msra.mxu0 0
    %972 = vmatprep.subr.bf16.mxu0 0
    %973 = vmatpush1.bf16.xpose.msra.mxu0 0
    %974 = vmatprep.subr.bf16.mxu0 0
    %975 = vmatpush1.bf16.xpose.msra.mxu0 0
    %976 = vmatprep.subr.bf16.mxu0 0
    %977 = vmatpush1.bf16.xpose.msra.mxu0 0
    %978 = vmatprep.subr.bf16.mxu0 0
    %979 = vmatpush1.bf16.xpose.msra.mxu0 0
    %980 = vmatprep.subr.bf16.mxu0 0
    %981 = vmatpush1.bf16.xpose.msra.mxu0 0
    %982 = vmatprep.subr.bf16.mxu0 0
    %983 = vmatpush1.bf16.xpose.msra.mxu0 0
    %984 = vmatprep.subr.bf16.mxu0 0
    %985 = vmatpush1.bf16.xpose.msra.mxu0 0
    %986 = vmatprep.subr.bf16.mxu0 0
    %987 = vmatpush1.bf16.xpose.msra.mxu0 0
    %988 = vmatprep.subr.bf16.mxu0 0
    %989 = vmatpush1.bf16.xpose.msra.mxu0 0
    %990 = vmatprep.subr.bf16.mxu0 0
    %991 = vmatpush1.bf16.xpose.msra.mxu0 0
    %992 = vmatprep.subr.bf16.mxu0 0
    %993 = vmatpush1.bf16.xpose.msra.mxu0 0
    %994 = vmatprep.subr.bf16.mxu0 0
    %995 = vmatpush1.bf16.xpose.msra.mxu0 0
    %996 = vmatprep.mubr.bf16.mxu0 0
    %997 = vmatmul.mubr.bf16.gmra.mrb[0].mxu0 %v959
    %v998 = vpop.f32.mrb[0].mxu0
    %v999 = vadd.f32 %v850, %v998
    %v1000 = vpop.f32.mrb[0].mxu0
    %v1001 = vpop.f32.mrb[0].mxu0
    %v1002 = vadd.f32 %v851, %v1001
    %v1003 = vpop.f32.mrb[0].mxu0
    %1004 = vdwg.mxu0
    %1005 = vrot.lane.b32.xlu0 %v352, 120
    %v1006 = vpop.permute.xlu0 %1005
    %1007 = vrot.lane.b32.xlu0 %v352, 88
    %v1008 = vpop.permute.xlu0 %1007
    %v1010 = vsel %vm360, %v1006, 0
    %v1013 = vsel %vm360, %v1008, 0
    %1015 = vmatprep.subr.bf16.mxu0 0
    %1016 = vmatpush1.bf16.xpose.msra.mxu0 %v1013
    %1017 = vmatprep.subr.bf16.mxu0 0
    %1018 = vmatpush1.bf16.xpose.msra.mxu0 0
    %1019 = vmatprep.subr.bf16.mxu0 0
    %1020 = vmatpush1.bf16.xpose.msra.mxu0 0
    %1021 = vmatprep.subr.bf16.mxu0 0
    %1022 = vmatpush1.bf16.xpose.msra.mxu0 0
    %1023 = vmatprep.subr.bf16.mxu0 0
    %1024 = vmatpush1.bf16.xpose.msra.mxu0 0
    %1025 = vmatprep.subr.bf16.mxu0 0
    %1026 = vmatpush1.bf16.xpose.msra.mxu0 0
    %1027 = vmatprep.subr.bf16.mxu0 0
    %1028 = vmatpush1.bf16.xpose.msra.mxu0 0
    %1029 = vmatprep.subr.bf16.mxu0 0
    %1030 = vmatpush1.bf16.xpose.msra.mxu0 0
    %1031 = vmatprep.subr.bf16.mxu0 0
    %1032 = vmatpush1.bf16.xpose.msra.mxu0 0
    %1033 = vmatprep.subr.bf16.mxu0 0
    %1034 = vmatpush1.bf16.xpose.msra.mxu0 0
    %1035 = vmatprep.subr.bf16.mxu0 0
    %1036 = vmatpush1.bf16.xpose.msra.mxu0 0
    %1037 = vmatprep.subr.bf16.mxu0 0
    %1038 = vmatpush1.bf16.xpose.msra.mxu0 0
    %1039 = vmatprep.subr.bf16.mxu0 0
    %1040 = vmatpush1.bf16.xpose.msra.mxu0 0
    %1041 = vmatprep.subr.bf16.mxu0 0
    %1042 = vmatpush1.bf16.xpose.msra.mxu0 0
    %1043 = vmatprep.subr.bf16.mxu0 0
    %1044 = vmatpush1.bf16.xpose.msra.mxu0 0
    %1045 = vmatprep.subr.bf16.mxu0 0
    %1046 = vmatpush1.bf16.xpose.msra.mxu0 0
    %1047 = vmatprep.mubr.bf16.mxu0 0
    %1048 = vmatmul.mubr.bf16.gmra.mrb[0].mxu0 %v1010
    %v1049 = vpop.f32.mrb[0].mxu0
    %v1050 = vadd.f32 %v850, %v1049
    %v1051 = vpop.f32.mrb[0].mxu0
    %v1052 = vpop.f32.mrb[0].mxu0
    %v1053 = vadd.f32 %v851, %v1052
    %v1054 = vpop.f32.mrb[0].mxu0
    %1055 = vdwg.mxu0
    %v1056 = vsel %vm558, %v897, -inf
    %1057 = vmax.xlane.f32.xlu0 %v1056
    %v1058 = vpop.xlane.xlu0 %1057
    %v1059 = vsel %vm558, %v900, -inf
    %1060 = vmax.xlane.f32.xlu0 %v1059
    %v1061 = vpop.xlane.xlu0 %1060
    %v1062 = vsel %vm558, %v948, -inf
    %1063 = vmax.xlane.f32.xlu0 %v1062
    %v1064 = vpop.xlane.xlu0 %1063
    %v1065 = vsel %vm558, %v951, -inf
    %1066 = vmax.xlane.f32.xlu0 %v1065
    %v1067 = vpop.xlane.xlu0 %1066
    %v1068 = vsel %vm558, %v999, -inf
    %1069 = vmax.xlane.f32.xlu0 %v1068
    %v1070 = vpop.xlane.xlu0 %1069
    %v1071 = vsel %vm558, %v1002, -inf
    %1072 = vmax.xlane.f32.xlu0 %v1071
    %v1073 = vpop.xlane.xlu0 %1072
    %v1074 = vsel %vm558, %v1050, -inf
    %1075 = vmax.xlane.f32.xlu0 %v1074
    %v1076 = vpop.xlane.xlu0 %1075
    %v1077 = vsel %vm558, %v1053, -inf
    %1078 = vmax.xlane.f32.xlu0 %v1077
    %v1079 = vpop.xlane.xlu0 %1078
    %v1080 = vsub.f32 %v897, %v1058
    %v1081 = vsub.f32 %v900, %v1061
    %v1082 = vsub.f32 %v948, %v1064
    %v1083 = vsub.f32 %v951, %v1067
    %v1084 = vsub.f32 %v999, %v1070
    %v1085 = vsub.f32 %v1002, %v1073
    %v1086 = vsub.f32 %v1050, %v1076
    %v1087 = vsub.f32 %v1053, %v1079
    %v1088 = vmul.f32 %v1080, 1.442695
    %v1089 = vpow.pop %v1088
    %v1090 = vmul.f32 %v1081, 1.442695
    %v1091 = vpow.pop %v1090
    %v1092 = vmul.f32 %v1082, 1.442695
    %v1093 = vpow.pop %v1092
    %v1094 = vmul.f32 %v1083, 1.442695
    %v1095 = vpow.pop %v1094
    %v1096 = vmul.f32 %v1084, 1.442695
    %v1097 = vpow.pop %v1096
    %v1098 = vmul.f32 %v1085, 1.442695
    %v1099 = vpow.pop %v1098
    %v1100 = vmul.f32 %v1086, 1.442695
    %v1101 = vpow.pop %v1100
    %v1102 = vmul.f32 %v1087, 1.442695
    %v1103 = vpow.pop %v1102
    %v1104 = vsel %vm558, %v1089, 0.0
    %1105 = vadd.xlane.f32.xlu0 %v1104
    %v1106 = vpop.xlane.xlu0 %1105
    %v1107 = vsel %vm558, %v1091, 0.0
    %1108 = vadd.xlane.f32.xlu0 %v1107
    %v1109 = vpop.xlane.xlu0 %1108
    %v1110 = vsel %vm558, %v1093, 0.0
    %1111 = vadd.xlane.f32.xlu0 %v1110
    %v1112 = vpop.xlane.xlu0 %1111
    %v1113 = vsel %vm558, %v1095, 0.0
    %1114 = vadd.xlane.f32.xlu0 %v1113
    %v1115 = vpop.xlane.xlu0 %1114
    %v1116 = vsel %vm558, %v1097, 0.0
    %1117 = vadd.xlane.f32.xlu0 %v1116
    %v1118 = vpop.xlane.xlu0 %1117
    %v1119 = vsel %vm558, %v1099, 0.0
    %1120 = vadd.xlane.f32.xlu0 %v1119
    %v1121 = vpop.xlane.xlu0 %1120
    %v1122 = vsel %vm558, %v1101, 0.0
    %1123 = vadd.xlane.f32.xlu0 %v1122
    %v1124 = vpop.xlane.xlu0 %1123
    %v1125 = vsel %vm558, %v1103, 0.0
    %1126 = vadd.xlane.f32.xlu0 %v1125
    %v1127 = vpop.xlane.xlu0 %1126
    %v1128 = vrcp.pop %v1106
    %v1129 = vrcp.pop %v1109
    %v1130 = vrcp.pop %v1112
    %v1131 = vrcp.pop %v1115
    %v1132 = vrcp.pop %v1118
    %v1133 = vrcp.pop %v1121
    %v1134 = vrcp.pop %v1124
    %v1135 = vrcp.pop %v1127
    %v1136 = vmul.f32 %v1089, %v1128
    %v1137 = vmul.f32 %v1091, %v1129
    %v1138 = vmul.f32 %v1093, %v1130
    %v1139 = vmul.f32 %v1095, %v1131
    %v1140 = vmul.f32 %v1097, %v1132
    %v1141 = vmul.f32 %v1099, %v1133
    %v1142 = vmul.f32 %v1101, %v1134
    %v1143 = vmul.f32 %v1103, %v1135
    %v1144 = vpack.c.bf16 %v1137, %v1136
    %v1145 = vpack.c.bf16 %v1139, %v1138
    %v1146 = vpack.c.bf16 %v1141, %v1140
    %v1147 = vpack.c.bf16 %v1143, %v1142
    %1148 = vrot.lane.b32.xlu0 %v349, 56
    %v1149 = vpop.permute.xlu0 %1148
    %v1152 = vsel %vm558, %v1144, 0
    %1154 = vmatprep.subr.bf16.mxu0 0
    %1155 = vmatpush1.bf16.msra.mxu0 %v1149
    %1156 = vmatprep.subr.bf16.mxu0 0
    %1157 = vmatpush1.bf16.msra.mxu0 0
    %1158 = vmatprep.subr.bf16.mxu0 0
    %1159 = vmatpush1.bf16.msra.mxu0 0
    %1160 = vmatprep.subr.bf16.mxu0 0
    %1161 = vmatpush1.bf16.msra.mxu0 0
    %1162 = vmatprep.subr.bf16.mxu0 0
    %1163 = vmatpush1.bf16.msra.mxu0 0
    %1164 = vmatprep.subr.bf16.mxu0 0
    %1165 = vmatpush1.bf16.msra.mxu0 0
    %1166 = vmatprep.subr.bf16.mxu0 0
    %1167 = vmatpush1.bf16.msra.mxu0 0
    %1168 = vmatprep.subr.bf16.mxu0 0
    %1169 = vmatpush1.bf16.msra.mxu0 0
    %1170 = vmatprep.subr.bf16.mxu0 0
    %1171 = vmatpush1.bf16.msra.mxu0 0
    %1172 = vmatprep.subr.bf16.mxu0 0
    %1173 = vmatpush1.bf16.msra.mxu0 0
    %1174 = vmatprep.subr.bf16.mxu0 0
    %1175 = vmatpush1.bf16.msra.mxu0 0
    %1176 = vmatprep.subr.bf16.mxu0 0
    %1177 = vmatpush1.bf16.msra.mxu0 0
    %1178 = vmatprep.subr.bf16.mxu0 0
    %1179 = vmatpush1.bf16.msra.mxu0 0
    %1180 = vmatprep.subr.bf16.mxu0 0
    %1181 = vmatpush1.bf16.msra.mxu0 0
    %1182 = vmatprep.subr.bf16.mxu0 0
    %1183 = vmatpush1.bf16.msra.mxu0 0
    %1184 = vmatprep.subr.bf16.mxu0 0
    %1185 = vmatpush1.bf16.msra.mxu0 0
    %1186 = vmatprep.mubr.bf16.mxu0 0
    %1187 = vmatmul.mubr.bf16.gmra.mrb[0].mxu0 %v1152
    %v1188 = vpop.f32.mrb[0].mxu0
    %v1189 = vadd.f32 0.0, %v1188
    %v1190 = vpop.f32.mrb[0].mxu0
    %v1191 = vpop.f32.mrb[0].mxu0
    %v1192 = vadd.f32 0.0, %v1191
    %v1193 = vpop.f32.mrb[0].mxu0
    %1194 = vdwg.mxu0
    %1195 = vrot.lane.b32.xlu0 %v350, 56
    %v1196 = vpop.permute.xlu0 %1195
    %v1199 = vsel %vm558, %v1145, 0
    %1201 = vmatprep.subr.bf16.mxu0 0
    %1202 = vmatpush1.bf16.msra.mxu0 %v1196
    %1203 = vmatprep.subr.bf16.mxu0 0
    %1204 = vmatpush1.bf16.msra.mxu0 0
    %1205 = vmatprep.subr.bf16.mxu0 0
    %1206 = vmatpush1.bf16.msra.mxu0 0
    %1207 = vmatprep.subr.bf16.mxu0 0
    %1208 = vmatpush1.bf16.msra.mxu0 0
    %1209 = vmatprep.subr.bf16.mxu0 0
    %1210 = vmatpush1.bf16.msra.mxu0 0
    %1211 = vmatprep.subr.bf16.mxu0 0
    %1212 = vmatpush1.bf16.msra.mxu0 0
    %1213 = vmatprep.subr.bf16.mxu0 0
    %1214 = vmatpush1.bf16.msra.mxu0 0
    %1215 = vmatprep.subr.bf16.mxu0 0
    %1216 = vmatpush1.bf16.msra.mxu0 0
    %1217 = vmatprep.subr.bf16.mxu0 0
    %1218 = vmatpush1.bf16.msra.mxu0 0
    %1219 = vmatprep.subr.bf16.mxu0 0
    %1220 = vmatpush1.bf16.msra.mxu0 0
    %1221 = vmatprep.subr.bf16.mxu0 0
    %1222 = vmatpush1.bf16.msra.mxu0 0
    %1223 = vmatprep.subr.bf16.mxu0 0
    %1224 = vmatpush1.bf16.msra.mxu0 0
    %1225 = vmatprep.subr.bf16.mxu0 0
    %1226 = vmatpush1.bf16.msra.mxu0 0
    %1227 = vmatprep.subr.bf16.mxu0 0
    %1228 = vmatpush1.bf16.msra.mxu0 0
    %1229 = vmatprep.subr.bf16.mxu0 0
    %1230 = vmatpush1.bf16.msra.mxu0 0
    %1231 = vmatprep.subr.bf16.mxu0 0
    %1232 = vmatpush1.bf16.msra.mxu0 0
    %1233 = vmatprep.mubr.bf16.mxu0 0
    %1234 = vmatmul.mubr.bf16.gmra.mrb[0].mxu0 %v1199
    %v1235 = vpop.f32.mrb[0].mxu0
    %v1236 = vadd.f32 0.0, %v1235
    %v1237 = vpop.f32.mrb[0].mxu0
    %v1238 = vpop.f32.mrb[0].mxu0
    %v1239 = vadd.f32 0.0, %v1238
    %v1240 = vpop.f32.mrb[0].mxu0
    %1241 = vdwg.mxu0
    %1242 = vrot.lane.b32.xlu0 %v351, 56
    %v1243 = vpop.permute.xlu0 %1242
    %v1246 = vsel %vm558, %v1146, 0
    %1248 = vmatprep.subr.bf16.mxu0 0
    %1249 = vmatpush1.bf16.msra.mxu0 %v1243
    %1250 = vmatprep.subr.bf16.mxu0 0
    %1251 = vmatpush1.bf16.msra.mxu0 0
    %1252 = vmatprep.subr.bf16.mxu0 0
    %1253 = vmatpush1.bf16.msra.mxu0 0
    %1254 = vmatprep.subr.bf16.mxu0 0
    %1255 = vmatpush1.bf16.msra.mxu0 0
    %1256 = vmatprep.subr.bf16.mxu0 0
    %1257 = vmatpush1.bf16.msra.mxu0 0
    %1258 = vmatprep.subr.bf16.mxu0 0
    %1259 = vmatpush1.bf16.msra.mxu0 0
    %1260 = vmatprep.subr.bf16.mxu0 0
    %1261 = vmatpush1.bf16.msra.mxu0 0
    %1262 = vmatprep.subr.bf16.mxu0 0
    %1263 = vmatpush1.bf16.msra.mxu0 0
    %1264 = vmatprep.subr.bf16.mxu0 0
    %1265 = vmatpush1.bf16.msra.mxu0 0
    %1266 = vmatprep.subr.bf16.mxu0 0
    %1267 = vmatpush1.bf16.msra.mxu0 0
    %1268 = vmatprep.subr.bf16.mxu0 0
    %1269 = vmatpush1.bf16.msra.mxu0 0
    %1270 = vmatprep.subr.bf16.mxu0 0
    %1271 = vmatpush1.bf16.msra.mxu0 0
    %1272 = vmatprep.subr.bf16.mxu0 0
    %1273 = vmatpush1.bf16.msra.mxu0 0
    %1274 = vmatprep.subr.bf16.mxu0 0
    %1275 = vmatpush1.bf16.msra.mxu0 0
    %1276 = vmatprep.subr.bf16.mxu0 0
    %1277 = vmatpush1.bf16.msra.mxu0 0
    %1278 = vmatprep.subr.bf16.mxu0 0
    %1279 = vmatpush1.bf16.msra.mxu0 0
    %1280 = vmatprep.mubr.bf16.mxu0 0
    %1281 = vmatmul.mubr.bf16.gmra.mrb[0].mxu0 %v1246
    %v1282 = vpop.f32.mrb[0].mxu0
    %v1283 = vadd.f32 0.0, %v1282
    %v1284 = vpop.f32.mrb[0].mxu0
    %v1285 = vpop.f32.mrb[0].mxu0
    %v1286 = vadd.f32 0.0, %v1285
    %v1287 = vpop.f32.mrb[0].mxu0
    %1288 = vdwg.mxu0
    %1289 = vrot.lane.b32.xlu0 %v352, 56
    %v1290 = vpop.permute.xlu0 %1289
    %v1293 = vsel %vm558, %v1147, 0
    %1295 = vmatprep.subr.bf16.mxu0 0
    %1296 = vmatpush1.bf16.msra.mxu0 %v1290
    %1297 = vmatprep.subr.bf16.mxu0 0
    %1298 = vmatpush1.bf16.msra.mxu0 0
    %1299 = vmatprep.subr.bf16.mxu0 0
    %1300 = vmatpush1.bf16.msra.mxu0 0
    %1301 = vmatprep.subr.bf16.mxu0 0
    %1302 = vmatpush1.bf16.msra.mxu0 0
    %1303 = vmatprep.subr.bf16.mxu0 0
    %1304 = vmatpush1.bf16.msra.mxu0 0
    %1305 = vmatprep.subr.bf16.mxu0 0
    %1306 = vmatpush1.bf16.msra.mxu0 0
    %1307 = vmatprep.subr.bf16.mxu0 0
    %1308 = vmatpush1.bf16.msra.mxu0 0
    %1309 = vmatprep.subr.bf16.mxu0 0
    %1310 = vmatpush1.bf16.msra.mxu0 0
    %1311 = vmatprep.subr.bf16.mxu0 0
    %1312 = vmatpush1.bf16.msra.mxu0 0
    %1313 = vmatprep.subr.bf16.mxu0 0
    %1314 = vmatpush1.bf16.msra.mxu0 0
    %1315 = vmatprep.subr.bf16.mxu0 0
    %1316 = vmatpush1.bf16.msra.mxu0 0
    %1317 = vmatprep.subr.bf16.mxu0 0
    %1318 = vmatpush1.bf16.msra.mxu0 0
    %1319 = vmatprep.subr.bf16.mxu0 0
    %1320 = vmatpush1.bf16.msra.mxu0 0
    %1321 = vmatprep.subr.bf16.mxu0 0
    %1322 = vmatpush1.bf16.msra.mxu0 0
    %1323 = vmatprep.subr.bf16.mxu0 0
    %1324 = vmatpush1.bf16.msra.mxu0 0
    %1325 = vmatprep.subr.bf16.mxu0 0
    %1326 = vmatpush1.bf16.msra.mxu0 0
    %1327 = vmatprep.mubr.bf16.mxu0 0
    %1328 = vmatmul.mubr.bf16.gmra.mrb[0].mxu0 %v1293
    %v1329 = vpop.f32.mrb[0].mxu0
    %v1330 = vadd.f32 0.0, %v1329
    %v1331 = vpop.f32.mrb[0].mxu0
    %v1332 = vpop.f32.mrb[0].mxu0
    %v1333 = vadd.f32 0.0, %v1332
    %v1334 = vpop.f32.mrb[0].mxu0
    %1335 = vdwg.mxu0
    %v1336 = vpack.c.bf16 %v1192, %v1189
    %v1337 = vpack.c.bf16 %v1239, %v1236
    %v1338 = vpack.c.bf16 %v1286, %v1283
    %v1339 = vpack.c.bf16 %v1333, %v1330
    %1344 = vrot.lane.b32.xlu0 %v1336, 8
    %v1345 = vpop.permute.xlu0 %1344
    %1346 = vrot.lane.b32.xlu0 %v1337, 8
    %v1347 = vpop.permute.xlu0 %1346
    %1348 = vrot.lane.b32.xlu0 %v1338, 8
    %v1349 = vpop.permute.xlu0 %1348
    %1350 = vrot.lane.b32.xlu0 %v1339, 8
    %v1351 = vpop.permute.xlu0 %1350
    %vm1356 = vcmask 130112
    %1357 = vst.msk [vmem:[#allocation2] sm:$0xff] %vm1356, %v1345
    %1358 = vst.msk [vmem:[#allocation2 + $0x8] sm:$0xff] %vm1356, %v1347
    %1359 = vst.msk [vmem:[#allocation2 + $0x10] sm:$0xff] %vm1356, %v1349
    %1360 = vst.msk [vmem:[#allocation2 + $0x18] sm:$0xff] %vm1356, %v1351
    %s1361 = scalar_lea.vmem [#allocation3], 16
    %v1362 = vld [vmem:[%s1361] sm:$0xf]
    %v1363 = vld [vmem:[%s1361 + $0x4] sm:$0xf]
    %v1364 = vunpack.c.l.bf16 %v1362
    %v1365 = vunpack.c.l.bf16 %v1363
    %1366 = vrot.lane.b32.xlu0 %v349, 112
    %v1367 = vpop.permute.xlu0 %1366
    %1368 = vrot.lane.b32.xlu0 %v349, 80
    %v1369 = vpop.permute.xlu0 %1368
    %v1371 = vsel %vm360, %v1367, 0
    %v1374 = vsel %vm360, %v1369, 0
    %1376 = vmatprep.subr.bf16.mxu0 0
    %1377 = vmatpush1.bf16.xpose.msra.mxu0 %v1374
    %1378 = vmatprep.subr.bf16.mxu0 0
    %1379 = vmatpush1.bf16.xpose.msra.mxu0 0
    %1380 = vmatprep.subr.bf16.mxu0 0
    %1381 = vmatpush1.bf16.xpose.msra.mxu0 0
    %1382 = vmatprep.subr.bf16.mxu0 0
    %1383 = vmatpush1.bf16.xpose.msra.mxu0 0
    %1384 = vmatprep.subr.bf16.mxu0 0
    %1385 = vmatpush1.bf16.xpose.msra.mxu0 0
    %1386 = vmatprep.subr.bf16.mxu0 0
    %1387 = vmatpush1.bf16.xpose.msra.mxu0 0
    %1388 = vmatprep.subr.bf16.mxu0 0
    %1389 = vmatpush1.bf16.xpose.msra.mxu0 0
    %1390 = vmatprep.subr.bf16.mxu0 0
    %1391 = vmatpush1.bf16.xpose.msra.mxu0 0
    %1392 = vmatprep.subr.bf16.mxu0 0
    %1393 = vmatpush1.bf16.xpose.msra.mxu0 0
    %1394 = vmatprep.subr.bf16.mxu0 0
    %1395 = vmatpush1.bf16.xpose.msra.mxu0 0
    %1396 = vmatprep.subr.bf16.mxu0 0
    %1397 = vmatpush1.bf16.xpose.msra.mxu0 0
    %1398 = vmatprep.subr.bf16.mxu0 0
    %1399 = vmatpush1.bf16.xpose.msra.mxu0 0
    %1400 = vmatprep.subr.bf16.mxu0 0
    %1401 = vmatpush1.bf16.xpose.msra.mxu0 0
    %1402 = vmatprep.subr.bf16.mxu0 0
    %1403 = vmatpush1.bf16.xpose.msra.mxu0 0
    %1404 = vmatprep.subr.bf16.mxu0 0
    %1405 = vmatpush1.bf16.xpose.msra.mxu0 0
    %1406 = vmatprep.subr.bf16.mxu0 0
    %1407 = vmatpush1.bf16.xpose.msra.mxu0 0
    %1408 = vmatprep.mubr.bf16.mxu0 0
    %1409 = vmatmul.mubr.bf16.gmra.mrb[0].mxu0 %v1371
    %v1410 = vpop.f32.mrb[0].mxu0
    %v1411 = vadd.f32 %v1364, %v1410
    %v1412 = vpop.f32.mrb[0].mxu0
    %v1413 = vpop.f32.mrb[0].mxu0
    %v1414 = vadd.f32 %v1365, %v1413
    %v1415 = vpop.f32.mrb[0].mxu0
    %1416 = vdwg.mxu0
    %1417 = vrot.lane.b32.xlu0 %v350, 112
    %v1418 = vpop.permute.xlu0 %1417
    %1419 = vrot.lane.b32.xlu0 %v350, 80
    %v1420 = vpop.permute.xlu0 %1419
    %v1422 = vsel %vm360, %v1418, 0
    %v1425 = vsel %vm360, %v1420, 0
    %1427 = vmatprep.subr.bf16.mxu0 0
    %1428 = vmatpush1.bf16.xpose.msra.mxu0 %v1425
    %1429 = vmatprep.subr.bf16.mxu0 0
    %1430 = vmatpush1.bf16.xpose.msra.mxu0 0
    %1431 = vmatprep.subr.bf16.mxu0 0
    %1432 = vmatpush1.bf16.xpose.msra.mxu0 0
    %1433 = vmatprep.subr.bf16.mxu0 0
    %1434 = vmatpush1.bf16.xpose.msra.mxu0 0
    %1435 = vmatprep.subr.bf16.mxu0 0
    %1436 = vmatpush1.bf16.xpose.msra.mxu0 0
    %1437 = vmatprep.subr.bf16.mxu0 0
    %1438 = vmatpush1.bf16.xpose.msra.mxu0 0
    %1439 = vmatprep.subr.bf16.mxu0 0
    %1440 = vmatpush1.bf16.xpose.msra.mxu0 0
    %1441 = vmatprep.subr.bf16.mxu0 0
    %1442 = vmatpush1.bf16.xpose.msra.mxu0 0
    %1443 = vmatprep.subr.bf16.mxu0 0
    %1444 = vmatpush1.bf16.xpose.msra.mxu0 0
    %1445 = vmatprep.subr.bf16.mxu0 0
    %1446 = vmatpush1.bf16.xpose.msra.mxu0 0
    %1447 = vmatprep.subr.bf16.mxu0 0
    %1448 = vmatpush1.bf16.xpose.msra.mxu0 0
    %1449 = vmatprep.subr.bf16.mxu0 0
    %1450 = vmatpush1.bf16.xpose.msra.mxu0 0
    %1451 = vmatprep.subr.bf16.mxu0 0
    %1452 = vmatpush1.bf16.xpose.msra.mxu0 0
    %1453 = vmatprep.subr.bf16.mxu0 0
    %1454 = vmatpush1.bf16.xpose.msra.mxu0 0
    %1455 = vmatprep.subr.bf16.mxu0 0
    %1456 = vmatpush1.bf16.xpose.msra.mxu0 0
    %1457 = vmatprep.subr.bf16.mxu0 0
    %1458 = vmatpush1.bf16.xpose.msra.mxu0 0
    %1459 = vmatprep.mubr.bf16.mxu0 0
    %1460 = vmatmul.mubr.bf16.gmra.mrb[0].mxu0 %v1422
    %v1461 = vpop.f32.mrb[0].mxu0
    %v1462 = vadd.f32 %v1364, %v1461
    %v1463 = vpop.f32.mrb[0].mxu0
    %v1464 = vpop.f32.mrb[0].mxu0
    %v1465 = vadd.f32 %v1365, %v1464
    %v1466 = vpop.f32.mrb[0].mxu0
    %1467 = vdwg.mxu0
    %1468 = vrot.lane.b32.xlu0 %v351, 112
    %v1469 = vpop.permute.xlu0 %1468
    %1470 = vrot.lane.b32.xlu0 %v351, 80
    %v1471 = vpop.permute.xlu0 %1470
    %v1473 = vsel %vm360, %v1469, 0
    %v1476 = vsel %vm360, %v1471, 0
    %1478 = vmatprep.subr.bf16.mxu0 0
    %1479 = vmatpush1.bf16.xpose.msra.mxu0 %v1476
    %1480 = vmatprep.subr.bf16.mxu0 0
    %1481 = vmatpush1.bf16.xpose.msra.mxu0 0
    %1482 = vmatprep.subr.bf16.mxu0 0
    %1483 = vmatpush1.bf16.xpose.msra.mxu0 0
    %1484 = vmatprep.subr.bf16.mxu0 0
    %1485 = vmatpush1.bf16.xpose.msra.mxu0 0
    %1486 = vmatprep.subr.bf16.mxu0 0
    %1487 = vmatpush1.bf16.xpose.msra.mxu0 0
    %1488 = vmatprep.subr.bf16.mxu0 0
    %1489 = vmatpush1.bf16.xpose.msra.mxu0 0
    %1490 = vmatprep.subr.bf16.mxu0 0
    %1491 = vmatpush1.bf16.xpose.msra.mxu0 0
    %1492 = vmatprep.subr.bf16.mxu0 0
    %1493 = vmatpush1.bf16.xpose.msra.mxu0 0
    %1494 = vmatprep.subr.bf16.mxu0 0
    %1495 = vmatpush1.bf16.xpose.msra.mxu0 0
    %1496 = vmatprep.subr.bf16.mxu0 0
    %1497 = vmatpush1.bf16.xpose.msra.mxu0 0
    %1498 = vmatprep.subr.bf16.mxu0 0
    %1499 = vmatpush1.bf16.xpose.msra.mxu0 0
    %1500 = vmatprep.subr.bf16.mxu0 0
    %1501 = vmatpush1.bf16.xpose.msra.mxu0 0
    %1502 = vmatprep.subr.bf16.mxu0 0
    %1503 = vmatpush1.bf16.xpose.msra.mxu0 0
    %1504 = vmatprep.subr.bf16.mxu0 0
    %1505 = vmatpush1.bf16.xpose.msra.mxu0 0
    %1506 = vmatprep.subr.bf16.mxu0 0
    %1507 = vmatpush1.bf16.xpose.msra.mxu0 0
    %1508 = vmatprep.subr.bf16.mxu0 0
    %1509 = vmatpush1.bf16.xpose.msra.mxu0 0
    %1510 = vmatprep.mubr.bf16.mxu0 0
    %1511 = vmatmul.mubr.bf16.gmra.mrb[0].mxu0 %v1473
    %v1512 = vpop.f32.mrb[0].mxu0
    %v1513 = vadd.f32 %v1364, %v1512
    %v1514 = vpop.f32.mrb[0].mxu0
    %v1515 = vpop.f32.mrb[0].mxu0
    %v1516 = vadd.f32 %v1365, %v1515
    %v1517 = vpop.f32.mrb[0].mxu0
    %1518 = vdwg.mxu0
    %1519 = vrot.lane.b32.xlu0 %v352, 112
    %v1520 = vpop.permute.xlu0 %1519
    %1521 = vrot.lane.b32.xlu0 %v352, 80
    %v1522 = vpop.permute.xlu0 %1521
    %v1524 = vsel %vm360, %v1520, 0
    %v1527 = vsel %vm360, %v1522, 0
    %1529 = vmatprep.subr.bf16.mxu0 0
    %1530 = vmatpush1.bf16.xpose.msra.mxu0 %v1527
    %1531 = vmatprep.subr.bf16.mxu0 0
    %1532 = vmatpush1.bf16.xpose.msra.mxu0 0
    %1533 = vmatprep.subr.bf16.mxu0 0
    %1534 = vmatpush1.bf16.xpose.msra.mxu0 0
    %1535 = vmatprep.subr.bf16.mxu0 0
    %1536 = vmatpush1.bf16.xpose.msra.mxu0 0
    %1537 = vmatprep.subr.bf16.mxu0 0
    %1538 = vmatpush1.bf16.xpose.msra.mxu0 0
    %1539 = vmatprep.subr.bf16.mxu0 0
    %1540 = vmatpush1.bf16.xpose.msra.mxu0 0
    %1541 = vmatprep.subr.bf16.mxu0 0
    %1542 = vmatpush1.bf16.xpose.msra.mxu0 0
    %1543 = vmatprep.subr.bf16.mxu0 0
    %1544 = vmatpush1.bf16.xpose.msra.mxu0 0
    %1545 = vmatprep.subr.bf16.mxu0 0
    %1546 = vmatpush1.bf16.xpose.msra.mxu0 0
    %1547 = vmatprep.subr.bf16.mxu0 0
    %1548 = vmatpush1.bf16.xpose.msra.mxu0 0
    %1549 = vmatprep.subr.bf16.mxu0 0
    %1550 = vmatpush1.bf16.xpose.msra.mxu0 0
    %1551 = vmatprep.subr.bf16.mxu0 0
    %1552 = vmatpush1.bf16.xpose.msra.mxu0 0
    %1553 = vmatprep.subr.bf16.mxu0 0
    %1554 = vmatpush1.bf16.xpose.msra.mxu0 0
    %1555 = vmatprep.subr.bf16.mxu0 0
    %1556 = vmatpush1.bf16.xpose.msra.mxu0 0
    %1557 = vmatprep.subr.bf16.mxu0 0
    %1558 = vmatpush1.bf16.xpose.msra.mxu0 0
    %1559 = vmatprep.subr.bf16.mxu0 0
    %1560 = vmatpush1.bf16.xpose.msra.mxu0 0
    %1561 = vmatprep.mubr.bf16.mxu0 0
    %1562 = vmatmul.mubr.bf16.gmra.mrb[0].mxu0 %v1524
    %v1563 = vpop.f32.mrb[0].mxu0
    %v1564 = vadd.f32 %v1364, %v1563
    %v1565 = vpop.f32.mrb[0].mxu0
    %v1566 = vpop.f32.mrb[0].mxu0
    %v1567 = vadd.f32 %v1365, %v1566
    %v1568 = vpop.f32.mrb[0].mxu0
    %1569 = vdwg.mxu0
    %v1570 = vsel %vm558, %v1411, -inf
    %1571 = vmax.xlane.f32.xlu0 %v1570
    %v1572 = vpop.xlane.xlu0 %1571
    %v1573 = vsel %vm558, %v1414, -inf
    %1574 = vmax.xlane.f32.xlu0 %v1573
    %v1575 = vpop.xlane.xlu0 %1574
    %v1576 = vsel %vm558, %v1462, -inf
    %1577 = vmax.xlane.f32.xlu0 %v1576
    %v1578 = vpop.xlane.xlu0 %1577
    %v1579 = vsel %vm558, %v1465, -inf
    %1580 = vmax.xlane.f32.xlu0 %v1579
    %v1581 = vpop.xlane.xlu0 %1580
    %v1582 = vsel %vm558, %v1513, -inf
    %1583 = vmax.xlane.f32.xlu0 %v1582
    %v1584 = vpop.xlane.xlu0 %1583
    %v1585 = vsel %vm558, %v1516, -inf
    %1586 = vmax.xlane.f32.xlu0 %v1585
    %v1587 = vpop.xlane.xlu0 %1586
    %v1588 = vsel %vm558, %v1564, -inf
    %1589 = vmax.xlane.f32.xlu0 %v1588
    %v1590 = vpop.xlane.xlu0 %1589
    %v1591 = vsel %vm558, %v1567, -inf
    %1592 = vmax.xlane.f32.xlu0 %v1591
    %v1593 = vpop.xlane.xlu0 %1592
    %v1594 = vsub.f32 %v1411, %v1572
    %v1595 = vsub.f32 %v1414, %v1575
    %v1596 = vsub.f32 %v1462, %v1578
    %v1597 = vsub.f32 %v1465, %v1581
    %v1598 = vsub.f32 %v1513, %v1584
    %v1599 = vsub.f32 %v1516, %v1587
    %v1600 = vsub.f32 %v1564, %v1590
    %v1601 = vsub.f32 %v1567, %v1593
    %v1602 = vmul.f32 %v1594, 1.442695
    %v1603 = vpow.pop %v1602
    %v1604 = vmul.f32 %v1595, 1.442695
    %v1605 = vpow.pop %v1604
    %v1606 = vmul.f32 %v1596, 1.442695
    %v1607 = vpow.pop %v1606
    %v1608 = vmul.f32 %v1597, 1.442695
    %v1609 = vpow.pop %v1608
    %v1610 = vmul.f32 %v1598, 1.442695
    %v1611 = vpow.pop %v1610
    %v1612 = vmul.f32 %v1599, 1.442695
    %v1613 = vpow.pop %v1612
    %v1614 = vmul.f32 %v1600, 1.442695
    %v1615 = vpow.pop %v1614
    %v1616 = vmul.f32 %v1601, 1.442695
    %v1617 = vpow.pop %v1616
    %v1618 = vsel %vm558, %v1603, 0.0
    %1619 = vadd.xlane.f32.xlu0 %v1618
    %v1620 = vpop.xlane.xlu0 %1619
    %v1621 = vsel %vm558, %v1605, 0.0
    %1622 = vadd.xlane.f32.xlu0 %v1621
    %v1623 = vpop.xlane.xlu0 %1622
    %v1624 = vsel %vm558, %v1607, 0.0
    %1625 = vadd.xlane.f32.xlu0 %v1624
    %v1626 = vpop.xlane.xlu0 %1625
    %v1627 = vsel %vm558, %v1609, 0.0
    %1628 = vadd.xlane.f32.xlu0 %v1627
    %v1629 = vpop.xlane.xlu0 %1628
    %v1630 = vsel %vm558, %v1611, 0.0
    %1631 = vadd.xlane.f32.xlu0 %v1630
    %v1632 = vpop.xlane.xlu0 %1631
    %v1633 = vsel %vm558, %v1613, 0.0
    %1634 = vadd.xlane.f32.xlu0 %v1633
    %v1635 = vpop.xlane.xlu0 %1634
    %v1636 = vsel %vm558, %v1615, 0.0
    %1637 = vadd.xlane.f32.xlu0 %v1636
    %v1638 = vpop.xlane.xlu0 %1637
    %v1639 = vsel %vm558, %v1617, 0.0
    %1640 = vadd.xlane.f32.xlu0 %v1639
    %v1641 = vpop.xlane.xlu0 %1640
    %v1642 = vrcp.pop %v1620
    %v1643 = vrcp.pop %v1623
    %v1644 = vrcp.pop %v1626
    %v1645 = vrcp.pop %v1629
    %v1646 = vrcp.pop %v1632
    %v1647 = vrcp.pop %v1635
    %v1648 = vrcp.pop %v1638
    %v1649 = vrcp.pop %v1641
    %v1650 = vmul.f32 %v1603, %v1642
    %v1651 = vmul.f32 %v1605, %v1643
    %v1652 = vmul.f32 %v1607, %v1644
    %v1653 = vmul.f32 %v1609, %v1645
    %v1654 = vmul.f32 %v1611, %v1646
    %v1655 = vmul.f32 %v1613, %v1647
    %v1656 = vmul.f32 %v1615, %v1648
    %v1657 = vmul.f32 %v1617, %v1649
    %v1658 = vpack.c.bf16 %v1651, %v1650
    %v1659 = vpack.c.bf16 %v1653, %v1652
    %v1660 = vpack.c.bf16 %v1655, %v1654
    %v1661 = vpack.c.bf16 %v1657, %v1656
    %1662 = vrot.lane.b32.xlu0 %v349, 48
    %v1663 = vpop.permute.xlu0 %1662
    %v1666 = vsel %vm558, %v1658, 0
    %1668 = vmatprep.subr.bf16.mxu0 0
    %1669 = vmatpush1.bf16.msra.mxu0 %v1663
    %1670 = vmatprep.subr.bf16.mxu0 0
    %1671 = vmatpush1.bf16.msra.mxu0 0
    %1672 = vmatprep.subr.bf16.mxu0 0
    %1673 = vmatpush1.bf16.msra.mxu0 0
    %1674 = vmatprep.subr.bf16.mxu0 0
    %1675 = vmatpush1.bf16.msra.mxu0 0
    %1676 = vmatprep.subr.bf16.mxu0 0
    %1677 = vmatpush1.bf16.msra.mxu0 0
    %1678 = vmatprep.subr.bf16.mxu0 0
    %1679 = vmatpush1.bf16.msra.mxu0 0
    %1680 = vmatprep.subr.bf16.mxu0 0
    %1681 = vmatpush1.bf16.msra.mxu0 0
    %1682 = vmatprep.subr.bf16.mxu0 0
    %1683 = vmatpush1.bf16.msra.mxu0 0
    %1684 = vmatprep.subr.bf16.mxu0 0
    %1685 = vmatpush1.bf16.msra.mxu0 0
    %1686 = vmatprep.subr.bf16.mxu0 0
    %1687 = vmatpush1.bf16.msra.mxu0 0
    %1688 = vmatprep.subr.bf16.mxu0 0
    %1689 = vmatpush1.bf16.msra.mxu0 0
    %1690 = vmatprep.subr.bf16.mxu0 0
    %1691 = vmatpush1.bf16.msra.mxu0 0
    %1692 = vmatprep.subr.bf16.mxu0 0
    %1693 = vmatpush1.bf16.msra.mxu0 0
    %1694 = vmatprep.subr.bf16.mxu0 0
    %1695 = vmatpush1.bf16.msra.mxu0 0
    %1696 = vmatprep.subr.bf16.mxu0 0
    %1697 = vmatpush1.bf16.msra.mxu0 0
    %1698 = vmatprep.subr.bf16.mxu0 0
    %1699 = vmatpush1.bf16.msra.mxu0 0
    %1700 = vmatprep.mubr.bf16.mxu0 0
    %1701 = vmatmul.mubr.bf16.gmra.mrb[0].mxu0 %v1666
    %v1702 = vpop.f32.mrb[0].mxu0
    %v1703 = vadd.f32 0.0, %v1702
    %v1704 = vpop.f32.mrb[0].mxu0
    %v1705 = vpop.f32.mrb[0].mxu0
    %v1706 = vadd.f32 0.0, %v1705
    %v1707 = vpop.f32.mrb[0].mxu0
    %1708 = vdwg.mxu0
    %1709 = vrot.lane.b32.xlu0 %v350, 48
    %v1710 = vpop.permute.xlu0 %1709
    %v1713 = vsel %vm558, %v1659, 0
    %1715 = vmatprep.subr.bf16.mxu0 0
    %1716 = vmatpush1.bf16.msra.mxu0 %v1710
    %1717 = vmatprep.subr.bf16.mxu0 0
    %1718 = vmatpush1.bf16.msra.mxu0 0
    %1719 = vmatprep.subr.bf16.mxu0 0
    %1720 = vmatpush1.bf16.msra.mxu0 0
    %1721 = vmatprep.subr.bf16.mxu0 0
    %1722 = vmatpush1.bf16.msra.mxu0 0
    %1723 = vmatprep.subr.bf16.mxu0 0
    %1724 = vmatpush1.bf16.msra.mxu0 0
    %1725 = vmatprep.subr.bf16.mxu0 0
    %1726 = vmatpush1.bf16.msra.mxu0 0
    %1727 = vmatprep.subr.bf16.mxu0 0
    %1728 = vmatpush1.bf16.msra.mxu0 0
    %1729 = vmatprep.subr.bf16.mxu0 0
    %1730 = vmatpush1.bf16.msra.mxu0 0
    %1731 = vmatprep.subr.bf16.mxu0 0
    %1732 = vmatpush1.bf16.msra.mxu0 0
    %1733 = vmatprep.subr.bf16.mxu0 0
    %1734 = vmatpush1.bf16.msra.mxu0 0
    %1735 = vmatprep.subr.bf16.mxu0 0
    %1736 = vmatpush1.bf16.msra.mxu0 0
    %1737 = vmatprep.subr.bf16.mxu0 0
    %1738 = vmatpush1.bf16.msra.mxu0 0
    %1739 = vmatprep.subr.bf16.mxu0 0
    %1740 = vmatpush1.bf16.msra.mxu0 0
    %1741 = vmatprep.subr.bf16.mxu0 0
    %1742 = vmatpush1.bf16.msra.mxu0 0
    %1743 = vmatprep.subr.bf16.mxu0 0
    %1744 = vmatpush1.bf16.msra.mxu0 0
    %1745 = vmatprep.subr.bf16.mxu0 0
    %1746 = vmatpush1.bf16.msra.mxu0 0
    %1747 = vmatprep.mubr.bf16.mxu0 0
    %1748 = vmatmul.mubr.bf16.gmra.mrb[0].mxu0 %v1713
    %v1749 = vpop.f32.mrb[0].mxu0
    %v1750 = vadd.f32 0.0, %v1749
    %v1751 = vpop.f32.mrb[0].mxu0
    %v1752 = vpop.f32.mrb[0].mxu0
    %v1753 = vadd.f32 0.0, %v1752
    %v1754 = vpop.f32.mrb[0].mxu0
    %1755 = vdwg.mxu0
    %1756 = vrot.lane.b32.xlu0 %v351, 48
    %v1757 = vpop.permute.xlu0 %1756
    %v1760 = vsel %vm558, %v1660, 0
    %1762 = vmatprep.subr.bf16.mxu0 0
    %1763 = vmatpush1.bf16.msra.mxu0 %v1757
    %1764 = vmatprep.subr.bf16.mxu0 0
    %1765 = vmatpush1.bf16.msra.mxu0 0
    %1766 = vmatprep.subr.bf16.mxu0 0
    %1767 = vmatpush1.bf16.msra.mxu0 0
    %1768 = vmatprep.subr.bf16.mxu0 0
    %1769 = vmatpush1.bf16.msra.mxu0 0
    %1770 = vmatprep.subr.bf16.mxu0 0
    %1771 = vmatpush1.bf16.msra.mxu0 0
    %1772 = vmatprep.subr.bf16.mxu0 0
    %1773 = vmatpush1.bf16.msra.mxu0 0
    %1774 = vmatprep.subr.bf16.mxu0 0
    %1775 = vmatpush1.bf16.msra.mxu0 0
    %1776 = vmatprep.subr.bf16.mxu0 0
    %1777 = vmatpush1.bf16.msra.mxu0 0
    %1778 = vmatprep.subr.bf16.mxu0 0
    %1779 = vmatpush1.bf16.msra.mxu0 0
    %1780 = vmatprep.subr.bf16.mxu0 0
    %1781 = vmatpush1.bf16.msra.mxu0 0
    %1782 = vmatprep.subr.bf16.mxu0 0
    %1783 = vmatpush1.bf16.msra.mxu0 0
    %1784 = vmatprep.subr.bf16.mxu0 0
    %1785 = vmatpush1.bf16.msra.mxu0 0
    %1786 = vmatprep.subr.bf16.mxu0 0
    %1787 = vmatpush1.bf16.msra.mxu0 0
    %1788 = vmatprep.subr.bf16.mxu0 0
    %1789 = vmatpush1.bf16.msra.mxu0 0
    %1790 = vmatprep.subr.bf16.mxu0 0
    %1791 = vmatpush1.bf16.msra.mxu0 0
    %1792 = vmatprep.subr.bf16.mxu0 0
    %1793 = vmatpush1.bf16.msra.mxu0 0
    %1794 = vmatprep.mubr.bf16.mxu0 0
    %1795 = vmatmul.mubr.bf16.gmra.mrb[0].mxu0 %v1760
    %v1796 = vpop.f32.mrb[0].mxu0
    %v1797 = vadd.f32 0.0, %v1796
    %v1798 = vpop.f32.mrb[0].mxu0
    %v1799 = vpop.f32.mrb[0].mxu0
    %v1800 = vadd.f32 0.0, %v1799
    %v1801 = vpop.f32.mrb[0].mxu0
    %1802 = vdwg.mxu0
    %1803 = vrot.lane.b32.xlu0 %v352, 48
    %v1804 = vpop.permute.xlu0 %1803
    %v1807 = vsel %vm558, %v1661, 0
    %1809 = vmatprep.subr.bf16.mxu0 0
    %1810 = vmatpush1.bf16.msra.mxu0 %v1804
    %1811 = vmatprep.subr.bf16.mxu0 0
    %1812 = vmatpush1.bf16.msra.mxu0 0
    %1813 = vmatprep.subr.bf16.mxu0 0
    %1814 = vmatpush1.bf16.msra.mxu0 0
    %1815 = vmatprep.subr.bf16.mxu0 0
    %1816 = vmatpush1.bf16.msra.mxu0 0
    %1817 = vmatprep.subr.bf16.mxu0 0
    %1818 = vmatpush1.bf16.msra.mxu0 0
    %1819 = vmatprep.subr.bf16.mxu0 0
    %1820 = vmatpush1.bf16.msra.mxu0 0
    %1821 = vmatprep.subr.bf16.mxu0 0
    %1822 = vmatpush1.bf16.msra.mxu0 0
    %1823 = vmatprep.subr.bf16.mxu0 0
    %1824 = vmatpush1.bf16.msra.mxu0 0
    %1825 = vmatprep.subr.bf16.mxu0 0
    %1826 = vmatpush1.bf16.msra.mxu0 0
    %1827 = vmatprep.subr.bf16.mxu0 0
    %1828 = vmatpush1.bf16.msra.mxu0 0
    %1829 = vmatprep.subr.bf16.mxu0 0
    %1830 = vmatpush1.bf16.msra.mxu0 0
    %1831 = vmatprep.subr.bf16.mxu0 0
    %1832 = vmatpush1.bf16.msra.mxu0 0
    %1833 = vmatprep.subr.bf16.mxu0 0
    %1834 = vmatpush1.bf16.msra.mxu0 0
    %1835 = vmatprep.subr.bf16.mxu0 0
    %1836 = vmatpush1.bf16.msra.mxu0 0
    %1837 = vmatprep.subr.bf16.mxu0 0
    %1838 = vmatpush1.bf16.msra.mxu0 0
    %1839 = vmatprep.subr.bf16.mxu0 0
    %1840 = vmatpush1.bf16.msra.mxu0 0
    %1841 = vmatprep.mubr.bf16.mxu0 0
    %1842 = vmatmul.mubr.bf16.gmra.mrb[0].mxu0 %v1807
    %v1843 = vpop.f32.mrb[0].mxu0
    %v1844 = vadd.f32 0.0, %v1843
    %v1845 = vpop.f32.mrb[0].mxu0
    %v1846 = vpop.f32.mrb[0].mxu0
    %v1847 = vadd.f32 0.0, %v1846
    %v1848 = vpop.f32.mrb[0].mxu0
    %1849 = vdwg.mxu0
    %v1850 = vpack.c.bf16 %v1706, %v1703
    %v1851 = vpack.c.bf16 %v1753, %v1750
    %v1852 = vpack.c.bf16 %v1800, %v1797
    %v1853 = vpack.c.bf16 %v1847, %v1844
    %1858 = vrot.lane.b32.xlu0 %v1850, 16
    %v1859 = vpop.permute.xlu0 %1858
    %1860 = vrot.lane.b32.xlu0 %v1851, 16
    %v1861 = vpop.permute.xlu0 %1860
    %1862 = vrot.lane.b32.xlu0 %v1852, 16
    %v1863 = vpop.permute.xlu0 %1862
    %1864 = vrot.lane.b32.xlu0 %v1853, 16
    %v1865 = vpop.permute.xlu0 %1864
    %vm1870 = vcmask 195712
    %1871 = vst.msk [vmem:[#allocation2] sm:$0xff] %vm1870, %v1859
    %1872 = vst.msk [vmem:[#allocation2 + $0x8] sm:$0xff] %vm1870, %v1861
    %1873 = vst.msk [vmem:[#allocation2 + $0x10] sm:$0xff] %vm1870, %v1863
    %1874 = vst.msk [vmem:[#allocation2 + $0x18] sm:$0xff] %vm1870, %v1865
    %s1875 = scalar_lea.vmem [#allocation3], 24
    %v1876 = vld [vmem:[%s1875] sm:$0xf]
    %v1877 = vld [vmem:[%s1875 + $0x4] sm:$0xf]
    %v1878 = vunpack.c.l.bf16 %v1876
    %v1879 = vunpack.c.l.bf16 %v1877
    %1880 = vrot.lane.b32.xlu0 %v349, 104
    %v1881 = vpop.permute.xlu0 %1880
    %1882 = vrot.lane.b32.xlu0 %v349, 72
    %v1883 = vpop.permute.xlu0 %1882
    %v1885 = vsel %vm360, %v1881, 0
    %v1888 = vsel %vm360, %v1883, 0
    %1890 = vmatprep.subr.bf16.mxu0 0
    %1891 = vmatpush1.bf16.xpose.msra.mxu0 %v1888
    %1892 = vmatprep.subr.bf16.mxu0 0
    %1893 = vmatpush1.bf16.xpose.msra.mxu0 0
    %1894 = vmatprep.subr.bf16.mxu0 0
    %1895 = vmatpush1.bf16.xpose.msra.mxu0 0
    %1896 = vmatprep.subr.bf16.mxu0 0
    %1897 = vmatpush1.bf16.xpose.msra.mxu0 0
    %1898 = vmatprep.subr.bf16.mxu0 0
    %1899 = vmatpush1.bf16.xpose.msra.mxu0 0
    %1900 = vmatprep.subr.bf16.mxu0 0
    %1901 = vmatpush1.bf16.xpose.msra.mxu0 0
    %1902 = vmatprep.subr.bf16.mxu0 0
    %1903 = vmatpush1.bf16.xpose.msra.mxu0 0
    %1904 = vmatprep.subr.bf16.mxu0 0
    %1905 = vmatpush1.bf16.xpose.msra.mxu0 0
    %1906 = vmatprep.subr.bf16.mxu0 0
    %1907 = vmatpush1.bf16.xpose.msra.mxu0 0
    %1908 = vmatprep.subr.bf16.mxu0 0
    %1909 = vmatpush1.bf16.xpose.msra.mxu0 0
    %1910 = vmatprep.subr.bf16.mxu0 0
    %1911 = vmatpush1.bf16.xpose.msra.mxu0 0
    %1912 = vmatprep.subr.bf16.mxu0 0
    %1913 = vmatpush1.bf16.xpose.msra.mxu0 0
    %1914 = vmatprep.subr.bf16.mxu0 0
    %1915 = vmatpush1.bf16.xpose.msra.mxu0 0
    %1916 = vmatprep.subr.bf16.mxu0 0
    %1917 = vmatpush1.bf16.xpose.msra.mxu0 0
    %1918 = vmatprep.subr.bf16.mxu0 0
    %1919 = vmatpush1.bf16.xpose.msra.mxu0 0
    %1920 = vmatprep.subr.bf16.mxu0 0
    %1921 = vmatpush1.bf16.xpose.msra.mxu0 0
    %1922 = vmatprep.mubr.bf16.mxu0 0
    %1923 = vmatmul.mubr.bf16.gmra.mrb[0].mxu0 %v1885
    %v1924 = vpop.f32.mrb[0].mxu0
    %v1925 = vadd.f32 %v1878, %v1924
    %v1926 = vpop.f32.mrb[0].mxu0
    %v1927 = vpop.f32.mrb[0].mxu0
    %v1928 = vadd.f32 %v1879, %v1927
    %v1929 = vpop.f32.mrb[0].mxu0
    %1930 = vdwg.mxu0
    %1931 = vrot.lane.b32.xlu0 %v350, 104
    %v1932 = vpop.permute.xlu0 %1931
    %1933 = vrot.lane.b32.xlu0 %v350, 72
    %v1934 = vpop.permute.xlu0 %1933
    %v1936 = vsel %vm360, %v1932, 0
    %v1939 = vsel %vm360, %v1934, 0
    %1941 = vmatprep.subr.bf16.mxu0 0
    %1942 = vmatpush1.bf16.xpose.msra.mxu0 %v1939
    %1943 = vmatprep.subr.bf16.mxu0 0
    %1944 = vmatpush1.bf16.xpose.msra.mxu0 0
    %1945 = vmatprep.subr.bf16.mxu0 0
    %1946 = vmatpush1.bf16.xpose.msra.mxu0 0
    %1947 = vmatprep.subr.bf16.mxu0 0
    %1948 = vmatpush1.bf16.xpose.msra.mxu0 0
    %1949 = vmatprep.subr.bf16.mxu0 0
    %1950 = vmatpush1.bf16.xpose.msra.mxu0 0
    %1951 = vmatprep.subr.bf16.mxu0 0
    %1952 = vmatpush1.bf16.xpose.msra.mxu0 0
    %1953 = vmatprep.subr.bf16.mxu0 0
    %1954 = vmatpush1.bf16.xpose.msra.mxu0 0
    %1955 = vmatprep.subr.bf16.mxu0 0
    %1956 = vmatpush1.bf16.xpose.msra.mxu0 0
    %1957 = vmatprep.subr.bf16.mxu0 0
    %1958 = vmatpush1.bf16.xpose.msra.mxu0 0
    %1959 = vmatprep.subr.bf16.mxu0 0
    %1960 = vmatpush1.bf16.xpose.msra.mxu0 0
    %1961 = vmatprep.subr.bf16.mxu0 0
    %1962 = vmatpush1.bf16.xpose.msra.mxu0 0
    %1963 = vmatprep.subr.bf16.mxu0 0
    %1964 = vmatpush1.bf16.xpose.msra.mxu0 0
    %1965 = vmatprep.subr.bf16.mxu0 0
    %1966 = vmatpush1.bf16.xpose.msra.mxu0 0
    %1967 = vmatprep.subr.bf16.mxu0 0
    %1968 = vmatpush1.bf16.xpose.msra.mxu0 0
    %1969 = vmatprep.subr.bf16.mxu0 0
    %1970 = vmatpush1.bf16.xpose.msra.mxu0 0
    %1971 = vmatprep.subr.bf16.mxu0 0
    %1972 = vmatpush1.bf16.xpose.msra.mxu0 0
    %1973 = vmatprep.mubr.bf16.mxu0 0
    %1974 = vmatmul.mubr.bf16.gmra.mrb[0].mxu0 %v1936
    %v1975 = vpop.f32.mrb[0].mxu0
    %v1976 = vadd.f32 %v1878, %v1975
    %v1977 = vpop.f32.mrb[0].mxu0
    %v1978 = vpop.f32.mrb[0].mxu0
    %v1979 = vadd.f32 %v1879, %v1978
    %v1980 = vpop.f32.mrb[0].mxu0
    %1981 = vdwg.mxu0
    %1982 = vrot.lane.b32.xlu0 %v351, 104
    %v1983 = vpop.permute.xlu0 %1982
    %1984 = vrot.lane.b32.xlu0 %v351, 72
    %v1985 = vpop.permute.xlu0 %1984
    %v1987 = vsel %vm360, %v1983, 0
    %v1990 = vsel %vm360, %v1985, 0
    %1992 = vmatprep.subr.bf16.mxu0 0
    %1993 = vmatpush1.bf16.xpose.msra.mxu0 %v1990
    %1994 = vmatprep.subr.bf16.mxu0 0
    %1995 = vmatpush1.bf16.xpose.msra.mxu0 0
    %1996 = vmatprep.subr.bf16.mxu0 0
    %1997 = vmatpush1.bf16.xpose.msra.mxu0 0
    %1998 = vmatprep.subr.bf16.mxu0 0
    %1999 = vmatpush1.bf16.xpose.msra.mxu0 0
    %2000 = vmatprep.subr.bf16.mxu0 0
    %2001 = vmatpush1.bf16.xpose.msra.mxu0 0
    %2002 = vmatprep.subr.bf16.mxu0 0
    %2003 = vmatpush1.bf16.xpose.msra.mxu0 0
    %2004 = vmatprep.subr.bf16.mxu0 0
    %2005 = vmatpush1.bf16.xpose.msra.mxu0 0
    %2006 = vmatprep.subr.bf16.mxu0 0
    %2007 = vmatpush1.bf16.xpose.msra.mxu0 0
    %2008 = vmatprep.subr.bf16.mxu0 0
    %2009 = vmatpush1.bf16.xpose.msra.mxu0 0
    %2010 = vmatprep.subr.bf16.mxu0 0
    %2011 = vmatpush1.bf16.xpose.msra.mxu0 0
    %2012 = vmatprep.subr.bf16.mxu0 0
    %2013 = vmatpush1.bf16.xpose.msra.mxu0 0
    %2014 = vmatprep.subr.bf16.mxu0 0
    %2015 = vmatpush1.bf16.xpose.msra.mxu0 0
    %2016 = vmatprep.subr.bf16.mxu0 0
    %2017 = vmatpush1.bf16.xpose.msra.mxu0 0
    %2018 = vmatprep.subr.bf16.mxu0 0
    %2019 = vmatpush1.bf16.xpose.msra.mxu0 0
    %2020 = vmatprep.subr.bf16.mxu0 0
    %2021 = vmatpush1.bf16.xpose.msra.mxu0 0
    %2022 = vmatprep.subr.bf16.mxu0 0
    %2023 = vmatpush1.bf16.xpose.msra.mxu0 0
    %2024 = vmatprep.mubr.bf16.mxu0 0
    %2025 = vmatmul.mubr.bf16.gmra.mrb[0].mxu0 %v1987
    %v2026 = vpop.f32.mrb[0].mxu0
    %v2027 = vadd.f32 %v1878, %v2026
    %v2028 = vpop.f32.mrb[0].mxu0
    %v2029 = vpop.f32.mrb[0].mxu0
    %v2030 = vadd.f32 %v1879, %v2029
    %v2031 = vpop.f32.mrb[0].mxu0
    %2032 = vdwg.mxu0
    %2033 = vrot.lane.b32.xlu0 %v352, 104
    %v2034 = vpop.permute.xlu0 %2033
    %2035 = vrot.lane.b32.xlu0 %v352, 72
    %v2036 = vpop.permute.xlu0 %2035
    %v2038 = vsel %vm360, %v2034, 0
    %v2041 = vsel %vm360, %v2036, 0
    %2043 = vmatprep.subr.bf16.mxu0 0
    %2044 = vmatpush1.bf16.xpose.msra.mxu0 %v2041
    %2045 = vmatprep.subr.bf16.mxu0 0
    %2046 = vmatpush1.bf16.xpose.msra.mxu0 0
    %2047 = vmatprep.subr.bf16.mxu0 0
    %2048 = vmatpush1.bf16.xpose.msra.mxu0 0
    %2049 = vmatprep.subr.bf16.mxu0 0
    %2050 = vmatpush1.bf16.xpose.msra.mxu0 0
    %2051 = vmatprep.subr.bf16.mxu0 0
    %2052 = vmatpush1.bf16.xpose.msra.mxu0 0
    %2053 = vmatprep.subr.bf16.mxu0 0
    %2054 = vmatpush1.bf16.xpose.msra.mxu0 0
    %2055 = vmatprep.subr.bf16.mxu0 0
    %2056 = vmatpush1.bf16.xpose.msra.mxu0 0
    %2057 = vmatprep.subr.bf16.mxu0 0
    %2058 = vmatpush1.bf16.xpose.msra.mxu0 0
    %2059 = vmatprep.subr.bf16.mxu0 0
    %2060 = vmatpush1.bf16.xpose.msra.mxu0 0
    %2061 = vmatprep.subr.bf16.mxu0 0
    %2062 = vmatpush1.bf16.xpose.msra.mxu0 0
    %2063 = vmatprep.subr.bf16.mxu0 0
    %2064 = vmatpush1.bf16.xpose.msra.mxu0 0
    %2065 = vmatprep.subr.bf16.mxu0 0
    %2066 = vmatpush1.bf16.xpose.msra.mxu0 0
    %2067 = vmatprep.subr.bf16.mxu0 0
    %2068 = vmatpush1.bf16.xpose.msra.mxu0 0
    %2069 = vmatprep.subr.bf16.mxu0 0
    %2070 = vmatpush1.bf16.xpose.msra.mxu0 0
    %2071 = vmatprep.subr.bf16.mxu0 0
    %2072 = vmatpush1.bf16.xpose.msra.mxu0 0
    %2073 = vmatprep.subr.bf16.mxu0 0
    %2074 = vmatpush1.bf16.xpose.msra.mxu0 0
    %2075 = vmatprep.mubr.bf16.mxu0 0
    %2076 = vmatmul.mubr.bf16.gmra.mrb[0].mxu0 %v2038
    %v2077 = vpop.f32.mrb[0].mxu0
    %v2078 = vadd.f32 %v1878, %v2077
    %v2079 = vpop.f32.mrb[0].mxu0
    %v2080 = vpop.f32.mrb[0].mxu0
    %v2081 = vadd.f32 %v1879, %v2080
    %v2082 = vpop.f32.mrb[0].mxu0
    %2083 = vdwg.mxu0
    %v2084 = vsel %vm558, %v1925, -inf
    %2085 = vmax.xlane.f32.xlu0 %v2084
    %v2086 = vpop.xlane.xlu0 %2085
    %v2087 = vsel %vm558, %v1928, -inf
    %2088 = vmax.xlane.f32.xlu0 %v2087
    %v2089 = vpop.xlane.xlu0 %2088
    %v2090 = vsel %vm558, %v1976, -inf
    %2091 = vmax.xlane.f32.xlu0 %v2090
    %v2092 = vpop.xlane.xlu0 %2091
    %v2093 = vsel %vm558, %v1979, -inf
    %2094 = vmax.xlane.f32.xlu0 %v2093
    %v2095 = vpop.xlane.xlu0 %2094
    %v2096 = vsel %vm558, %v2027, -inf
    %2097 = vmax.xlane.f32.xlu0 %v2096
    %v2098 = vpop.xlane.xlu0 %2097
    %v2099 = vsel %vm558, %v2030, -inf
    %2100 = vmax.xlane.f32.xlu0 %v2099
    %v2101 = vpop.xlane.xlu0 %2100
    %v2102 = vsel %vm558, %v2078, -inf
    %2103 = vmax.xlane.f32.xlu0 %v2102
    %v2104 = vpop.xlane.xlu0 %2103
    %v2105 = vsel %vm558, %v2081, -inf
    %2106 = vmax.xlane.f32.xlu0 %v2105
    %v2107 = vpop.xlane.xlu0 %2106
    %v2108 = vsub.f32 %v1925, %v2086
    %v2109 = vsub.f32 %v1928, %v2089
    %v2110 = vsub.f32 %v1976, %v2092
    %v2111 = vsub.f32 %v1979, %v2095
    %v2112 = vsub.f32 %v2027, %v2098
    %v2113 = vsub.f32 %v2030, %v2101
    %v2114 = vsub.f32 %v2078, %v2104
    %v2115 = vsub.f32 %v2081, %v2107
    %v2116 = vmul.f32 %v2108, 1.442695
    %v2117 = vpow.pop %v2116
    %v2118 = vmul.f32 %v2109, 1.442695
    %v2119 = vpow.pop %v2118
    %v2120 = vmul.f32 %v2110, 1.442695
    %v2121 = vpow.pop %v2120
    %v2122 = vmul.f32 %v2111, 1.442695
    %v2123 = vpow.pop %v2122
    %v2124 = vmul.f32 %v2112, 1.442695
    %v2125 = vpow.pop %v2124
    %v2126 = vmul.f32 %v2113, 1.442695
    %v2127 = vpow.pop %v2126
    %v2128 = vmul.f32 %v2114, 1.442695
    %v2129 = vpow.pop %v2128
    %v2130 = vmul.f32 %v2115, 1.442695
    %v2131 = vpow.pop %v2130
    %v2132 = vsel %vm558, %v2117, 0.0
    %2133 = vadd.xlane.f32.xlu0 %v2132
    %v2134 = vpop.xlane.xlu0 %2133
    %v2135 = vsel %vm558, %v2119, 0.0
    %2136 = vadd.xlane.f32.xlu0 %v2135
    %v2137 = vpop.xlane.xlu0 %2136
    %v2138 = vsel %vm558, %v2121, 0.0
    %2139 = vadd.xlane.f32.xlu0 %v2138
    %v2140 = vpop.xlane.xlu0 %2139
    %v2141 = vsel %vm558, %v2123, 0.0
    %2142 = vadd.xlane.f32.xlu0 %v2141
    %v2143 = vpop.xlane.xlu0 %2142
    %v2144 = vsel %vm558, %v2125, 0.0
    %2145 = vadd.xlane.f32.xlu0 %v2144
    %v2146 = vpop.xlane.xlu0 %2145
    %v2147 = vsel %vm558, %v2127, 0.0
    %2148 = vadd.xlane.f32.xlu0 %v2147
    %v2149 = vpop.xlane.xlu0 %2148
    %v2150 = vsel %vm558, %v2129, 0.0
    %2151 = vadd.xlane.f32.xlu0 %v2150
    %v2152 = vpop.xlane.xlu0 %2151
    %v2153 = vsel %vm558, %v2131, 0.0
    %2154 = vadd.xlane.f32.xlu0 %v2153
    %v2155 = vpop.xlane.xlu0 %2154
    %v2156 = vrcp.pop %v2134
    %v2157 = vrcp.pop %v2137
    %v2158 = vrcp.pop %v2140
    %v2159 = vrcp.pop %v2143
    %v2160 = vrcp.pop %v2146
    %v2161 = vrcp.pop %v2149
    %v2162 = vrcp.pop %v2152
    %v2163 = vrcp.pop %v2155
    %v2164 = vmul.f32 %v2117, %v2156
    %v2165 = vmul.f32 %v2119, %v2157
    %v2166 = vmul.f32 %v2121, %v2158
    %v2167 = vmul.f32 %v2123, %v2159
    %v2168 = vmul.f32 %v2125, %v2160
    %v2169 = vmul.f32 %v2127, %v2161
    %v2170 = vmul.f32 %v2129, %v2162
    %v2171 = vmul.f32 %v2131, %v2163
    %v2172 = vpack.c.bf16 %v2165, %v2164
    %v2173 = vpack.c.bf16 %v2167, %v2166
    %v2174 = vpack.c.bf16 %v2169, %v2168
    %v2175 = vpack.c.bf16 %v2171, %v2170
    %2176 = vrot.lane.b32.xlu0 %v349, 40
    %v2177 = vpop.permute.xlu0 %2176
    %v2180 = vsel %vm558, %v2172, 0
    %2182 = vmatprep.subr.bf16.mxu0 0
    %2183 = vmatpush1.bf16.msra.mxu0 %v2177
    %2184 = vmatprep.subr.bf16.mxu0 0
    %2185 = vmatpush1.bf16.msra.mxu0 0
    %2186 = vmatprep.subr.bf16.mxu0 0
    %2187 = vmatpush1.bf16.msra.mxu0 0
    %2188 = vmatprep.subr.bf16.mxu0 0
    %2189 = vmatpush1.bf16.msra.mxu0 0
    %2190 = vmatprep.subr.bf16.mxu0 0
    %2191 = vmatpush1.bf16.msra.mxu0 0
    %2192 = vmatprep.subr.bf16.mxu0 0
    %2193 = vmatpush1.bf16.msra.mxu0 0
    %2194 = vmatprep.subr.bf16.mxu0 0
    %2195 = vmatpush1.bf16.msra.mxu0 0
    %2196 = vmatprep.subr.bf16.mxu0 0
    %2197 = vmatpush1.bf16.msra.mxu0 0
    %2198 = vmatprep.subr.bf16.mxu0 0
    %2199 = vmatpush1.bf16.msra.mxu0 0
    %2200 = vmatprep.subr.bf16.mxu0 0
    %2201 = vmatpush1.bf16.msra.mxu0 0
    %2202 = vmatprep.subr.bf16.mxu0 0
    %2203 = vmatpush1.bf16.msra.mxu0 0
    %2204 = vmatprep.subr.bf16.mxu0 0
    %2205 = vmatpush1.bf16.msra.mxu0 0
    %2206 = vmatprep.subr.bf16.mxu0 0
    %2207 = vmatpush1.bf16.msra.mxu0 0
    %2208 = vmatprep.subr.bf16.mxu0 0
    %2209 = vmatpush1.bf16.msra.mxu0 0
    %2210 = vmatprep.subr.bf16.mxu0 0
    %2211 = vmatpush1.bf16.msra.mxu0 0
    %2212 = vmatprep.subr.bf16.mxu0 0
    %2213 = vmatpush1.bf16.msra.mxu0 0
    %2214 = vmatprep.mubr.bf16.mxu0 0
    %2215 = vmatmul.mubr.bf16.gmra.mrb[0].mxu0 %v2180
    %v2216 = vpop.f32.mrb[0].mxu0
    %v2217 = vadd.f32 0.0, %v2216
    %v2218 = vpop.f32.mrb[0].mxu0
    %v2219 = vpop.f32.mrb[0].mxu0
    %v2220 = vadd.f32 0.0, %v2219
    %v2221 = vpop.f32.mrb[0].mxu0
    %2222 = vdwg.mxu0
    %2223 = vrot.lane.b32.xlu0 %v350, 40
    %v2224 = vpop.permute.xlu0 %2223
    %v2227 = vsel %vm558, %v2173, 0
    %2229 = vmatprep.subr.bf16.mxu0 0
    %2230 = vmatpush1.bf16.msra.mxu0 %v2224
    %2231 = vmatprep.subr.bf16.mxu0 0
    %2232 = vmatpush1.bf16.msra.mxu0 0
    %2233 = vmatprep.subr.bf16.mxu0 0
    %2234 = vmatpush1.bf16.msra.mxu0 0
    %2235 = vmatprep.subr.bf16.mxu0 0
    %2236 = vmatpush1.bf16.msra.mxu0 0
    %2237 = vmatprep.subr.bf16.mxu0 0
    %2238 = vmatpush1.bf16.msra.mxu0 0
    %2239 = vmatprep.subr.bf16.mxu0 0
    %2240 = vmatpush1.bf16.msra.mxu0 0
    %2241 = vmatprep.subr.bf16.mxu0 0
    %2242 = vmatpush1.bf16.msra.mxu0 0
    %2243 = vmatprep.subr.bf16.mxu0 0
    %2244 = vmatpush1.bf16.msra.mxu0 0
    %2245 = vmatprep.subr.bf16.mxu0 0
    %2246 = vmatpush1.bf16.msra.mxu0 0
    %2247 = vmatprep.subr.bf16.mxu0 0
    %2248 = vmatpush1.bf16.msra.mxu0 0
    %2249 = vmatprep.subr.bf16.mxu0 0
    %2250 = vmatpush1.bf16.msra.mxu0 0
    %2251 = vmatprep.subr.bf16.mxu0 0
    %2252 = vmatpush1.bf16.msra.mxu0 0
    %2253 = vmatprep.subr.bf16.mxu0 0
    %2254 = vmatpush1.bf16.msra.mxu0 0
    %2255 = vmatprep.subr.bf16.mxu0 0
    %2256 = vmatpush1.bf16.msra.mxu0 0
    %2257 = vmatprep.subr.bf16.mxu0 0
    %2258 = vmatpush1.bf16.msra.mxu0 0
    %2259 = vmatprep.subr.bf16.mxu0 0
    %2260 = vmatpush1.bf16.msra.mxu0 0
    %2261 = vmatprep.mubr.bf16.mxu0 0
    %2262 = vmatmul.mubr.bf16.gmra.mrb[0].mxu0 %v2227
    %v2263 = vpop.f32.mrb[0].mxu0
    %v2264 = vadd.f32 0.0, %v2263
    %v2265 = vpop.f32.mrb[0].mxu0
    %v2266 = vpop.f32.mrb[0].mxu0
    %v2267 = vadd.f32 0.0, %v2266
    %v2268 = vpop.f32.mrb[0].mxu0
    %2269 = vdwg.mxu0
    %2270 = vrot.lane.b32.xlu0 %v351, 40
    %v2271 = vpop.permute.xlu0 %2270
    %v2274 = vsel %vm558, %v2174, 0
    %2276 = vmatprep.subr.bf16.mxu0 0
    %2277 = vmatpush1.bf16.msra.mxu0 %v2271
    %2278 = vmatprep.subr.bf16.mxu0 0
    %2279 = vmatpush1.bf16.msra.mxu0 0
    %2280 = vmatprep.subr.bf16.mxu0 0
    %2281 = vmatpush1.bf16.msra.mxu0 0
    %2282 = vmatprep.subr.bf16.mxu0 0
    %2283 = vmatpush1.bf16.msra.mxu0 0
    %2284 = vmatprep.subr.bf16.mxu0 0
    %2285 = vmatpush1.bf16.msra.mxu0 0
    %2286 = vmatprep.subr.bf16.mxu0 0
    %2287 = vmatpush1.bf16.msra.mxu0 0
    %2288 = vmatprep.subr.bf16.mxu0 0
    %2289 = vmatpush1.bf16.msra.mxu0 0
    %2290 = vmatprep.subr.bf16.mxu0 0
    %2291 = vmatpush1.bf16.msra.mxu0 0
    %2292 = vmatprep.subr.bf16.mxu0 0
    %2293 = vmatpush1.bf16.msra.mxu0 0
    %2294 = vmatprep.subr.bf16.mxu0 0
    %2295 = vmatpush1.bf16.msra.mxu0 0
    %2296 = vmatprep.subr.bf16.mxu0 0
    %2297 = vmatpush1.bf16.msra.mxu0 0
    %2298 = vmatprep.subr.bf16.mxu0 0
    %2299 = vmatpush1.bf16.msra.mxu0 0
    %2300 = vmatprep.subr.bf16.mxu0 0
    %2301 = vmatpush1.bf16.msra.mxu0 0
    %2302 = vmatprep.subr.bf16.mxu0 0
    %2303 = vmatpush1.bf16.msra.mxu0 0
    %2304 = vmatprep.subr.bf16.mxu0 0
    %2305 = vmatpush1.bf16.msra.mxu0 0
    %2306 = vmatprep.subr.bf16.mxu0 0
    %2307 = vmatpush1.bf16.msra.mxu0 0
    %2308 = vmatprep.mubr.bf16.mxu0 0
    %2309 = vmatmul.mubr.bf16.gmra.mrb[0].mxu0 %v2274
    %v2310 = vpop.f32.mrb[0].mxu0
    %v2311 = vadd.f32 0.0, %v2310
    %v2312 = vpop.f32.mrb[0].mxu0
    %v2313 = vpop.f32.mrb[0].mxu0
    %v2314 = vadd.f32 0.0, %v2313
    %v2315 = vpop.f32.mrb[0].mxu0
    %2316 = vdwg.mxu0
    %2317 = vrot.lane.b32.xlu0 %v352, 40
    %v2318 = vpop.permute.xlu0 %2317
    %v2321 = vsel %vm558, %v2175, 0
    %2323 = vmatprep.subr.bf16.mxu0 0
    %2324 = vmatpush1.bf16.msra.mxu0 %v2318
    %2325 = vmatprep.subr.bf16.mxu0 0
    %2326 = vmatpush1.bf16.msra.mxu0 0
    %2327 = vmatprep.subr.bf16.mxu0 0
    %2328 = vmatpush1.bf16.msra.mxu0 0
    %2329 = vmatprep.subr.bf16.mxu0 0
    %2330 = vmatpush1.bf16.msra.mxu0 0
    %2331 = vmatprep.subr.bf16.mxu0 0
    %2332 = vmatpush1.bf16.msra.mxu0 0
    %2333 = vmatprep.subr.bf16.mxu0 0
    %2334 = vmatpush1.bf16.msra.mxu0 0
    %2335 = vmatprep.subr.bf16.mxu0 0
    %2336 = vmatpush1.bf16.msra.mxu0 0
    %2337 = vmatprep.subr.bf16.mxu0 0
    %2338 = vmatpush1.bf16.msra.mxu0 0
    %2339 = vmatprep.subr.bf16.mxu0 0
    %2340 = vmatpush1.bf16.msra.mxu0 0
    %2341 = vmatprep.subr.bf16.mxu0 0
    %2342 = vmatpush1.bf16.msra.mxu0 0
    %2343 = vmatprep.subr.bf16.mxu0 0
    %2344 = vmatpush1.bf16.msra.mxu0 0
    %2345 = vmatprep.subr.bf16.mxu0 0
    %2346 = vmatpush1.bf16.msra.mxu0 0
    %2347 = vmatprep.subr.bf16.mxu0 0
    %2348 = vmatpush1.bf16.msra.mxu0 0
    %2349 = vmatprep.subr.bf16.mxu0 0
    %2350 = vmatpush1.bf16.msra.mxu0 0
    %2351 = vmatprep.subr.bf16.mxu0 0
    %2352 = vmatpush1.bf16.msra.mxu0 0
    %2353 = vmatprep.subr.bf16.mxu0 0
    %2354 = vmatpush1.bf16.msra.mxu0 0
    %2355 = vmatprep.mubr.bf16.mxu0 0
    %2356 = vmatmul.mubr.bf16.gmra.mrb[0].mxu0 %v2321
    %v2357 = vpop.f32.mrb[0].mxu0
    %v2358 = vadd.f32 0.0, %v2357
    %v2359 = vpop.f32.mrb[0].mxu0
    %v2360 = vpop.f32.mrb[0].mxu0
    %v2361 = vadd.f32 0.0, %v2360
    %v2362 = vpop.f32.mrb[0].mxu0
    %2363 = vdwg.mxu0
    %v2364 = vpack.c.bf16 %v2220, %v2217
    %v2365 = vpack.c.bf16 %v2267, %v2264
    %v2366 = vpack.c.bf16 %v2314, %v2311
    %v2367 = vpack.c.bf16 %v2361, %v2358
    %2372 = vrot.lane.b32.xlu0 %v2364, 24
    %v2373 = vpop.permute.xlu0 %2372
    %2374 = vrot.lane.b32.xlu0 %v2365, 24
    %v2375 = vpop.permute.xlu0 %2374
    %2376 = vrot.lane.b32.xlu0 %v2366, 24
    %v2377 = vpop.permute.xlu0 %2376
    %2378 = vrot.lane.b32.xlu0 %v2367, 24
    %v2379 = vpop.permute.xlu0 %2378
    %vm2384 = vcmask 261312
    %2385 = vst.msk [vmem:[#allocation2] sm:$0xff] %vm2384, %v2373
    %2386 = vst.msk [vmem:[#allocation2 + $0x8] sm:$0xff] %vm2384, %v2375
    %2387 = vst.msk [vmem:[#allocation2 + $0x10] sm:$0xff] %vm2384, %v2377
    %2388 = vst.msk [vmem:[#allocation2 + $0x18] sm:$0xff] %vm2384, %v2379
    %v2389 = vld [vmem:[#allocation2] sm:$0xff]
    %v2390 = vld [vmem:[#allocation2 + $0x8] sm:$0xff]
    %v2391 = vld [vmem:[#allocation2 + $0x10] sm:$0xff]
    %v2392 = vld [vmem:[#allocation2 + $0x18] sm:$0xff]
    %v2393 = vld [vmem:[#allocation6] sm:$0xf]
    %v2394 = vld [vmem:[#allocation6 + $0x4] sm:$0xf]
    %v2395 = vld [vmem:[#allocation6 + $0x8] sm:$0xf]
    %v2396 = vld [vmem:[#allocation6 + $0xc] sm:$0xf]
    %v2401 = vunpack.c.l.b16 %v2393
    %v2402 = vunpack.c.l.b16 %v2394
    %v2403 = vunpack.c.l.b16 %v2395
    %v2404 = vunpack.c.l.b16 %v2396
    %v2405 = vpack.c.b16 %v2402, %v2401
    %v2406 = vpack.c.b16 %v2404, %v2403
    %v2410 = vsel %vm116, %v2389, 0
    %v2413 = vsel %vm116, %v2390, 0
    %v2416 = vsel %vm116, %v2391, 0
    %v2419 = vsel %vm116, %v2392, 0
    %2421 = vmatprep.subr.bf16.mxu0 0
    %2422 = vmatpush1.bf16.msra.mxu0 %v2405
    %2423 = vmatprep.subr.bf16.mxu0 0
    %2424 = vmatpush1.bf16.msra.mxu0 %v2406
    %2425 = vmatprep.subr.bf16.mxu0 0
    %2426 = vmatpush1.bf16.msra.mxu0 0
    %2427 = vmatprep.subr.bf16.mxu0 0
    %2428 = vmatpush1.bf16.msra.mxu0 0
    %2429 = vmatprep.subr.bf16.mxu0 0
    %2430 = vmatpush1.bf16.msra.mxu0 0
    %2431 = vmatprep.subr.bf16.mxu0 0
    %2432 = vmatpush1.bf16.msra.mxu0 0
    %2433 = vmatprep.subr.bf16.mxu0 0
    %2434 = vmatpush1.bf16.msra.mxu0 0
    %2435 = vmatprep.subr.bf16.mxu0 0
    %2436 = vmatpush1.bf16.msra.mxu0 0
    %2437 = vmatprep.subr.bf16.mxu0 0
    %2438 = vmatpush1.bf16.msra.mxu0 0
    %2439 = vmatprep.subr.bf16.mxu0 0
    %2440 = vmatpush1.bf16.msra.mxu0 0
    %2441 = vmatprep.subr.bf16.mxu0 0
    %2442 = vmatpush1.bf16.msra.mxu0 0
    %2443 = vmatprep.subr.bf16.mxu0 0
    %2444 = vmatpush1.bf16.msra.mxu0 0
    %2445 = vmatprep.subr.bf16.mxu0 0
    %2446 = vmatpush1.bf16.msra.mxu0 0
    %2447 = vmatprep.subr.bf16.mxu0 0
    %2448 = vmatpush1.bf16.msra.mxu0 0
    %2449 = vmatprep.subr.bf16.mxu0 0
    %2450 = vmatpush1.bf16.msra.mxu0 0
    %2451 = vmatprep.subr.bf16.mxu0 0
    %2452 = vmatpush1.bf16.msra.mxu0 0
    %2453 = vmatprep.mubr.bf16.mxu0 0
    %2454 = vmatmul.mubr.bf16.gmra.mrb[0].mxu0 %v2410
    %v2455 = vpop.f32.mrb[0].mxu0
    %v2456 = vadd.f32 0.0, %v2455
    %v2457 = vpop.f32.mrb[0].mxu0
    %v2458 = vpop.f32.mrb[0].mxu0
    %v2459 = vadd.f32 0.0, %v2458
    %v2460 = vpop.f32.mrb[0].mxu0
    %2461 = vmatprep.mubr.bf16.mxu0 0
    %2462 = vmatmul.mubr.bf16.gmra.mrb[0].mxu0 %v2413
    %v2463 = vpop.f32.mrb[0].mxu0
    %v2464 = vadd.f32 0.0, %v2463
    %v2465 = vpop.f32.mrb[0].mxu0
    %v2466 = vpop.f32.mrb[0].mxu0
    %v2467 = vadd.f32 0.0, %v2466
    %v2468 = vpop.f32.mrb[0].mxu0
    %2469 = vmatprep.mubr.bf16.mxu0 0
    %2470 = vmatmul.mubr.bf16.gmra.mrb[0].mxu0 %v2416
    %v2471 = vpop.f32.mrb[0].mxu0
    %v2472 = vadd.f32 0.0, %v2471
    %v2473 = vpop.f32.mrb[0].mxu0
    %v2474 = vpop.f32.mrb[0].mxu0
    %v2475 = vadd.f32 0.0, %v2474
    %v2476 = vpop.f32.mrb[0].mxu0
    %2477 = vmatprep.mubr.bf16.mxu0 0
    %2478 = vmatmul.mubr.bf16.gmra.mrb[0].mxu0 %v2419
    %v2479 = vpop.f32.mrb[0].mxu0
    %v2480 = vadd.f32 0.0, %v2479
    %v2481 = vpop.f32.mrb[0].mxu0
    %v2482 = vpop.f32.mrb[0].mxu0
    %v2483 = vadd.f32 0.0, %v2482
    %v2484 = vpop.f32.mrb[0].mxu0
    %2485 = vdwg.mxu0
    %v2486 = vadd.f32 %v108, %v2456
    %v2487 = vadd.f32 %v109, %v2459
    %v2488 = vadd.f32 %v110, %v2464
    %v2489 = vadd.f32 %v111, %v2467
    %v2490 = vadd.f32 %v112, %v2472
    %v2491 = vadd.f32 %v113, %v2475
    %v2492 = vadd.f32 %v114, %v2480
    %v2493 = vadd.f32 %v115, %v2483
    %v2494 = vld [vmem:[#allocation8] sm:$0x1]
    %v2496 = vlaneseq
    %v2497 = vshrl.u32 %v2496, 7
    %v2498 = vsub.s32 0, %v2497
    %v2499 = vrot.slane %v2494, %v2498
    %v2501 = vadd.f32 %v2486, %v2499
    %v2502 = vadd.f32 %v2487, %v2499
    %v2503 = vadd.f32 %v2488, %v2499
    %v2504 = vadd.f32 %v2489, %v2499
    %v2505 = vadd.f32 %v2490, %v2499
    %v2506 = vadd.f32 %v2491, %v2499
    %v2507 = vadd.f32 %v2492, %v2499
    %v2508 = vadd.f32 %v2493, %v2499
    %v2509 = vsel %vm116, %v2501, 0.0
    %2510 = vadd.xlane.f32.xlu0 %v2509
    %v2511 = vpop.xlane.xlu0 %2510
    %v2512 = vsel %vm116, %v2502, 0.0
    %2513 = vadd.xlane.f32.xlu0 %v2512
    %v2514 = vpop.xlane.xlu0 %2513
    %v2515 = vsel %vm116, %v2503, 0.0
    %2516 = vadd.xlane.f32.xlu0 %v2515
    %v2517 = vpop.xlane.xlu0 %2516
    %v2518 = vsel %vm116, %v2504, 0.0
    %2519 = vadd.xlane.f32.xlu0 %v2518
    %v2520 = vpop.xlane.xlu0 %2519
    %v2521 = vsel %vm116, %v2505, 0.0
    %2522 = vadd.xlane.f32.xlu0 %v2521
    %v2523 = vpop.xlane.xlu0 %2522
    %v2524 = vsel %vm116, %v2506, 0.0
    %2525 = vadd.xlane.f32.xlu0 %v2524
    %v2526 = vpop.xlane.xlu0 %2525
    %v2527 = vsel %vm116, %v2507, 0.0
    %2528 = vadd.xlane.f32.xlu0 %v2527
    %v2529 = vpop.xlane.xlu0 %2528
    %v2530 = vsel %vm116, %v2508, 0.0
    %2531 = vadd.xlane.f32.xlu0 %v2530
    %v2532 = vpop.xlane.xlu0 %2531
    %v2533 = vmul.f32 %v2511, %v141
    %v2534 = vmul.f32 %v2514, %v141
    %v2535 = vmul.f32 %v2517, %v141
    %v2536 = vmul.f32 %v2520, %v141
    %v2537 = vmul.f32 %v2523, %v141
    %v2538 = vmul.f32 %v2526, %v141
    %v2539 = vmul.f32 %v2529, %v141
    %v2540 = vmul.f32 %v2532, %v141
    %v2541 = vsub.f32 %v2501, %v2533
    %v2542 = vsub.f32 %v2502, %v2534
    %v2543 = vsub.f32 %v2503, %v2535
    %v2544 = vsub.f32 %v2504, %v2536
    %v2545 = vsub.f32 %v2505, %v2537
    %v2546 = vsub.f32 %v2506, %v2538
    %v2547 = vsub.f32 %v2507, %v2539
    %v2548 = vsub.f32 %v2508, %v2540
    %v2549 = vmul.f32 %v2541, %v2541
    %v2550 = vmul.f32 %v2542, %v2542
    %v2551 = vmul.f32 %v2543, %v2543
    %v2552 = vmul.f32 %v2544, %v2544
    %v2553 = vmul.f32 %v2545, %v2545
    %v2554 = vmul.f32 %v2546, %v2546
    %v2555 = vmul.f32 %v2547, %v2547
    %v2556 = vmul.f32 %v2548, %v2548
    %v2557 = vsel %vm116, %v2549, 0.0
    %2558 = vadd.xlane.f32.xlu0 %v2557
    %v2559 = vpop.xlane.xlu0 %2558
    %v2560 = vsel %vm116, %v2550, 0.0
    %2561 = vadd.xlane.f32.xlu0 %v2560
    %v2562 = vpop.xlane.xlu0 %2561
    %v2563 = vsel %vm116, %v2551, 0.0
    %2564 = vadd.xlane.f32.xlu0 %v2563
    %v2565 = vpop.xlane.xlu0 %2564
    %v2566 = vsel %vm116, %v2552, 0.0
    %2567 = vadd.xlane.f32.xlu0 %v2566
    %v2568 = vpop.xlane.xlu0 %2567
    %v2569 = vsel %vm116, %v2553, 0.0
    %2570 = vadd.xlane.f32.xlu0 %v2569
    %v2571 = vpop.xlane.xlu0 %2570
    %v2572 = vsel %vm116, %v2554, 0.0
    %2573 = vadd.xlane.f32.xlu0 %v2572
    %v2574 = vpop.xlane.xlu0 %2573
    %v2575 = vsel %vm116, %v2555, 0.0
    %2576 = vadd.xlane.f32.xlu0 %v2575
    %v2577 = vpop.xlane.xlu0 %2576
    %v2578 = vsel %vm116, %v2556, 0.0
    %2579 = vadd.xlane.f32.xlu0 %v2578
    %v2580 = vpop.xlane.xlu0 %2579
    %v2581 = vmul.f32 %v2559, %v141
    %v2582 = vmul.f32 %v2562, %v141
    %v2583 = vmul.f32 %v2565, %v141
    %v2584 = vmul.f32 %v2568, %v141
    %v2585 = vmul.f32 %v2571, %v141
    %v2586 = vmul.f32 %v2574, %v141
    %v2587 = vmul.f32 %v2577, %v141
    %v2588 = vmul.f32 %v2580, %v141
    %v2589 = vadd.f32 %v2581, 1e-05
    %v2590 = vadd.f32 %v2582, 1e-05
    %v2591 = vadd.f32 %v2583, 1e-05
    %v2592 = vadd.f32 %v2584, 1e-05
    %v2593 = vadd.f32 %v2585, 1e-05
    %v2594 = vadd.f32 %v2586, 1e-05
    %v2595 = vadd.f32 %v2587, 1e-05
    %v2596 = vadd.f32 %v2588, 1e-05
    %v2597 = vrsqrt.pop %v2589
    %v2598 = vrsqrt.pop %v2590
    %v2599 = vrsqrt.pop %v2591
    %v2600 = vrsqrt.pop %v2592
    %v2601 = vrsqrt.pop %v2593
    %v2602 = vrsqrt.pop %v2594
    %v2603 = vrsqrt.pop %v2595
    %v2604 = vrsqrt.pop %v2596
    %v2605 = vmul.f32 %v2541, %v2597
    %v2606 = vmul.f32 %v2542, %v2598
    %v2607 = vmul.f32 %v2543, %v2599
    %v2608 = vmul.f32 %v2544, %v2600
    %v2609 = vmul.f32 %v2545, %v2601
    %v2610 = vmul.f32 %v2546, %v2602
    %v2611 = vmul.f32 %v2547, %v2603
    %v2612 = vmul.f32 %v2548, %v2604
    %v2613 = vld [vmem:[#allocation9] sm:$0x1]
    %v2615 = vlaneseq
    %v2616 = vshrl.u32 %v2615, 7
    %v2617 = vsub.s32 0, %v2616
    %v2618 = vrot.slane %v2613, %v2617
    %v2620 = vmul.f32 %v2605, %v2618
    %v2621 = vmul.f32 %v2606, %v2618
    %v2622 = vmul.f32 %v2607, %v2618
    %v2623 = vmul.f32 %v2608, %v2618
    %v2624 = vmul.f32 %v2609, %v2618
    %v2625 = vmul.f32 %v2610, %v2618
    %v2626 = vmul.f32 %v2611, %v2618
    %v2627 = vmul.f32 %v2612, %v2618
    %v2628 = vld [vmem:[#allocation11] sm:$0x1]
    %v2630 = vlaneseq
    %v2631 = vshrl.u32 %v2630, 7
    %v2632 = vsub.s32 0, %v2631
    %v2633 = vrot.slane %v2628, %v2632
    %v2635 = vadd.f32 %v2620, %v2633
    %v2636 = vadd.f32 %v2621, %v2633
    %v2637 = vadd.f32 %v2622, %v2633
    %v2638 = vadd.f32 %v2623, %v2633
    %v2639 = vadd.f32 %v2624, %v2633
    %v2640 = vadd.f32 %v2625, %v2633
    %v2641 = vadd.f32 %v2626, %v2633
    %v2642 = vadd.f32 %v2627, %v2633
    %v2643 = vpack.c.bf16 %v2636, %v2635
    %v2644 = vpack.c.bf16 %v2638, %v2637
    %v2645 = vpack.c.bf16 %v2640, %v2639
    %v2646 = vpack.c.bf16 %v2642, %v2641
    %v2647 = vld [vmem:[%s9] sm:$0xf]
    %v2648 = vld [vmem:[%s9 + $0x4] sm:$0xf]
    %v2649 = vld [vmem:[%s9 + $0x8] sm:$0xf]
    %v2650 = vld [vmem:[%s9 + $0xc] sm:$0xf]
    %v2651 = vld [vmem:[%s10] sm:$0x1]
    %v2653 = vlaneseq
    %v2654 = vshrl.u32 %v2653, 7
    %v2655 = vsub.s32 0, %v2654
    %v2656 = vrot.slane %v2651, %v2655
    %v2662 = vunpack.c.l.b16 %v2647
    %v2663 = vunpack.c.l.b16 %v2648
    %v2664 = vunpack.c.l.b16 %v2649
    %v2665 = vunpack.c.l.b16 %v2650
    %v2666 = vpack.c.b16 %v2663, %v2662
    %v2667 = vpack.c.b16 %v2665, %v2664
    %v2671 = vsel %vm116, %v2643, 0
    %v2674 = vsel %vm116, %v2644, 0
    %v2677 = vsel %vm116, %v2645, 0
    %v2680 = vsel %vm116, %v2646, 0
    %2682 = vmatprep.subr.bf16.mxu0 0
    %2683 = vmatpush1.bf16.msra.mxu0 %v2666
    %2684 = vmatprep.subr.bf16.mxu0 0
    %2685 = vmatpush1.bf16.msra.mxu0 %v2667
    %2686 = vmatprep.subr.bf16.mxu0 0
    %2687 = vmatpush1.bf16.msra.mxu0 0
    %2688 = vmatprep.subr.bf16.mxu0 0
    %2689 = vmatpush1.bf16.msra.mxu0 0
    %2690 = vmatprep.subr.bf16.mxu0 0
    %2691 = vmatpush1.bf16.msra.mxu0 0
    %2692 = vmatprep.subr.bf16.mxu0 0
    %2693 = vmatpush1.bf16.msra.mxu0 0
    %2694 = vmatprep.subr.bf16.mxu0 0
    %2695 = vmatpush1.bf16.msra.mxu0 0
    %2696 = vmatprep.subr.bf16.mxu0 0
    %2697 = vmatpush1.bf16.msra.mxu0 0
    %2698 = vmatprep.subr.bf16.mxu0 0
    %2699 = vmatpush1.bf16.msra.mxu0 0
    %2700 = vmatprep.subr.bf16.mxu0 0
    %2701 = vmatpush1.bf16.msra.mxu0 0
    %2702 = vmatprep.subr.bf16.mxu0 0
    %2703 = vmatpush1.bf16.msra.mxu0 0
    %2704 = vmatprep.subr.bf16.mxu0 0
    %2705 = vmatpush1.bf16.msra.mxu0 0
    %2706 = vmatprep.subr.bf16.mxu0 0
    %2707 = vmatpush1.bf16.msra.mxu0 0
    %2708 = vmatprep.subr.bf16.mxu0 0
    %2709 = vmatpush1.bf16.msra.mxu0 0
    %2710 = vmatprep.subr.bf16.mxu0 0
    %2711 = vmatpush1.bf16.msra.mxu0 0
    %2712 = vmatprep.subr.bf16.mxu0 0
    %2713 = vmatpush1.bf16.msra.mxu0 0
    %2714 = vmatprep.mubr.bf16.mxu0 0
    %2715 = vmatmul.mubr.bf16.gmra.mrb[0].mxu0 %v2671
    %v2716 = vpop.f32.mrb[0].mxu0
    %v2717 = vadd.f32 %v2656, %v2716
    %v2718 = vpop.f32.mrb[0].mxu0
    %v2719 = vpop.f32.mrb[0].mxu0
    %v2720 = vadd.f32 %v2656, %v2719
    %v2721 = vpop.f32.mrb[0].mxu0
    %2722 = vmatprep.mubr.bf16.mxu0 0
    %2723 = vmatmul.mubr.bf16.gmra.mrb[0].mxu0 %v2674
    %v2724 = vpop.f32.mrb[0].mxu0
    %v2725 = vadd.f32 %v2656, %v2724
    %v2726 = vpop.f32.mrb[0].mxu0
    %v2727 = vpop.f32.mrb[0].mxu0
    %v2728 = vadd.f32 %v2656, %v2727
    %v2729 = vpop.f32.mrb[0].mxu0
    %2730 = vmatprep.mubr.bf16.mxu0 0
    %2731 = vmatmul.mubr.bf16.gmra.mrb[0].mxu0 %v2677
    %v2732 = vpop.f32.mrb[0].mxu0
    %v2733 = vadd.f32 %v2656, %v2732
    %v2734 = vpop.f32.mrb[0].mxu0
    %v2735 = vpop.f32.mrb[0].mxu0
    %v2736 = vadd.f32 %v2656, %v2735
    %v2737 = vpop.f32.mrb[0].mxu0
    %2738 = vmatprep.mubr.bf16.mxu0 0
    %2739 = vmatmul.mubr.bf16.gmra.mrb[0].mxu0 %v2680
    %v2740 = vpop.f32.mrb[0].mxu0
    %v2741 = vadd.f32 %v2656, %v2740
    %v2742 = vpop.f32.mrb[0].mxu0
    %v2743 = vpop.f32.mrb[0].mxu0
    %v2744 = vadd.f32 %v2656, %v2743
    %v2745 = vpop.f32.mrb[0].mxu0
    %2746 = vdwg.mxu0
    %v2747 = vmul.f32 %v2717, 0.5
    %v2748 = vmul.f32 %v2720, 0.5
    %v2749 = vmul.f32 %v2725, 0.5
    %v2750 = vmul.f32 %v2728, 0.5
    %v2751 = vmul.f32 %v2733, 0.5
    %v2752 = vmul.f32 %v2736, 0.5
    %v2753 = vmul.f32 %v2741, 0.5
    %v2754 = vmul.f32 %v2744, 0.5
    %v2755 = vmul.f32 %v2717, 0.70710677
    %v2756 = vmul.f32 %v2720, 0.70710677
    %v2757 = vmul.f32 %v2725, 0.70710677
    %v2758 = vmul.f32 %v2728, 0.70710677
    %v2759 = vmul.f32 %v2733, 0.70710677
    %v2760 = vmul.f32 %v2736, 0.70710677
    %v2761 = vmul.f32 %v2741, 0.70710677
    %v2762 = vmul.f32 %v2744, 0.70710677
    %v2763 = verf.f32.pop %v2755
    %v2764 = verf.f32.pop %v2756
    %v2765 = verf.f32.pop %v2757
    %v2766 = verf.f32.pop %v2758
    %v2767 = verf.f32.pop %v2759
    %v2768 = verf.f32.pop %v2760
    %v2769 = verf.f32.pop %v2761
    %v2770 = verf.f32.pop %v2762
    %v2771 = vadd.f32 %v2763, 1.0
    %v2772 = vadd.f32 %v2764, 1.0
    %v2773 = vadd.f32 %v2765, 1.0
    %v2774 = vadd.f32 %v2766, 1.0
    %v2775 = vadd.f32 %v2767, 1.0
    %v2776 = vadd.f32 %v2768, 1.0
    %v2777 = vadd.f32 %v2769, 1.0
    %v2778 = vadd.f32 %v2770, 1.0
    %v2779 = vmul.f32 %v2747, %v2771
    %v2780 = vmul.f32 %v2748, %v2772
    %v2781 = vmul.f32 %v2749, %v2773
    %v2782 = vmul.f32 %v2750, %v2774
    %v2783 = vmul.f32 %v2751, %v2775
    %v2784 = vmul.f32 %v2752, %v2776
    %v2785 = vmul.f32 %v2753, %v2777
    %v2786 = vmul.f32 %v2754, %v2778
    %v2787 = vpack.c.bf16 %v2780, %v2779
    %v2788 = vpack.c.bf16 %v2782, %v2781
    %v2789 = vpack.c.bf16 %v2784, %v2783
    %v2790 = vpack.c.bf16 %v2786, %v2785
    %v2791 = vld [vmem:[%s11] sm:$0xf]
    %v2792 = vld [vmem:[%s11 + $0x4] sm:$0xf]
    %v2793 = vld [vmem:[%s11 + $0x8] sm:$0xf]
    %v2794 = vld [vmem:[%s11 + $0xc] sm:$0xf]
    %v2795 = vld [vmem:[%s11 + $0x10] sm:$0xf]
    %v2796 = vld [vmem:[%s11 + $0x14] sm:$0xf]
    %v2797 = vld [vmem:[%s11 + $0x18] sm:$0xf]
    %v2798 = vld [vmem:[%s11 + $0x1c] sm:$0xf]
    %v2799 = vld [vmem:[%s11 + $0x20] sm:$0xf]
    %v2800 = vld [vmem:[%s11 + $0x24] sm:$0xf]
    %v2801 = vld [vmem:[%s11 + $0x28] sm:$0xf]
    %v2802 = vld [vmem:[%s11 + $0x2c] sm:$0xf]
    %v2803 = vld [vmem:[%s11 + $0x30] sm:$0xf]
    %v2804 = vld [vmem:[%s11 + $0x34] sm:$0xf]
    %v2805 = vld [vmem:[%s11 + $0x38] sm:$0xf]
    %v2806 = vld [vmem:[%s11 + $0x3c] sm:$0xf]
    %v2807 = vld [vmem:[%s12] sm:$0x1]
    %v2809 = vlaneseq
    %v2810 = vshrl.u32 %v2809, 7
    %v2811 = vsub.s32 0, %v2810
    %v2812 = vrot.slane %v2807, %v2811
    %v2830 = vunpack.c.l.b16 %v2791
    %v2831 = vunpack.c.l.b16 %v2792
    %v2832 = vunpack.c.l.b16 %v2793
    %v2833 = vunpack.c.l.b16 %v2794
    %v2834 = vunpack.c.l.b16 %v2795
    %v2835 = vunpack.c.l.b16 %v2796
    %v2836 = vunpack.c.l.b16 %v2797
    %v2837 = vunpack.c.l.b16 %v2798
    %v2838 = vunpack.c.l.b16 %v2799
    %v2839 = vunpack.c.l.b16 %v2800
    %v2840 = vunpack.c.l.b16 %v2801
    %v2841 = vunpack.c.l.b16 %v2802
    %v2842 = vunpack.c.l.b16 %v2803
    %v2843 = vunpack.c.l.b16 %v2804
    %v2844 = vunpack.c.l.b16 %v2805
    %v2845 = vunpack.c.l.b16 %v2806
    %v2846 = vpack.c.b16 %v2831, %v2830
    %v2847 = vpack.c.b16 %v2833, %v2832
    %v2848 = vpack.c.b16 %v2835, %v2834
    %v2849 = vpack.c.b16 %v2837, %v2836
    %v2850 = vpack.c.b16 %v2839, %v2838
    %v2851 = vpack.c.b16 %v2841, %v2840
    %v2852 = vpack.c.b16 %v2843, %v2842
    %v2853 = vpack.c.b16 %v2845, %v2844
    %2862 = vmatprep.subr.bf16.mxu0 0
    %2863 = vmatpush1.bf16.msra.mxu0 %v2846
    %2864 = vmatprep.subr.bf16.mxu0 0
    %2865 = vmatpush1.bf16.msra.mxu0 %v2847
    %2866 = vmatprep.subr.bf16.mxu0 0
    %2867 = vmatpush1.bf16.msra.mxu0 %v2848
    %2868 = vmatprep.subr.bf16.mxu0 0
    %2869 = vmatpush1.bf16.msra.mxu0 %v2849
    %2870 = vmatprep.subr.bf16.mxu0 0
    %2871 = vmatpush1.bf16.msra.mxu0 %v2850
    %2872 = vmatprep.subr.bf16.mxu0 0
    %2873 = vmatpush1.bf16.msra.mxu0 %v2851
    %2874 = vmatprep.subr.bf16.mxu0 0
    %2875 = vmatpush1.bf16.msra.mxu0 %v2852
    %2876 = vmatprep.subr.bf16.mxu0 0
    %2877 = vmatpush1.bf16.msra.mxu0 %v2853
    %2878 = vmatprep.subr.bf16.mxu0 0
    %2879 = vmatpush1.bf16.msra.mxu0 0
    %2880 = vmatprep.subr.bf16.mxu0 0
    %2881 = vmatpush1.bf16.msra.mxu0 0
    %2882 = vmatprep.subr.bf16.mxu0 0
    %2883 = vmatpush1.bf16.msra.mxu0 0
    %2884 = vmatprep.subr.bf16.mxu0 0
    %2885 = vmatpush1.bf16.msra.mxu0 0
    %2886 = vmatprep.subr.bf16.mxu0 0
    %2887 = vmatpush1.bf16.msra.mxu0 0
    %2888 = vmatprep.subr.bf16.mxu0 0
    %2889 = vmatpush1.bf16.msra.mxu0 0
    %2890 = vmatprep.subr.bf16.mxu0 0
    %2891 = vmatpush1.bf16.msra.mxu0 0
    %2892 = vmatprep.subr.bf16.mxu0 0
    %2893 = vmatpush1.bf16.msra.mxu0 0
    %2894 = vmatprep.mubr.bf16.mxu0 0
    %2895 = vmatmul.mubr.bf16.gmra.mrb[0].mxu0 %v2787
    %v2896 = vpop.f32.mrb[0].mxu0
    %v2897 = vadd.f32 %v2812, %v2896
    %v2898 = vpop.f32.mrb[0].mxu0
    %v2899 = vpop.f32.mrb[0].mxu0
    %v2900 = vadd.f32 %v2812, %v2899
    %v2901 = vpop.f32.mrb[0].mxu0
    %2902 = vmatprep.mubr.bf16.mxu0 0
    %2903 = vmatmul.mubr.bf16.gmra.mrb[0].mxu0 %v2788
    %v2904 = vpop.f32.mrb[0].mxu0
    %v2905 = vadd.f32 %v2812, %v2904
    %v2906 = vpop.f32.mrb[0].mxu0
    %v2907 = vpop.f32.mrb[0].mxu0
    %v2908 = vadd.f32 %v2812, %v2907
    %v2909 = vpop.f32.mrb[0].mxu0
    %2910 = vmatprep.mubr.bf16.mxu0 0
    %2911 = vmatmul.mubr.bf16.gmra.mrb[0].mxu0 %v2789
    %v2912 = vpop.f32.mrb[0].mxu0
    %v2913 = vadd.f32 %v2812, %v2912
    %v2914 = vpop.f32.mrb[0].mxu0
    %v2915 = vpop.f32.mrb[0].mxu0
    %v2916 = vadd.f32 %v2812, %v2915
    %v2917 = vpop.f32.mrb[0].mxu0
    %2918 = vmatprep.mubr.bf16.mxu0 0
    %2919 = vmatmul.mubr.bf16.gmra.mrb[0].mxu0 %v2790
    %v2920 = vpop.f32.mrb[0].mxu0
    %v2921 = vadd.f32 %v2812, %v2920
    %v2922 = vpop.f32.mrb[0].mxu0
    %v2923 = vpop.f32.mrb[0].mxu0
    %v2924 = vadd.f32 %v2812, %v2923
    %v2925 = vpop.f32.mrb[0].mxu0
    %2926 = vdwg.mxu0
    %v2927 = vadd.f32 %v2501, %v2897
    %v2928 = vadd.f32 %v2502, %v2900
    %v2929 = vadd.f32 %v2503, %v2905
    %v2930 = vadd.f32 %v2504, %v2908
    %v2931 = vadd.f32 %v2505, %v2913
    %v2932 = vadd.f32 %v2506, %v2916
    %v2933 = vadd.f32 %v2507, %v2921
    %v2934 = vadd.f32 %v2508, %v2924
    %2935 = vst.msk [vmem:[#allocation12] sm:$0xff] %vm116, %v2927
    %2936 = vst.msk [vmem:[#allocation12 + $0x8] sm:$0xff] %vm116, %v2928
    %2937 = vst.msk [vmem:[#allocation12 + $0x10] sm:$0xff] %vm116, %v2929
    %2938 = vst.msk [vmem:[#allocation12 + $0x18] sm:$0xff] %vm116, %v2930
    %2939 = vst.msk [vmem:[#allocation12 + $0x20] sm:$0xff] %vm116, %v2931
    %2940 = vst.msk [vmem:[#allocation12 + $0x28] sm:$0xff] %vm116, %v2932
    %2941 = vst.msk [vmem:[#allocation12 + $0x30] sm:$0xff] %vm116, %v2933
    %2942 = vst.msk [vmem:[#allocation12 + $0x38] sm:$0xff] %vm116, %v2934
    // Predicated region
    $region74: #{tpu_custom_call.1} parent=1 // pred_check
      _
    $region75: #{tpu_custom_call.1} parent=1 // pred_check_branch
      %2944 = sbr.rel (0) target = $region77
    $region76: #{tpu_custom_call.1} parent=1 // pred_region
      %s2946 = ssub.s32 1024, 1024
      %2947 = vsyncadd [#allocation5], %s2946
      %s2948 = sshll.u32 [#allocation12], 4
      %s2949 = int_to_ptr.vmem [resolvable:$true] %s2948
      %2954 = dma.vmem_to_hbm [thread:$0]  %s2949, 1024, %s13, [#allocation5], 128, 128, 8
    $region77: #{tpu_custom_call.1} parent=1 // pred_fallthru
      _
    // Predicated region
    $region78: #{tpu_custom_call.1} parent=1 // pred_check
      _
    $region79: #{tpu_custom_call.1} parent=1 // pred_check_branch
      %2956 = sbr.rel (0) target = $region81
    $region80: #{tpu_custom_call.1} parent=1 // pred_region
      %2957 = dma.done [#allocation5], 1024
    $region81: #{tpu_custom_call.1} parent=1 // pred_fallthru
      _
    %2958 = vsyncpa [#allocation4], 1
    %2959 = vsyncpa [#allocation7], 1
    %2960 = vsyncpa [#allocation10], 1
    %2961 = vsyncpa [#allocation5], 1

</llo_original>
